<compile_context>
chip_gen: v7x
topology: tpu7x:2x2x1
jax: 0.10.0
libtpu: 0.0.40
codegen_flags: <defaults>
</compile_context>

<pallas_src>
import functools

import numpy as np

import jax
import jax.numpy as jnp
from jax.experimental import pallas as pl
from jax.experimental.pallas import tpu as pltpu

SQRT_HALF = 0.7071067811865476
_VMEM_LIMIT = 32 * 1024 * 1024


def _gelu(x):
    # exact (erf) GELU, matching torch.nn.GELU()
    return 0.5 * x * (1.0 + jax.lax.erf(x * SQRT_HALF))


# --------------------------------------------------------------------------
# host-side constant matrices (built from static shapes only)
# --------------------------------------------------------------------------
def _bilinear_matrix(n_out, n_in):
    """(n_out, n_in) interpolation matrix, bilinear align_corners=True."""
    m = np.zeros((n_out, n_in), np.float32)
    if n_in == 1 or n_out == 1:
        m[:, 0] = 1.0
        return m
    scale = (n_in - 1) / (n_out - 1)
    for i in range(n_out):
        pos = i * scale
        i0 = min(int(np.floor(pos)), n_in - 1)
        i1 = min(i0 + 1, n_in - 1)
        frac = pos - i0
        m[i, i0] += 1.0 - frac
        m[i, i1] += frac
    return m


def _shift_matrices(n):
    """0/1 matrices: (m @ prev)[:, j] = m[:, max(j-1,0)],
    (m @ nxt)[:, j] = m[:, min(j+1,n-1)] (edge-replicate shifts)."""
    prev_m = np.zeros((n, n), np.float32)
    next_m = np.zeros((n, n), np.float32)
    for j in range(n):
        prev_m[max(j - 1, 0), j] = 1.0
        next_m[min(j + 1, n - 1), j] = 1.0
    return prev_m, next_m


# --------------------------------------------------------------------------
# generic conv (stride 1, pad K//2) + folded-BN scale/shift + activation:
# one wide MXU matmul per row tile over wrapper-side im2col patches.
# weight layout: (K*K*Cin, Cout), row = (dy*K+dx)*Cin + ci  (matches im2col)
# --------------------------------------------------------------------------
def _conv_kernel(p_ref, w_ref, s_ref, t_ref, o_ref, *, act):
    acc = jnp.dot(p_ref[0], w_ref[...], preferred_element_type=jnp.float32)
    acc = acc * s_ref[...] + t_ref[...]
    if act == "gelu":
        acc = _gelu(acc)
    o_ref[0] = acc.astype(o_ref.dtype)


def _pick_row_tile(hw):
    for cand in (128, 64, 32, 16, 8):
        if hw % cand == 0:
            return cand
    return hw


def _conv_mm(patches, w, s, t, act, out_dtype):
    B, HW, KKC = patches.shape
    Cout = w.shape[1]
    tile = _pick_row_tile(HW)
    return pl.pallas_call(
        functools.partial(_conv_kernel, act=act),
        grid=(B, HW // tile),
        in_specs=[
            pl.BlockSpec((1, tile, KKC), lambda b, m: (b, m, 0)),
            pl.BlockSpec((KKC, Cout), lambda b, m: (0, 0)),
            pl.BlockSpec((1, Cout), lambda b, m: (0, 0)),
            pl.BlockSpec((1, Cout), lambda b, m: (0, 0)),
        ],
        out_specs=pl.BlockSpec((1, tile, Cout), lambda b, m: (b, m, 0)),
        out_shape=jax.ShapeDtypeStruct((B, HW, Cout), out_dtype),
        compiler_params=pltpu.CompilerParams(
            dimension_semantics=("parallel", "parallel"),
            vmem_limit_bytes=_VMEM_LIMIT),
    )(patches, w, s, t)


def _im2col(x_nhwc, K):
    """(B, H, W, C) -> bf16 (B, H*W, K*K*C); column = (dy*K+dx)*C + ci."""
    B, H, W, C = x_nhwc.shape
    pad = K // 2
    xp = jnp.pad(x_nhwc, ((0, 0), (pad, pad), (pad, pad), (0, 0)))
    taps = [xp[:, dy:dy + H, dx:dx + W, :] for dy in range(K) for dx in range(K)]
    p = jnp.concatenate(taps, axis=-1)
    return p.reshape(B, H * W, K * K * C).astype(jnp.bfloat16)


def conv_bn_act(x_nhwc, w, s, t, ksize, act, out_dtype=jnp.float32):
    B, H, W, _ = x_nhwc.shape
    patches = _im2col(x_nhwc, ksize)
    y = _conv_mm(patches, w, s, t, act, out_dtype)
    return y.reshape(B, H, W, w.shape[1])


# --------------------------------------------------------------------------
# separable, exact align_corners=True bilinear x2 (after the `up` 7x7 conv).
# Two tiny interpolation matrices instead of a dense kron(UH, UW).
# --------------------------------------------------------------------------
def _upsample2x(y_nhwc, H, W):
    _, H2, W2, _ = y_nhwc.shape
    uh = jnp.asarray(_bilinear_matrix(H, H2))
    uw = jnp.asarray(_bilinear_matrix(W, W2))
    hp = jax.lax.Precision.HIGHEST
    z = jnp.einsum("Hh,bhwc->bHwc", uh, y_nhwc, precision=hp)
    return jnp.einsum("Ww,bhwc->bhWc", uw, z, precision=hp)


# --------------------------------------------------------------------------
# fused AP_MP / uncertainty-map / gating stage (focus_background=True):
#   dm   = ||avgpool2(sxu) - maxpool2(x)||_2,C + ||avgpool2(x) - maxpool2(sxu)||_2,C
#   imap = sigmoid(up2(in_map));  dmap = sigmoid(up2(dm))
#   b_feature = x * (dilate3(imap)-imap) + x * (dilate3(dmap)-dmap) + x
# Lane-dense (H, W*C) output; dilation via exact 0/1 shift matrices (== cv2).
# --------------------------------------------------------------------------
def _bfeat_kernel(x2_ref, xph_ref, sph_ref, im_ref, uh_ref, uwt_ref,
                  rw_ref, scol_ref, srow_ref, o_ref):
    xph = [xph_ref[i] for i in range(4)]       # 2x2 pooling phases of x
    sph = [sph_ref[i] for i in range(4)]       # 2x2 pooling phases of small_x_up
    avg_x = (xph[0] + xph[1] + xph[2] + xph[3]) * 0.25
    max_x = jnp.maximum(jnp.maximum(xph[0], xph[1]), jnp.maximum(xph[2], xph[3]))
    avg_s = (sph[0] + sph[1] + sph[2] + sph[3]) * 0.25
    max_s = jnp.maximum(jnp.maximum(sph[0], sph[1]), jnp.maximum(sph[2], sph[3]))

    d1 = avg_s - max_x                          # AP_MP(small_x_up, x)
    d2 = avg_x - max_s                          # AP_MP(x, small_x_up)
    dm = (jnp.sqrt(jnp.sum(d1 * d1, axis=-1))
          + jnp.sqrt(jnp.sum(d2 * d2, axis=-1)))            # (H2, W2)

    uh = uh_ref[...]                            # (H, H2)
    uwt = uwt_ref[...]                          # (W2, W)

    def up2(m):                                 # bilinear x2, align_corners=True
        z = jnp.dot(uh, m, preferred_element_type=jnp.float32)
        return jnp.dot(z, uwt, preferred_element_type=jnp.float32)

    imap = jax.nn.sigmoid(up2(im_ref[0]))       # (H, W)
    dmap = jax.nn.sigmoid(up2(dm))              # (H, W)

    scol = scol_ref[...]                        # (W, 2W)  [left | right] shifts
    srow = srow_ref[...]                        # (2H, H)  [up ; down]    shifts

    def dil3(m):                                # 3x3 grayscale dilation (cv2.dilate)
        H_, W_ = m.shape
        left = jnp.dot(m, scol[:, :W_], preferred_element_type=jnp.float32)
        right = jnp.dot(m, scol[:, W_:], preferred_element_type=jnp.float32)
        h = jnp.maximum(jnp.maximum(left, m), right)
        up_ = jnp.dot(srow[:H_, :], h, preferred_element_type=jnp.float32)
        dn_ = jnp.dot(srow[H_:, :], h, preferred_element_type=jnp.float32)
        return jnp.maximum(jnp.maximum(up_, h), dn_)

    gate = (dil3(imap) - imap) + (dil3(dmap) - dmap) + 1.0      # (H, W)
    gate_wide = jnp.dot(gate, rw_ref[...],
                        preferred_element_type=jnp.float32)     # (H, W*C)
    o_ref[0] = (x2_ref[0] * gate_wide).astype(o_ref.dtype)


def _phases(t_nhwc):
    """2x2 pooling phases, stacked: (B, H, W, C) -> (B*4, H/2, W/2, C)."""
    B, H, W, C = t_nhwc.shape
    ph = jnp.stack([t_nhwc[:, 0::2, 0::2, :], t_nhwc[:, 0::2, 1::2, :],
                    t_nhwc[:, 1::2, 0::2, :], t_nhwc[:, 1::2, 1::2, :]], axis=1)
    return ph.reshape(B * 4, H // 2, W // 2, C)


def b_feature_block(x_nhwc, sxu_nhwc, in_map_bhw):
    B, H, W, C = x_nhwc.shape
    H2, W2 = H // 2, W // 2
    uh = jnp.asarray(_bilinear_matrix(H, H2))
    uwt = jnp.asarray(_bilinear_matrix(W, W2).T)
    rw = jnp.asarray(np.kron(np.eye(W, dtype=np.float32),
                             np.ones((1, C), np.float32)))          # (W, W*C)
    slw, srw = _shift_matrices(W)
    slh, srh = _shift_matrices(H)
    scol = jnp.asarray(np.concatenate([slw, srw], axis=1))           # (W, 2W)
    srow = jnp.asarray(np.concatenate([slh.T, srh.T], axis=0))       # (2H, H)
    x2 = x_nhwc.reshape(B, H, W * C)

    out = pl.pallas_call(
        _bfeat_kernel,
        grid=(B,),
        in_specs=[
            pl.BlockSpec((1, H, W * C), lambda b: (b, 0, 0)),
            pl.BlockSpec((4, H2, W2, C), lambda b: (b, 0, 0, 0)),
            pl.BlockSpec((4, H2, W2, C), lambda b: (b, 0, 0, 0)),
            pl.BlockSpec((1, H2, W2), lambda b: (b, 0, 0)),
            pl.BlockSpec((H, H2), lambda b: (0, 0)),
            pl.BlockSpec((W2, W), lambda b: (0, 0)),
            pl.BlockSpec((W, W * C), lambda b: (0, 0)),
            pl.BlockSpec((W, 2 * W), lambda b: (0, 0)),
            pl.BlockSpec((2 * H, H), lambda b: (0, 0)),
        ],
        out_specs=pl.BlockSpec((1, H, W * C), lambda b: (b, 0, 0)),
        out_shape=jax.ShapeDtypeStruct((B, H, W * C), jnp.bfloat16),
        compiler_params=pltpu.CompilerParams(
            dimension_semantics=("parallel",),
            vmem_limit_bytes=_VMEM_LIMIT),
    )(x2, _phases(x_nhwc), _phases(sxu_nhwc), in_map_bhw, uh, uwt, rw, scol, srow)
    return out.reshape(B, H, W, C)


# --------------------------------------------------------------------------
# full FGC forward
# --------------------------------------------------------------------------
def fgc_forward(params, x_nchw, small_x_nchw, in_map_nchw):
    B, C1, H, W = x_nchw.shape
    x = jnp.transpose(x_nchw, (0, 2, 3, 1))            # (B, H, W, C1)
    sx = jnp.transpose(small_x_nchw, (0, 2, 3, 1))     # (B, H/2, W/2, C2)
    im = in_map_nchw[:, 0, :, :]                       # (B, H/2, W/2)

    # up: Conv7x7 + BN + GELU (Pallas) then separable bilinear x2 (exact).
    y = conv_bn_act(sx, params["w_up"], params["s_up"], params["t_up"], 7,
                    "gelu", out_dtype=jnp.float32)              # (B,H/2,W/2,C1)
    sxu = _upsample2x(y, H, W)                                   # (B,H,W,C1)

    # diff_1 / diff_2 (conv_context_* branches) are dead code in the PyTorch
    # forward (never used in the returned values) -> skipped.

    # AP_MP maps + sigmoid(upsample) + 3x3 dilation gating (focus_background=True)
    bfeat = b_feature_block(x, sxu, im)                          # bf16

    # fn = conv2(b_feature)       (3x3, bias, no BN / activation)
    fn = conv_bn_act(bfeat, params["w_conv2"], params["s_conv2"],
                     params["t_conv2"], 3, None, out_dtype=jnp.bfloat16)

    # refine2 = dep1(cat(small_x, beta*fn)) -> dep2 -> dep3 (Conv+BN+GELU each).
    # beta is folded into w_dep1 at init.
    cat = jnp.concatenate([sxu.astype(jnp.bfloat16), fn], axis=-1)
    r = conv_bn_act(cat, params["w_dep1"], params["s_dep1"], params["t_dep1"],
                    3, "gelu", out_dtype=jnp.bfloat16)
    r = conv_bn_act(r, params["w_dep2"], params["s_dep2"], params["t_dep2"],
                    3, "gelu", out_dtype=jnp.bfloat16)
    r = conv_bn_act(r, params["w_dep3"], params["s_dep3"], params["t_dep3"],
                    3, "gelu", out_dtype=jnp.float32)

    # output_map = output_map_sal(refine2)   (7x7, C1 -> 1, padded to 128 lanes)
    om = conv_bn_act(r, params["w_sal"], params["s_sal"], params["t_sal"], 7,
                     None, out_dtype=jnp.float32)[..., :1]

    return jnp.transpose(r, (0, 3, 1, 2)), jnp.transpose(om, (0, 3, 1, 2))


# --------------------------------------------------------------------------
# deterministic parameter construction (shapes from FGC.__init__, BN folded,
# weights stored bf16, beta folded into w_dep1 -- all once, at init).
# --------------------------------------------------------------------------
def init_params(key, c1, c2):
    keys = iter(jax.random.split(key, 64))

    def w(shape, scale=0.05):
        return scale * jax.random.normal(next(keys), shape, jnp.float32)

    def bn_fold(cout, bias):
        gamma = 1.0 + 0.1 * jax.random.normal(next(keys), (cout,), jnp.float32)
        beta_ = 0.1 * jax.random.normal(next(keys), (cout,), jnp.float32)
        mean = 0.1 * jax.random.normal(next(keys), (cout,), jnp.float32)
        var = 1.0 + 0.1 * jnp.abs(jax.random.normal(next(keys), (cout,), jnp.float32))
        scale = gamma / jnp.sqrt(var + 1e-5)
        shift = scale * (bias - mean) + beta_
        return scale[None, :], shift[None, :]

    p = {}
    beta = jnp.ones((1,), jnp.float32)           # nn.Parameter(torch.ones(1))
    p["beta"] = beta

    # up: Conv2d(c2, c1, 7, 1, 3) + BN
    p["w_up"] = w((49 * c2, c1)).astype(jnp.bfloat16)
    p["s_up"], p["t_up"] = bn_fold(c1, w((c1,)))

    # conv2: Conv2d(c1, c1, 3, 1, 1) (bias only)
    p["w_conv2"] = w((9 * c1, c1)).astype(jnp.bfloat16)
    p["s_conv2"] = jnp.ones((1, c1), jnp.float32)
    p["t_conv2"] = w((c1,))[None, :]

    # conv_cur_dep1: Basic_Conv(2*c1 -> c1); beta scales the fn-half input rows
    rs = jnp.tile(jnp.concatenate([jnp.ones((c1,), jnp.float32),
                                   beta[0] * jnp.ones((c1,), jnp.float32)]), 9)
    p["w_dep1"] = (w((9 * 2 * c1, c1)) * rs[:, None]).astype(jnp.bfloat16)
    p["s_dep1"], p["t_dep1"] = bn_fold(c1, w((c1,)))

    # conv_cur_dep2/3
    p["w_dep2"] = w((9 * c1, c1)).astype(jnp.bfloat16)
    p["s_dep2"], p["t_dep2"] = bn_fold(c1, w((c1,)))
    p["w_dep3"] = w((9 * c1, c1)).astype(jnp.bfloat16)
    p["s_dep3"], p["t_dep3"] = bn_fold(c1, w((c1,)))

    # output_map_sal: Conv2d(c1, 1, 7, 1, 3), Cout padded to 128 lanes (col 0 real)
    npad = 128
    w_sal = jnp.zeros((49 * c1, npad), jnp.float32).at[:, 0].set(w((49 * c1,)))
    p["w_sal"] = w_sal.astype(jnp.bfloat16)
    p["s_sal"] = jnp.ones((1, npad), jnp.float32)
    p["t_sal"] = jnp.zeros((1, npad), jnp.float32).at[0, 0].set(w((1,))[0])
    return p


if __name__ == "__main__":
    C1, C2, B, H, W = 32, 64, 2, 16, 16
    kp, kx, ks, km = jax.random.split(jax.random.PRNGKey(0), 4)
    params = init_params(kp, C1, C2)
    x = jax.random.normal(kx, (B, C1, H, W), jnp.float32)
    small_x = jax.random.normal(ks, (B, C2, H // 2, W // 2), jnp.float32)
    in_map = jax.random.normal(km, (B, 1, H // 2, W // 2), jnp.float32)

    refine2, out_map = jax.jit(fgc_forward)(params, x, small_x, in_map)
    refine2, out_map = jax.block_until_ready((refine2, out_map))

    assert refine2.shape == (B, C1, H, W) and refine2.dtype == jnp.float32
    assert out_map.shape == (B, 1, H, W) and out_map.dtype == jnp.float32
    assert bool(jnp.all(jnp.isfinite(refine2))) and bool(jnp.all(jnp.isfinite(out_map)))
    print("KERNEL_OK")
</pallas_src>

<mosaic_0001>
module attributes {stable_mosaic.version = 11 : i64} {
  func.func @_conv_kernel(%arg0: i32, %arg1: i32, %arg2: memref<1x64x3136xbf16, #tpu.memory_space<vmem>>, %arg3: memref<3136x32xbf16, #tpu.memory_space<vmem>>, %arg4: memref<1x32xf32, #tpu.memory_space<vmem>>, %arg5: memref<1x32xf32, #tpu.memory_space<vmem>>, %arg6: memref<1x64x32xf32, #tpu.memory_space<vmem>>) attributes {dimension_semantics = [#tpu.dimension_semantics<parallel>, #tpu.dimension_semantics<parallel>], iteration_bounds = array<i64: 2, 1>, scalar_prefetch = 0 : i64, scratch_operands = 0 : i64, tpu.core_type = #tpu.core_type<tc>, window_params = [{transform_indices = @transform_0, window_bounds = array<i64: 1, 64, 3136>}, {pipeline_mode = #tpu.pipeline_mode<synchronous>, transform_indices = @transform_1, window_bounds = array<i64: 3136, 32>}, {pipeline_mode = #tpu.pipeline_mode<synchronous>, transform_indices = @transform_2, window_bounds = array<i64: 1, 32>}, {pipeline_mode = #tpu.pipeline_mode<synchronous>, transform_indices = @transform_3, window_bounds = array<i64: 1, 32>}, {transform_indices = @transform_4, window_bounds = array<i64: 1, 64, 32>}]} {
    %c0 = arith.constant 0 : index
    %c0_0 = arith.constant 0 : index
    %c0_1 = arith.constant 0 : index
    %0 = vector.load %arg2[%c0, %c0_0, %c0_1] : memref<1x64x3136xbf16, #tpu.memory_space<vmem>>, vector<1x64x3136xbf16>
    %1 = vector.shape_cast %0 : vector<1x64x3136xbf16> to vector<64x3136xbf16>
    %c0_2 = arith.constant 0 : index
    %c0_3 = arith.constant 0 : index
    %2 = vector.load %arg3[%c0_2, %c0_3] : memref<3136x32xbf16, #tpu.memory_space<vmem>>, vector<3136x32xbf16>
    %cst = arith.constant dense<0.000000e+00> : vector<64x32xf32>
    %3 = tpu.matmul %1, %2, %cst {dimension_numbers = #tpu.dot_dimension_numbers<[1], [0], [0], [1], [0, 0, 1, 1], [], []>} : vector<64x3136xbf16>, vector<3136x32xbf16>, vector<64x32xf32> -> vector<64x32xf32>
    %c0_4 = arith.constant 0 : index
    %c0_5 = arith.constant 0 : index
    %4 = vector.load %arg4[%c0_4, %c0_5] : memref<1x32xf32, #tpu.memory_space<vmem>>, vector<1x32xf32>
    %5 = vector.broadcast %4 : vector<1x32xf32> to vector<64x32xf32>
    %6 = arith.mulf %3, %5 : vector<64x32xf32>
    %c0_6 = arith.constant 0 : index
    %c0_7 = arith.constant 0 : index
    %7 = vector.load %arg5[%c0_6, %c0_7] : memref<1x32xf32, #tpu.memory_space<vmem>>, vector<1x32xf32>
    %8 = vector.broadcast %7 : vector<1x32xf32> to vector<64x32xf32>
    %9 = arith.addf %6, %8 : vector<64x32xf32>
    %cst_8 = arith.constant 5.000000e-01 : f32
    %10 = vector.broadcast %cst_8 : f32 to vector<64x32xf32>
    %11 = arith.mulf %10, %9 : vector<64x32xf32>
    %cst_9 = arith.constant 0.707106769 : f32
    %12 = vector.broadcast %cst_9 : f32 to vector<64x32xf32>
    %13 = arith.mulf %9, %12 : vector<64x32xf32>
    %14 = math.erf %13 : vector<64x32xf32>
    %cst_10 = arith.constant 1.000000e+00 : f32
    %15 = vector.broadcast %cst_10 : f32 to vector<64x32xf32>
    %16 = arith.addf %15, %14 : vector<64x32xf32>
    %17 = arith.mulf %11, %16 : vector<64x32xf32>
    %c0_11 = arith.constant 0 : index
    %c0_12 = arith.constant 0 : index
    %c0_13 = arith.constant 0 : index
    %18 = vector.load %arg6[%c0_11, %c0_12, %c0_13] : memref<1x64x32xf32, #tpu.memory_space<vmem>>, vector<1x64x32xf32>
    %19 = vector.shape_cast %18 : vector<1x64x32xf32> to vector<64x32xf32>
    %20 = vector.shape_cast %17 : vector<64x32xf32> to vector<1x64x32xf32>
    tpu.vector_store %arg6[%c0_11, %c0_12, %c0_13], %20 {strides = array<i32>} : memref<1x64x32xf32, #tpu.memory_space<vmem>>, vector<1x64x32xf32>,
    return
  }
  func.func @transform_0(%arg0: i32, %arg1: i32) -> (i32, i32, i32) {
    %c0_i32 = arith.constant 0 : i32
    %c0_i32_0 = arith.constant 0 : i32
    return %arg0, %arg1, %c0_i32 : i32, i32, i32
  }
  func.func @transform_1(%arg0: i32, %arg1: i32) -> (i32, i32) {
    %c0_i32 = arith.constant 0 : i32
    %c0_i32_0 = arith.constant 0 : i32
    %c0_i32_1 = arith.constant 0 : i32
    return %c0_i32, %c0_i32_0 : i32, i32
  }
  func.func @transform_2(%arg0: i32, %arg1: i32) -> (i32, i32) {
    %c0_i32 = arith.constant 0 : i32
    %c0_i32_0 = arith.constant 0 : i32
    %c0_i32_1 = arith.constant 0 : i32
    return %c0_i32, %c0_i32_0 : i32, i32
  }
  func.func @transform_3(%arg0: i32, %arg1: i32) -> (i32, i32) {
    %c0_i32 = arith.constant 0 : i32
    %c0_i32_0 = arith.constant 0 : i32
    %c0_i32_1 = arith.constant 0 : i32
    return %c0_i32, %c0_i32_0 : i32, i32
  }
  func.func @transform_4(%arg0: i32, %arg1: i32) -> (i32, i32, i32) {
    %c0_i32 = arith.constant 0 : i32
    %c0_i32_0 = arith.constant 0 : i32
    return %arg0, %arg1, %c0_i32 : i32, i32, i32
  }
}

module attributes {stable_mosaic.version = 11 : i64} {
  func.func @_bfeat_kernel(%arg0: i32, %arg1: memref<1x16x512xf32, #tpu.memory_space<vmem>>, %arg2: memref<4x8x8x32xf32, #tpu.memory_space<vmem>>, %arg3: memref<4x8x8x32xf32, #tpu.memory_space<vmem>>, %arg4: memref<1x8x8xf32, #tpu.memory_space<vmem>>, %arg5: memref<16x8xf32, #tpu.memory_space<vmem>>, %arg6: memref<8x16xf32, #tpu.memory_space<vmem>>, %arg7: memref<16x512xf32, #tpu.memory_space<vmem>>, %arg8: memref<16x32xf32, #tpu.memory_space<vmem>>, %arg9: memref<32x16xf32, #tpu.memory_space<vmem>>, %arg10: memref<1x16x512xbf16, #tpu.memory_space<vmem>>) attributes {dimension_semantics = [#tpu.dimension_semantics<parallel>], iteration_bounds = array<i64: 2>, scalar_prefetch = 0 : i64, scratch_operands = 0 : i64, tpu.core_type = #tpu.core_type<tc>, window_params = [{transform_indices = @transform_0, window_bounds = array<i64: 1, 16, 512>}, {transform_indices = @transform_1, window_bounds = array<i64: 4, 8, 8, 32>}, {transform_indices = @transform_2, window_bounds = array<i64: 4, 8, 8, 32>}, {transform_indices = @transform_3, window_bounds = array<i64: 1, 8, 8>}, {pipeline_mode = #tpu.pipeline_mode<synchronous>, transform_indices = @transform_4, window_bounds = array<i64: 16, 8>}, {pipeline_mode = #tpu.pipeline_mode<synchronous>, transform_indices = @transform_5, window_bounds = array<i64: 8, 16>}, {pipeline_mode = #tpu.pipeline_mode<synchronous>, transform_indices = @transform_6, window_bounds = array<i64: 16, 512>}, {pipeline_mode = #tpu.pipeline_mode<synchronous>, transform_indices = @transform_7, window_bounds = array<i64: 16, 32>}, {pipeline_mode = #tpu.pipeline_mode<synchronous>, transform_indices = @transform_8, window_bounds = array<i64: 32, 16>}, {transform_indices = @transform_9, window_bounds = array<i64: 1, 16, 512>}]} {
    %c0 = arith.constant 0 : index
    %c0_0 = arith.constant 0 : index
    %c0_1 = arith.constant 0 : index
    %c0_2 = arith.constant 0 : index
    %0 = vector.load %arg2[%c0, %c0_0, %c0_1, %c0_2] : memref<4x8x8x32xf32, #tpu.memory_space<vmem>>, vector<1x8x8x32xf32>
    %1 = vector.shape_cast %0 : vector<1x8x8x32xf32> to vector<8x8x32xf32>
    %c1 = arith.constant 1 : index
    %c0_3 = arith.constant 0 : index
    %c0_4 = arith.constant 0 : index
    %c0_5 = arith.constant 0 : index
    %2 = vector.load %arg2[%c1, %c0_3, %c0_4, %c0_5] : memref<4x8x8x32xf32, #tpu.memory_space<vmem>>, vector<1x8x8x32xf32>
    %3 = vector.shape_cast %2 : vector<1x8x8x32xf32> to vector<8x8x32xf32>
    %c2 = arith.constant 2 : index
    %c0_6 = arith.constant 0 : index
    %c0_7 = arith.constant 0 : index
    %c0_8 = arith.constant 0 : index
    %4 = vector.load %arg2[%c2, %c0_6, %c0_7, %c0_8] : memref<4x8x8x32xf32, #tpu.memory_space<vmem>>, vector<1x8x8x32xf32>
    %5 = vector.shape_cast %4 : vector<1x8x8x32xf32> to vector<8x8x32xf32>
    %c3 = arith.constant 3 : index
    %c0_9 = arith.constant 0 : index
    %c0_10 = arith.constant 0 : index
    %c0_11 = arith.constant 0 : index
    %6 = vector.load %arg2[%c3, %c0_9, %c0_10, %c0_11] : memref<4x8x8x32xf32, #tpu.memory_space<vmem>>, vector<1x8x8x32xf32>
    %7 = vector.shape_cast %6 : vector<1x8x8x32xf32> to vector<8x8x32xf32>
    %c0_12 = arith.constant 0 : index
    %c0_13 = arith.constant 0 : index
    %c0_14 = arith.constant 0 : index
    %c0_15 = arith.constant 0 : index
    %8 = vector.load %arg3[%c0_12, %c0_13, %c0_14, %c0_15] : memref<4x8x8x32xf32, #tpu.memory_space<vmem>>, vector<1x8x8x32xf32>
    %9 = vector.shape_cast %8 : vector<1x8x8x32xf32> to vector<8x8x32xf32>
    %c1_16 = arith.constant 1 : index
    %c0_17 = arith.constant 0 : index
    %c0_18 = arith.constant 0 : index
    %c0_19 = arith.constant 0 : index
    %10 = vector.load %arg3[%c1_16, %c0_17, %c0_18, %c0_19] : memref<4x8x8x32xf32, #tpu.memory_space<vmem>>, vector<1x8x8x32xf32>
    %11 = vector.shape_cast %10 : vector<1x8x8x32xf32> to vector<8x8x32xf32>
    %c2_20 = arith.constant 2 : index
    %c0_21 = arith.constant 0 : index
    %c0_22 = arith.constant 0 : index
    %c0_23 = arith.constant 0 : index
    %12 = vector.load %arg3[%c2_20, %c0_21, %c0_22, %c0_23] : memref<4x8x8x32xf32, #tpu.memory_space<vmem>>, vector<1x8x8x32xf32>
    %13 = vector.shape_cast %12 : vector<1x8x8x32xf32> to vector<8x8x32xf32>
    %c3_24 = arith.constant 3 : index
    %c0_25 = arith.constant 0 : index
    %c0_26 = arith.constant 0 : index
    %c0_27 = arith.constant 0 : index
    %14 = vector.load %arg3[%c3_24, %c0_25, %c0_26, %c0_27] : memref<4x8x8x32xf32, #tpu.memory_space<vmem>>, vector<1x8x8x32xf32>
    %15 = vector.shape_cast %14 : vector<1x8x8x32xf32> to vector<8x8x32xf32>
    %16 = arith.addf %1, %3 : vector<8x8x32xf32>
    %17 = arith.addf %16, %5 : vector<8x8x32xf32>
    %18 = arith.addf %17, %7 : vector<8x8x32xf32>
    %cst = arith.constant 2.500000e-01 : f32
    %19 = vector.broadcast %cst : f32 to vector<8x8x32xf32>
    %20 = arith.mulf %18, %19 : vector<8x8x32xf32>
    %21 = arith.maximumf %1, %3 : vector<8x8x32xf32>
    %22 = arith.maximumf %5, %7 : vector<8x8x32xf32>
    %23 = arith.maximumf %21, %22 : vector<8x8x32xf32>
    %24 = arith.addf %9, %11 : vector<8x8x32xf32>
    %25 = arith.addf %24, %13 : vector<8x8x32xf32>
    %26 = arith.addf %25, %15 : vector<8x8x32xf32>
    %cst_28 = arith.constant 2.500000e-01 : f32
    %27 = vector.broadcast %cst_28 : f32 to vector<8x8x32xf32>
    %28 = arith.mulf %26, %27 : vector<8x8x32xf32>
    %29 = arith.maximumf %9, %11 : vector<8x8x32xf32>
    %30 = arith.maximumf %13, %15 : vector<8x8x32xf32>
    %31 = arith.maximumf %29, %30 : vector<8x8x32xf32>
    %32 = arith.subf %28, %23 : vector<8x8x32xf32>
    %33 = arith.subf %20, %31 : vector<8x8x32xf32>
    %34 = arith.mulf %32, %32 : vector<8x8x32xf32>
    %cst_29 = arith.constant dense<0.000000e+00> : vector<8x8xf32>
    %35 = vector.multi_reduction <add>, %34, %cst_29 [2] : vector<8x8x32xf32> to vector<8x8xf32>
    %36 = math.sqrt %35 : vector<8x8xf32>
    %37 = arith.mulf %33, %33 : vector<8x8x32xf32>
    %cst_30 = arith.constant dense<0.000000e+00> : vector<8x8xf32>
    %38 = vector.multi_reduction <add>, %37, %cst_30 [2] : vector<8x8x32xf32> to vector<8x8xf32>
    %39 = math.sqrt %38 : vector<8x8xf32>
    %40 = arith.addf %36, %39 : vector<8x8xf32>
    %c0_31 = arith.constant 0 : index
    %c0_32 = arith.constant 0 : index
    %41 = vector.load %arg5[%c0_31, %c0_32] : memref<16x8xf32, #tpu.memory_space<vmem>>, vector<16x8xf32>
    %c0_33 = arith.constant 0 : index
    %c0_34 = arith.constant 0 : index
    %42 = vector.load %arg6[%c0_33, %c0_34] : memref<8x16xf32, #tpu.memory_space<vmem>>, vector<8x16xf32>
    %c0_35 = arith.constant 0 : index
    %c0_36 = arith.constant 0 : index
    %c0_37 = arith.constant 0 : index
    %43 = vector.load %arg4[%c0_35, %c0_36, %c0_37] : memref<1x8x8xf32, #tpu.memory_space<vmem>>, vector<1x8x8xf32>
    %44 = vector.shape_cast %43 : vector<1x8x8xf32> to vector<8x8xf32>
    %cst_38 = arith.constant dense<0.000000e+00> : vector<16x8xf32>
    %45 = tpu.matmul %41, %44, %cst_38 {dimension_numbers = #tpu.dot_dimension_numbers<[1], [0], [0], [1], [0, 0, 1, 1], [], []>} : vector<16x8xf32>, vector<8x8xf32>, vector<16x8xf32> -> vector<16x8xf32>
    %cst_39 = arith.constant dense<0.000000e+00> : vector<16x16xf32>
    %46 = tpu.matmul %45, %42, %cst_39 {dimension_numbers = #tpu.dot_dimension_numbers<[1], [0], [0], [1], [0, 0, 1, 1], [], []>} : vector<16x8xf32>, vector<8x16xf32>, vector<16x16xf32> -> vector<16x16xf32>
    %47 = arith.negf %46 : vector<16x16xf32>
    %48 = math.exp %47 : vector<16x16xf32>
    %cst_40 = arith.constant 1.000000e+00 : f32
    %49 = vector.broadcast %cst_40 : f32 to vector<16x16xf32>
    %50 = arith.addf %49, %48 : vector<16x16xf32>
    %51 = arith.divf %49, %50 : vector<16x16xf32>
    %cst_41 = arith.constant dense<0.000000e+00> : vector<16x8xf32>
    %52 = tpu.matmul %41, %40, %cst_41 {dimension_numbers = #tpu.dot_dimension_numbers<[1], [0], [0], [1], [0, 0, 1, 1], [], []>} : vector<16x8xf32>, vector<8x8xf32>, vector<16x8xf32> -> vector<16x8xf32>
    %cst_42 = arith.constant dense<0.000000e+00> : vector<16x16xf32>
    %53 = tpu.matmul %52, %42, %cst_42 {dimension_numbers = #tpu.dot_dimension_numbers<[1], [0], [0], [1], [0, 0, 1, 1], [], []>} : vector<16x8xf32>, vector<8x16xf32>, vector<16x16xf32> -> vector<16x16xf32>
    %54 = arith.negf %53 : vector<16x16xf32>
    %55 = math.exp %54 : vector<16x16xf32>
    %cst_43 = arith.constant 1.000000e+00 : f32
    %56 = vector.broadcast %cst_43 : f32 to vector<16x16xf32>
    %57 = arith.addf %56, %55 : vector<16x16xf32>
    %58 = arith.divf %56, %57 : vector<16x16xf32>
    %c0_44 = arith.constant 0 : index
    %c0_45 = arith.constant 0 : index
    %59 = vector.load %arg8[%c0_44, %c0_45] : memref<16x32xf32, #tpu.memory_space<vmem>>, vector<16x32xf32>
    %c0_46 = arith.constant 0 : index
    %c0_47 = arith.constant 0 : index
    %60 = vector.load %arg9[%c0_46, %c0_47] : memref<32x16xf32, #tpu.memory_space<vmem>>, vector<32x16xf32>
    %61 = vector.extract_strided_slice %59 {offsets = [0, 0], sizes = [16, 16], strides = [1, 1]} : vector<16x32xf32> to vector<16x16xf32>
    %cst_48 = arith.constant dense<0.000000e+00> : vector<16x16xf32>
    %62 = tpu.matmul %51, %61, %cst_48 {dimension_numbers = #tpu.dot_dimension_numbers<[1], [0], [0], [1], [0, 0, 1, 1], [], []>} : vector<16x16xf32>, vector<16x16xf32>, vector<16x16xf32> -> vector<16x16xf32>
    %63 = vector.extract_strided_slice %59 {offsets = [0, 16], sizes = [16, 16], strides = [1, 1]} : vector<16x32xf32> to vector<16x16xf32>
    %cst_49 = arith.constant dense<0.000000e+00> : vector<16x16xf32>
    %64 = tpu.matmul %51, %63, %cst_49 {dimension_numbers = #tpu.dot_dimension_numbers<[1], [0], [0], [1], [0, 0, 1, 1], [], []>} : vector<16x16xf32>, vector<16x16xf32>, vector<16x16xf32> -> vector<16x16xf32>
    %65 = arith.maximumf %62, %51 : vector<16x16xf32>
    %66 = arith.maximumf %65, %64 : vector<16x16xf32>
    %67 = vector.extract_strided_slice %60 {offsets = [0, 0], sizes = [16, 16], strides = [1, 1]} : vector<32x16xf32> to vector<16x16xf32>
    %cst_50 = arith.constant dense<0.000000e+00> : vector<16x16xf32>
    %68 = tpu.matmul %67, %66, %cst_50 {dimension_numbers = #tpu.dot_dimension_numbers<[1], [0], [0], [1], [0, 0, 1, 1], [], []>} : vector<16x16xf32>, vector<16x16xf32>, vector<16x16xf32> -> vector<16x16xf32>
    %69 = vector.extract_strided_slice %60 {offsets = [16, 0], sizes = [16, 16], strides = [1, 1]} : vector<32x16xf32> to vector<16x16xf32>
    %cst_51 = arith.constant dense<0.000000e+00> : vector<16x16xf32>
    %70 = tpu.matmul %69, %66, %cst_51 {dimension_numbers = #tpu.dot_dimension_numbers<[1], [0], [0], [1], [0, 0, 1, 1], [], []>} : vector<16x16xf32>, vector<16x16xf32>, vector<16x16xf32> -> vector<16x16xf32>
    %71 = arith.maximumf %68, %66 : vector<16x16xf32>
    %72 = arith.maximumf %71, %70 : vector<16x16xf32>
    %73 = arith.subf %72, %51 : vector<16x16xf32>
    %74 = vector.extract_strided_slice %59 {offsets = [0, 0], sizes = [16, 16], strides = [1, 1]} : vector<16x32xf32> to vector<16x16xf32>
    %cst_52 = arith.constant dense<0.000000e+00> : vector<16x16xf32>
    %75 = tpu.matmul %58, %74, %cst_52 {dimension_numbers = #tpu.dot_dimension_numbers<[1], [0], [0], [1], [0, 0, 1, 1], [], []>} : vector<16x16xf32>, vector<16x16xf32>, vector<16x16xf32> -> vector<16x16xf32>
    %76 = vector.extract_strided_slice %59 {offsets = [0, 16], sizes = [16, 16], strides = [1, 1]} : vector<16x32xf32> to vector<16x16xf32>
    %cst_53 = arith.constant dense<0.000000e+00> : vector<16x16xf32>
    %77 = tpu.matmul %58, %76, %cst_53 {dimension_numbers = #tpu.dot_dimension_numbers<[1], [0], [0], [1], [0, 0, 1, 1], [], []>} : vector<16x16xf32>, vector<16x16xf32>, vector<16x16xf32> -> vector<16x16xf32>
    %78 = arith.maximumf %75, %58 : vector<16x16xf32>
    %79 = arith.maximumf %78, %77 : vector<16x16xf32>
    %80 = vector.extract_strided_slice %60 {offsets = [0, 0], sizes = [16, 16], strides = [1, 1]} : vector<32x16xf32> to vector<16x16xf32>
    %cst_54 = arith.constant dense<0.000000e+00> : vector<16x16xf32>
    %81 = tpu.matmul %80, %79, %cst_54 {dimension_numbers = #tpu.dot_dimension_numbers<[1], [0], [0], [1], [0, 0, 1, 1], [], []>} : vector<16x16xf32>, vector<16x16xf32>, vector<16x16xf32> -> vector<16x16xf32>
    %82 = vector.extract_strided_slice %60 {offsets = [16, 0], sizes = [16, 16], strides = [1, 1]} : vector<32x16xf32> to vector<16x16xf32>
    %cst_55 = arith.constant dense<0.000000e+00> : vector<16x16xf32>
    %83 = tpu.matmul %82, %79, %cst_55 {dimension_numbers = #tpu.dot_dimension_numbers<[1], [0], [0], [1], [0, 0, 1, 1], [], []>} : vector<16x16xf32>, vector<16x16xf32>, vector<16x16xf32> -> vector<16x16xf32>
    %84 = arith.maximumf %81, %79 : vector<16x16xf32>
    %85 = arith.maximumf %84, %83 : vector<16x16xf32>
    %86 = arith.subf %85, %58 : vector<16x16xf32>
    %87 = arith.addf %73, %86 : vector<16x16xf32>
    %cst_56 = arith.constant 1.000000e+00 : f32
    %88 = vector.broadcast %cst_56 : f32 to vector<16x16xf32>
    %89 = arith.addf %87, %88 : vector<16x16xf32>
    %c0_57 = arith.constant 0 : index
    %c0_58 = arith.constant 0 : index
    %90 = vector.load %arg7[%c0_57, %c0_58] : memref<16x512xf32, #tpu.memory_space<vmem>>, vector<16x512xf32>
    %cst_59 = arith.constant dense<0.000000e+00> : vector<16x512xf32>
    %91 = tpu.matmul %89, %90, %cst_59 {dimension_numbers = #tpu.dot_dimension_numbers<[1], [0], [0], [1], [0, 0, 1, 1], [], []>} : vector<16x16xf32>, vector<16x512xf32>, vector<16x512xf32> -> vector<16x512xf32>
    %c0_60 = arith.constant 0 : index
    %c0_61 = arith.constant 0 : index
    %c0_62 = arith.constant 0 : index
    %92 = vector.load %arg1[%c0_60, %c0_61, %c0_62] : memref<1x16x512xf32, #tpu.memory_space<vmem>>, vector<1x16x512xf32>
    %93 = vector.shape_cast %92 : vector<1x16x512xf32> to vector<16x512xf32>
    %94 = arith.mulf %93, %91 : vector<16x512xf32>
    %95 = arith.truncf %94 : vector<16x512xf32> to vector<16x512xbf16>
    %c0_63 = arith.constant 0 : index
    %c0_64 = arith.constant 0 : index
    %c0_65 = arith.constant 0 : index
    %96 = vector.load %arg10[%c0_63, %c0_64, %c0_65] : memref<1x16x512xbf16, #tpu.memory_space<vmem>>, vector<1x16x512xbf16>
    %97 = vector.shape_cast %96 : vector<1x16x512xbf16> to vector<16x512xbf16>
    %98 = vector.shape_cast %95 : vector<16x512xbf16> to vector<1x16x512xbf16>
    tpu.vector_store %arg10[%c0_63, %c0_64, %c0_65], %98 {strides = array<i32>} : memref<1x16x512xbf16, #tpu.memory_space<vmem>>, vector<1x16x512xbf16>,
    return
  }
  func.func @transform_0(%arg0: i32) -> (i32, i32, i32) {
    %c0_i32 = arith.constant 0 : i32
    %c0_i32_0 = arith.constant 0 : i32
    %c0_i32_1 = arith.constant 0 : i32
    return %arg0, %c0_i32, %c0_i32_0 : i32, i32, i32
  }
  func.func @transform_1(%arg0: i32) -> (i32, i32, i32, i32) {
    %c0_i32 = arith.constant 0 : i32
    %c0_i32_0 = arith.constant 0 : i32
    %c0_i32_1 = arith.constant 0 : i32
    %c0_i32_2 = arith.constant 0 : i32
    return %arg0, %c0_i32, %c0_i32_0, %c0_i32_1 : i32, i32, i32, i32
  }
  func.func @transform_2(%arg0: i32) -> (i32, i32, i32, i32) {
    %c0_i32 = arith.constant 0 : i32
    %c0_i32_0 = arith.constant 0 : i32
    %c0_i32_1 = arith.constant 0 : i32
    %c0_i32_2 = arith.constant 0 : i32
    return %arg0, %c0_i32, %c0_i32_0, %c0_i32_1 : i32, i32, i32, i32
  }
  func.func @transform_3(%arg0: i32) -> (i32, i32, i32) {
    %c0_i32 = arith.constant 0 : i32
    %c0_i32_0 = arith.constant 0 : i32
    %c0_i32_1 = arith.constant 0 : i32
    return %arg0, %c0_i32, %c0_i32_0 : i32, i32, i32
  }
  func.func @transform_4(%arg0: i32) -> (i32, i32) {
    %c0_i32 = arith.constant 0 : i32
    %c0_i32_0 = arith.constant 0 : i32
    %c0_i32_1 = arith.constant 0 : i32
    return %c0_i32, %c0_i32_0 : i32, i32
  }
  func.func @transform_5(%arg0: i32) -> (i32, i32) {
    %c0_i32 = arith.constant 0 : i32
    %c0_i32_0 = arith.constant 0 : i32
    %c0_i32_1 = arith.constant 0 : i32
    return %c0_i32, %c0_i32_0 : i32, i32
  }
  func.func @transform_6(%arg0: i32) -> (i32, i32) {
    %c0_i32 = arith.constant 0 : i32
    %c0_i32_0 = arith.constant 0 : i32
    %c0_i32_1 = arith.constant 0 : i32
    return %c0_i32, %c0_i32_0 : i32, i32
  }
  func.func @transform_7(%arg0: i32) -> (i32, i32) {
    %c0_i32 = arith.constant 0 : i32
    %c0_i32_0 = arith.constant 0 : i32
    %c0_i32_1 = arith.constant 0 : i32
    return %c0_i32, %c0_i32_0 : i32, i32
  }
  func.func @transform_8(%arg0: i32) -> (i32, i32) {
    %c0_i32 = arith.constant 0 : i32
    %c0_i32_0 = arith.constant 0 : i32
    %c0_i32_1 = arith.constant 0 : i32
    return %c0_i32, %c0_i32_0 : i32, i32
  }
  func.func @transform_9(%arg0: i32) -> (i32, i32, i32) {
    %c0_i32 = arith.constant 0 : i32
    %c0_i32_0 = arith.constant 0 : i32
    %c0_i32_1 = arith.constant 0 : i32
    return %arg0, %c0_i32, %c0_i32_0 : i32, i32, i32
  }
}

module attributes {stable_mosaic.version = 11 : i64} {
  func.func @_conv_kernel(%arg0: i32, %arg1: i32, %arg2: memref<1x128x288xbf16, #tpu.memory_space<vmem>>, %arg3: memref<288x32xbf16, #tpu.memory_space<vmem>>, %arg4: memref<1x32xf32, #tpu.memory_space<vmem>>, %arg5: memref<1x32xf32, #tpu.memory_space<vmem>>, %arg6: memref<1x128x32xbf16, #tpu.memory_space<vmem>>) attributes {dimension_semantics = [#tpu.dimension_semantics<parallel>, #tpu.dimension_semantics<parallel>], iteration_bounds = array<i64: 2, 2>, scalar_prefetch = 0 : i64, scratch_operands = 0 : i64, tpu.core_type = #tpu.core_type<tc>, window_params = [{transform_indices = @transform_0, window_bounds = array<i64: 1, 128, 288>}, {pipeline_mode = #tpu.pipeline_mode<synchronous>, transform_indices = @transform_1, window_bounds = array<i64: 288, 32>}, {pipeline_mode = #tpu.pipeline_mode<synchronous>, transform_indices = @transform_2, window_bounds = array<i64: 1, 32>}, {pipeline_mode = #tpu.pipeline_mode<synchronous>, transform_indices = @transform_3, window_bounds = array<i64: 1, 32>}, {transform_indices = @transform_4, window_bounds = array<i64: 1, 128, 32>}]} {
    %c0 = arith.constant 0 : index
    %c0_0 = arith.constant 0 : index
    %c0_1 = arith.constant 0 : index
    %0 = vector.load %arg2[%c0, %c0_0, %c0_1] : memref<1x128x288xbf16, #tpu.memory_space<vmem>>, vector<1x128x288xbf16>
    %1 = vector.shape_cast %0 : vector<1x128x288xbf16> to vector<128x288xbf16>
    %c0_2 = arith.constant 0 : index
    %c0_3 = arith.constant 0 : index
    %2 = vector.load %arg3[%c0_2, %c0_3] : memref<288x32xbf16, #tpu.memory_space<vmem>>, vector<288x32xbf16>
    %cst = arith.constant dense<0.000000e+00> : vector<128x32xf32>
    %3 = tpu.matmul %1, %2, %cst {dimension_numbers = #tpu.dot_dimension_numbers<[1], [0], [0], [1], [0, 0, 1, 1], [], []>} : vector<128x288xbf16>, vector<288x32xbf16>, vector<128x32xf32> -> vector<128x32xf32>
    %c0_4 = arith.constant 0 : index
    %c0_5 = arith.constant 0 : index
    %4 = vector.load %arg4[%c0_4, %c0_5] : memref<1x32xf32, #tpu.memory_space<vmem>>, vector<1x32xf32>
    %5 = vector.broadcast %4 : vector<1x32xf32> to vector<128x32xf32>
    %6 = arith.mulf %3, %5 : vector<128x32xf32>
    %c0_6 = arith.constant 0 : index
    %c0_7 = arith.constant 0 : index
    %7 = vector.load %arg5[%c0_6, %c0_7] : memref<1x32xf32, #tpu.memory_space<vmem>>, vector<1x32xf32>
    %8 = vector.broadcast %7 : vector<1x32xf32> to vector<128x32xf32>
    %9 = arith.addf %6, %8 : vector<128x32xf32>
    %10 = arith.truncf %9 : vector<128x32xf32> to vector<128x32xbf16>
    %c0_8 = arith.constant 0 : index
    %c0_9 = arith.constant 0 : index
    %c0_10 = arith.constant 0 : index
    %11 = vector.load %arg6[%c0_8, %c0_9, %c0_10] : memref<1x128x32xbf16, #tpu.memory_space<vmem>>, vector<1x128x32xbf16>
    %12 = vector.shape_cast %11 : vector<1x128x32xbf16> to vector<128x32xbf16>
    %13 = vector.shape_cast %10 : vector<128x32xbf16> to vector<1x128x32xbf16>
    tpu.vector_store %arg6[%c0_8, %c0_9, %c0_10], %13 {strides = array<i32>} : memref<1x128x32xbf16, #tpu.memory_space<vmem>>, vector<1x128x32xbf16>,
    return
  }
  func.func @transform_0(%arg0: i32, %arg1: i32) -> (i32, i32, i32) {
    %c0_i32 = arith.constant 0 : i32
    %c0_i32_0 = arith.constant 0 : i32
    return %arg0, %arg1, %c0_i32 : i32, i32, i32
  }
  func.func @transform_1(%arg0: i32, %arg1: i32) -> (i32, i32) {
    %c0_i32 = arith.constant 0 : i32
    %c0_i32_0 = arith.constant 0 : i32
    %c0_i32_1 = arith.constant 0 : i32
    return %c0_i32, %c0_i32_0 : i32, i32
  }
  func.func @transform_2(%arg0: i32, %arg1: i32) -> (i32, i32) {
    %c0_i32 = arith.constant 0 : i32
    %c0_i32_0 = arith.constant 0 : i32
    %c0_i32_1 = arith.constant 0 : i32
    return %c0_i32, %c0_i32_0 : i32, i32
  }
  func.func @transform_3(%arg0: i32, %arg1: i32) -> (i32, i32) {
    %c0_i32 = arith.constant 0 : i32
    %c0_i32_0 = arith.constant 0 : i32
    %c0_i32_1 = arith.constant 0 : i32
    return %c0_i32, %c0_i32_0 : i32, i32
  }
  func.func @transform_4(%arg0: i32, %arg1: i32) -> (i32, i32, i32) {
    %c0_i32 = arith.constant 0 : i32
    %c0_i32_0 = arith.constant 0 : i32
    return %arg0, %arg1, %c0_i32 : i32, i32, i32
  }
}

module attributes {stable_mosaic.version = 11 : i64} {
  func.func @_conv_kernel(%arg0: i32, %arg1: i32, %arg2: memref<1x128x576xbf16, #tpu.memory_space<vmem>>, %arg3: memref<576x32xbf16, #tpu.memory_space<vmem>>, %arg4: memref<1x32xf32, #tpu.memory_space<vmem>>, %arg5: memref<1x32xf32, #tpu.memory_space<vmem>>, %arg6: memref<1x128x32xbf16, #tpu.memory_space<vmem>>) attributes {dimension_semantics = [#tpu.dimension_semantics<parallel>, #tpu.dimension_semantics<parallel>], iteration_bounds = array<i64: 2, 2>, scalar_prefetch = 0 : i64, scratch_operands = 0 : i64, tpu.core_type = #tpu.core_type<tc>, window_params = [{transform_indices = @transform_0, window_bounds = array<i64: 1, 128, 576>}, {pipeline_mode = #tpu.pipeline_mode<synchronous>, transform_indices = @transform_1, window_bounds = array<i64: 576, 32>}, {pipeline_mode = #tpu.pipeline_mode<synchronous>, transform_indices = @transform_2, window_bounds = array<i64: 1, 32>}, {pipeline_mode = #tpu.pipeline_mode<synchronous>, transform_indices = @transform_3, window_bounds = array<i64: 1, 32>}, {transform_indices = @transform_4, window_bounds = array<i64: 1, 128, 32>}]} {
    %c0 = arith.constant 0 : index
    %c0_0 = arith.constant 0 : index
    %c0_1 = arith.constant 0 : index
    %0 = vector.load %arg2[%c0, %c0_0, %c0_1] : memref<1x128x576xbf16, #tpu.memory_space<vmem>>, vector<1x128x576xbf16>
    %1 = vector.shape_cast %0 : vector<1x128x576xbf16> to vector<128x576xbf16>
    %c0_2 = arith.constant 0 : index
    %c0_3 = arith.constant 0 : index
    %2 = vector.load %arg3[%c0_2, %c0_3] : memref<576x32xbf16, #tpu.memory_space<vmem>>, vector<576x32xbf16>
    %cst = arith.constant dense<0.000000e+00> : vector<128x32xf32>
    %3 = tpu.matmul %1, %2, %cst {dimension_numbers = #tpu.dot_dimension_numbers<[1], [0], [0], [1], [0, 0, 1, 1], [], []>} : vector<128x576xbf16>, vector<576x32xbf16>, vector<128x32xf32> -> vector<128x32xf32>
    %c0_4 = arith.constant 0 : index
    %c0_5 = arith.constant 0 : index
    %4 = vector.load %arg4[%c0_4, %c0_5] : memref<1x32xf32, #tpu.memory_space<vmem>>, vector<1x32xf32>
    %5 = vector.broadcast %4 : vector<1x32xf32> to vector<128x32xf32>
    %6 = arith.mulf %3, %5 : vector<128x32xf32>
    %c0_6 = arith.constant 0 : index
    %c0_7 = arith.constant 0 : index
    %7 = vector.load %arg5[%c0_6, %c0_7] : memref<1x32xf32, #tpu.memory_space<vmem>>, vector<1x32xf32>
    %8 = vector.broadcast %7 : vector<1x32xf32> to vector<128x32xf32>
    %9 = arith.addf %6, %8 : vector<128x32xf32>
    %cst_8 = arith.constant 5.000000e-01 : f32
    %10 = vector.broadcast %cst_8 : f32 to vector<128x32xf32>
    %11 = arith.mulf %10, %9 : vector<128x32xf32>
    %cst_9 = arith.constant 0.707106769 : f32
    %12 = vector.broadcast %cst_9 : f32 to vector<128x32xf32>
    %13 = arith.mulf %9, %12 : vector<128x32xf32>
    %14 = math.erf %13 : vector<128x32xf32>
    %cst_10 = arith.constant 1.000000e+00 : f32
    %15 = vector.broadcast %cst_10 : f32 to vector<128x32xf32>
    %16 = arith.addf %15, %14 : vector<128x32xf32>
    %17 = arith.mulf %11, %16 : vector<128x32xf32>
    %18 = arith.truncf %17 : vector<128x32xf32> to vector<128x32xbf16>
    %c0_11 = arith.constant 0 : index
    %c0_12 = arith.constant 0 : index
    %c0_13 = arith.constant 0 : index
    %19 = vector.load %arg6[%c0_11, %c0_12, %c0_13] : memref<1x128x32xbf16, #tpu.memory_space<vmem>>, vector<1x128x32xbf16>
    %20 = vector.shape_cast %19 : vector<1x128x32xbf16> to vector<128x32xbf16>
    %21 = vector.shape_cast %18 : vector<128x32xbf16> to vector<1x128x32xbf16>
    tpu.vector_store %arg6[%c0_11, %c0_12, %c0_13], %21 {strides = array<i32>} : memref<1x128x32xbf16, #tpu.memory_space<vmem>>, vector<1x128x32xbf16>,
    return
  }
  func.func @transform_0(%arg0: i32, %arg1: i32) -> (i32, i32, i32) {
    %c0_i32 = arith.constant 0 : i32
    %c0_i32_0 = arith.constant 0 : i32
    return %arg0, %arg1, %c0_i32 : i32, i32, i32
  }
  func.func @transform_1(%arg0: i32, %arg1: i32) -> (i32, i32) {
    %c0_i32 = arith.constant 0 : i32
    %c0_i32_0 = arith.constant 0 : i32
    %c0_i32_1 = arith.constant 0 : i32
    return %c0_i32, %c0_i32_0 : i32, i32
  }
  func.func @transform_2(%arg0: i32, %arg1: i32) -> (i32, i32) {
    %c0_i32 = arith.constant 0 : i32
    %c0_i32_0 = arith.constant 0 : i32
    %c0_i32_1 = arith.constant 0 : i32
    return %c0_i32, %c0_i32_0 : i32, i32
  }
  func.func @transform_3(%arg0: i32, %arg1: i32) -> (i32, i32) {
    %c0_i32 = arith.constant 0 : i32
    %c0_i32_0 = arith.constant 0 : i32
    %c0_i32_1 = arith.constant 0 : i32
    return %c0_i32, %c0_i32_0 : i32, i32
  }
  func.func @transform_4(%arg0: i32, %arg1: i32) -> (i32, i32, i32) {
    %c0_i32 = arith.constant 0 : i32
    %c0_i32_0 = arith.constant 0 : i32
    return %arg0, %arg1, %c0_i32 : i32, i32, i32
  }
}

module attributes {stable_mosaic.version = 11 : i64} {
  func.func @_conv_kernel(%arg0: i32, %arg1: i32, %arg2: memref<1x128x288xbf16, #tpu.memory_space<vmem>>, %arg3: memref<288x32xbf16, #tpu.memory_space<vmem>>, %arg4: memref<1x32xf32, #tpu.memory_space<vmem>>, %arg5: memref<1x32xf32, #tpu.memory_space<vmem>>, %arg6: memref<1x128x32xbf16, #tpu.memory_space<vmem>>) attributes {dimension_semantics = [#tpu.dimension_semantics<parallel>, #tpu.dimension_semantics<parallel>], iteration_bounds = array<i64: 2, 2>, scalar_prefetch = 0 : i64, scratch_operands = 0 : i64, tpu.core_type = #tpu.core_type<tc>, window_params = [{transform_indices = @transform_0, window_bounds = array<i64: 1, 128, 288>}, {pipeline_mode = #tpu.pipeline_mode<synchronous>, transform_indices = @transform_1, window_bounds = array<i64: 288, 32>}, {pipeline_mode = #tpu.pipeline_mode<synchronous>, transform_indices = @transform_2, window_bounds = array<i64: 1, 32>}, {pipeline_mode = #tpu.pipeline_mode<synchronous>, transform_indices = @transform_3, window_bounds = array<i64: 1, 32>}, {transform_indices = @transform_4, window_bounds = array<i64: 1, 128, 32>}]} {
    %c0 = arith.constant 0 : index
    %c0_0 = arith.constant 0 : index
    %c0_1 = arith.constant 0 : index
    %0 = vector.load %arg2[%c0, %c0_0, %c0_1] : memref<1x128x288xbf16, #tpu.memory_space<vmem>>, vector<1x128x288xbf16>
    %1 = vector.shape_cast %0 : vector<1x128x288xbf16> to vector<128x288xbf16>
    %c0_2 = arith.constant 0 : index
    %c0_3 = arith.constant 0 : index
    %2 = vector.load %arg3[%c0_2, %c0_3] : memref<288x32xbf16, #tpu.memory_space<vmem>>, vector<288x32xbf16>
    %cst = arith.constant dense<0.000000e+00> : vector<128x32xf32>
    %3 = tpu.matmul %1, %2, %cst {dimension_numbers = #tpu.dot_dimension_numbers<[1], [0], [0], [1], [0, 0, 1, 1], [], []>} : vector<128x288xbf16>, vector<288x32xbf16>, vector<128x32xf32> -> vector<128x32xf32>
    %c0_4 = arith.constant 0 : index
    %c0_5 = arith.constant 0 : index
    %4 = vector.load %arg4[%c0_4, %c0_5] : memref<1x32xf32, #tpu.memory_space<vmem>>, vector<1x32xf32>
    %5 = vector.broadcast %4 : vector<1x32xf32> to vector<128x32xf32>
    %6 = arith.mulf %3, %5 : vector<128x32xf32>
    %c0_6 = arith.constant 0 : index
    %c0_7 = arith.constant 0 : index
    %7 = vector.load %arg5[%c0_6, %c0_7] : memref<1x32xf32, #tpu.memory_space<vmem>>, vector<1x32xf32>
    %8 = vector.broadcast %7 : vector<1x32xf32> to vector<128x32xf32>
    %9 = arith.addf %6, %8 : vector<128x32xf32>
    %cst_8 = arith.constant 5.000000e-01 : f32
    %10 = vector.broadcast %cst_8 : f32 to vector<128x32xf32>
    %11 = arith.mulf %10, %9 : vector<128x32xf32>
    %cst_9 = arith.constant 0.707106769 : f32
    %12 = vector.broadcast %cst_9 : f32 to vector<128x32xf32>
    %13 = arith.mulf %9, %12 : vector<128x32xf32>
    %14 = math.erf %13 : vector<128x32xf32>
    %cst_10 = arith.constant 1.000000e+00 : f32
    %15 = vector.broadcast %cst_10 : f32 to vector<128x32xf32>
    %16 = arith.addf %15, %14 : vector<128x32xf32>
    %17 = arith.mulf %11, %16 : vector<128x32xf32>
    %18 = arith.truncf %17 : vector<128x32xf32> to vector<128x32xbf16>
    %c0_11 = arith.constant 0 : index
    %c0_12 = arith.constant 0 : index
    %c0_13 = arith.constant 0 : index
    %19 = vector.load %arg6[%c0_11, %c0_12, %c0_13] : memref<1x128x32xbf16, #tpu.memory_space<vmem>>, vector<1x128x32xbf16>
    %20 = vector.shape_cast %19 : vector<1x128x32xbf16> to vector<128x32xbf16>
    %21 = vector.shape_cast %18 : vector<128x32xbf16> to vector<1x128x32xbf16>
    tpu.vector_store %arg6[%c0_11, %c0_12, %c0_13], %21 {strides = array<i32>} : memref<1x128x32xbf16, #tpu.memory_space<vmem>>, vector<1x128x32xbf16>,
    return
  }
  func.func @transform_0(%arg0: i32, %arg1: i32) -> (i32, i32, i32) {
    %c0_i32 = arith.constant 0 : i32
    %c0_i32_0 = arith.constant 0 : i32
    return %arg0, %arg1, %c0_i32 : i32, i32, i32
  }
  func.func @transform_1(%arg0: i32, %arg1: i32) -> (i32, i32) {
    %c0_i32 = arith.constant 0 : i32
    %c0_i32_0 = arith.constant 0 : i32
    %c0_i32_1 = arith.constant 0 : i32
    return %c0_i32, %c0_i32_0 : i32, i32
  }
  func.func @transform_2(%arg0: i32, %arg1: i32) -> (i32, i32) {
    %c0_i32 = arith.constant 0 : i32
    %c0_i32_0 = arith.constant 0 : i32
    %c0_i32_1 = arith.constant 0 : i32
    return %c0_i32, %c0_i32_0 : i32, i32
  }
  func.func @transform_3(%arg0: i32, %arg1: i32) -> (i32, i32) {
    %c0_i32 = arith.constant 0 : i32
    %c0_i32_0 = arith.constant 0 : i32
    %c0_i32_1 = arith.constant 0 : i32
    return %c0_i32, %c0_i32_0 : i32, i32
  }
  func.func @transform_4(%arg0: i32, %arg1: i32) -> (i32, i32, i32) {
    %c0_i32 = arith.constant 0 : i32
    %c0_i32_0 = arith.constant 0 : i32
    return %arg0, %arg1, %c0_i32 : i32, i32, i32
  }
}

module attributes {stable_mosaic.version = 11 : i64} {
  func.func @_conv_kernel(%arg0: i32, %arg1: i32, %arg2: memref<1x128x288xbf16, #tpu.memory_space<vmem>>, %arg3: memref<288x32xbf16, #tpu.memory_space<vmem>>, %arg4: memref<1x32xf32, #tpu.memory_space<vmem>>, %arg5: memref<1x32xf32, #tpu.memory_space<vmem>>, %arg6: memref<1x128x32xf32, #tpu.memory_space<vmem>>) attributes {dimension_semantics = [#tpu.dimension_semantics<parallel>, #tpu.dimension_semantics<parallel>], iteration_bounds = array<i64: 2, 2>, scalar_prefetch = 0 : i64, scratch_operands = 0 : i64, tpu.core_type = #tpu.core_type<tc>, window_params = [{transform_indices = @transform_0, window_bounds = array<i64: 1, 128, 288>}, {pipeline_mode = #tpu.pipeline_mode<synchronous>, transform_indices = @transform_1, window_bounds = array<i64: 288, 32>}, {pipeline_mode = #tpu.pipeline_mode<synchronous>, transform_indices = @transform_2, window_bounds = array<i64: 1, 32>}, {pipeline_mode = #tpu.pipeline_mode<synchronous>, transform_indices = @transform_3, window_bounds = array<i64: 1, 32>}, {transform_indices = @transform_4, window_bounds = array<i64: 1, 128, 32>}]} {
    %c0 = arith.constant 0 : index
    %c0_0 = arith.constant 0 : index
    %c0_1 = arith.constant 0 : index
    %0 = vector.load %arg2[%c0, %c0_0, %c0_1] : memref<1x128x288xbf16, #tpu.memory_space<vmem>>, vector<1x128x288xbf16>
    %1 = vector.shape_cast %0 : vector<1x128x288xbf16> to vector<128x288xbf16>
    %c0_2 = arith.constant 0 : index
    %c0_3 = arith.constant 0 : index
    %2 = vector.load %arg3[%c0_2, %c0_3] : memref<288x32xbf16, #tpu.memory_space<vmem>>, vector<288x32xbf16>
    %cst = arith.constant dense<0.000000e+00> : vector<128x32xf32>
    %3 = tpu.matmul %1, %2, %cst {dimension_numbers = #tpu.dot_dimension_numbers<[1], [0], [0], [1], [0, 0, 1, 1], [], []>} : vector<128x288xbf16>, vector<288x32xbf16>, vector<128x32xf32> -> vector<128x32xf32>
    %c0_4 = arith.constant 0 : index
    %c0_5 = arith.constant 0 : index
    %4 = vector.load %arg4[%c0_4, %c0_5] : memref<1x32xf32, #tpu.memory_space<vmem>>, vector<1x32xf32>
    %5 = vector.broadcast %4 : vector<1x32xf32> to vector<128x32xf32>
    %6 = arith.mulf %3, %5 : vector<128x32xf32>
    %c0_6 = arith.constant 0 : index
    %c0_7 = arith.constant 0 : index
    %7 = vector.load %arg5[%c0_6, %c0_7] : memref<1x32xf32, #tpu.memory_space<vmem>>, vector<1x32xf32>
    %8 = vector.broadcast %7 : vector<1x32xf32> to vector<128x32xf32>
    %9 = arith.addf %6, %8 : vector<128x32xf32>
    %cst_8 = arith.constant 5.000000e-01 : f32
    %10 = vector.broadcast %cst_8 : f32 to vector<128x32xf32>
    %11 = arith.mulf %10, %9 : vector<128x32xf32>
    %cst_9 = arith.constant 0.707106769 : f32
    %12 = vector.broadcast %cst_9 : f32 to vector<128x32xf32>
    %13 = arith.mulf %9, %12 : vector<128x32xf32>
    %14 = math.erf %13 : vector<128x32xf32>
    %cst_10 = arith.constant 1.000000e+00 : f32
    %15 = vector.broadcast %cst_10 : f32 to vector<128x32xf32>
    %16 = arith.addf %15, %14 : vector<128x32xf32>
    %17 = arith.mulf %11, %16 : vector<128x32xf32>
    %c0_11 = arith.constant 0 : index
    %c0_12 = arith.constant 0 : index
    %c0_13 = arith.constant 0 : index
    %18 = vector.load %arg6[%c0_11, %c0_12, %c0_13] : memref<1x128x32xf32, #tpu.memory_space<vmem>>, vector<1x128x32xf32>
    %19 = vector.shape_cast %18 : vector<1x128x32xf32> to vector<128x32xf32>
    %20 = vector.shape_cast %17 : vector<128x32xf32> to vector<1x128x32xf32>
    tpu.vector_store %arg6[%c0_11, %c0_12, %c0_13], %20 {strides = array<i32>} : memref<1x128x32xf32, #tpu.memory_space<vmem>>, vector<1x128x32xf32>,
    return
  }
  func.func @transform_0(%arg0: i32, %arg1: i32) -> (i32, i32, i32) {
    %c0_i32 = arith.constant 0 : i32
    %c0_i32_0 = arith.constant 0 : i32
    return %arg0, %arg1, %c0_i32 : i32, i32, i32
  }
  func.func @transform_1(%arg0: i32, %arg1: i32) -> (i32, i32) {
    %c0_i32 = arith.constant 0 : i32
    %c0_i32_0 = arith.constant 0 : i32
    %c0_i32_1 = arith.constant 0 : i32
    return %c0_i32, %c0_i32_0 : i32, i32
  }
  func.func @transform_2(%arg0: i32, %arg1: i32) -> (i32, i32) {
    %c0_i32 = arith.constant 0 : i32
    %c0_i32_0 = arith.constant 0 : i32
    %c0_i32_1 = arith.constant 0 : i32
    return %c0_i32, %c0_i32_0 : i32, i32
  }
  func.func @transform_3(%arg0: i32, %arg1: i32) -> (i32, i32) {
    %c0_i32 = arith.constant 0 : i32
    %c0_i32_0 = arith.constant 0 : i32
    %c0_i32_1 = arith.constant 0 : i32
    return %c0_i32, %c0_i32_0 : i32, i32
  }
  func.func @transform_4(%arg0: i32, %arg1: i32) -> (i32, i32, i32) {
    %c0_i32 = arith.constant 0 : i32
    %c0_i32_0 = arith.constant 0 : i32
    return %arg0, %arg1, %c0_i32 : i32, i32, i32
  }
}

module attributes {stable_mosaic.version = 11 : i64} {
  func.func @_conv_kernel(%arg0: i32, %arg1: i32, %arg2: memref<1x128x1568xbf16, #tpu.memory_space<vmem>>, %arg3: memref<1568x128xbf16, #tpu.memory_space<vmem>>, %arg4: memref<1x128xf32, #tpu.memory_space<vmem>>, %arg5: memref<1x128xf32, #tpu.memory_space<vmem>>, %arg6: memref<1x128x128xf32, #tpu.memory_space<vmem>>) attributes {dimension_semantics = [#tpu.dimension_semantics<parallel>, #tpu.dimension_semantics<parallel>], iteration_bounds = array<i64: 2, 2>, scalar_prefetch = 0 : i64, scratch_operands = 0 : i64, tpu.core_type = #tpu.core_type<tc>, window_params = [{transform_indices = @transform_0, window_bounds = array<i64: 1, 128, 1568>}, {pipeline_mode = #tpu.pipeline_mode<synchronous>, transform_indices = @transform_1, window_bounds = array<i64: 1568, 128>}, {pipeline_mode = #tpu.pipeline_mode<synchronous>, transform_indices = @transform_2, window_bounds = array<i64: 1, 128>}, {pipeline_mode = #tpu.pipeline_mode<synchronous>, transform_indices = @transform_3, window_bounds = array<i64: 1, 128>}, {transform_indices = @transform_4, window_bounds = array<i64: 1, 128, 128>}]} {
    %c0 = arith.constant 0 : index
    %c0_0 = arith.constant 0 : index
    %c0_1 = arith.constant 0 : index
    %0 = vector.load %arg2[%c0, %c0_0, %c0_1] : memref<1x128x1568xbf16, #tpu.memory_space<vmem>>, vector<1x128x1568xbf16>
    %1 = vector.shape_cast %0 : vector<1x128x1568xbf16> to vector<128x1568xbf16>
    %c0_2 = arith.constant 0 : index
    %c0_3 = arith.constant 0 : index
    %2 = vector.load %arg3[%c0_2, %c0_3] : memref<1568x128xbf16, #tpu.memory_space<vmem>>, vector<1568x128xbf16>
    %cst = arith.constant dense<0.000000e+00> : vector<128x128xf32>
    %3 = tpu.matmul %1, %2, %cst {dimension_numbers = #tpu.dot_dimension_numbers<[1], [0], [0], [1], [0, 0, 1, 1], [], []>} : vector<128x1568xbf16>, vector<1568x128xbf16>, vector<128x128xf32> -> vector<128x128xf32>
    %c0_4 = arith.constant 0 : index
    %c0_5 = arith.constant 0 : index
    %4 = vector.load %arg4[%c0_4, %c0_5] : memref<1x128xf32, #tpu.memory_space<vmem>>, vector<1x128xf32>
    %5 = vector.broadcast %4 : vector<1x128xf32> to vector<128x128xf32>
    %6 = arith.mulf %3, %5 : vector<128x128xf32>
    %c0_6 = arith.constant 0 : index
    %c0_7 = arith.constant 0 : index
    %7 = vector.load %arg5[%c0_6, %c0_7] : memref<1x128xf32, #tpu.memory_space<vmem>>, vector<1x128xf32>
    %8 = vector.broadcast %7 : vector<1x128xf32> to vector<128x128xf32>
    %9 = arith.addf %6, %8 : vector<128x128xf32>
    %c0_8 = arith.constant 0 : index
    %c0_9 = arith.constant 0 : index
    %c0_10 = arith.constant 0 : index
    %10 = vector.load %arg6[%c0_8, %c0_9, %c0_10] : memref<1x128x128xf32, #tpu.memory_space<vmem>>, vector<1x128x128xf32>
    %11 = vector.shape_cast %10 : vector<1x128x128xf32> to vector<128x128xf32>
    %12 = vector.shape_cast %9 : vector<128x128xf32> to vector<1x128x128xf32>
    tpu.vector_store %arg6[%c0_8, %c0_9, %c0_10], %12 {strides = array<i32>} : memref<1x128x128xf32, #tpu.memory_space<vmem>>, vector<1x128x128xf32>,
    return
  }
  func.func @transform_0(%arg0: i32, %arg1: i32) -> (i32, i32, i32) {
    %c0_i32 = arith.constant 0 : i32
    %c0_i32_0 = arith.constant 0 : i32
    return %arg0, %arg1, %c0_i32 : i32, i32, i32
  }
  func.func @transform_1(%arg0: i32, %arg1: i32) -> (i32, i32) {
    %c0_i32 = arith.constant 0 : i32
    %c0_i32_0 = arith.constant 0 : i32
    %c0_i32_1 = arith.constant 0 : i32
    return %c0_i32, %c0_i32_0 : i32, i32
  }
  func.func @transform_2(%arg0: i32, %arg1: i32) -> (i32, i32) {
    %c0_i32 = arith.constant 0 : i32
    %c0_i32_0 = arith.constant 0 : i32
    %c0_i32_1 = arith.constant 0 : i32
    return %c0_i32, %c0_i32_0 : i32, i32
  }
  func.func @transform_3(%arg0: i32, %arg1: i32) -> (i32, i32) {
    %c0_i32 = arith.constant 0 : i32
    %c0_i32_0 = arith.constant 0 : i32
    %c0_i32_1 = arith.constant 0 : i32
    return %c0_i32, %c0_i32_0 : i32, i32
  }
  func.func @transform_4(%arg0: i32, %arg1: i32) -> (i32, i32, i32) {
    %c0_i32 = arith.constant 0 : i32
    %c0_i32_0 = arith.constant 0 : i32
    return %arg0, %arg1, %c0_i32 : i32, i32, i32
  }
}

</mosaic_0001>

<llo_original>
// kernel: fgc_forward.8
$region0: #{fgc_forward.8}
  #allocation0 [shape = 'u32[]', space=smem, size = 0x4, offset = 0x4, fixed_abs, tag = 'smem constant byte address 0x4 - core index']
  #allocation1 [shape = 'u32[144,128]{1,0:T(1,128)}', space=vmem, size = 0x12000, scoped, tag = 'internal scratch']
  %s0 = inlined_call_operand.vmem [shape: f32[2,16,512], index: 0, kind: input, shape index: {}]
  %s1 = inlined_call_operand.vmem [shape: f32[8,8,8,32], index: 1, kind: input, shape index: {}]
  %s2 = inlined_call_operand.vmem [shape: f32[8,8,8,32], index: 2, kind: input, shape index: {}]
  %s3 = inlined_call_operand.vmem [shape: f32[2,8,8], index: 3, kind: input, shape index: {}]
  %s4 = inlined_call_operand.vmem [shape: f32[16,8], index: 4, kind: input, shape index: {}]
  %s5 = inlined_call_operand.vmem [shape: f32[8,16], index: 5, kind: input, shape index: {}]
  %s6 = inlined_call_operand.vmem [shape: f32[16,512], index: 6, kind: input, shape index: {}]
  %s7 = inlined_call_operand.vmem [shape: f32[16,32], index: 7, kind: input, shape index: {}]
  %s8 = inlined_call_operand.vmem [shape: f32[32,16], index: 8, kind: input, shape index: {}]
  %s9 = inlined_call_operand.vmem [shape: bf16[2,16,512], index: 9, kind: output, shape index: {}]
  %s10 = sld [smem:[#allocation0]]
  $region69: #{fgc_forward.8} parent=0
    _
  %s12 = ssub.s32 1, %s10
  %s13 = scalar_select 0, %s12, %s10
  loop: start=0, step=1, limit=4
  $region2: #{fgc_forward.8} parent=0 // loop_pre_header
    _
  $region3: #{fgc_forward.8} parent=0 // loop_header
    %s15 = sphi 0, %s19
    %p16 = scmp.ge.s32.totalorder %s15, 4
    %s25 = sphi 0, %s27
    %s28 = sphi 0, %s25
    %s29 = sphi 0, %s28
    %s45 = sphi 0, %s29
    %s51 = sphi 0, %s53
    %s54 = sphi 0, %s51
    %s55 = sphi 0, %s54
    %s71 = sphi 0, %s55
    %s77 = sphi 0, %s79
    %s80 = sphi 0, %s77
    %s81 = sphi 0, %s80
    %s97 = sphi 0, %s81
    %s103 = sphi 0, %s105
    %s106 = sphi 0, %s103
    %s107 = sphi 0, %s106
    %s123 = sphi 0, %s107
    %s127 = sphi 0, %s127
    %s129 = sphi 0, %s127
    %s130 = sphi 0, %s129
    %s144 = sphi 0, %s130
    %s148 = sphi 0, %s148
    %s150 = sphi 0, %s148
    %s151 = sphi 0, %s150
    %s165 = sphi 0, %s151
    %s169 = sphi 0, %s169
    %s171 = sphi 0, %s169
    %s172 = sphi 0, %s171
    %s186 = sphi 0, %s172
    %s190 = sphi 0, %s190
    %s192 = sphi 0, %s190
    %s193 = sphi 0, %s192
    %s207 = sphi 0, %s193
    %s211 = sphi 0, %s211
    %s213 = sphi 0, %s211
    %s214 = sphi 0, %s213
    %s228 = sphi 0, %s214
    %s234 = sphi 0, %s236
    %s237 = sphi 0, %s234
    %s238 = sphi 0, %s237
    %s254 = sphi 0, %s238
  $region4: #{fgc_forward.8} parent=0 // loop_header_branch
    %18 = sbr.rel (%p16) target = $region8
  $region5: #{fgc_forward.8} parent=0 // loop_body
    %s20 = ssub.s32 %s15, 1
    %s21 = ssub.s32 %s15, 2
    %s22 = sadd.s32 %s15, 1
    %s23 = ssub.s32 %s15, %s22
    %p24 = scmp.eq.s32.totalorder %s23, 0
    %s26 = sadd.s32 %s25, 1
    %s27 = scalar_select %p24, %s25, %s26
    %p30 = pneg %p24
    %p31 = scmp.eq.s32.totalorder %s15, 1
    %p32 = por %p30, %p31
    %p33 = scmp.ne.s32.totalorder %s25, %s28
    %p34 = scmp.eq.s32.totalorder %s15, 0
    %p35 = por %p33, %p34
    %p36 = scmp.ne.s32.totalorder %s25, %s28
    %p37 = scmp.eq.s32.totalorder %s20, 1
    %p38 = por %p36, %p37
    %p39 = scmp.ne.s32.totalorder %s28, %s29
    %p40 = scmp.eq.s32.totalorder %s20, 0
    %p41 = por %p39, %p40
    %p42 = scmp.ne.s32.totalorder %s28, %s29
    %p43 = scmp.eq.s32.totalorder %s21, 1
    %p44 = por %p42, %p43
    %p46 = scmp.ne.s32.totalorder %s29, %s45
    %p47 = scmp.eq.s32.totalorder %s21, 0
    %p48 = por %p46, %p47
    %s49 = ssub.s32 %s15, %s22
    %p50 = scmp.eq.s32.totalorder %s49, 0
    %s52 = sadd.s32 %s51, 1
    %s53 = scalar_select %p50, %s51, %s52
    %p56 = pneg %p50
    %p57 = scmp.eq.s32.totalorder %s15, 1
    %p58 = por %p56, %p57
    %p59 = scmp.ne.s32.totalorder %s51, %s54
    %p60 = scmp.eq.s32.totalorder %s15, 0
    %p61 = por %p59, %p60
    %p62 = scmp.ne.s32.totalorder %s51, %s54
    %p63 = scmp.eq.s32.totalorder %s20, 1
    %p64 = por %p62, %p63
    %p65 = scmp.ne.s32.totalorder %s54, %s55
    %p66 = scmp.eq.s32.totalorder %s20, 0
    %p67 = por %p65, %p66
    %p68 = scmp.ne.s32.totalorder %s54, %s55
    %p69 = scmp.eq.s32.totalorder %s21, 1
    %p70 = por %p68, %p69
    %p72 = scmp.ne.s32.totalorder %s55, %s71
    %p73 = scmp.eq.s32.totalorder %s21, 0
    %p74 = por %p72, %p73
    %s75 = ssub.s32 %s15, %s22
    %p76 = scmp.eq.s32.totalorder %s75, 0
    %s78 = sadd.s32 %s77, 1
    %s79 = scalar_select %p76, %s77, %s78
    %p82 = pneg %p76
    %p83 = scmp.eq.s32.totalorder %s15, 1
    %p84 = por %p82, %p83
    %p85 = scmp.ne.s32.totalorder %s77, %s80
    %p86 = scmp.eq.s32.totalorder %s15, 0
    %p87 = por %p85, %p86
    %p88 = scmp.ne.s32.totalorder %s77, %s80
    %p89 = scmp.eq.s32.totalorder %s20, 1
    %p90 = por %p88, %p89
    %p91 = scmp.ne.s32.totalorder %s80, %s81
    %p92 = scmp.eq.s32.totalorder %s20, 0
    %p93 = por %p91, %p92
    %p94 = scmp.ne.s32.totalorder %s80, %s81
    %p95 = scmp.eq.s32.totalorder %s21, 1
    %p96 = por %p94, %p95
    %p98 = scmp.ne.s32.totalorder %s81, %s97
    %p99 = scmp.eq.s32.totalorder %s21, 0
    %p100 = por %p98, %p99
    %s101 = ssub.s32 %s15, %s22
    %p102 = scmp.eq.s32.totalorder %s101, 0
    %s104 = sadd.s32 %s103, 1
    %s105 = scalar_select %p102, %s103, %s104
    %p108 = pneg %p102
    %p109 = scmp.eq.s32.totalorder %s15, 1
    %p110 = por %p108, %p109
    %p111 = scmp.ne.s32.totalorder %s103, %s106
    %p112 = scmp.eq.s32.totalorder %s15, 0
    %p113 = por %p111, %p112
    %p114 = scmp.ne.s32.totalorder %s103, %s106
    %p115 = scmp.eq.s32.totalorder %s20, 1
    %p116 = por %p114, %p115
    %p117 = scmp.ne.s32.totalorder %s106, %s107
    %p118 = scmp.eq.s32.totalorder %s20, 0
    %p119 = por %p117, %p118
    %p120 = scmp.ne.s32.totalorder %s106, %s107
    %p121 = scmp.eq.s32.totalorder %s21, 1
    %p122 = por %p120, %p121
    %p124 = scmp.ne.s32.totalorder %s107, %s123
    %p125 = scmp.eq.s32.totalorder %s21, 0
    %p126 = por %p124, %p125
    %s128 = sadd.s32 %s127, 1
    %p131 = scmp.eq.s32.totalorder %s15, 1
    %p132 = scmp.ne.s32.totalorder %s127, %s129
    %p133 = scmp.eq.s32.totalorder %s15, 0
    %p134 = por %p132, %p133
    %p135 = scmp.ne.s32.totalorder %s127, %s129
    %p136 = scmp.eq.s32.totalorder %s20, 1
    %p137 = por %p135, %p136
    %p138 = scmp.ne.s32.totalorder %s129, %s130
    %p139 = scmp.eq.s32.totalorder %s20, 0
    %p140 = por %p138, %p139
    %p141 = scmp.ne.s32.totalorder %s129, %s130
    %p142 = scmp.eq.s32.totalorder %s21, 1
    %p143 = por %p141, %p142
    %p145 = scmp.ne.s32.totalorder %s130, %s144
    %p146 = scmp.eq.s32.totalorder %s21, 0
    %p147 = por %p145, %p146
    %s149 = sadd.s32 %s148, 1
    %p152 = scmp.eq.s32.totalorder %s15, 1
    %p153 = scmp.ne.s32.totalorder %s148, %s150
    %p154 = scmp.eq.s32.totalorder %s15, 0
    %p155 = por %p153, %p154
    %p156 = scmp.ne.s32.totalorder %s148, %s150
    %p157 = scmp.eq.s32.totalorder %s20, 1
    %p158 = por %p156, %p157
    %p159 = scmp.ne.s32.totalorder %s150, %s151
    %p160 = scmp.eq.s32.totalorder %s20, 0
    %p161 = por %p159, %p160
    %p162 = scmp.ne.s32.totalorder %s150, %s151
    %p163 = scmp.eq.s32.totalorder %s21, 1
    %p164 = por %p162, %p163
    %p166 = scmp.ne.s32.totalorder %s151, %s165
    %p167 = scmp.eq.s32.totalorder %s21, 0
    %p168 = por %p166, %p167
    %s170 = sadd.s32 %s169, 1
    %p173 = scmp.eq.s32.totalorder %s15, 1
    %p174 = scmp.ne.s32.totalorder %s169, %s171
    %p175 = scmp.eq.s32.totalorder %s15, 0
    %p176 = por %p174, %p175
    %p177 = scmp.ne.s32.totalorder %s169, %s171
    %p178 = scmp.eq.s32.totalorder %s20, 1
    %p179 = por %p177, %p178
    %p180 = scmp.ne.s32.totalorder %s171, %s172
    %p181 = scmp.eq.s32.totalorder %s20, 0
    %p182 = por %p180, %p181
    %p183 = scmp.ne.s32.totalorder %s171, %s172
    %p184 = scmp.eq.s32.totalorder %s21, 1
    %p185 = por %p183, %p184
    %p187 = scmp.ne.s32.totalorder %s172, %s186
    %p188 = scmp.eq.s32.totalorder %s21, 0
    %p189 = por %p187, %p188
    %s191 = sadd.s32 %s190, 1
    %p194 = scmp.eq.s32.totalorder %s15, 1
    %p195 = scmp.ne.s32.totalorder %s190, %s192
    %p196 = scmp.eq.s32.totalorder %s15, 0
    %p197 = por %p195, %p196
    %p198 = scmp.ne.s32.totalorder %s190, %s192
    %p199 = scmp.eq.s32.totalorder %s20, 1
    %p200 = por %p198, %p199
    %p201 = scmp.ne.s32.totalorder %s192, %s193
    %p202 = scmp.eq.s32.totalorder %s20, 0
    %p203 = por %p201, %p202
    %p204 = scmp.ne.s32.totalorder %s192, %s193
    %p205 = scmp.eq.s32.totalorder %s21, 1
    %p206 = por %p204, %p205
    %p208 = scmp.ne.s32.totalorder %s193, %s207
    %p209 = scmp.eq.s32.totalorder %s21, 0
    %p210 = por %p208, %p209
    %s212 = sadd.s32 %s211, 1
    %p215 = scmp.eq.s32.totalorder %s15, 1
    %p216 = scmp.ne.s32.totalorder %s211, %s213
    %p217 = scmp.eq.s32.totalorder %s15, 0
    %p218 = por %p216, %p217
    %p219 = scmp.ne.s32.totalorder %s211, %s213
    %p220 = scmp.eq.s32.totalorder %s20, 1
    %p221 = por %p219, %p220
    %p222 = scmp.ne.s32.totalorder %s213, %s214
    %p223 = scmp.eq.s32.totalorder %s20, 0
    %p224 = por %p222, %p223
    %p225 = scmp.ne.s32.totalorder %s213, %s214
    %p226 = scmp.eq.s32.totalorder %s21, 1
    %p227 = por %p225, %p226
    %p229 = scmp.ne.s32.totalorder %s214, %s228
    %p230 = scmp.eq.s32.totalorder %s21, 0
    %p231 = por %p229, %p230
    %s232 = ssub.s32 %s15, %s22
    %p233 = scmp.eq.s32.totalorder %s232, 0
    %s235 = sadd.s32 %s234, 1
    %s236 = scalar_select %p233, %s234, %s235
    %p239 = pneg %p233
    %p240 = scmp.eq.s32.totalorder %s15, 1
    %p241 = por %p239, %p240
    %p242 = scmp.ne.s32.totalorder %s234, %s237
    %p243 = scmp.eq.s32.totalorder %s15, 0
    %p244 = por %p242, %p243
    %p245 = scmp.ne.s32.totalorder %s234, %s237
    %p246 = scmp.eq.s32.totalorder %s20, 1
    %p247 = por %p245, %p246
    %p248 = scmp.ne.s32.totalorder %s237, %s238
    %p249 = scmp.eq.s32.totalorder %s20, 0
    %p250 = por %p248, %p249
    %p251 = scmp.ne.s32.totalorder %s237, %s238
    %p252 = scmp.eq.s32.totalorder %s21, 1
    %p253 = por %p251, %p252
    %p255 = scmp.ne.s32.totalorder %s238, %s254
    %p256 = scmp.eq.s32.totalorder %s21, 0
    %p257 = por %p255, %p256
    %p258 = scmp.le.s32.totalorder 1, %s15
    %p259 = scmp.lt.s32.totalorder %s15, 3
    %p260 = pnand %p258, %p259
    %p261 = pneg %p260
    // Predicated region
    $region9: #{fgc_forward.8} parent=5 // pred_check
      _
    $region10: #{fgc_forward.8} parent=5 // pred_check_branch
      %263 = sbr.rel (%p260) target = $region12
    $region11: #{fgc_forward.8} parent=5 // pred_region
      %s264 = ssub.s32 %s15, 1
      // Predicated region
      $region13: #{fgc_forward.8} parent=11 // pred_check
        %p265 = pneg %p140
      $region14: #{fgc_forward.8} parent=11 // pred_check_branch
        %267 = sbr.rel (%p265) target = $region16
      $region15: #{fgc_forward.8} parent=11 // pred_region
        _
      $region16: #{fgc_forward.8} parent=11 // pred_fallthru
        _
      // Predicated region
      $region17: #{fgc_forward.8} parent=11 // pred_check
        %p268 = pneg %p161
      $region18: #{fgc_forward.8} parent=11 // pred_check_branch
        %270 = sbr.rel (%p268) target = $region20
      $region19: #{fgc_forward.8} parent=11 // pred_region
        _
      $region20: #{fgc_forward.8} parent=11 // pred_fallthru
        _
      // Predicated region
      $region21: #{fgc_forward.8} parent=11 // pred_check
        %p271 = pneg %p182
      $region22: #{fgc_forward.8} parent=11 // pred_check_branch
        %273 = sbr.rel (%p271) target = $region24
      $region23: #{fgc_forward.8} parent=11 // pred_region
        _
      $region24: #{fgc_forward.8} parent=11 // pred_fallthru
        _
      // Predicated region
      $region25: #{fgc_forward.8} parent=11 // pred_check
        %p274 = pneg %p203
      $region26: #{fgc_forward.8} parent=11 // pred_check_branch
        %276 = sbr.rel (%p274) target = $region28
      $region27: #{fgc_forward.8} parent=11 // pred_region
        _
      $region28: #{fgc_forward.8} parent=11 // pred_fallthru
        _
      // Predicated region
      $region29: #{fgc_forward.8} parent=11 // pred_check
        %p277 = pneg %p224
      $region30: #{fgc_forward.8} parent=11 // pred_check_branch
        %279 = sbr.rel (%p277) target = $region32
      $region31: #{fgc_forward.8} parent=11 // pred_region
        _
      $region32: #{fgc_forward.8} parent=11 // pred_fallthru
        _
    $region12: #{fgc_forward.8} parent=5 // pred_fallthru
      _
    %p280 = scmp.lt.s32.totalorder %s15, 2
    // Predicated region
    $region33: #{fgc_forward.8} parent=5 // pred_check
      %p281 = pneg %p280
    $region34: #{fgc_forward.8} parent=5 // pred_check_branch
      %283 = sbr.rel (%p281) target = $region36
    $region35: #{fgc_forward.8} parent=5 // pred_region
      // Predicated region
      $region37: #{fgc_forward.8} parent=35 // pred_check
        %p284 = pneg %p35
      $region38: #{fgc_forward.8} parent=35 // pred_check_branch
        %286 = sbr.rel (%p284) target = $region40
      $region39: #{fgc_forward.8} parent=35 // pred_region
        %p287 = scmp.lt.s32.totalorder %s15, 1
        %s288 = scalar_select %p287, %s15, 1
        %s289 = smul.addr %s288, 8
        %s290 = smul.addr %s289, 8
        %s291 = scalar_lea.vmem %s0, %s290
      $region40: #{fgc_forward.8} parent=35 // pred_fallthru
        _
      // Predicated region
      $region41: #{fgc_forward.8} parent=35 // pred_check
        %p292 = pneg %p61
      $region42: #{fgc_forward.8} parent=35 // pred_check_branch
        %294 = sbr.rel (%p292) target = $region44
      $region43: #{fgc_forward.8} parent=35 // pred_region
        %s295 = smul.u32 4, %s15
        %p296 = scmp.lt.s32.totalorder %s295, 7
        %s297 = scalar_select %p296, %s295, 7
        %s298 = smul.addr %s297, 8
        %s299 = smul.addr %s298, 8
        %s300 = scalar_lea.vmem %s1, %s299
        %s301 = smul.u32 4, %s15
      $region44: #{fgc_forward.8} parent=35 // pred_fallthru
        _
      // Predicated region
      $region45: #{fgc_forward.8} parent=35 // pred_check
        %p302 = pneg %p87
      $region46: #{fgc_forward.8} parent=35 // pred_check_branch
        %304 = sbr.rel (%p302) target = $region48
      $region47: #{fgc_forward.8} parent=35 // pred_region
        %s305 = smul.u32 4, %s15
        %p306 = scmp.lt.s32.totalorder %s305, 7
        %s307 = scalar_select %p306, %s305, 7
        %s308 = smul.addr %s307, 8
        %s309 = smul.addr %s308, 8
        %s310 = scalar_lea.vmem %s2, %s309
        %s311 = smul.u32 4, %s15
      $region48: #{fgc_forward.8} parent=35 // pred_fallthru
        _
      // Predicated region
      $region49: #{fgc_forward.8} parent=35 // pred_check
        %p312 = pneg %p113
      $region50: #{fgc_forward.8} parent=35 // pred_check_branch
        %314 = sbr.rel (%p312) target = $region52
      $region51: #{fgc_forward.8} parent=35 // pred_region
        %p315 = scmp.lt.s32.totalorder %s15, 1
        %s316 = scalar_select %p315, %s15, 1
        %s317 = smul.addr %s316, 8
        %s318 = scalar_lea.vmem %s3, %s317
      $region52: #{fgc_forward.8} parent=35 // pred_fallthru
        _
    $region36: #{fgc_forward.8} parent=5 // pred_fallthru
      _
    %p319 = scmp.le.s32.totalorder 1, %s15
    %p320 = scmp.lt.s32.totalorder %s15, 3
    %p321 = pnand %p319, %p320
    %p322 = pneg %p321
    // Predicated region
    $region53: #{fgc_forward.8} parent=5 // pred_check
      _
    $region54: #{fgc_forward.8} parent=5 // pred_check_branch
      %324 = sbr.rel (%p321) target = $region56
    $region55: #{fgc_forward.8} parent=5 // pred_region
      %s325 = ssub.s32 %s15, 1
      %p326 = scmp.lt.s32.totalorder %s20, 1
      %s327 = scalar_select %p326, %s20, 1
      %s328 = smul.addr %s327, 8
      %s329 = smul.addr %s328, 8
      %s330 = scalar_lea.vmem %s0, %s329
      %p331 = pneg %p41
      %p332 = pneg %p38
      %s333 = smul.u32 4, %s20
      %p334 = scmp.lt.s32.totalorder %s333, 7
      %s335 = scalar_select %p334, %s333, 7
      %s336 = smul.addr %s335, 8
      %s337 = smul.addr %s336, 8
      %s338 = scalar_lea.vmem %s1, %s337
      %p339 = pneg %p67
      %p340 = pneg %p64
      %s341 = smul.u32 4, %s20
      %p342 = scmp.lt.s32.totalorder %s341, 7
      %s343 = scalar_select %p342, %s341, 7
      %s344 = smul.addr %s343, 8
      %s345 = smul.addr %s344, 8
      %s346 = scalar_lea.vmem %s2, %s345
      %p347 = pneg %p93
      %p348 = pneg %p90
      %p349 = scmp.lt.s32.totalorder %s20, 1
      %s350 = scalar_select %p349, %s20, 1
      %s351 = smul.addr %s350, 8
      %s352 = scalar_lea.vmem %s3, %s351
      %p353 = pneg %p119
      %p354 = pneg %p116
      %p355 = pneg %p140
      %p356 = pneg %p137
      %p357 = pneg %p161
      %p358 = pneg %p158
      %p359 = pneg %p182
      %p360 = pneg %p179
      %p361 = pneg %p203
      %p362 = pneg %p200
      %p363 = pneg %p224
      %p364 = pneg %p221
      %p365 = pneg %p250
      %p366 = pneg %p247
      %p367 = scmp.lt.s32.totalorder %s20, 1
      %s368 = scalar_select %p367, %s20, 1
      %s369 = smul.addr %s368, 8
      %s370 = smul.addr %s369, 4
      %s371 = scalar_lea.vmem %s9, %s370
      %p372 = scmp.lt.s32.totalorder %s20, 1
      %s373 = scalar_select %p372, %s20, 1
      %s374 = smul.addr %s373, 8
      %s375 = smul.addr %s374, 8
      %s376 = scalar_lea.vmem %s0, %s375
      %s377 = smul.u32 4, %s20
      %p378 = scmp.lt.s32.totalorder %s377, 7
      %s379 = scalar_select %p378, %s377, 7
      %s380 = smul.addr %s379, 8
      %s381 = smul.addr %s380, 8
      %s382 = scalar_lea.vmem %s1, %s381
      %s383 = smul.u32 4, %s20
      %s384 = smul.u32 4, %s20
      %p385 = scmp.lt.s32.totalorder %s384, 7
      %s386 = scalar_select %p385, %s384, 7
      %s387 = smul.addr %s386, 8
      %s388 = smul.addr %s387, 8
      %s389 = scalar_lea.vmem %s2, %s388
      %s390 = smul.u32 4, %s20
      %p391 = scmp.lt.s32.totalorder %s20, 1
      %s392 = scalar_select %p391, %s20, 1
      %s393 = smul.addr %s392, 8
      %s394 = scalar_lea.vmem %s3, %s393
      %p395 = scmp.lt.s32.totalorder %s20, 1
      %s396 = scalar_select %p395, %s20, 1
      %s397 = smul.addr %s396, 8
      %s398 = smul.addr %s397, 4
      %s399 = scalar_lea.vmem %s9, %s398
      %v400 = vld [vmem:[%s382] sm:$0xff]
      %v401 = vld [vmem:[%s382 + $0x8] sm:$0xff]
      %v402 = vld [vmem:[%s382 + $0x10] sm:$0xff]
      %v403 = vld [vmem:[%s382 + $0x18] sm:$0xff]
      %v404 = vld [vmem:[%s382 + $0x20] sm:$0xff]
      %v405 = vld [vmem:[%s382 + $0x28] sm:$0xff]
      %v406 = vld [vmem:[%s382 + $0x30] sm:$0xff]
      %v407 = vld [vmem:[%s382 + $0x38] sm:$0xff]
      %s408 = scalar_lea.vmem %s382, 64
      %v409 = vld [vmem:[%s408] sm:$0xff]
      %v410 = vld [vmem:[%s408 + $0x8] sm:$0xff]
      %v411 = vld [vmem:[%s408 + $0x10] sm:$0xff]
      %v412 = vld [vmem:[%s408 + $0x18] sm:$0xff]
      %v413 = vld [vmem:[%s408 + $0x20] sm:$0xff]
      %v414 = vld [vmem:[%s408 + $0x28] sm:$0xff]
      %v415 = vld [vmem:[%s408 + $0x30] sm:$0xff]
      %v416 = vld [vmem:[%s408 + $0x38] sm:$0xff]
      %s417 = scalar_lea.vmem %s382, 128
      %v418 = vld [vmem:[%s417] sm:$0xff]
      %v419 = vld [vmem:[%s417 + $0x8] sm:$0xff]
      %v420 = vld [vmem:[%s417 + $0x10] sm:$0xff]
      %v421 = vld [vmem:[%s417 + $0x18] sm:$0xff]
      %v422 = vld [vmem:[%s417 + $0x20] sm:$0xff]
      %v423 = vld [vmem:[%s417 + $0x28] sm:$0xff]
      %v424 = vld [vmem:[%s417 + $0x30] sm:$0xff]
      %v425 = vld [vmem:[%s417 + $0x38] sm:$0xff]
      %s426 = scalar_lea.vmem %s382, 192
      %v427 = vld [vmem:[%s426] sm:$0xff]
      %v428 = vld [vmem:[%s426 + $0x8] sm:$0xff]
      %v429 = vld [vmem:[%s426 + $0x10] sm:$0xff]
      %v430 = vld [vmem:[%s426 + $0x18] sm:$0xff]
      %v431 = vld [vmem:[%s426 + $0x20] sm:$0xff]
      %v432 = vld [vmem:[%s426 + $0x28] sm:$0xff]
      %v433 = vld [vmem:[%s426 + $0x30] sm:$0xff]
      %v434 = vld [vmem:[%s426 + $0x38] sm:$0xff]
      %v435 = vld [vmem:[%s389] sm:$0xff]
      %v436 = vld [vmem:[%s389 + $0x8] sm:$0xff]
      %v437 = vld [vmem:[%s389 + $0x10] sm:$0xff]
      %v438 = vld [vmem:[%s389 + $0x18] sm:$0xff]
      %v439 = vld [vmem:[%s389 + $0x20] sm:$0xff]
      %v440 = vld [vmem:[%s389 + $0x28] sm:$0xff]
      %v441 = vld [vmem:[%s389 + $0x30] sm:$0xff]
      %v442 = vld [vmem:[%s389 + $0x38] sm:$0xff]
      %s443 = scalar_lea.vmem %s389, 64
      %v444 = vld [vmem:[%s443] sm:$0xff]
      %v445 = vld [vmem:[%s443 + $0x8] sm:$0xff]
      %v446 = vld [vmem:[%s443 + $0x10] sm:$0xff]
      %v447 = vld [vmem:[%s443 + $0x18] sm:$0xff]
      %v448 = vld [vmem:[%s443 + $0x20] sm:$0xff]
      %v449 = vld [vmem:[%s443 + $0x28] sm:$0xff]
      %v450 = vld [vmem:[%s443 + $0x30] sm:$0xff]
      %v451 = vld [vmem:[%s443 + $0x38] sm:$0xff]
      %s452 = scalar_lea.vmem %s389, 128
      %v453 = vld [vmem:[%s452] sm:$0xff]
      %v454 = vld [vmem:[%s452 + $0x8] sm:$0xff]
      %v455 = vld [vmem:[%s452 + $0x10] sm:$0xff]
      %v456 = vld [vmem:[%s452 + $0x18] sm:$0xff]
      %v457 = vld [vmem:[%s452 + $0x20] sm:$0xff]
      %v458 = vld [vmem:[%s452 + $0x28] sm:$0xff]
      %v459 = vld [vmem:[%s452 + $0x30] sm:$0xff]
      %v460 = vld [vmem:[%s452 + $0x38] sm:$0xff]
      %s461 = scalar_lea.vmem %s389, 192
      %v462 = vld [vmem:[%s461] sm:$0xff]
      %v463 = vld [vmem:[%s461 + $0x8] sm:$0xff]
      %v464 = vld [vmem:[%s461 + $0x10] sm:$0xff]
      %v465 = vld [vmem:[%s461 + $0x18] sm:$0xff]
      %v466 = vld [vmem:[%s461 + $0x20] sm:$0xff]
      %v467 = vld [vmem:[%s461 + $0x28] sm:$0xff]
      %v468 = vld [vmem:[%s461 + $0x30] sm:$0xff]
      %v469 = vld [vmem:[%s461 + $0x38] sm:$0xff]
      %v470 = vadd.f32 %v400, %v409
      %v471 = vadd.f32 %v401, %v410
      %v472 = vadd.f32 %v402, %v411
      %v473 = vadd.f32 %v403, %v412
      %v474 = vadd.f32 %v404, %v413
      %v475 = vadd.f32 %v405, %v414
      %v476 = vadd.f32 %v406, %v415
      %v477 = vadd.f32 %v407, %v416
      %v478 = vadd.f32 %v470, %v418
      %v479 = vadd.f32 %v471, %v419
      %v480 = vadd.f32 %v472, %v420
      %v481 = vadd.f32 %v473, %v421
      %v482 = vadd.f32 %v474, %v422
      %v483 = vadd.f32 %v475, %v423
      %v484 = vadd.f32 %v476, %v424
      %v485 = vadd.f32 %v477, %v425
      %v486 = vadd.f32 %v478, %v427
      %v487 = vadd.f32 %v479, %v428
      %v488 = vadd.f32 %v480, %v429
      %v489 = vadd.f32 %v481, %v430
      %v490 = vadd.f32 %v482, %v431
      %v491 = vadd.f32 %v483, %v432
      %v492 = vadd.f32 %v484, %v433
      %v493 = vadd.f32 %v485, %v434
      %v494 = vmul.f32 %v486, 0.25
      %v495 = vmul.f32 %v487, 0.25
      %v496 = vmul.f32 %v488, 0.25
      %v497 = vmul.f32 %v489, 0.25
      %v498 = vmul.f32 %v490, 0.25
      %v499 = vmul.f32 %v491, 0.25
      %v500 = vmul.f32 %v492, 0.25
      %v501 = vmul.f32 %v493, 0.25
      %v502 = vmax.f32 %v400, %v409
      %v503 = vmax.f32 %v401, %v410
      %v504 = vmax.f32 %v402, %v411
      %v505 = vmax.f32 %v403, %v412
      %v506 = vmax.f32 %v404, %v413
      %v507 = vmax.f32 %v405, %v414
      %v508 = vmax.f32 %v406, %v415
      %v509 = vmax.f32 %v407, %v416
      %v510 = vmax.f32 %v418, %v427
      %v511 = vmax.f32 %v419, %v428
      %v512 = vmax.f32 %v420, %v429
      %v513 = vmax.f32 %v421, %v430
      %v514 = vmax.f32 %v422, %v431
      %v515 = vmax.f32 %v423, %v432
      %v516 = vmax.f32 %v424, %v433
      %v517 = vmax.f32 %v425, %v434
      %v518 = vmax.f32 %v502, %v510
      %v519 = vmax.f32 %v503, %v511
      %v520 = vmax.f32 %v504, %v512
      %v521 = vmax.f32 %v505, %v513
      %v522 = vmax.f32 %v506, %v514
      %v523 = vmax.f32 %v507, %v515
      %v524 = vmax.f32 %v508, %v516
      %v525 = vmax.f32 %v509, %v517
      %v526 = vadd.f32 %v435, %v444
      %v527 = vadd.f32 %v436, %v445
      %v528 = vadd.f32 %v437, %v446
      %v529 = vadd.f32 %v438, %v447
      %v530 = vadd.f32 %v439, %v448
      %v531 = vadd.f32 %v440, %v449
      %v532 = vadd.f32 %v441, %v450
      %v533 = vadd.f32 %v442, %v451
      %v534 = vadd.f32 %v526, %v453
      %v535 = vadd.f32 %v527, %v454
      %v536 = vadd.f32 %v528, %v455
      %v537 = vadd.f32 %v529, %v456
      %v538 = vadd.f32 %v530, %v457
      %v539 = vadd.f32 %v531, %v458
      %v540 = vadd.f32 %v532, %v459
      %v541 = vadd.f32 %v533, %v460
      %v542 = vadd.f32 %v534, %v462
      %v543 = vadd.f32 %v535, %v463
      %v544 = vadd.f32 %v536, %v464
      %v545 = vadd.f32 %v537, %v465
      %v546 = vadd.f32 %v538, %v466
      %v547 = vadd.f32 %v539, %v467
      %v548 = vadd.f32 %v540, %v468
      %v549 = vadd.f32 %v541, %v469
      %v550 = vmul.f32 %v542, 0.25
      %v551 = vmul.f32 %v543, 0.25
      %v552 = vmul.f32 %v544, 0.25
      %v553 = vmul.f32 %v545, 0.25
      %v554 = vmul.f32 %v546, 0.25
      %v555 = vmul.f32 %v547, 0.25
      %v556 = vmul.f32 %v548, 0.25
      %v557 = vmul.f32 %v549, 0.25
      %v558 = vmax.f32 %v435, %v444
      %v559 = vmax.f32 %v436, %v445
      %v560 = vmax.f32 %v437, %v446
      %v561 = vmax.f32 %v438, %v447
      %v562 = vmax.f32 %v439, %v448
      %v563 = vmax.f32 %v440, %v449
      %v564 = vmax.f32 %v441, %v450
      %v565 = vmax.f32 %v442, %v451
      %v566 = vmax.f32 %v453, %v462
      %v567 = vmax.f32 %v454, %v463
      %v568 = vmax.f32 %v455, %v464
      %v569 = vmax.f32 %v456, %v465
      %v570 = vmax.f32 %v457, %v466
      %v571 = vmax.f32 %v458, %v467
      %v572 = vmax.f32 %v459, %v468
      %v573 = vmax.f32 %v460, %v469
      %v574 = vmax.f32 %v558, %v566
      %v575 = vmax.f32 %v559, %v567
      %v576 = vmax.f32 %v560, %v568
      %v577 = vmax.f32 %v561, %v569
      %v578 = vmax.f32 %v562, %v570
      %v579 = vmax.f32 %v563, %v571
      %v580 = vmax.f32 %v564, %v572
      %v581 = vmax.f32 %v565, %v573
      %v582 = vsub.f32 %v550, %v518
      %v583 = vsub.f32 %v551, %v519
      %v584 = vsub.f32 %v552, %v520
      %v585 = vsub.f32 %v553, %v521
      %v586 = vsub.f32 %v554, %v522
      %v587 = vsub.f32 %v555, %v523
      %v588 = vsub.f32 %v556, %v524
      %v589 = vsub.f32 %v557, %v525
      %v590 = vsub.f32 %v494, %v574
      %v591 = vsub.f32 %v495, %v575
      %v592 = vsub.f32 %v496, %v576
      %v593 = vsub.f32 %v497, %v577
      %v594 = vsub.f32 %v498, %v578
      %v595 = vsub.f32 %v499, %v579
      %v596 = vsub.f32 %v500, %v580
      %v597 = vsub.f32 %v501, %v581
      %v598 = vmul.f32 %v582, %v582
      %v599 = vmul.f32 %v583, %v583
      %v600 = vmul.f32 %v584, %v584
      %v601 = vmul.f32 %v585, %v585
      %v602 = vmul.f32 %v586, %v586
      %v603 = vmul.f32 %v587, %v587
      %v604 = vmul.f32 %v588, %v588
      %v605 = vmul.f32 %v589, %v589
      %vm606 = vcmask 261120
      %v607 = vsel %vm606, %v598, 0.0
      %608 = vadd.xlane.f32.xlu0 %v607
      %v609 = vpop.xlane.xlu0 %608
      %v610 = vsel %vm606, %v599, 0.0
      %611 = vadd.xlane.f32.xlu0 %v610
      %v612 = vpop.xlane.xlu0 %611
      %v613 = vsel %vm606, %v600, 0.0
      %614 = vadd.xlane.f32.xlu0 %v613
      %v615 = vpop.xlane.xlu0 %614
      %v616 = vsel %vm606, %v601, 0.0
      %617 = vadd.xlane.f32.xlu0 %v616
      %v618 = vpop.xlane.xlu0 %617
      %v619 = vsel %vm606, %v602, 0.0
      %620 = vadd.xlane.f32.xlu0 %v619
      %v621 = vpop.xlane.xlu0 %620
      %v622 = vsel %vm606, %v603, 0.0
      %623 = vadd.xlane.f32.xlu0 %v622
      %v624 = vpop.xlane.xlu0 %623
      %v625 = vsel %vm606, %v604, 0.0
      %626 = vadd.xlane.f32.xlu0 %v625
      %v627 = vpop.xlane.xlu0 %626
      %v628 = vsel %vm606, %v605, 0.0
      %629 = vadd.xlane.f32.xlu0 %v628
      %v630 = vpop.xlane.xlu0 %629
      %v631 = vrsqrt.pop %v609
      %v632 = vmul.f32 %v609, %v631
      %vm633 = vcmp.eq.f32.partialorder %v609, inf
      %v634 = vsel %vm633, %v609, %v632
      %vm635 = vcmp.eq.f32.partialorder %v609, 0.0
      %v636 = vand.u32 %v609, 2147483648
      %v637 = vsel %vm635, %v636, %v634
      %v638 = vrsqrt.pop %v612
      %v639 = vmul.f32 %v612, %v638
      %vm640 = vcmp.eq.f32.partialorder %v612, inf
      %v641 = vsel %vm640, %v612, %v639
      %vm642 = vcmp.eq.f32.partialorder %v612, 0.0
      %v643 = vand.u32 %v612, 2147483648
      %v644 = vsel %vm642, %v643, %v641
      %v645 = vrsqrt.pop %v615
      %v646 = vmul.f32 %v615, %v645
      %vm647 = vcmp.eq.f32.partialorder %v615, inf
      %v648 = vsel %vm647, %v615, %v646
      %vm649 = vcmp.eq.f32.partialorder %v615, 0.0
      %v650 = vand.u32 %v615, 2147483648
      %v651 = vsel %vm649, %v650, %v648
      %v652 = vrsqrt.pop %v618
      %v653 = vmul.f32 %v618, %v652
      %vm654 = vcmp.eq.f32.partialorder %v618, inf
      %v655 = vsel %vm654, %v618, %v653
      %vm656 = vcmp.eq.f32.partialorder %v618, 0.0
      %v657 = vand.u32 %v618, 2147483648
      %v658 = vsel %vm656, %v657, %v655
      %v659 = vrsqrt.pop %v621
      %v660 = vmul.f32 %v621, %v659
      %vm661 = vcmp.eq.f32.partialorder %v621, inf
      %v662 = vsel %vm661, %v621, %v660
      %vm663 = vcmp.eq.f32.partialorder %v621, 0.0
      %v664 = vand.u32 %v621, 2147483648
      %v665 = vsel %vm663, %v664, %v662
      %v666 = vrsqrt.pop %v624
      %v667 = vmul.f32 %v624, %v666
      %vm668 = vcmp.eq.f32.partialorder %v624, inf
      %v669 = vsel %vm668, %v624, %v667
      %vm670 = vcmp.eq.f32.partialorder %v624, 0.0
      %v671 = vand.u32 %v624, 2147483648
      %v672 = vsel %vm670, %v671, %v669
      %v673 = vrsqrt.pop %v627
      %v674 = vmul.f32 %v627, %v673
      %vm675 = vcmp.eq.f32.partialorder %v627, inf
      %v676 = vsel %vm675, %v627, %v674
      %vm677 = vcmp.eq.f32.partialorder %v627, 0.0
      %v678 = vand.u32 %v627, 2147483648
      %v679 = vsel %vm677, %v678, %v676
      %v680 = vrsqrt.pop %v630
      %v681 = vmul.f32 %v630, %v680
      %vm682 = vcmp.eq.f32.partialorder %v630, inf
      %v683 = vsel %vm682, %v630, %v681
      %vm684 = vcmp.eq.f32.partialorder %v630, 0.0
      %v685 = vand.u32 %v630, 2147483648
      %v686 = vsel %vm684, %v685, %v683
      %v687 = vmul.f32 %v590, %v590
      %v688 = vmul.f32 %v591, %v591
      %v689 = vmul.f32 %v592, %v592
      %v690 = vmul.f32 %v593, %v593
      %v691 = vmul.f32 %v594, %v594
      %v692 = vmul.f32 %v595, %v595
      %v693 = vmul.f32 %v596, %v596
      %v694 = vmul.f32 %v597, %v597
      %v695 = vsel %vm606, %v687, 0.0
      %696 = vadd.xlane.f32.xlu0 %v695
      %v697 = vpop.xlane.xlu0 %696
      %v698 = vsel %vm606, %v688, 0.0
      %699 = vadd.xlane.f32.xlu0 %v698
      %v700 = vpop.xlane.xlu0 %699
      %v701 = vsel %vm606, %v689, 0.0
      %702 = vadd.xlane.f32.xlu0 %v701
      %v703 = vpop.xlane.xlu0 %702
      %v704 = vsel %vm606, %v690, 0.0
      %705 = vadd.xlane.f32.xlu0 %v704
      %v706 = vpop.xlane.xlu0 %705
      %v707 = vsel %vm606, %v691, 0.0
      %708 = vadd.xlane.f32.xlu0 %v707
      %v709 = vpop.xlane.xlu0 %708
      %v710 = vsel %vm606, %v692, 0.0
      %711 = vadd.xlane.f32.xlu0 %v710
      %v712 = vpop.xlane.xlu0 %711
      %v713 = vsel %vm606, %v693, 0.0
      %714 = vadd.xlane.f32.xlu0 %v713
      %v715 = vpop.xlane.xlu0 %714
      %v716 = vsel %vm606, %v694, 0.0
      %717 = vadd.xlane.f32.xlu0 %v716
      %v718 = vpop.xlane.xlu0 %717
      %v719 = vrsqrt.pop %v697
      %v720 = vmul.f32 %v697, %v719
      %vm721 = vcmp.eq.f32.partialorder %v697, inf
      %v722 = vsel %vm721, %v697, %v720
      %vm723 = vcmp.eq.f32.partialorder %v697, 0.0
      %v724 = vand.u32 %v697, 2147483648
      %v725 = vsel %vm723, %v724, %v722
      %v726 = vrsqrt.pop %v700
      %v727 = vmul.f32 %v700, %v726
      %vm728 = vcmp.eq.f32.partialorder %v700, inf
      %v729 = vsel %vm728, %v700, %v727
      %vm730 = vcmp.eq.f32.partialorder %v700, 0.0
      %v731 = vand.u32 %v700, 2147483648
      %v732 = vsel %vm730, %v731, %v729
      %v733 = vrsqrt.pop %v703
      %v734 = vmul.f32 %v703, %v733
      %vm735 = vcmp.eq.f32.partialorder %v703, inf
      %v736 = vsel %vm735, %v703, %v734
      %vm737 = vcmp.eq.f32.partialorder %v703, 0.0
      %v738 = vand.u32 %v703, 2147483648
      %v739 = vsel %vm737, %v738, %v736
      %v740 = vrsqrt.pop %v706
      %v741 = vmul.f32 %v706, %v740
      %vm742 = vcmp.eq.f32.partialorder %v706, inf
      %v743 = vsel %vm742, %v706, %v741
      %vm744 = vcmp.eq.f32.partialorder %v706, 0.0
      %v745 = vand.u32 %v706, 2147483648
      %v746 = vsel %vm744, %v745, %v743
      %v747 = vrsqrt.pop %v709
      %v748 = vmul.f32 %v709, %v747
      %vm749 = vcmp.eq.f32.partialorder %v709, inf
      %v750 = vsel %vm749, %v709, %v748
      %vm751 = vcmp.eq.f32.partialorder %v709, 0.0
      %v752 = vand.u32 %v709, 2147483648
      %v753 = vsel %vm751, %v752, %v750
      %v754 = vrsqrt.pop %v712
      %v755 = vmul.f32 %v712, %v754
      %vm756 = vcmp.eq.f32.partialorder %v712, inf
      %v757 = vsel %vm756, %v712, %v755
      %vm758 = vcmp.eq.f32.partialorder %v712, 0.0
      %v759 = vand.u32 %v712, 2147483648
      %v760 = vsel %vm758, %v759, %v757
      %v761 = vrsqrt.pop %v715
      %v762 = vmul.f32 %v715, %v761
      %vm763 = vcmp.eq.f32.partialorder %v715, inf
      %v764 = vsel %vm763, %v715, %v762
      %vm765 = vcmp.eq.f32.partialorder %v715, 0.0
      %v766 = vand.u32 %v715, 2147483648
      %v767 = vsel %vm765, %v766, %v764
      %v768 = vrsqrt.pop %v718
      %v769 = vmul.f32 %v718, %v768
      %vm770 = vcmp.eq.f32.partialorder %v718, inf
      %v771 = vsel %vm770, %v718, %v769
      %vm772 = vcmp.eq.f32.partialorder %v718, 0.0
      %v773 = vand.u32 %v718, 2147483648
      %v774 = vsel %vm772, %v773, %v771
      %v775 = vadd.f32 %v637, %v725
      %v776 = vadd.f32 %v644, %v732
      %v777 = vadd.f32 %v651, %v739
      %v778 = vadd.f32 %v658, %v746
      %v779 = vadd.f32 %v665, %v753
      %v780 = vadd.f32 %v672, %v760
      %v781 = vadd.f32 %v679, %v767
      %v782 = vadd.f32 %v686, %v774
      %v783 = vld [vmem:[%s4] sm:$0xff]
      %v784 = vld [vmem:[%s4 + $0x8] sm:$0xff]
      %v785 = vld [vmem:[%s5] sm:$0xff]
      %v786 = vld [vmem:[%s394] sm:$0xff]
      %vm787 = vcmask 64512
      %v789 = vsel %vm787, %v783, 0
      %v792 = vsel %vm787, %v784, 0
      %794 = vmatprep.subr.mxu0 0.0
      %795 = vmatpush1.msra.mxu0 %v786
      %796 = vmatprep.subr.mxu0 0.0
      %797 = vmatpush1.msra.mxu0 0.0
      %798 = vmatprep.subr.mxu0 0.0
      %799 = vmatpush1.msra.mxu0 0.0
      %800 = vmatprep.subr.mxu0 0.0
      %801 = vmatpush1.msra.mxu0 0.0
      %802 = vmatprep.subr.mxu0 0.0
      %803 = vmatpush1.msra.mxu0 0.0
      %804 = vmatprep.subr.mxu0 0.0
      %805 = vmatpush1.msra.mxu0 0.0
      %806 = vmatprep.subr.mxu0 0.0
      %807 = vmatpush1.msra.mxu0 0.0
      %808 = vmatprep.subr.mxu0 0.0
      %809 = vmatpush1.msra.mxu0 0.0
      %810 = vmatprep.subr.mxu0 0.0
      %811 = vmatpush1.msra.mxu0 0.0
      %812 = vmatprep.subr.mxu0 0.0
      %813 = vmatpush1.msra.mxu0 0.0
      %814 = vmatprep.subr.mxu0 0.0
      %815 = vmatpush1.msra.mxu0 0.0
      %816 = vmatprep.subr.mxu0 0.0
      %817 = vmatpush1.msra.mxu0 0.0
      %818 = vmatprep.subr.mxu0 0.0
      %819 = vmatpush1.msra.mxu0 0.0
      %820 = vmatprep.subr.mxu0 0.0
      %821 = vmatpush1.msra.mxu0 0.0
      %822 = vmatprep.subr.mxu0 0.0
      %823 = vmatpush1.msra.mxu0 0.0
      %824 = vmatprep.subr.mxu0 0.0
      %825 = vmatpush1.msra.mxu0 0.0
      %826 = vmatprep.subr.mxu0 0.0
      %827 = vmatpush1.msra.mxu0 0.0
      %828 = vmatprep.subr.mxu0 0.0
      %829 = vmatpush1.msra.mxu0 0.0
      %830 = vmatprep.subr.mxu0 0.0
      %831 = vmatpush1.msra.mxu0 0.0
      %832 = vmatprep.subr.mxu0 0.0
      %833 = vmatpush1.msra.mxu0 0.0
      %834 = vmatprep.subr.mxu0 0.0
      %835 = vmatpush1.msra.mxu0 0.0
      %836 = vmatprep.subr.mxu0 0.0
      %837 = vmatpush1.msra.mxu0 0.0
      %838 = vmatprep.subr.mxu0 0.0
      %839 = vmatpush1.msra.mxu0 0.0
      %840 = vmatprep.subr.mxu0 0.0
      %841 = vmatpush1.msra.mxu0 0.0
      %842 = vmatprep.subr.mxu0 0.0
      %843 = vmatpush1.msra.mxu0 0.0
      %844 = vmatprep.subr.mxu0 0.0
      %845 = vmatpush1.msra.mxu0 0.0
      %846 = vmatprep.subr.mxu0 0.0
      %847 = vmatpush1.msra.mxu0 0.0
      %848 = vmatprep.subr.mxu0 0.0
      %849 = vmatpush1.msra.mxu0 0.0
      %850 = vmatprep.subr.mxu0 0.0
      %851 = vmatpush1.msra.mxu0 0.0
      %852 = vmatprep.subr.mxu0 0.0
      %853 = vmatpush1.msra.mxu0 0.0
      %854 = vmatprep.subr.mxu0 0.0
      %855 = vmatpush1.msra.mxu0 0.0
      %856 = vmatprep.subr.mxu0 0.0
      %857 = vmatpush1.msra.mxu0 0.0
      %858 = vmatprep.mubr.f32.mxu0 0.0
      %859 = vmatmul.mubr.f32.gmra.mrb[0].mxu0 %v789
      %v860 = vpop.f32.mrb[0].mxu0
      %v861 = vadd.f32 0.0, %v860
      %v862 = vpop.f32.mrb[0].mxu0
      %863 = vmatprep.mubr.f32.mxu0 0.0
      %864 = vmatmul.mubr.f32.gmra.mrb[0].mxu0 %v792
      %v865 = vpop.f32.mrb[0].mxu0
      %v866 = vadd.f32 0.0, %v865
      %v867 = vpop.f32.mrb[0].mxu0
      %868 = vdwg.mxu0
      %v870 = vsel %vm787, %v861, 0
      %v873 = vsel %vm787, %v866, 0
      %875 = vmatprep.subr.mxu0 0.0
      %876 = vmatpush1.msra.mxu0 %v785
      %877 = vmatprep.subr.mxu0 0.0
      %878 = vmatpush1.msra.mxu0 0.0
      %879 = vmatprep.subr.mxu0 0.0
      %880 = vmatpush1.msra.mxu0 0.0
      %881 = vmatprep.subr.mxu0 0.0
      %882 = vmatpush1.msra.mxu0 0.0
      %883 = vmatprep.subr.mxu0 0.0
      %884 = vmatpush1.msra.mxu0 0.0
      %885 = vmatprep.subr.mxu0 0.0
      %886 = vmatpush1.msra.mxu0 0.0
      %887 = vmatprep.subr.mxu0 0.0
      %888 = vmatpush1.msra.mxu0 0.0
      %889 = vmatprep.subr.mxu0 0.0
      %890 = vmatpush1.msra.mxu0 0.0
      %891 = vmatprep.subr.mxu0 0.0
      %892 = vmatpush1.msra.mxu0 0.0
      %893 = vmatprep.subr.mxu0 0.0
      %894 = vmatpush1.msra.mxu0 0.0
      %895 = vmatprep.subr.mxu0 0.0
      %896 = vmatpush1.msra.mxu0 0.0
      %897 = vmatprep.subr.mxu0 0.0
      %898 = vmatpush1.msra.mxu0 0.0
      %899 = vmatprep.subr.mxu0 0.0
      %900 = vmatpush1.msra.mxu0 0.0
      %901 = vmatprep.subr.mxu0 0.0
      %902 = vmatpush1.msra.mxu0 0.0
      %903 = vmatprep.subr.mxu0 0.0
      %904 = vmatpush1.msra.mxu0 0.0
      %905 = vmatprep.subr.mxu0 0.0
      %906 = vmatpush1.msra.mxu0 0.0
      %907 = vmatprep.subr.mxu0 0.0
      %908 = vmatpush1.msra.mxu0 0.0
      %909 = vmatprep.subr.mxu0 0.0
      %910 = vmatpush1.msra.mxu0 0.0
      %911 = vmatprep.subr.mxu0 0.0
      %912 = vmatpush1.msra.mxu0 0.0
      %913 = vmatprep.subr.mxu0 0.0
      %914 = vmatpush1.msra.mxu0 0.0
      %915 = vmatprep.subr.mxu0 0.0
      %916 = vmatpush1.msra.mxu0 0.0
      %917 = vmatprep.subr.mxu0 0.0
      %918 = vmatpush1.msra.mxu0 0.0
      %919 = vmatprep.subr.mxu0 0.0
      %920 = vmatpush1.msra.mxu0 0.0
      %921 = vmatprep.subr.mxu0 0.0
      %922 = vmatpush1.msra.mxu0 0.0
      %923 = vmatprep.subr.mxu0 0.0
      %924 = vmatpush1.msra.mxu0 0.0
      %925 = vmatprep.subr.mxu0 0.0
      %926 = vmatpush1.msra.mxu0 0.0
      %927 = vmatprep.subr.mxu0 0.0
      %928 = vmatpush1.msra.mxu0 0.0
      %929 = vmatprep.subr.mxu0 0.0
      %930 = vmatpush1.msra.mxu0 0.0
      %931 = vmatprep.subr.mxu0 0.0
      %932 = vmatpush1.msra.mxu0 0.0
      %933 = vmatprep.subr.mxu0 0.0
      %934 = vmatpush1.msra.mxu0 0.0
      %935 = vmatprep.subr.mxu0 0.0
      %936 = vmatpush1.msra.mxu0 0.0
      %937 = vmatprep.subr.mxu0 0.0
      %938 = vmatpush1.msra.mxu0 0.0
      %939 = vmatprep.mubr.f32.mxu0 0.0
      %940 = vmatmul.mubr.f32.gmra.mrb[0].mxu0 %v870
      %v941 = vpop.f32.mrb[0].mxu0
      %v942 = vadd.f32 0.0, %v941
      %v943 = vpop.f32.mrb[0].mxu0
      %944 = vmatprep.mubr.f32.mxu0 0.0
      %945 = vmatmul.mubr.f32.gmra.mrb[0].mxu0 %v873
      %v946 = vpop.f32.mrb[0].mxu0
      %v947 = vadd.f32 0.0, %v946
      %v948 = vpop.f32.mrb[0].mxu0
      %949 = vdwg.mxu0
      %v950 = vxor.u32 %v942, 2147483648
      %v951 = vxor.u32 %v947, 2147483648
      %v952 = vmul.f32 %v950, 1.442695
      %v953 = vpow.pop %v952
      %v954 = vmul.f32 %v951, 1.442695
      %v955 = vpow.pop %v954
      %v956 = vadd.f32 %v953, 1.0
      %v957 = vadd.f32 %v955, 1.0
      %v958 = vrcp.pop %v956
      %v959 = vmul.f32 1.0, %v958
      %v960 = vrcp.pop %v957
      %v961 = vmul.f32 1.0, %v960
      %v970 = vlaneseq
      %v971 = vand.u32 %v970, 127
      %v972 = vlaneseq
      %v973 = vshrl.u32 %v972, 7
      %v974 = vsub.s32 %v971, %v973
      %v975 = vrot.slane %v775, %v974
      %v976 = vlaneseq
      %v977 = vshrl.u32 %v976, 7
      %v978 = vsub.s32 %v971, %v977
      %v979 = vrot.slane %v776, %v978
      %v980 = vlaneseq
      %v981 = vshrl.u32 %v980, 7
      %v982 = vsub.s32 %v971, %v981
      %v983 = vrot.slane %v777, %v982
      %v984 = vlaneseq
      %v985 = vshrl.u32 %v984, 7
      %v986 = vsub.s32 %v971, %v985
      %v987 = vrot.slane %v778, %v986
      %v988 = vlaneseq
      %v989 = vshrl.u32 %v988, 7
      %v990 = vsub.s32 %v971, %v989
      %v991 = vrot.slane %v779, %v990
      %v992 = vlaneseq
      %v993 = vshrl.u32 %v992, 7
      %v994 = vsub.s32 %v971, %v993
      %v995 = vrot.slane %v780, %v994
      %v996 = vlaneseq
      %v997 = vshrl.u32 %v996, 7
      %v998 = vsub.s32 %v971, %v997
      %v999 = vrot.slane %v781, %v998
      %v1000 = vlaneseq
      %v1001 = vshrl.u32 %v1000, 7
      %v1002 = vsub.s32 %v971, %v1001
      %v1003 = vrot.slane %v782, %v1002
      %vm1004 = vcmask 1041409
      %v1005 = vsel %vm1004, %v979, %v975
      %vm1006 = vcmask 1042434
      %v1007 = vsel %vm1006, %v983, %v1005
      %vm1008 = vcmask 1043459
      %v1009 = vsel %vm1008, %v987, %v1007
      %vm1010 = vcmask 1044484
      %v1011 = vsel %vm1010, %v991, %v1009
      %vm1012 = vcmask 1045509
      %v1013 = vsel %vm1012, %v995, %v1011
      %vm1014 = vcmask 1046534
      %v1015 = vsel %vm1014, %v999, %v1013
      %vm1016 = vcmask 1047559
      %v1017 = vsel %vm1016, %v1003, %v1015
      %1019 = vmatprep.subr.mxu0 0.0
      %1020 = vmatpush1.msra.mxu0 %v1017
      %1021 = vmatprep.subr.mxu0 0.0
      %1022 = vmatpush1.msra.mxu0 0.0
      %1023 = vmatprep.subr.mxu0 0.0
      %1024 = vmatpush1.msra.mxu0 0.0
      %1025 = vmatprep.subr.mxu0 0.0
      %1026 = vmatpush1.msra.mxu0 0.0
      %1027 = vmatprep.subr.mxu0 0.0
      %1028 = vmatpush1.msra.mxu0 0.0
      %1029 = vmatprep.subr.mxu0 0.0
      %1030 = vmatpush1.msra.mxu0 0.0
      %1031 = vmatprep.subr.mxu0 0.0
      %1032 = vmatpush1.msra.mxu0 0.0
      %1033 = vmatprep.subr.mxu0 0.0
      %1034 = vmatpush1.msra.mxu0 0.0
      %1035 = vmatprep.subr.mxu0 0.0
      %1036 = vmatpush1.msra.mxu0 0.0
      %1037 = vmatprep.subr.mxu0 0.0
      %1038 = vmatpush1.msra.mxu0 0.0
      %1039 = vmatprep.subr.mxu0 0.0
      %1040 = vmatpush1.msra.mxu0 0.0
      %1041 = vmatprep.subr.mxu0 0.0
      %1042 = vmatpush1.msra.mxu0 0.0
      %1043 = vmatprep.subr.mxu0 0.0
      %1044 = vmatpush1.msra.mxu0 0.0
      %1045 = vmatprep.subr.mxu0 0.0
      %1046 = vmatpush1.msra.mxu0 0.0
      %1047 = vmatprep.subr.mxu0 0.0
      %1048 = vmatpush1.msra.mxu0 0.0
      %1049 = vmatprep.subr.mxu0 0.0
      %1050 = vmatpush1.msra.mxu0 0.0
      %1051 = vmatprep.subr.mxu0 0.0
      %1052 = vmatpush1.msra.mxu0 0.0
      %1053 = vmatprep.subr.mxu0 0.0
      %1054 = vmatpush1.msra.mxu0 0.0
      %1055 = vmatprep.subr.mxu0 0.0
      %1056 = vmatpush1.msra.mxu0 0.0
      %1057 = vmatprep.subr.mxu0 0.0
      %1058 = vmatpush1.msra.mxu0 0.0
      %1059 = vmatprep.subr.mxu0 0.0
      %1060 = vmatpush1.msra.mxu0 0.0
      %1061 = vmatprep.subr.mxu0 0.0
      %1062 = vmatpush1.msra.mxu0 0.0
      %1063 = vmatprep.subr.mxu0 0.0
      %1064 = vmatpush1.msra.mxu0 0.0
      %1065 = vmatprep.subr.mxu0 0.0
      %1066 = vmatpush1.msra.mxu0 0.0
      %1067 = vmatprep.subr.mxu0 0.0
      %1068 = vmatpush1.msra.mxu0 0.0
      %1069 = vmatprep.subr.mxu0 0.0
      %1070 = vmatpush1.msra.mxu0 0.0
      %1071 = vmatprep.subr.mxu0 0.0
      %1072 = vmatpush1.msra.mxu0 0.0
      %1073 = vmatprep.subr.mxu0 0.0
      %1074 = vmatpush1.msra.mxu0 0.0
      %1075 = vmatprep.subr.mxu0 0.0
      %1076 = vmatpush1.msra.mxu0 0.0
      %1077 = vmatprep.subr.mxu0 0.0
      %1078 = vmatpush1.msra.mxu0 0.0
      %1079 = vmatprep.subr.mxu0 0.0
      %1080 = vmatpush1.msra.mxu0 0.0
      %1081 = vmatprep.subr.mxu0 0.0
      %1082 = vmatpush1.msra.mxu0 0.0
      %1083 = vmatprep.mubr.f32.mxu0 0.0
      %1084 = vmatmul.mubr.f32.gmra.mrb[0].mxu0 %v789
      %v1085 = vpop.f32.mrb[0].mxu0
      %v1086 = vadd.f32 0.0, %v1085
      %v1087 = vpop.f32.mrb[0].mxu0
      %1088 = vmatprep.mubr.f32.mxu0 0.0
      %1089 = vmatmul.mubr.f32.gmra.mrb[0].mxu0 %v792
      %v1090 = vpop.f32.mrb[0].mxu0
      %v1091 = vadd.f32 0.0, %v1090
      %v1092 = vpop.f32.mrb[0].mxu0
      %1093 = vdwg.mxu0
      %v1095 = vsel %vm787, %v1086, 0
      %v1098 = vsel %vm787, %v1091, 0
      %1100 = vmatprep.subr.mxu0 0.0
      %1101 = vmatpush1.msra.mxu0 %v785
      %1102 = vmatprep.subr.mxu0 0.0
      %1103 = vmatpush1.msra.mxu0 0.0
      %1104 = vmatprep.subr.mxu0 0.0
      %1105 = vmatpush1.msra.mxu0 0.0
      %1106 = vmatprep.subr.mxu0 0.0
      %1107 = vmatpush1.msra.mxu0 0.0
      %1108 = vmatprep.subr.mxu0 0.0
      %1109 = vmatpush1.msra.mxu0 0.0
      %1110 = vmatprep.subr.mxu0 0.0
      %1111 = vmatpush1.msra.mxu0 0.0
      %1112 = vmatprep.subr.mxu0 0.0
      %1113 = vmatpush1.msra.mxu0 0.0
      %1114 = vmatprep.subr.mxu0 0.0
      %1115 = vmatpush1.msra.mxu0 0.0
      %1116 = vmatprep.subr.mxu0 0.0
      %1117 = vmatpush1.msra.mxu0 0.0
      %1118 = vmatprep.subr.mxu0 0.0
      %1119 = vmatpush1.msra.mxu0 0.0
      %1120 = vmatprep.subr.mxu0 0.0
      %1121 = vmatpush1.msra.mxu0 0.0
      %1122 = vmatprep.subr.mxu0 0.0
      %1123 = vmatpush1.msra.mxu0 0.0
      %1124 = vmatprep.subr.mxu0 0.0
      %1125 = vmatpush1.msra.mxu0 0.0
      %1126 = vmatprep.subr.mxu0 0.0
      %1127 = vmatpush1.msra.mxu0 0.0
      %1128 = vmatprep.subr.mxu0 0.0
      %1129 = vmatpush1.msra.mxu0 0.0
      %1130 = vmatprep.subr.mxu0 0.0
      %1131 = vmatpush1.msra.mxu0 0.0
      %1132 = vmatprep.subr.mxu0 0.0
      %1133 = vmatpush1.msra.mxu0 0.0
      %1134 = vmatprep.subr.mxu0 0.0
      %1135 = vmatpush1.msra.mxu0 0.0
      %1136 = vmatprep.subr.mxu0 0.0
      %1137 = vmatpush1.msra.mxu0 0.0
      %1138 = vmatprep.subr.mxu0 0.0
      %1139 = vmatpush1.msra.mxu0 0.0
      %1140 = vmatprep.subr.mxu0 0.0
      %1141 = vmatpush1.msra.mxu0 0.0
      %1142 = vmatprep.subr.mxu0 0.0
      %1143 = vmatpush1.msra.mxu0 0.0
      %1144 = vmatprep.subr.mxu0 0.0
      %1145 = vmatpush1.msra.mxu0 0.0
      %1146 = vmatprep.subr.mxu0 0.0
      %1147 = vmatpush1.msra.mxu0 0.0
      %1148 = vmatprep.subr.mxu0 0.0
      %1149 = vmatpush1.msra.mxu0 0.0
      %1150 = vmatprep.subr.mxu0 0.0
      %1151 = vmatpush1.msra.mxu0 0.0
      %1152 = vmatprep.subr.mxu0 0.0
      %1153 = vmatpush1.msra.mxu0 0.0
      %1154 = vmatprep.subr.mxu0 0.0
      %1155 = vmatpush1.msra.mxu0 0.0
      %1156 = vmatprep.subr.mxu0 0.0
      %1157 = vmatpush1.msra.mxu0 0.0
      %1158 = vmatprep.subr.mxu0 0.0
      %1159 = vmatpush1.msra.mxu0 0.0
      %1160 = vmatprep.subr.mxu0 0.0
      %1161 = vmatpush1.msra.mxu0 0.0
      %1162 = vmatprep.subr.mxu0 0.0
      %1163 = vmatpush1.msra.mxu0 0.0
      %1164 = vmatprep.mubr.f32.mxu0 0.0
      %1165 = vmatmul.mubr.f32.gmra.mrb[0].mxu0 %v1095
      %v1166 = vpop.f32.mrb[0].mxu0
      %v1167 = vadd.f32 0.0, %v1166
      %v1168 = vpop.f32.mrb[0].mxu0
      %1169 = vmatprep.mubr.f32.mxu0 0.0
      %1170 = vmatmul.mubr.f32.gmra.mrb[0].mxu0 %v1098
      %v1171 = vpop.f32.mrb[0].mxu0
      %v1172 = vadd.f32 0.0, %v1171
      %v1173 = vpop.f32.mrb[0].mxu0
      %1174 = vdwg.mxu0
      %v1175 = vxor.u32 %v1167, 2147483648
      %v1176 = vxor.u32 %v1172, 2147483648
      %v1177 = vmul.f32 %v1175, 1.442695
      %v1178 = vpow.pop %v1177
      %v1179 = vmul.f32 %v1176, 1.442695
      %v1180 = vpow.pop %v1179
      %v1181 = vadd.f32 %v1178, 1.0
      %v1182 = vadd.f32 %v1180, 1.0
      %v1183 = vrcp.pop %v1181
      %v1184 = vmul.f32 1.0, %v1183
      %v1185 = vrcp.pop %v1182
      %v1186 = vmul.f32 1.0, %v1185
      %v1187 = vld [vmem:[%s7] sm:$0xff]
      %v1188 = vld [vmem:[%s7 + $0x8] sm:$0xff]
      %v1189 = vld [vmem:[%s8] sm:$0xff]
      %v1190 = vld [vmem:[%s8 + $0x8] sm:$0xff]
      %v1191 = vld [vmem:[%s8 + $0x10] sm:$0xff]
      %v1192 = vld [vmem:[%s8 + $0x18] sm:$0xff]
      %vm1193 = vcmask 130048
      %v1195 = vsel %vm1193, %v959, 0
      %v1198 = vsel %vm1193, %v961, 0
      %1200 = vmatprep.subr.mxu0 0.0
      %1201 = vmatpush1.msra.mxu0 %v1187
      %1202 = vmatprep.subr.mxu0 0.0
      %1203 = vmatpush1.msra.mxu0 %v1188
      %1204 = vmatprep.subr.mxu0 0.0
      %1205 = vmatpush1.msra.mxu0 0.0
      %1206 = vmatprep.subr.mxu0 0.0
      %1207 = vmatpush1.msra.mxu0 0.0
      %1208 = vmatprep.subr.mxu0 0.0
      %1209 = vmatpush1.msra.mxu0 0.0
      %1210 = vmatprep.subr.mxu0 0.0
      %1211 = vmatpush1.msra.mxu0 0.0
      %1212 = vmatprep.subr.mxu0 0.0
      %1213 = vmatpush1.msra.mxu0 0.0
      %1214 = vmatprep.subr.mxu0 0.0
      %1215 = vmatpush1.msra.mxu0 0.0
      %1216 = vmatprep.subr.mxu0 0.0
      %1217 = vmatpush1.msra.mxu0 0.0
      %1218 = vmatprep.subr.mxu0 0.0
      %1219 = vmatpush1.msra.mxu0 0.0
      %1220 = vmatprep.subr.mxu0 0.0
      %1221 = vmatpush1.msra.mxu0 0.0
      %1222 = vmatprep.subr.mxu0 0.0
      %1223 = vmatpush1.msra.mxu0 0.0
      %1224 = vmatprep.subr.mxu0 0.0
      %1225 = vmatpush1.msra.mxu0 0.0
      %1226 = vmatprep.subr.mxu0 0.0
      %1227 = vmatpush1.msra.mxu0 0.0
      %1228 = vmatprep.subr.mxu0 0.0
      %1229 = vmatpush1.msra.mxu0 0.0
      %1230 = vmatprep.subr.mxu0 0.0
      %1231 = vmatpush1.msra.mxu0 0.0
      %1232 = vmatprep.subr.mxu0 0.0
      %1233 = vmatpush1.msra.mxu0 0.0
      %1234 = vmatprep.subr.mxu0 0.0
      %1235 = vmatpush1.msra.mxu0 0.0
      %1236 = vmatprep.subr.mxu0 0.0
      %1237 = vmatpush1.msra.mxu0 0.0
      %1238 = vmatprep.subr.mxu0 0.0
      %1239 = vmatpush1.msra.mxu0 0.0
      %1240 = vmatprep.subr.mxu0 0.0
      %1241 = vmatpush1.msra.mxu0 0.0
      %1242 = vmatprep.subr.mxu0 0.0
      %1243 = vmatpush1.msra.mxu0 0.0
      %1244 = vmatprep.subr.mxu0 0.0
      %1245 = vmatpush1.msra.mxu0 0.0
      %1246 = vmatprep.subr.mxu0 0.0
      %1247 = vmatpush1.msra.mxu0 0.0
      %1248 = vmatprep.subr.mxu0 0.0
      %1249 = vmatpush1.msra.mxu0 0.0
      %1250 = vmatprep.subr.mxu0 0.0
      %1251 = vmatpush1.msra.mxu0 0.0
      %1252 = vmatprep.subr.mxu0 0.0
      %1253 = vmatpush1.msra.mxu0 0.0
      %1254 = vmatprep.subr.mxu0 0.0
      %1255 = vmatpush1.msra.mxu0 0.0
      %1256 = vmatprep.subr.mxu0 0.0
      %1257 = vmatpush1.msra.mxu0 0.0
      %1258 = vmatprep.subr.mxu0 0.0
      %1259 = vmatpush1.msra.mxu0 0.0
      %1260 = vmatprep.subr.mxu0 0.0
      %1261 = vmatpush1.msra.mxu0 0.0
      %1262 = vmatprep.subr.mxu0 0.0
      %1263 = vmatpush1.msra.mxu0 0.0
      %1264 = vmatprep.mubr.f32.mxu0 0.0
      %1265 = vmatmul.mubr.f32.gmra.mrb[0].mxu0 %v1195
      %v1266 = vpop.f32.mrb[0].mxu0
      %v1267 = vadd.f32 0.0, %v1266
      %v1268 = vpop.f32.mrb[0].mxu0
      %1269 = vmatprep.mubr.f32.mxu0 0.0
      %1270 = vmatmul.mubr.f32.gmra.mrb[0].mxu0 %v1198
      %v1271 = vpop.f32.mrb[0].mxu0
      %v1272 = vadd.f32 0.0, %v1271
      %v1273 = vpop.f32.mrb[0].mxu0
      %1274 = vdwg.mxu0
      %1277 = vrot.lane.b32.xlu0 %v1187, 112
      %v1278 = vpop.permute.xlu0 %1277
      %1279 = vrot.lane.b32.xlu0 %v1188, 112
      %v1280 = vpop.permute.xlu0 %1279
      %1283 = vmatprep.subr.mxu0 0.0
      %1284 = vmatpush1.msra.mxu0 %v1278
      %1285 = vmatprep.subr.mxu0 0.0
      %1286 = vmatpush1.msra.mxu0 %v1280
      %1287 = vmatprep.subr.mxu0 0.0
      %1288 = vmatpush1.msra.mxu0 0.0
      %1289 = vmatprep.subr.mxu0 0.0
      %1290 = vmatpush1.msra.mxu0 0.0
      %1291 = vmatprep.subr.mxu0 0.0
      %1292 = vmatpush1.msra.mxu0 0.0
      %1293 = vmatprep.subr.mxu0 0.0
      %1294 = vmatpush1.msra.mxu0 0.0
      %1295 = vmatprep.subr.mxu0 0.0
      %1296 = vmatpush1.msra.mxu0 0.0
      %1297 = vmatprep.subr.mxu0 0.0
      %1298 = vmatpush1.msra.mxu0 0.0
      %1299 = vmatprep.subr.mxu0 0.0
      %1300 = vmatpush1.msra.mxu0 0.0
      %1301 = vmatprep.subr.mxu0 0.0
      %1302 = vmatpush1.msra.mxu0 0.0
      %1303 = vmatprep.subr.mxu0 0.0
      %1304 = vmatpush1.msra.mxu0 0.0
      %1305 = vmatprep.subr.mxu0 0.0
      %1306 = vmatpush1.msra.mxu0 0.0
      %1307 = vmatprep.subr.mxu0 0.0
      %1308 = vmatpush1.msra.mxu0 0.0
      %1309 = vmatprep.subr.mxu0 0.0
      %1310 = vmatpush1.msra.mxu0 0.0
      %1311 = vmatprep.subr.mxu0 0.0
      %1312 = vmatpush1.msra.mxu0 0.0
      %1313 = vmatprep.subr.mxu0 0.0
      %1314 = vmatpush1.msra.mxu0 0.0
      %1315 = vmatprep.subr.mxu0 0.0
      %1316 = vmatpush1.msra.mxu0 0.0
      %1317 = vmatprep.subr.mxu0 0.0
      %1318 = vmatpush1.msra.mxu0 0.0
      %1319 = vmatprep.subr.mxu0 0.0
      %1320 = vmatpush1.msra.mxu0 0.0
      %1321 = vmatprep.subr.mxu0 0.0
      %1322 = vmatpush1.msra.mxu0 0.0
      %1323 = vmatprep.subr.mxu0 0.0
      %1324 = vmatpush1.msra.mxu0 0.0
      %1325 = vmatprep.subr.mxu0 0.0
      %1326 = vmatpush1.msra.mxu0 0.0
      %1327 = vmatprep.subr.mxu0 0.0
      %1328 = vmatpush1.msra.mxu0 0.0
      %1329 = vmatprep.subr.mxu0 0.0
      %1330 = vmatpush1.msra.mxu0 0.0
      %1331 = vmatprep.subr.mxu0 0.0
      %1332 = vmatpush1.msra.mxu0 0.0
      %1333 = vmatprep.subr.mxu0 0.0
      %1334 = vmatpush1.msra.mxu0 0.0
      %1335 = vmatprep.subr.mxu0 0.0
      %1336 = vmatpush1.msra.mxu0 0.0
      %1337 = vmatprep.subr.mxu0 0.0
      %1338 = vmatpush1.msra.mxu0 0.0
      %1339 = vmatprep.subr.mxu0 0.0
      %1340 = vmatpush1.msra.mxu0 0.0
      %1341 = vmatprep.subr.mxu0 0.0
      %1342 = vmatpush1.msra.mxu0 0.0
      %1343 = vmatprep.subr.mxu0 0.0
      %1344 = vmatpush1.msra.mxu0 0.0
      %1345 = vmatprep.subr.mxu0 0.0
      %1346 = vmatpush1.msra.mxu0 0.0
      %1347 = vmatprep.mubr.f32.mxu0 0.0
      %1348 = vmatmul.mubr.f32.gmra.mrb[0].mxu0 %v1195
      %v1349 = vpop.f32.mrb[0].mxu0
      %v1350 = vadd.f32 0.0, %v1349
      %v1351 = vpop.f32.mrb[0].mxu0
      %1352 = vmatprep.mubr.f32.mxu0 0.0
      %1353 = vmatmul.mubr.f32.gmra.mrb[0].mxu0 %v1198
      %v1354 = vpop.f32.mrb[0].mxu0
      %v1355 = vadd.f32 0.0, %v1354
      %v1356 = vpop.f32.mrb[0].mxu0
      %1357 = vdwg.mxu0
      %v1358 = vmax.f32 %v1267, %v959
      %v1359 = vmax.f32 %v1272, %v961
      %v1360 = vmax.f32 %v1358, %v1350
      %v1361 = vmax.f32 %v1359, %v1355
      %v1363 = vsel %vm1193, %v1189, 0
      %v1366 = vsel %vm1193, %v1190, 0
      %1368 = vmatprep.subr.mxu0 0.0
      %1369 = vmatpush1.msra.mxu0 %v1360
      %1370 = vmatprep.subr.mxu0 0.0
      %1371 = vmatpush1.msra.mxu0 %v1361
      %1372 = vmatprep.subr.mxu0 0.0
      %1373 = vmatpush1.msra.mxu0 0.0
      %1374 = vmatprep.subr.mxu0 0.0
      %1375 = vmatpush1.msra.mxu0 0.0
      %1376 = vmatprep.subr.mxu0 0.0
      %1377 = vmatpush1.msra.mxu0 0.0
      %1378 = vmatprep.subr.mxu0 0.0
      %1379 = vmatpush1.msra.mxu0 0.0
      %1380 = vmatprep.subr.mxu0 0.0
      %1381 = vmatpush1.msra.mxu0 0.0
      %1382 = vmatprep.subr.mxu0 0.0
      %1383 = vmatpush1.msra.mxu0 0.0
      %1384 = vmatprep.subr.mxu0 0.0
      %1385 = vmatpush1.msra.mxu0 0.0
      %1386 = vmatprep.subr.mxu0 0.0
      %1387 = vmatpush1.msra.mxu0 0.0
      %1388 = vmatprep.subr.mxu0 0.0
      %1389 = vmatpush1.msra.mxu0 0.0
      %1390 = vmatprep.subr.mxu0 0.0
      %1391 = vmatpush1.msra.mxu0 0.0
      %1392 = vmatprep.subr.mxu0 0.0
      %1393 = vmatpush1.msra.mxu0 0.0
      %1394 = vmatprep.subr.mxu0 0.0
      %1395 = vmatpush1.msra.mxu0 0.0
      %1396 = vmatprep.subr.mxu0 0.0
      %1397 = vmatpush1.msra.mxu0 0.0
      %1398 = vmatprep.subr.mxu0 0.0
      %1399 = vmatpush1.msra.mxu0 0.0
      %1400 = vmatprep.subr.mxu0 0.0
      %1401 = vmatpush1.msra.mxu0 0.0
      %1402 = vmatprep.subr.mxu0 0.0
      %1403 = vmatpush1.msra.mxu0 0.0
      %1404 = vmatprep.subr.mxu0 0.0
      %1405 = vmatpush1.msra.mxu0 0.0
      %1406 = vmatprep.subr.mxu0 0.0
      %1407 = vmatpush1.msra.mxu0 0.0
      %1408 = vmatprep.subr.mxu0 0.0
      %1409 = vmatpush1.msra.mxu0 0.0
      %1410 = vmatprep.subr.mxu0 0.0
      %1411 = vmatpush1.msra.mxu0 0.0
      %1412 = vmatprep.subr.mxu0 0.0
      %1413 = vmatpush1.msra.mxu0 0.0
      %1414 = vmatprep.subr.mxu0 0.0
      %1415 = vmatpush1.msra.mxu0 0.0
      %1416 = vmatprep.subr.mxu0 0.0
      %1417 = vmatpush1.msra.mxu0 0.0
      %1418 = vmatprep.subr.mxu0 0.0
      %1419 = vmatpush1.msra.mxu0 0.0
      %1420 = vmatprep.subr.mxu0 0.0
      %1421 = vmatpush1.msra.mxu0 0.0
      %1422 = vmatprep.subr.mxu0 0.0
      %1423 = vmatpush1.msra.mxu0 0.0
      %1424 = vmatprep.subr.mxu0 0.0
      %1425 = vmatpush1.msra.mxu0 0.0
      %1426 = vmatprep.subr.mxu0 0.0
      %1427 = vmatpush1.msra.mxu0 0.0
      %1428 = vmatprep.subr.mxu0 0.0
      %1429 = vmatpush1.msra.mxu0 0.0
      %1430 = vmatprep.subr.mxu0 0.0
      %1431 = vmatpush1.msra.mxu0 0.0
      %1432 = vmatprep.mubr.f32.mxu0 0.0
      %1433 = vmatmul.mubr.f32.gmra.mrb[0].mxu0 %v1363
      %v1434 = vpop.f32.mrb[0].mxu0
      %v1435 = vadd.f32 0.0, %v1434
      %v1436 = vpop.f32.mrb[0].mxu0
      %1437 = vmatprep.mubr.f32.mxu0 0.0
      %1438 = vmatmul.mubr.f32.gmra.mrb[0].mxu0 %v1366
      %v1439 = vpop.f32.mrb[0].mxu0
      %v1440 = vadd.f32 0.0, %v1439
      %v1441 = vpop.f32.mrb[0].mxu0
      %1442 = vdwg.mxu0
      %v1444 = vsel %vm1193, %v1191, 0
      %v1447 = vsel %vm1193, %v1192, 0
      %1449 = vmatprep.subr.mxu0 0.0
      %1450 = vmatpush1.msra.mxu0 %v1360
      %1451 = vmatprep.subr.mxu0 0.0
      %1452 = vmatpush1.msra.mxu0 %v1361
      %1453 = vmatprep.subr.mxu0 0.0
      %1454 = vmatpush1.msra.mxu0 0.0
      %1455 = vmatprep.subr.mxu0 0.0
      %1456 = vmatpush1.msra.mxu0 0.0
      %1457 = vmatprep.subr.mxu0 0.0
      %1458 = vmatpush1.msra.mxu0 0.0
      %1459 = vmatprep.subr.mxu0 0.0
      %1460 = vmatpush1.msra.mxu0 0.0
      %1461 = vmatprep.subr.mxu0 0.0
      %1462 = vmatpush1.msra.mxu0 0.0
      %1463 = vmatprep.subr.mxu0 0.0
      %1464 = vmatpush1.msra.mxu0 0.0
      %1465 = vmatprep.subr.mxu0 0.0
      %1466 = vmatpush1.msra.mxu0 0.0
      %1467 = vmatprep.subr.mxu0 0.0
      %1468 = vmatpush1.msra.mxu0 0.0
      %1469 = vmatprep.subr.mxu0 0.0
      %1470 = vmatpush1.msra.mxu0 0.0
      %1471 = vmatprep.subr.mxu0 0.0
      %1472 = vmatpush1.msra.mxu0 0.0
      %1473 = vmatprep.subr.mxu0 0.0
      %1474 = vmatpush1.msra.mxu0 0.0
      %1475 = vmatprep.subr.mxu0 0.0
      %1476 = vmatpush1.msra.mxu0 0.0
      %1477 = vmatprep.subr.mxu0 0.0
      %1478 = vmatpush1.msra.mxu0 0.0
      %1479 = vmatprep.subr.mxu0 0.0
      %1480 = vmatpush1.msra.mxu0 0.0
      %1481 = vmatprep.subr.mxu0 0.0
      %1482 = vmatpush1.msra.mxu0 0.0
      %1483 = vmatprep.subr.mxu0 0.0
      %1484 = vmatpush1.msra.mxu0 0.0
      %1485 = vmatprep.subr.mxu0 0.0
      %1486 = vmatpush1.msra.mxu0 0.0
      %1487 = vmatprep.subr.mxu0 0.0
      %1488 = vmatpush1.msra.mxu0 0.0
      %1489 = vmatprep.subr.mxu0 0.0
      %1490 = vmatpush1.msra.mxu0 0.0
      %1491 = vmatprep.subr.mxu0 0.0
      %1492 = vmatpush1.msra.mxu0 0.0
      %1493 = vmatprep.subr.mxu0 0.0
      %1494 = vmatpush1.msra.mxu0 0.0
      %1495 = vmatprep.subr.mxu0 0.0
      %1496 = vmatpush1.msra.mxu0 0.0
      %1497 = vmatprep.subr.mxu0 0.0
      %1498 = vmatpush1.msra.mxu0 0.0
      %1499 = vmatprep.subr.mxu0 0.0
      %1500 = vmatpush1.msra.mxu0 0.0
      %1501 = vmatprep.subr.mxu0 0.0
      %1502 = vmatpush1.msra.mxu0 0.0
      %1503 = vmatprep.subr.mxu0 0.0
      %1504 = vmatpush1.msra.mxu0 0.0
      %1505 = vmatprep.subr.mxu0 0.0
      %1506 = vmatpush1.msra.mxu0 0.0
      %1507 = vmatprep.subr.mxu0 0.0
      %1508 = vmatpush1.msra.mxu0 0.0
      %1509 = vmatprep.subr.mxu0 0.0
      %1510 = vmatpush1.msra.mxu0 0.0
      %1511 = vmatprep.subr.mxu0 0.0
      %1512 = vmatpush1.msra.mxu0 0.0
      %1513 = vmatprep.mubr.f32.mxu0 0.0
      %1514 = vmatmul.mubr.f32.gmra.mrb[0].mxu0 %v1444
      %v1515 = vpop.f32.mrb[0].mxu0
      %v1516 = vadd.f32 0.0, %v1515
      %v1517 = vpop.f32.mrb[0].mxu0
      %1518 = vmatprep.mubr.f32.mxu0 0.0
      %1519 = vmatmul.mubr.f32.gmra.mrb[0].mxu0 %v1447
      %v1520 = vpop.f32.mrb[0].mxu0
      %v1521 = vadd.f32 0.0, %v1520
      %v1522 = vpop.f32.mrb[0].mxu0
      %1523 = vdwg.mxu0
      %v1524 = vmax.f32 %v1435, %v1360
      %v1525 = vmax.f32 %v1440, %v1361
      %v1526 = vmax.f32 %v1524, %v1516
      %v1527 = vmax.f32 %v1525, %v1521
      %v1528 = vsub.f32 %v1526, %v959
      %v1529 = vsub.f32 %v1527, %v961
      %v1531 = vsel %vm1193, %v1184, 0
      %v1534 = vsel %vm1193, %v1186, 0
      %1536 = vmatprep.subr.mxu0 0.0
      %1537 = vmatpush1.msra.mxu0 %v1187
      %1538 = vmatprep.subr.mxu0 0.0
      %1539 = vmatpush1.msra.mxu0 %v1188
      %1540 = vmatprep.subr.mxu0 0.0
      %1541 = vmatpush1.msra.mxu0 0.0
      %1542 = vmatprep.subr.mxu0 0.0
      %1543 = vmatpush1.msra.mxu0 0.0
      %1544 = vmatprep.subr.mxu0 0.0
      %1545 = vmatpush1.msra.mxu0 0.0
      %1546 = vmatprep.subr.mxu0 0.0
      %1547 = vmatpush1.msra.mxu0 0.0
      %1548 = vmatprep.subr.mxu0 0.0
      %1549 = vmatpush1.msra.mxu0 0.0
      %1550 = vmatprep.subr.mxu0 0.0
      %1551 = vmatpush1.msra.mxu0 0.0
      %1552 = vmatprep.subr.mxu0 0.0
      %1553 = vmatpush1.msra.mxu0 0.0
      %1554 = vmatprep.subr.mxu0 0.0
      %1555 = vmatpush1.msra.mxu0 0.0
      %1556 = vmatprep.subr.mxu0 0.0
      %1557 = vmatpush1.msra.mxu0 0.0
      %1558 = vmatprep.subr.mxu0 0.0
      %1559 = vmatpush1.msra.mxu0 0.0
      %1560 = vmatprep.subr.mxu0 0.0
      %1561 = vmatpush1.msra.mxu0 0.0
      %1562 = vmatprep.subr.mxu0 0.0
      %1563 = vmatpush1.msra.mxu0 0.0
      %1564 = vmatprep.subr.mxu0 0.0
      %1565 = vmatpush1.msra.mxu0 0.0
      %1566 = vmatprep.subr.mxu0 0.0
      %1567 = vmatpush1.msra.mxu0 0.0
      %1568 = vmatprep.subr.mxu0 0.0
      %1569 = vmatpush1.msra.mxu0 0.0
      %1570 = vmatprep.subr.mxu0 0.0
      %1571 = vmatpush1.msra.mxu0 0.0
      %1572 = vmatprep.subr.mxu0 0.0
      %1573 = vmatpush1.msra.mxu0 0.0
      %1574 = vmatprep.subr.mxu0 0.0
      %1575 = vmatpush1.msra.mxu0 0.0
      %1576 = vmatprep.subr.mxu0 0.0
      %1577 = vmatpush1.msra.mxu0 0.0
      %1578 = vmatprep.subr.mxu0 0.0
      %1579 = vmatpush1.msra.mxu0 0.0
      %1580 = vmatprep.subr.mxu0 0.0
      %1581 = vmatpush1.msra.mxu0 0.0
      %1582 = vmatprep.subr.mxu0 0.0
      %1583 = vmatpush1.msra.mxu0 0.0
      %1584 = vmatprep.subr.mxu0 0.0
      %1585 = vmatpush1.msra.mxu0 0.0
      %1586 = vmatprep.subr.mxu0 0.0
      %1587 = vmatpush1.msra.mxu0 0.0
      %1588 = vmatprep.subr.mxu0 0.0
      %1589 = vmatpush1.msra.mxu0 0.0
      %1590 = vmatprep.subr.mxu0 0.0
      %1591 = vmatpush1.msra.mxu0 0.0
      %1592 = vmatprep.subr.mxu0 0.0
      %1593 = vmatpush1.msra.mxu0 0.0
      %1594 = vmatprep.subr.mxu0 0.0
      %1595 = vmatpush1.msra.mxu0 0.0
      %1596 = vmatprep.subr.mxu0 0.0
      %1597 = vmatpush1.msra.mxu0 0.0
      %1598 = vmatprep.subr.mxu0 0.0
      %1599 = vmatpush1.msra.mxu0 0.0
      %1600 = vmatprep.mubr.f32.mxu0 0.0
      %1601 = vmatmul.mubr.f32.gmra.mrb[0].mxu0 %v1531
      %v1602 = vpop.f32.mrb[0].mxu0
      %v1603 = vadd.f32 0.0, %v1602
      %v1604 = vpop.f32.mrb[0].mxu0
      %1605 = vmatprep.mubr.f32.mxu0 0.0
      %1606 = vmatmul.mubr.f32.gmra.mrb[0].mxu0 %v1534
      %v1607 = vpop.f32.mrb[0].mxu0
      %v1608 = vadd.f32 0.0, %v1607
      %v1609 = vpop.f32.mrb[0].mxu0
      %1610 = vdwg.mxu0
      %1611 = vmatprep.subr.mxu0 0.0
      %1612 = vmatpush1.msra.mxu0 %v1278
      %1613 = vmatprep.subr.mxu0 0.0
      %1614 = vmatpush1.msra.mxu0 %v1280
      %1615 = vmatprep.subr.mxu0 0.0
      %1616 = vmatpush1.msra.mxu0 0.0
      %1617 = vmatprep.subr.mxu0 0.0
      %1618 = vmatpush1.msra.mxu0 0.0
      %1619 = vmatprep.subr.mxu0 0.0
      %1620 = vmatpush1.msra.mxu0 0.0
      %1621 = vmatprep.subr.mxu0 0.0
      %1622 = vmatpush1.msra.mxu0 0.0
      %1623 = vmatprep.subr.mxu0 0.0
      %1624 = vmatpush1.msra.mxu0 0.0
      %1625 = vmatprep.subr.mxu0 0.0
      %1626 = vmatpush1.msra.mxu0 0.0
      %1627 = vmatprep.subr.mxu0 0.0
      %1628 = vmatpush1.msra.mxu0 0.0
      %1629 = vmatprep.subr.mxu0 0.0
      %1630 = vmatpush1.msra.mxu0 0.0
      %1631 = vmatprep.subr.mxu0 0.0
      %1632 = vmatpush1.msra.mxu0 0.0
      %1633 = vmatprep.subr.mxu0 0.0
      %1634 = vmatpush1.msra.mxu0 0.0
      %1635 = vmatprep.subr.mxu0 0.0
      %1636 = vmatpush1.msra.mxu0 0.0
      %1637 = vmatprep.subr.mxu0 0.0
      %1638 = vmatpush1.msra.mxu0 0.0
      %1639 = vmatprep.subr.mxu0 0.0
      %1640 = vmatpush1.msra.mxu0 0.0
      %1641 = vmatprep.subr.mxu0 0.0
      %1642 = vmatpush1.msra.mxu0 0.0
      %1643 = vmatprep.subr.mxu0 0.0
      %1644 = vmatpush1.msra.mxu0 0.0
      %1645 = vmatprep.subr.mxu0 0.0
      %1646 = vmatpush1.msra.mxu0 0.0
      %1647 = vmatprep.subr.mxu0 0.0
      %1648 = vmatpush1.msra.mxu0 0.0
      %1649 = vmatprep.subr.mxu0 0.0
      %1650 = vmatpush1.msra.mxu0 0.0
      %1651 = vmatprep.subr.mxu0 0.0
      %1652 = vmatpush1.msra.mxu0 0.0
      %1653 = vmatprep.subr.mxu0 0.0
      %1654 = vmatpush1.msra.mxu0 0.0
      %1655 = vmatprep.subr.mxu0 0.0
      %1656 = vmatpush1.msra.mxu0 0.0
      %1657 = vmatprep.subr.mxu0 0.0
      %1658 = vmatpush1.msra.mxu0 0.0
      %1659 = vmatprep.subr.mxu0 0.0
      %1660 = vmatpush1.msra.mxu0 0.0
      %1661 = vmatprep.subr.mxu0 0.0
      %1662 = vmatpush1.msra.mxu0 0.0
      %1663 = vmatprep.subr.mxu0 0.0
      %1664 = vmatpush1.msra.mxu0 0.0
      %1665 = vmatprep.subr.mxu0 0.0
      %1666 = vmatpush1.msra.mxu0 0.0
      %1667 = vmatprep.subr.mxu0 0.0
      %1668 = vmatpush1.msra.mxu0 0.0
      %1669 = vmatprep.subr.mxu0 0.0
      %1670 = vmatpush1.msra.mxu0 0.0
      %1671 = vmatprep.subr.mxu0 0.0
      %1672 = vmatpush1.msra.mxu0 0.0
      %1673 = vmatprep.subr.mxu0 0.0
      %1674 = vmatpush1.msra.mxu0 0.0
      %1675 = vmatprep.mubr.f32.mxu0 0.0
      %1676 = vmatmul.mubr.f32.gmra.mrb[0].mxu0 %v1531
      %v1677 = vpop.f32.mrb[0].mxu0
      %v1678 = vadd.f32 0.0, %v1677
      %v1679 = vpop.f32.mrb[0].mxu0
      %1680 = vmatprep.mubr.f32.mxu0 0.0
      %1681 = vmatmul.mubr.f32.gmra.mrb[0].mxu0 %v1534
      %v1682 = vpop.f32.mrb[0].mxu0
      %v1683 = vadd.f32 0.0, %v1682
      %v1684 = vpop.f32.mrb[0].mxu0
      %1685 = vdwg.mxu0
      %v1686 = vmax.f32 %v1603, %v1184
      %v1687 = vmax.f32 %v1608, %v1186
      %v1688 = vmax.f32 %v1686, %v1678
      %v1689 = vmax.f32 %v1687, %v1683
      %1690 = vmatprep.subr.mxu0 0.0
      %1691 = vmatpush1.msra.mxu0 %v1688
      %1692 = vmatprep.subr.mxu0 0.0
      %1693 = vmatpush1.msra.mxu0 %v1689
      %1694 = vmatprep.subr.mxu0 0.0
      %1695 = vmatpush1.msra.mxu0 0.0
      %1696 = vmatprep.subr.mxu0 0.0
      %1697 = vmatpush1.msra.mxu0 0.0
      %1698 = vmatprep.subr.mxu0 0.0
      %1699 = vmatpush1.msra.mxu0 0.0
      %1700 = vmatprep.subr.mxu0 0.0
      %1701 = vmatpush1.msra.mxu0 0.0
      %1702 = vmatprep.subr.mxu0 0.0
      %1703 = vmatpush1.msra.mxu0 0.0
      %1704 = vmatprep.subr.mxu0 0.0
      %1705 = vmatpush1.msra.mxu0 0.0
      %1706 = vmatprep.subr.mxu0 0.0
      %1707 = vmatpush1.msra.mxu0 0.0
      %1708 = vmatprep.subr.mxu0 0.0
      %1709 = vmatpush1.msra.mxu0 0.0
      %1710 = vmatprep.subr.mxu0 0.0
      %1711 = vmatpush1.msra.mxu0 0.0
      %1712 = vmatprep.subr.mxu0 0.0
      %1713 = vmatpush1.msra.mxu0 0.0
      %1714 = vmatprep.subr.mxu0 0.0
      %1715 = vmatpush1.msra.mxu0 0.0
      %1716 = vmatprep.subr.mxu0 0.0
      %1717 = vmatpush1.msra.mxu0 0.0
      %1718 = vmatprep.subr.mxu0 0.0
      %1719 = vmatpush1.msra.mxu0 0.0
      %1720 = vmatprep.subr.mxu0 0.0
      %1721 = vmatpush1.msra.mxu0 0.0
      %1722 = vmatprep.subr.mxu0 0.0
      %1723 = vmatpush1.msra.mxu0 0.0
      %1724 = vmatprep.subr.mxu0 0.0
      %1725 = vmatpush1.msra.mxu0 0.0
      %1726 = vmatprep.subr.mxu0 0.0
      %1727 = vmatpush1.msra.mxu0 0.0
      %1728 = vmatprep.subr.mxu0 0.0
      %1729 = vmatpush1.msra.mxu0 0.0
      %1730 = vmatprep.subr.mxu0 0.0
      %1731 = vmatpush1.msra.mxu0 0.0
      %1732 = vmatprep.subr.mxu0 0.0
      %1733 = vmatpush1.msra.mxu0 0.0
      %1734 = vmatprep.subr.mxu0 0.0
      %1735 = vmatpush1.msra.mxu0 0.0
      %1736 = vmatprep.subr.mxu0 0.0
      %1737 = vmatpush1.msra.mxu0 0.0
      %1738 = vmatprep.subr.mxu0 0.0
      %1739 = vmatpush1.msra.mxu0 0.0
      %1740 = vmatprep.subr.mxu0 0.0
      %1741 = vmatpush1.msra.mxu0 0.0
      %1742 = vmatprep.subr.mxu0 0.0
      %1743 = vmatpush1.msra.mxu0 0.0
      %1744 = vmatprep.subr.mxu0 0.0
      %1745 = vmatpush1.msra.mxu0 0.0
      %1746 = vmatprep.subr.mxu0 0.0
      %1747 = vmatpush1.msra.mxu0 0.0
      %1748 = vmatprep.subr.mxu0 0.0
      %1749 = vmatpush1.msra.mxu0 0.0
      %1750 = vmatprep.subr.mxu0 0.0
      %1751 = vmatpush1.msra.mxu0 0.0
      %1752 = vmatprep.subr.mxu0 0.0
      %1753 = vmatpush1.msra.mxu0 0.0
      %1754 = vmatprep.mubr.f32.mxu0 0.0
      %1755 = vmatmul.mubr.f32.gmra.mrb[0].mxu0 %v1363
      %v1756 = vpop.f32.mrb[0].mxu0
      %v1757 = vadd.f32 0.0, %v1756
      %v1758 = vpop.f32.mrb[0].mxu0
      %1759 = vmatprep.mubr.f32.mxu0 0.0
      %1760 = vmatmul.mubr.f32.gmra.mrb[0].mxu0 %v1366
      %v1761 = vpop.f32.mrb[0].mxu0
      %v1762 = vadd.f32 0.0, %v1761
      %v1763 = vpop.f32.mrb[0].mxu0
      %1764 = vdwg.mxu0
      %1765 = vmatprep.subr.mxu0 0.0
      %1766 = vmatpush1.msra.mxu0 %v1688
      %1767 = vmatprep.subr.mxu0 0.0
      %1768 = vmatpush1.msra.mxu0 %v1689
      %1769 = vmatprep.subr.mxu0 0.0
      %1770 = vmatpush1.msra.mxu0 0.0
      %1771 = vmatprep.subr.mxu0 0.0
      %1772 = vmatpush1.msra.mxu0 0.0
      %1773 = vmatprep.subr.mxu0 0.0
      %1774 = vmatpush1.msra.mxu0 0.0
      %1775 = vmatprep.subr.mxu0 0.0
      %1776 = vmatpush1.msra.mxu0 0.0
      %1777 = vmatprep.subr.mxu0 0.0
      %1778 = vmatpush1.msra.mxu0 0.0
      %1779 = vmatprep.subr.mxu0 0.0
      %1780 = vmatpush1.msra.mxu0 0.0
      %1781 = vmatprep.subr.mxu0 0.0
      %1782 = vmatpush1.msra.mxu0 0.0
      %1783 = vmatprep.subr.mxu0 0.0
      %1784 = vmatpush1.msra.mxu0 0.0
      %1785 = vmatprep.subr.mxu0 0.0
      %1786 = vmatpush1.msra.mxu0 0.0
      %1787 = vmatprep.subr.mxu0 0.0
      %1788 = vmatpush1.msra.mxu0 0.0
      %1789 = vmatprep.subr.mxu0 0.0
      %1790 = vmatpush1.msra.mxu0 0.0
      %1791 = vmatprep.subr.mxu0 0.0
      %1792 = vmatpush1.msra.mxu0 0.0
      %1793 = vmatprep.subr.mxu0 0.0
      %1794 = vmatpush1.msra.mxu0 0.0
      %1795 = vmatprep.subr.mxu0 0.0
      %1796 = vmatpush1.msra.mxu0 0.0
      %1797 = vmatprep.subr.mxu0 0.0
      %1798 = vmatpush1.msra.mxu0 0.0
      %1799 = vmatprep.subr.mxu0 0.0
      %1800 = vmatpush1.msra.mxu0 0.0
      %1801 = vmatprep.subr.mxu0 0.0
      %1802 = vmatpush1.msra.mxu0 0.0
      %1803 = vmatprep.subr.mxu0 0.0
      %1804 = vmatpush1.msra.mxu0 0.0
      %1805 = vmatprep.subr.mxu0 0.0
      %1806 = vmatpush1.msra.mxu0 0.0
      %1807 = vmatprep.subr.mxu0 0.0
      %1808 = vmatpush1.msra.mxu0 0.0
      %1809 = vmatprep.subr.mxu0 0.0
      %1810 = vmatpush1.msra.mxu0 0.0
      %1811 = vmatprep.subr.mxu0 0.0
      %1812 = vmatpush1.msra.mxu0 0.0
      %1813 = vmatprep.subr.mxu0 0.0
      %1814 = vmatpush1.msra.mxu0 0.0
      %1815 = vmatprep.subr.mxu0 0.0
      %1816 = vmatpush1.msra.mxu0 0.0
      %1817 = vmatprep.subr.mxu0 0.0
      %1818 = vmatpush1.msra.mxu0 0.0
      %1819 = vmatprep.subr.mxu0 0.0
      %1820 = vmatpush1.msra.mxu0 0.0
      %1821 = vmatprep.subr.mxu0 0.0
      %1822 = vmatpush1.msra.mxu0 0.0
      %1823 = vmatprep.subr.mxu0 0.0
      %1824 = vmatpush1.msra.mxu0 0.0
      %1825 = vmatprep.subr.mxu0 0.0
      %1826 = vmatpush1.msra.mxu0 0.0
      %1827 = vmatprep.subr.mxu0 0.0
      %1828 = vmatpush1.msra.mxu0 0.0
      %1829 = vmatprep.mubr.f32.mxu0 0.0
      %1830 = vmatmul.mubr.f32.gmra.mrb[0].mxu0 %v1444
      %v1831 = vpop.f32.mrb[0].mxu0
      %v1832 = vadd.f32 0.0, %v1831
      %v1833 = vpop.f32.mrb[0].mxu0
      %1834 = vmatprep.mubr.f32.mxu0 0.0
      %1835 = vmatmul.mubr.f32.gmra.mrb[0].mxu0 %v1447
      %v1836 = vpop.f32.mrb[0].mxu0
      %v1837 = vadd.f32 0.0, %v1836
      %v1838 = vpop.f32.mrb[0].mxu0
      %1839 = vdwg.mxu0
      %v1840 = vmax.f32 %v1757, %v1688
      %v1841 = vmax.f32 %v1762, %v1689
      %v1842 = vmax.f32 %v1840, %v1832
      %v1843 = vmax.f32 %v1841, %v1837
      %v1844 = vsub.f32 %v1842, %v1184
      %v1845 = vsub.f32 %v1843, %v1186
      %v1846 = vadd.f32 %v1528, %v1844
      %v1847 = vadd.f32 %v1529, %v1845
      %v1848 = vadd.f32 %v1846, 1.0
      %v1849 = vadd.f32 %v1847, 1.0
      %v1850 = vld [vmem:[%s6] sm:$0xff]
      %v1851 = vld [vmem:[%s6 + $0x8] sm:$0xff]
      %v1852 = vld [vmem:[%s6 + $0x10] sm:$0xff]
      %v1853 = vld [vmem:[%s6 + $0x18] sm:$0xff]
      %v1854 = vld [vmem:[%s6 + $0x20] sm:$0xff]
      %v1855 = vld [vmem:[%s6 + $0x28] sm:$0xff]
      %v1856 = vld [vmem:[%s6 + $0x30] sm:$0xff]
      %v1857 = vld [vmem:[%s6 + $0x38] sm:$0xff]
      %v1859 = vsel %vm1193, %v1848, 0
      %v1862 = vsel %vm1193, %v1849, 0
      %1864 = vmatprep.subr.mxu0 %v1851
      %1865 = vmatpush1.msra.mxu0 %v1850
      %1866 = vmatprep.subr.mxu0 %v1855
      %1867 = vmatpush1.msra.mxu0 %v1854
      %1868 = vmatprep.subr.mxu0 0.0
      %1869 = vmatpush1.msra.mxu0 0.0
      %1870 = vmatprep.subr.mxu0 0.0
      %1871 = vmatpush1.msra.mxu0 0.0
      %1872 = vmatprep.subr.mxu0 0.0
      %1873 = vmatpush1.msra.mxu0 0.0
      %1874 = vmatprep.subr.mxu0 0.0
      %1875 = vmatpush1.msra.mxu0 0.0
      %1876 = vmatprep.subr.mxu0 0.0
      %1877 = vmatpush1.msra.mxu0 0.0
      %1878 = vmatprep.subr.mxu0 0.0
      %1879 = vmatpush1.msra.mxu0 0.0
      %1880 = vmatprep.subr.mxu0 0.0
      %1881 = vmatpush1.msra.mxu0 0.0
      %1882 = vmatprep.subr.mxu0 0.0
      %1883 = vmatpush1.msra.mxu0 0.0
      %1884 = vmatprep.subr.mxu0 0.0
      %1885 = vmatpush1.msra.mxu0 0.0
      %1886 = vmatprep.subr.mxu0 0.0
      %1887 = vmatpush1.msra.mxu0 0.0
      %1888 = vmatprep.subr.mxu0 0.0
      %1889 = vmatpush1.msra.mxu0 0.0
      %1890 = vmatprep.subr.mxu0 0.0
      %1891 = vmatpush1.msra.mxu0 0.0
      %1892 = vmatprep.subr.mxu0 0.0
      %1893 = vmatpush1.msra.mxu0 0.0
      %1894 = vmatprep.subr.mxu0 0.0
      %1895 = vmatpush1.msra.mxu0 0.0
      %1896 = vmatprep.subr.mxu0 0.0
      %1897 = vmatpush1.msra.mxu0 0.0
      %1898 = vmatprep.subr.mxu0 0.0
      %1899 = vmatpush1.msra.mxu0 0.0
      %1900 = vmatprep.subr.mxu0 0.0
      %1901 = vmatpush1.msra.mxu0 0.0
      %1902 = vmatprep.subr.mxu0 0.0
      %1903 = vmatpush1.msra.mxu0 0.0
      %1904 = vmatprep.subr.mxu0 0.0
      %1905 = vmatpush1.msra.mxu0 0.0
      %1906 = vmatprep.subr.mxu0 0.0
      %1907 = vmatpush1.msra.mxu0 0.0
      %1908 = vmatprep.subr.mxu0 0.0
      %1909 = vmatpush1.msra.mxu0 0.0
      %1910 = vmatprep.subr.mxu0 0.0
      %1911 = vmatpush1.msra.mxu0 0.0
      %1912 = vmatprep.subr.mxu0 0.0
      %1913 = vmatpush1.msra.mxu0 0.0
      %1914 = vmatprep.subr.mxu0 0.0
      %1915 = vmatpush1.msra.mxu0 0.0
      %1916 = vmatprep.subr.mxu0 0.0
      %1917 = vmatpush1.msra.mxu0 0.0
      %1918 = vmatprep.subr.mxu0 0.0
      %1919 = vmatpush1.msra.mxu0 0.0
      %1920 = vmatprep.subr.mxu0 0.0
      %1921 = vmatpush1.msra.mxu0 0.0
      %1922 = vmatprep.subr.mxu0 0.0
      %1923 = vmatpush1.msra.mxu0 0.0
      %1924 = vmatprep.subr.mxu0 0.0
      %1925 = vmatpush1.msra.mxu0 0.0
      %1926 = vmatprep.subr.mxu0 0.0
      %1927 = vmatpush1.msra.mxu0 0.0
      %1928 = vmatprep.mubr.f32.mxu0 0.0
      %1929 = vmatmul.mubr.f32.gmra.mrb[0].mxu0 %v1859
      %v1930 = vpop.f32.mrb[0].mxu0
      %v1931 = vadd.f32 0.0, %v1930
      %v1932 = vpop.f32.mrb[0].mxu0
      %v1933 = vadd.f32 0.0, %v1932
      %1934 = vmatprep.mubr.f32.mxu0 0.0
      %1935 = vmatmul.mubr.f32.gmra.mrb[0].mxu0 %v1862
      %v1936 = vpop.f32.mrb[0].mxu0
      %v1937 = vadd.f32 0.0, %v1936
      %v1938 = vpop.f32.mrb[0].mxu0
      %v1939 = vadd.f32 0.0, %v1938
      %1940 = vdwg.mxu0
      %1941 = vmatprep.subr.mxu0 %v1853
      %1942 = vmatpush1.msra.mxu0 %v1852
      %1943 = vmatprep.subr.mxu0 %v1857
      %1944 = vmatpush1.msra.mxu0 %v1856
      %1945 = vmatprep.subr.mxu0 0.0
      %1946 = vmatpush1.msra.mxu0 0.0
      %1947 = vmatprep.subr.mxu0 0.0
      %1948 = vmatpush1.msra.mxu0 0.0
      %1949 = vmatprep.subr.mxu0 0.0
      %1950 = vmatpush1.msra.mxu0 0.0
      %1951 = vmatprep.subr.mxu0 0.0
      %1952 = vmatpush1.msra.mxu0 0.0
      %1953 = vmatprep.subr.mxu0 0.0
      %1954 = vmatpush1.msra.mxu0 0.0
      %1955 = vmatprep.subr.mxu0 0.0
      %1956 = vmatpush1.msra.mxu0 0.0
      %1957 = vmatprep.subr.mxu0 0.0
      %1958 = vmatpush1.msra.mxu0 0.0
      %1959 = vmatprep.subr.mxu0 0.0
      %1960 = vmatpush1.msra.mxu0 0.0
      %1961 = vmatprep.subr.mxu0 0.0
      %1962 = vmatpush1.msra.mxu0 0.0
      %1963 = vmatprep.subr.mxu0 0.0
      %1964 = vmatpush1.msra.mxu0 0.0
      %1965 = vmatprep.subr.mxu0 0.0
      %1966 = vmatpush1.msra.mxu0 0.0
      %1967 = vmatprep.subr.mxu0 0.0
      %1968 = vmatpush1.msra.mxu0 0.0
      %1969 = vmatprep.subr.mxu0 0.0
      %1970 = vmatpush1.msra.mxu0 0.0
      %1971 = vmatprep.subr.mxu0 0.0
      %1972 = vmatpush1.msra.mxu0 0.0
      %1973 = vmatprep.subr.mxu0 0.0
      %1974 = vmatpush1.msra.mxu0 0.0
      %1975 = vmatprep.subr.mxu0 0.0
      %1976 = vmatpush1.msra.mxu0 0.0
      %1977 = vmatprep.subr.mxu0 0.0
      %1978 = vmatpush1.msra.mxu0 0.0
      %1979 = vmatprep.subr.mxu0 0.0
      %1980 = vmatpush1.msra.mxu0 0.0
      %1981 = vmatprep.subr.mxu0 0.0
      %1982 = vmatpush1.msra.mxu0 0.0
      %1983 = vmatprep.subr.mxu0 0.0
      %1984 = vmatpush1.msra.mxu0 0.0
      %1985 = vmatprep.subr.mxu0 0.0
      %1986 = vmatpush1.msra.mxu0 0.0
      %1987 = vmatprep.subr.mxu0 0.0
      %1988 = vmatpush1.msra.mxu0 0.0
      %1989 = vmatprep.subr.mxu0 0.0
      %1990 = vmatpush1.msra.mxu0 0.0
      %1991 = vmatprep.subr.mxu0 0.0
      %1992 = vmatpush1.msra.mxu0 0.0
      %1993 = vmatprep.subr.mxu0 0.0
      %1994 = vmatpush1.msra.mxu0 0.0
      %1995 = vmatprep.subr.mxu0 0.0
      %1996 = vmatpush1.msra.mxu0 0.0
      %1997 = vmatprep.subr.mxu0 0.0
      %1998 = vmatpush1.msra.mxu0 0.0
      %1999 = vmatprep.subr.mxu0 0.0
      %2000 = vmatpush1.msra.mxu0 0.0
      %2001 = vmatprep.subr.mxu0 0.0
      %2002 = vmatpush1.msra.mxu0 0.0
      %2003 = vmatprep.subr.mxu0 0.0
      %2004 = vmatpush1.msra.mxu0 0.0
      %2005 = vmatprep.mubr.f32.mxu0 0.0
      %2006 = vmatmul.mubr.f32.gmra.mrb[0].mxu0 %v1859
      %v2007 = vpop.f32.mrb[0].mxu0
      %v2008 = vadd.f32 0.0, %v2007
      %v2009 = vpop.f32.mrb[0].mxu0
      %v2010 = vadd.f32 0.0, %v2009
      %2011 = vmatprep.mubr.f32.mxu0 0.0
      %2012 = vmatmul.mubr.f32.gmra.mrb[0].mxu0 %v1862
      %v2013 = vpop.f32.mrb[0].mxu0
      %v2014 = vadd.f32 0.0, %v2013
      %v2015 = vpop.f32.mrb[0].mxu0
      %v2016 = vadd.f32 0.0, %v2015
      %2017 = vdwg.mxu0
      %v2018 = vld [vmem:[%s376] sm:$0xff]
      %v2019 = vld [vmem:[%s376 + $0x8] sm:$0xff]
      %v2020 = vld [vmem:[%s376 + $0x10] sm:$0xff]
      %v2021 = vld [vmem:[%s376 + $0x18] sm:$0xff]
      %v2022 = vld [vmem:[%s376 + $0x20] sm:$0xff]
      %v2023 = vld [vmem:[%s376 + $0x28] sm:$0xff]
      %v2024 = vld [vmem:[%s376 + $0x30] sm:$0xff]
      %v2025 = vld [vmem:[%s376 + $0x38] sm:$0xff]
      %v2026 = vmul.f32 %v2018, %v1931
      %v2027 = vmul.f32 %v2019, %v1933
      %v2028 = vmul.f32 %v2020, %v2008
      %v2029 = vmul.f32 %v2021, %v2010
      %v2030 = vmul.f32 %v2022, %v1937
      %v2031 = vmul.f32 %v2023, %v1939
      %v2032 = vmul.f32 %v2024, %v2014
      %v2033 = vmul.f32 %v2025, %v2016
      %v2034 = vpack.c.bf16 %v2030, %v2026
      %v2035 = vpack.c.bf16 %v2031, %v2027
      %v2036 = vpack.c.bf16 %v2032, %v2028
      %v2037 = vpack.c.bf16 %v2033, %v2029
      %v2042 = vunpack.c.l.b16 %v2034
      %v2043 = vunpack.c.l.b16 %v2035
      %v2044 = vunpack.c.l.b16 %v2036
      %v2045 = vunpack.c.l.b16 %v2037
      %v2046 = vunpack.c.h.b16 %v2034
      %v2047 = vunpack.c.h.b16 %v2035
      %v2048 = vunpack.c.h.b16 %v2036
      %v2049 = vunpack.c.h.b16 %v2037
      %v2050 = vpack.c.b16 %v2043, %v2042
      %v2051 = vpack.c.b16 %v2045, %v2044
      %v2052 = vpack.c.b16 %v2047, %v2046
      %v2053 = vpack.c.b16 %v2049, %v2048
      %2058 = vst [vmem:[%s399] sm:$0xff] %v2050
      %2059 = vst [vmem:[%s399 + $0x8] sm:$0xff] %v2051
      %2060 = vst [vmem:[%s399 + $0x10] sm:$0xff] %v2052
      %2061 = vst [vmem:[%s399 + $0x18] sm:$0xff] %v2053
      %p2062 = scmp.lt.s32.totalorder %s20, 1
      %s2063 = scalar_select %p2062, %s20, 1
      %s2064 = smul.addr %s2063, 8
      %s2065 = smul.addr %s2064, 4
      %s2066 = scalar_lea.vmem %s9, %s2065
      // Predicated region
      $region57: #{fgc_forward.8} parent=55 // pred_check
        %p2067 = pneg %p247
      $region58: #{fgc_forward.8} parent=55 // pred_check_branch
        %2069 = sbr.rel (%p2067) target = $region60
      $region59: #{fgc_forward.8} parent=55 // pred_region
        _
      $region60: #{fgc_forward.8} parent=55 // pred_fallthru
        _
    $region56: #{fgc_forward.8} parent=5 // pred_fallthru
      _
    %p2070 = scmp.le.s32.totalorder 2, %s15
    // Predicated region
    $region61: #{fgc_forward.8} parent=5 // pred_check
      %p2071 = pneg %p2070
    $region62: #{fgc_forward.8} parent=5 // pred_check_branch
      %2073 = sbr.rel (%p2071) target = $region64
    $region63: #{fgc_forward.8} parent=5 // pred_region
      %s2074 = ssub.s32 %s15, 2
      // Predicated region
      $region65: #{fgc_forward.8} parent=63 // pred_check
        %p2075 = pneg %p253
      $region66: #{fgc_forward.8} parent=63 // pred_check_branch
        %2077 = sbr.rel (%p2075) target = $region68
      $region67: #{fgc_forward.8} parent=63 // pred_region
        %p2078 = scmp.lt.s32.totalorder %s21, 1
        %s2079 = scalar_select %p2078, %s21, 1
        %s2080 = smul.addr %s2079, 8
        %s2081 = smul.addr %s2080, 4
        %s2082 = scalar_lea.vmem %s9, %s2081
      $region68: #{fgc_forward.8} parent=63 // pred_fallthru
        _
    $region64: #{fgc_forward.8} parent=5 // pred_fallthru
      _
  $region6: #{fgc_forward.8} parent=0 // loop_footer
    %s19 = sadd.s32 1, %s15
  $region7: #{fgc_forward.8} parent=0 // loop_footer_branch
    %14 = sbr.rel target = $region3
  $region8: #{fgc_forward.8} parent=0 // loop_exit
    _

// kernel: fgc_forward.7
$region0: #{fgc_forward.7}
  #allocation0 [shape = 'u32[]', space=smem, size = 0x4, offset = 0x4, fixed_abs, tag = 'smem constant byte address 0x4 - core index']
  #allocation1 [shape = 'u32[144,128]{1,0:T(1,128)}', space=vmem, size = 0x12000, scoped, tag = 'internal scratch']
  %s0 = inlined_call_operand.vmem [shape: bf16[2,64,3136], index: 0, kind: input, shape index: {}]
  %s1 = inlined_call_operand.vmem [shape: bf16[3136,32], index: 1, kind: input, shape index: {}]
  %s2 = inlined_call_operand.vmem [shape: f32[1,32], index: 2, kind: input, shape index: {}]
  %s3 = inlined_call_operand.vmem [shape: f32[1,32], index: 3, kind: input, shape index: {}]
  %s4 = inlined_call_operand.vmem [shape: f32[2,64,32], index: 4, kind: output, shape index: {}]
  %s5 = sld [smem:[#allocation0]]
  $region49: #{fgc_forward.7} parent=0
    _
  %s7 = ssub.s32 1, %s5
  %s8 = scalar_select 0, %s7, %s5
  loop: start=0, step=1, limit=4
  $region2: #{fgc_forward.7} parent=0 // loop_pre_header
    _
  $region3: #{fgc_forward.7} parent=0 // loop_header
    %s10 = sphi 0, %s14
    %p11 = scmp.ge.s32.totalorder %s10, 4
    %s17 = sphi 0, %s29
    %s18 = sphi 0, %s25
    %s19 = sphi 0, %s17
    %s20 = sphi 0, %s18
    %s21 = sphi 0, %s19
    %s22 = sphi 0, %s20
    %s34 = sphi 0, %s36
    %s37 = sphi 0, %s34
    %s38 = sphi 0, %s37
    %s54 = sphi 0, %s38
    %s58 = sphi 0, %s58
    %s60 = sphi 0, %s58
    %s61 = sphi 0, %s60
    %s75 = sphi 0, %s61
    %s79 = sphi 0, %s79
    %s81 = sphi 0, %s79
    %s82 = sphi 0, %s81
    %s96 = sphi 0, %s82
    %s100 = sphi 0, %s100
    %s102 = sphi 0, %s100
    %s103 = sphi 0, %s102
    %s117 = sphi 0, %s103
    %s125 = sphi 0, %s127
    %s128 = sphi 0, %s125
    %s129 = sphi 0, %s128
    %s145 = sphi 0, %s129
  $region4: #{fgc_forward.7} parent=0 // loop_header_branch
    %13 = sbr.rel (%p11) target = $region8
  $region5: #{fgc_forward.7} parent=0 // loop_body
    %s15 = ssub.s32 %s10, 1
    %s16 = ssub.s32 %s10, 2
    %s23 = sadd.s32 1, %s18
    %p24 = scmp.ge.s32.totalorder %s23, 1
    %s25 = scalar_select %p24, 0, %s23
    %s26 = sadd.s32 1, %s17
    %s27 = scalar_select %p24, %s26, %s17
    %p28 = scmp.ge.s32.totalorder %s27, 2
    %s29 = scalar_select %p28, 0, %s27
    %s30 = ssub.s32 %s17, %s29
    %s31 = ssub.s32 %s18, %s25
    %s32 = sor.u32 %s30, %s31
    %p33 = scmp.eq.s32.totalorder %s32, 0
    %s35 = sadd.s32 %s34, 1
    %s36 = scalar_select %p33, %s34, %s35
    %p39 = pneg %p33
    %p40 = scmp.eq.s32.totalorder %s10, 1
    %p41 = por %p39, %p40
    %p42 = scmp.ne.s32.totalorder %s34, %s37
    %p43 = scmp.eq.s32.totalorder %s10, 0
    %p44 = por %p42, %p43
    %p45 = scmp.ne.s32.totalorder %s34, %s37
    %p46 = scmp.eq.s32.totalorder %s15, 1
    %p47 = por %p45, %p46
    %p48 = scmp.ne.s32.totalorder %s37, %s38
    %p49 = scmp.eq.s32.totalorder %s15, 0
    %p50 = por %p48, %p49
    %p51 = scmp.ne.s32.totalorder %s37, %s38
    %p52 = scmp.eq.s32.totalorder %s16, 1
    %p53 = por %p51, %p52
    %p55 = scmp.ne.s32.totalorder %s38, %s54
    %p56 = scmp.eq.s32.totalorder %s16, 0
    %p57 = por %p55, %p56
    %s59 = sadd.s32 %s58, 1
    %p62 = scmp.eq.s32.totalorder %s10, 1
    %p63 = scmp.ne.s32.totalorder %s58, %s60
    %p64 = scmp.eq.s32.totalorder %s10, 0
    %p65 = por %p63, %p64
    %p66 = scmp.ne.s32.totalorder %s58, %s60
    %p67 = scmp.eq.s32.totalorder %s15, 1
    %p68 = por %p66, %p67
    %p69 = scmp.ne.s32.totalorder %s60, %s61
    %p70 = scmp.eq.s32.totalorder %s15, 0
    %p71 = por %p69, %p70
    %p72 = scmp.ne.s32.totalorder %s60, %s61
    %p73 = scmp.eq.s32.totalorder %s16, 1
    %p74 = por %p72, %p73
    %p76 = scmp.ne.s32.totalorder %s61, %s75
    %p77 = scmp.eq.s32.totalorder %s16, 0
    %p78 = por %p76, %p77
    %s80 = sadd.s32 %s79, 1
    %p83 = scmp.eq.s32.totalorder %s10, 1
    %p84 = scmp.ne.s32.totalorder %s79, %s81
    %p85 = scmp.eq.s32.totalorder %s10, 0
    %p86 = por %p84, %p85
    %p87 = scmp.ne.s32.totalorder %s79, %s81
    %p88 = scmp.eq.s32.totalorder %s15, 1
    %p89 = por %p87, %p88
    %p90 = scmp.ne.s32.totalorder %s81, %s82
    %p91 = scmp.eq.s32.totalorder %s15, 0
    %p92 = por %p90, %p91
    %p93 = scmp.ne.s32.totalorder %s81, %s82
    %p94 = scmp.eq.s32.totalorder %s16, 1
    %p95 = por %p93, %p94
    %p97 = scmp.ne.s32.totalorder %s82, %s96
    %p98 = scmp.eq.s32.totalorder %s16, 0
    %p99 = por %p97, %p98
    %s101 = sadd.s32 %s100, 1
    %p104 = scmp.eq.s32.totalorder %s10, 1
    %p105 = scmp.ne.s32.totalorder %s100, %s102
    %p106 = scmp.eq.s32.totalorder %s10, 0
    %p107 = por %p105, %p106
    %p108 = scmp.ne.s32.totalorder %s100, %s102
    %p109 = scmp.eq.s32.totalorder %s15, 1
    %p110 = por %p108, %p109
    %p111 = scmp.ne.s32.totalorder %s102, %s103
    %p112 = scmp.eq.s32.totalorder %s15, 0
    %p113 = por %p111, %p112
    %p114 = scmp.ne.s32.totalorder %s102, %s103
    %p115 = scmp.eq.s32.totalorder %s16, 1
    %p116 = por %p114, %p115
    %p118 = scmp.ne.s32.totalorder %s103, %s117
    %p119 = scmp.eq.s32.totalorder %s16, 0
    %p120 = por %p118, %p119
    %s121 = ssub.s32 %s17, %s29
    %s122 = ssub.s32 %s18, %s25
    %s123 = sor.u32 %s121, %s122
    %p124 = scmp.eq.s32.totalorder %s123, 0
    %s126 = sadd.s32 %s125, 1
    %s127 = scalar_select %p124, %s125, %s126
    %p130 = pneg %p124
    %p131 = scmp.eq.s32.totalorder %s10, 1
    %p132 = por %p130, %p131
    %p133 = scmp.ne.s32.totalorder %s125, %s128
    %p134 = scmp.eq.s32.totalorder %s10, 0
    %p135 = por %p133, %p134
    %p136 = scmp.ne.s32.totalorder %s125, %s128
    %p137 = scmp.eq.s32.totalorder %s15, 1
    %p138 = por %p136, %p137
    %p139 = scmp.ne.s32.totalorder %s128, %s129
    %p140 = scmp.eq.s32.totalorder %s15, 0
    %p141 = por %p139, %p140
    %p142 = scmp.ne.s32.totalorder %s128, %s129
    %p143 = scmp.eq.s32.totalorder %s16, 1
    %p144 = por %p142, %p143
    %p146 = scmp.ne.s32.totalorder %s129, %s145
    %p147 = scmp.eq.s32.totalorder %s16, 0
    %p148 = por %p146, %p147
    %p149 = scmp.le.s32.totalorder 1, %s10
    %p150 = scmp.lt.s32.totalorder %s10, 3
    %p151 = pnand %p149, %p150
    %p152 = pneg %p151
    // Predicated region
    $region9: #{fgc_forward.7} parent=5 // pred_check
      _
    $region10: #{fgc_forward.7} parent=5 // pred_check_branch
      %154 = sbr.rel (%p151) target = $region12
    $region11: #{fgc_forward.7} parent=5 // pred_region
      %s155 = ssub.s32 %s10, 1
      // Predicated region
      $region13: #{fgc_forward.7} parent=11 // pred_check
        %p156 = pneg %p71
      $region14: #{fgc_forward.7} parent=11 // pred_check_branch
        %158 = sbr.rel (%p156) target = $region16
      $region15: #{fgc_forward.7} parent=11 // pred_region
        _
      $region16: #{fgc_forward.7} parent=11 // pred_fallthru
        _
      // Predicated region
      $region17: #{fgc_forward.7} parent=11 // pred_check
        %p159 = pneg %p92
      $region18: #{fgc_forward.7} parent=11 // pred_check_branch
        %161 = sbr.rel (%p159) target = $region20
      $region19: #{fgc_forward.7} parent=11 // pred_region
        _
      $region20: #{fgc_forward.7} parent=11 // pred_fallthru
        _
      // Predicated region
      $region21: #{fgc_forward.7} parent=11 // pred_check
        %p162 = pneg %p113
      $region22: #{fgc_forward.7} parent=11 // pred_check_branch
        %164 = sbr.rel (%p162) target = $region24
      $region23: #{fgc_forward.7} parent=11 // pred_region
        _
      $region24: #{fgc_forward.7} parent=11 // pred_fallthru
        _
    $region12: #{fgc_forward.7} parent=5 // pred_fallthru
      _
    %p165 = scmp.lt.s32.totalorder %s10, 2
    // Predicated region
    $region25: #{fgc_forward.7} parent=5 // pred_check
      %p166 = pneg %p165
    $region26: #{fgc_forward.7} parent=5 // pred_check_branch
      %168 = sbr.rel (%p166) target = $region28
    $region27: #{fgc_forward.7} parent=5 // pred_region
      // Predicated region
      $region29: #{fgc_forward.7} parent=27 // pred_check
        %p169 = pneg %p44
      $region30: #{fgc_forward.7} parent=27 // pred_check_branch
        %171 = sbr.rel (%p169) target = $region32
      $region31: #{fgc_forward.7} parent=27 // pred_region
        %s172 = smul.u32 8, %s18
        %p173 = scmp.lt.s32.totalorder %s17, 1
        %s174 = scalar_select %p173, %s17, 1
        %p175 = scmp.lt.s32.totalorder %s172, 7
        %s176 = scalar_select %p175, %s172, 7
        %s177 = smul.addr %s176, 25
        %s178 = smul.addr %s174, 200
        %s179 = sadd.s32 %s177, %s178
        %s180 = smul.addr %s179, 4
        %s181 = scalar_lea.vmem %s0, %s180
        %s182 = smul.u32 8, %s18
      $region32: #{fgc_forward.7} parent=27 // pred_fallthru
        _
    $region28: #{fgc_forward.7} parent=5 // pred_fallthru
      _
    %p183 = scmp.le.s32.totalorder 1, %s10
    %p184 = scmp.lt.s32.totalorder %s10, 3
    %p185 = pnand %p183, %p184
    %p186 = pneg %p185
    // Predicated region
    $region33: #{fgc_forward.7} parent=5 // pred_check
      _
    $region34: #{fgc_forward.7} parent=5 // pred_check_branch
      %188 = sbr.rel (%p185) target = $region36
    $region35: #{fgc_forward.7} parent=5 // pred_region
      %s189 = ssub.s32 %s10, 1
      %s190 = smul.u32 8, %s20
      %p191 = scmp.lt.s32.totalorder %s19, 1
      %s192 = scalar_select %p191, %s19, 1
      %p193 = scmp.lt.s32.totalorder %s190, 7
      %s194 = scalar_select %p193, %s190, 7
      %s195 = smul.addr %s194, 25
      %s196 = smul.addr %s192, 200
      %s197 = sadd.s32 %s195, %s196
      %s198 = smul.addr %s197, 4
      %s199 = scalar_lea.vmem %s0, %s198
      %p200 = pneg %p50
      %p201 = pneg %p47
      %p202 = pneg %p71
      %p203 = pneg %p68
      %p204 = pneg %p92
      %p205 = pneg %p89
      %p206 = pneg %p113
      %p207 = pneg %p110
      %p208 = pneg %p141
      %p209 = pneg %p138
      %s210 = smul.u32 8, %s20
      %p211 = scmp.lt.s32.totalorder %s19, 1
      %s212 = scalar_select %p211, %s19, 1
      %p213 = scmp.lt.s32.totalorder %s210, 7
      %s214 = scalar_select %p213, %s210, 7
      %s215 = smul.addr %s212, 8
      %s216 = sadd.s32 %s214, %s215
      %s217 = smul.addr %s216, 8
      %s218 = scalar_lea.vmem %s4, %s217
      %s219 = smul.u32 8, %s20
      %p220 = scmp.lt.s32.totalorder %s19, 1
      %s221 = scalar_select %p220, %s19, 1
      %p222 = scmp.lt.s32.totalorder %s219, 7
      %s223 = scalar_select %p222, %s219, 7
      %s224 = smul.addr %s223, 25
      %s225 = smul.addr %s221, 200
      %s226 = sadd.s32 %s224, %s225
      %s227 = smul.addr %s226, 4
      %s228 = scalar_lea.vmem %s0, %s227
      %s229 = smul.u32 8, %s20
      %s230 = smul.u32 8, %s20
      %p231 = scmp.lt.s32.totalorder %s19, 1
      %s232 = scalar_select %p231, %s19, 1
      %p233 = scmp.lt.s32.totalorder %s230, 7
      %s234 = scalar_select %p233, %s230, 7
      %s235 = smul.addr %s232, 8
      %s236 = sadd.s32 %s234, %s235
      %s237 = smul.addr %s236, 8
      %s238 = scalar_lea.vmem %s4, %s237
      %s239 = smul.u32 8, %s20
      %v241 = vld [vmem:[%s228] sm:$0xff]
      %v242 = vld [vmem:[%s228 + $0x8] sm:$0xff]
      %v243 = vld [vmem:[%s228 + $0x10] sm:$0xff]
      %v244 = vld [vmem:[%s228 + $0x18] sm:$0xff]
      %v245 = vld [vmem:[%s228 + $0x20] sm:$0xff]
      %v246 = vld [vmem:[%s228 + $0x28] sm:$0xff]
      %v247 = vld [vmem:[%s228 + $0x30] sm:$0xff]
      %v248 = vld [vmem:[%s228 + $0x38] sm:$0xff]
      %v249 = vld [vmem:[%s228 + $0x40] sm:$0xff]
      %v250 = vld [vmem:[%s228 + $0x48] sm:$0xff]
      %v251 = vld [vmem:[%s228 + $0x50] sm:$0xff]
      %v252 = vld [vmem:[%s228 + $0x58] sm:$0xff]
      %v253 = vld [vmem:[%s228 + $0x60] sm:$0xf]
      %v254 = vld [vmem:[%s228 + $0x64] sm:$0xff]
      %v255 = vld [vmem:[%s228 + $0x6c] sm:$0xff]
      %v256 = vld [vmem:[%s228 + $0x74] sm:$0xff]
      %v257 = vld [vmem:[%s228 + $0x7c] sm:$0xff]
      %v258 = vld [vmem:[%s228 + $0x84] sm:$0xff]
      %v259 = vld [vmem:[%s228 + $0x8c] sm:$0xff]
      %v260 = vld [vmem:[%s228 + $0x94] sm:$0xff]
      %v261 = vld [vmem:[%s228 + $0x9c] sm:$0xff]
      %v262 = vld [vmem:[%s228 + $0xa4] sm:$0xff]
      %v263 = vld [vmem:[%s228 + $0xac] sm:$0xff]
      %v264 = vld [vmem:[%s228 + $0xb4] sm:$0xff]
      %v265 = vld [vmem:[%s228 + $0xbc] sm:$0xff]
      %v266 = vld [vmem:[%s228 + $0xc4] sm:$0xf]
      %v267 = vld [vmem:[%s228 + $0xc8] sm:$0xff]
      %v268 = vld [vmem:[%s228 + $0xd0] sm:$0xff]
      %v269 = vld [vmem:[%s228 + $0xd8] sm:$0xff]
      %v270 = vld [vmem:[%s228 + $0xe0] sm:$0xff]
      %v271 = vld [vmem:[%s228 + $0xe8] sm:$0xff]
      %v272 = vld [vmem:[%s228 + $0xf0] sm:$0xff]
      %v273 = vld [vmem:[%s228 + $0xf8] sm:$0xff]
      %v274 = vld [vmem:[%s228 + $0x100] sm:$0xff]
      %v275 = vld [vmem:[%s228 + $0x108] sm:$0xff]
      %v276 = vld [vmem:[%s228 + $0x110] sm:$0xff]
      %v277 = vld [vmem:[%s228 + $0x118] sm:$0xff]
      %v278 = vld [vmem:[%s228 + $0x120] sm:$0xff]
      %v279 = vld [vmem:[%s228 + $0x128] sm:$0xf]
      %v280 = vld [vmem:[%s228 + $0x12c] sm:$0xff]
      %v281 = vld [vmem:[%s228 + $0x134] sm:$0xff]
      %v282 = vld [vmem:[%s228 + $0x13c] sm:$0xff]
      %v283 = vld [vmem:[%s228 + $0x144] sm:$0xff]
      %v284 = vld [vmem:[%s228 + $0x14c] sm:$0xff]
      %v285 = vld [vmem:[%s228 + $0x154] sm:$0xff]
      %v286 = vld [vmem:[%s228 + $0x15c] sm:$0xff]
      %v287 = vld [vmem:[%s228 + $0x164] sm:$0xff]
      %v288 = vld [vmem:[%s228 + $0x16c] sm:$0xff]
      %v289 = vld [vmem:[%s228 + $0x174] sm:$0xff]
      %v290 = vld [vmem:[%s228 + $0x17c] sm:$0xff]
      %v291 = vld [vmem:[%s228 + $0x184] sm:$0xff]
      %v292 = vld [vmem:[%s228 + $0x18c] sm:$0xf]
      %v293 = vld [vmem:[%s228 + $0x190] sm:$0xff]
      %v294 = vld [vmem:[%s228 + $0x198] sm:$0xff]
      %v295 = vld [vmem:[%s228 + $0x1a0] sm:$0xff]
      %v296 = vld [vmem:[%s228 + $0x1a8] sm:$0xff]
      %v297 = vld [vmem:[%s228 + $0x1b0] sm:$0xff]
      %v298 = vld [vmem:[%s228 + $0x1b8] sm:$0xff]
      %v299 = vld [vmem:[%s228 + $0x1c0] sm:$0xff]
      %v300 = vld [vmem:[%s228 + $0x1c8] sm:$0xff]
      %v301 = vld [vmem:[%s228 + $0x1d0] sm:$0xff]
      %v302 = vld [vmem:[%s228 + $0x1d8] sm:$0xff]
      %v303 = vld [vmem:[%s228 + $0x1e0] sm:$0xff]
      %v304 = vld [vmem:[%s228 + $0x1e8] sm:$0xff]
      %v305 = vld [vmem:[%s228 + $0x1f0] sm:$0xf]
      %v306 = vld [vmem:[%s228 + $0x1f4] sm:$0xff]
      %v307 = vld [vmem:[%s228 + $0x1fc] sm:$0xff]
      %v308 = vld [vmem:[%s228 + $0x204] sm:$0xff]
      %v309 = vld [vmem:[%s228 + $0x20c] sm:$0xff]
      %v310 = vld [vmem:[%s228 + $0x214] sm:$0xff]
      %v311 = vld [vmem:[%s228 + $0x21c] sm:$0xff]
      %v312 = vld [vmem:[%s228 + $0x224] sm:$0xff]
      %v313 = vld [vmem:[%s228 + $0x22c] sm:$0xff]
      %v314 = vld [vmem:[%s228 + $0x234] sm:$0xff]
      %v315 = vld [vmem:[%s228 + $0x23c] sm:$0xff]
      %v316 = vld [vmem:[%s228 + $0x244] sm:$0xff]
      %v317 = vld [vmem:[%s228 + $0x24c] sm:$0xff]
      %v318 = vld [vmem:[%s228 + $0x254] sm:$0xf]
      %v319 = vld [vmem:[%s228 + $0x258] sm:$0xff]
      %v320 = vld [vmem:[%s228 + $0x260] sm:$0xff]
      %v321 = vld [vmem:[%s228 + $0x268] sm:$0xff]
      %v322 = vld [vmem:[%s228 + $0x270] sm:$0xff]
      %v323 = vld [vmem:[%s228 + $0x278] sm:$0xff]
      %v324 = vld [vmem:[%s228 + $0x280] sm:$0xff]
      %v325 = vld [vmem:[%s228 + $0x288] sm:$0xff]
      %v326 = vld [vmem:[%s228 + $0x290] sm:$0xff]
      %v327 = vld [vmem:[%s228 + $0x298] sm:$0xff]
      %v328 = vld [vmem:[%s228 + $0x2a0] sm:$0xff]
      %v329 = vld [vmem:[%s228 + $0x2a8] sm:$0xff]
      %v330 = vld [vmem:[%s228 + $0x2b0] sm:$0xff]
      %v331 = vld [vmem:[%s228 + $0x2b8] sm:$0xf]
      %v332 = vld [vmem:[%s228 + $0x2bc] sm:$0xff]
      %v333 = vld [vmem:[%s228 + $0x2c4] sm:$0xff]
      %v334 = vld [vmem:[%s228 + $0x2cc] sm:$0xff]
      %v335 = vld [vmem:[%s228 + $0x2d4] sm:$0xff]
      %v336 = vld [vmem:[%s228 + $0x2dc] sm:$0xff]
      %v337 = vld [vmem:[%s228 + $0x2e4] sm:$0xff]
      %v338 = vld [vmem:[%s228 + $0x2ec] sm:$0xff]
      %v339 = vld [vmem:[%s228 + $0x2f4] sm:$0xff]
      %v340 = vld [vmem:[%s228 + $0x2fc] sm:$0xff]
      %v341 = vld [vmem:[%s228 + $0x304] sm:$0xff]
      %v342 = vld [vmem:[%s228 + $0x30c] sm:$0xff]
      %v343 = vld [vmem:[%s228 + $0x314] sm:$0xff]
      %v344 = vld [vmem:[%s228 + $0x31c] sm:$0xf]
      %v345 = vld [vmem:[%s1] sm:$0xf]
      %v346 = vld [vmem:[%s1 + $0x4] sm:$0xf]
      %v347 = vld [vmem:[%s1 + $0x8] sm:$0xf]
      %v348 = vld [vmem:[%s1 + $0xc] sm:$0xf]
      %v349 = vld [vmem:[%s1 + $0x10] sm:$0xf]
      %v350 = vld [vmem:[%s1 + $0x14] sm:$0xf]
      %v351 = vld [vmem:[%s1 + $0x18] sm:$0xf]
      %v352 = vld [vmem:[%s1 + $0x1c] sm:$0xf]
      %v353 = vld [vmem:[%s1 + $0x20] sm:$0xf]
      %v354 = vld [vmem:[%s1 + $0x24] sm:$0xf]
      %v355 = vld [vmem:[%s1 + $0x28] sm:$0xf]
      %v356 = vld [vmem:[%s1 + $0x2c] sm:$0xf]
      %v357 = vld [vmem:[%s1 + $0x30] sm:$0xf]
      %v358 = vld [vmem:[%s1 + $0x34] sm:$0xf]
      %v359 = vld [vmem:[%s1 + $0x38] sm:$0xf]
      %v360 = vld [vmem:[%s1 + $0x3c] sm:$0xf]
      %v361 = vld [vmem:[%s1 + $0x40] sm:$0xf]
      %v362 = vld [vmem:[%s1 + $0x44] sm:$0xf]
      %v363 = vld [vmem:[%s1 + $0x48] sm:$0xf]
      %v364 = vld [vmem:[%s1 + $0x4c] sm:$0xf]
      %v365 = vld [vmem:[%s1 + $0x50] sm:$0xf]
      %v366 = vld [vmem:[%s1 + $0x54] sm:$0xf]
      %v367 = vld [vmem:[%s1 + $0x58] sm:$0xf]
      %v368 = vld [vmem:[%s1 + $0x5c] sm:$0xf]
      %v369 = vld [vmem:[%s1 + $0x60] sm:$0xf]
      %v370 = vld [vmem:[%s1 + $0x64] sm:$0xf]
      %v371 = vld [vmem:[%s1 + $0x68] sm:$0xf]
      %v372 = vld [vmem:[%s1 + $0x6c] sm:$0xf]
      %v373 = vld [vmem:[%s1 + $0x70] sm:$0xf]
      %v374 = vld [vmem:[%s1 + $0x74] sm:$0xf]
      %v375 = vld [vmem:[%s1 + $0x78] sm:$0xf]
      %v376 = vld [vmem:[%s1 + $0x7c] sm:$0xf]
      %v377 = vld [vmem:[%s1 + $0x80] sm:$0xf]
      %v378 = vld [vmem:[%s1 + $0x84] sm:$0xf]
      %v379 = vld [vmem:[%s1 + $0x88] sm:$0xf]
      %v380 = vld [vmem:[%s1 + $0x8c] sm:$0xf]
      %v381 = vld [vmem:[%s1 + $0x90] sm:$0xf]
      %v382 = vld [vmem:[%s1 + $0x94] sm:$0xf]
      %v383 = vld [vmem:[%s1 + $0x98] sm:$0xf]
      %v384 = vld [vmem:[%s1 + $0x9c] sm:$0xf]
      %v385 = vld [vmem:[%s1 + $0xa0] sm:$0xf]
      %v386 = vld [vmem:[%s1 + $0xa4] sm:$0xf]
      %v387 = vld [vmem:[%s1 + $0xa8] sm:$0xf]
      %v388 = vld [vmem:[%s1 + $0xac] sm:$0xf]
      %v389 = vld [vmem:[%s1 + $0xb0] sm:$0xf]
      %v390 = vld [vmem:[%s1 + $0xb4] sm:$0xf]
      %v391 = vld [vmem:[%s1 + $0xb8] sm:$0xf]
      %v392 = vld [vmem:[%s1 + $0xbc] sm:$0xf]
      %v393 = vld [vmem:[%s1 + $0xc0] sm:$0xf]
      %v394 = vld [vmem:[%s1 + $0xc4] sm:$0xf]
      %v395 = vld [vmem:[%s1 + $0xc8] sm:$0xf]
      %v396 = vld [vmem:[%s1 + $0xcc] sm:$0xf]
      %v397 = vld [vmem:[%s1 + $0xd0] sm:$0xf]
      %v398 = vld [vmem:[%s1 + $0xd4] sm:$0xf]
      %v399 = vld [vmem:[%s1 + $0xd8] sm:$0xf]
      %v400 = vld [vmem:[%s1 + $0xdc] sm:$0xf]
      %v401 = vld [vmem:[%s1 + $0xe0] sm:$0xf]
      %v402 = vld [vmem:[%s1 + $0xe4] sm:$0xf]
      %v403 = vld [vmem:[%s1 + $0xe8] sm:$0xf]
      %v404 = vld [vmem:[%s1 + $0xec] sm:$0xf]
      %v405 = vld [vmem:[%s1 + $0xf0] sm:$0xf]
      %v406 = vld [vmem:[%s1 + $0xf4] sm:$0xf]
      %v407 = vld [vmem:[%s1 + $0xf8] sm:$0xf]
      %v408 = vld [vmem:[%s1 + $0xfc] sm:$0xf]
      %v409 = vld [vmem:[%s1 + $0x100] sm:$0xf]
      %v410 = vld [vmem:[%s1 + $0x104] sm:$0xf]
      %v411 = vld [vmem:[%s1 + $0x108] sm:$0xf]
      %v412 = vld [vmem:[%s1 + $0x10c] sm:$0xf]
      %v413 = vld [vmem:[%s1 + $0x110] sm:$0xf]
      %v414 = vld [vmem:[%s1 + $0x114] sm:$0xf]
      %v415 = vld [vmem:[%s1 + $0x118] sm:$0xf]
      %v416 = vld [vmem:[%s1 + $0x11c] sm:$0xf]
      %v417 = vld [vmem:[%s1 + $0x120] sm:$0xf]
      %v418 = vld [vmem:[%s1 + $0x124] sm:$0xf]
      %v419 = vld [vmem:[%s1 + $0x128] sm:$0xf]
      %v420 = vld [vmem:[%s1 + $0x12c] sm:$0xf]
      %v421 = vld [vmem:[%s1 + $0x130] sm:$0xf]
      %v422 = vld [vmem:[%s1 + $0x134] sm:$0xf]
      %v423 = vld [vmem:[%s1 + $0x138] sm:$0xf]
      %v424 = vld [vmem:[%s1 + $0x13c] sm:$0xf]
      %v425 = vld [vmem:[%s1 + $0x140] sm:$0xf]
      %v426 = vld [vmem:[%s1 + $0x144] sm:$0xf]
      %v427 = vld [vmem:[%s1 + $0x148] sm:$0xf]
      %v428 = vld [vmem:[%s1 + $0x14c] sm:$0xf]
      %v429 = vld [vmem:[%s1 + $0x150] sm:$0xf]
      %v430 = vld [vmem:[%s1 + $0x154] sm:$0xf]
      %v431 = vld [vmem:[%s1 + $0x158] sm:$0xf]
      %v432 = vld [vmem:[%s1 + $0x15c] sm:$0xf]
      %v433 = vld [vmem:[%s1 + $0x160] sm:$0xf]
      %v434 = vld [vmem:[%s1 + $0x164] sm:$0xf]
      %v435 = vld [vmem:[%s1 + $0x168] sm:$0xf]
      %v436 = vld [vmem:[%s1 + $0x16c] sm:$0xf]
      %v437 = vld [vmem:[%s1 + $0x170] sm:$0xf]
      %v438 = vld [vmem:[%s1 + $0x174] sm:$0xf]
      %v439 = vld [vmem:[%s1 + $0x178] sm:$0xf]
      %v440 = vld [vmem:[%s1 + $0x17c] sm:$0xf]
      %v441 = vld [vmem:[%s1 + $0x180] sm:$0xf]
      %v442 = vld [vmem:[%s1 + $0x184] sm:$0xf]
      %v443 = vld [vmem:[%s1 + $0x188] sm:$0xf]
      %v444 = vld [vmem:[%s1 + $0x18c] sm:$0xf]
      %v445 = vld [vmem:[%s1 + $0x190] sm:$0xf]
      %v446 = vld [vmem:[%s1 + $0x194] sm:$0xf]
      %v447 = vld [vmem:[%s1 + $0x198] sm:$0xf]
      %v448 = vld [vmem:[%s1 + $0x19c] sm:$0xf]
      %v449 = vld [vmem:[%s1 + $0x1a0] sm:$0xf]
      %v450 = vld [vmem:[%s1 + $0x1a4] sm:$0xf]
      %v451 = vld [vmem:[%s1 + $0x1a8] sm:$0xf]
      %v452 = vld [vmem:[%s1 + $0x1ac] sm:$0xf]
      %v453 = vld [vmem:[%s1 + $0x1b0] sm:$0xf]
      %v454 = vld [vmem:[%s1 + $0x1b4] sm:$0xf]
      %v455 = vld [vmem:[%s1 + $0x1b8] sm:$0xf]
      %v456 = vld [vmem:[%s1 + $0x1bc] sm:$0xf]
      %v457 = vld [vmem:[%s1 + $0x1c0] sm:$0xf]
      %v458 = vld [vmem:[%s1 + $0x1c4] sm:$0xf]
      %v459 = vld [vmem:[%s1 + $0x1c8] sm:$0xf]
      %v460 = vld [vmem:[%s1 + $0x1cc] sm:$0xf]
      %v461 = vld [vmem:[%s1 + $0x1d0] sm:$0xf]
      %v462 = vld [vmem:[%s1 + $0x1d4] sm:$0xf]
      %v463 = vld [vmem:[%s1 + $0x1d8] sm:$0xf]
      %v464 = vld [vmem:[%s1 + $0x1dc] sm:$0xf]
      %v465 = vld [vmem:[%s1 + $0x1e0] sm:$0xf]
      %v466 = vld [vmem:[%s1 + $0x1e4] sm:$0xf]
      %v467 = vld [vmem:[%s1 + $0x1e8] sm:$0xf]
      %v468 = vld [vmem:[%s1 + $0x1ec] sm:$0xf]
      %v469 = vld [vmem:[%s1 + $0x1f0] sm:$0xf]
      %v470 = vld [vmem:[%s1 + $0x1f4] sm:$0xf]
      %v471 = vld [vmem:[%s1 + $0x1f8] sm:$0xf]
      %v472 = vld [vmem:[%s1 + $0x1fc] sm:$0xf]
      %v473 = vld [vmem:[%s1 + $0x200] sm:$0xf]
      %v474 = vld [vmem:[%s1 + $0x204] sm:$0xf]
      %v475 = vld [vmem:[%s1 + $0x208] sm:$0xf]
      %v476 = vld [vmem:[%s1 + $0x20c] sm:$0xf]
      %v477 = vld [vmem:[%s1 + $0x210] sm:$0xf]
      %v478 = vld [vmem:[%s1 + $0x214] sm:$0xf]
      %v479 = vld [vmem:[%s1 + $0x218] sm:$0xf]
      %v480 = vld [vmem:[%s1 + $0x21c] sm:$0xf]
      %v481 = vld [vmem:[%s1 + $0x220] sm:$0xf]
      %v482 = vld [vmem:[%s1 + $0x224] sm:$0xf]
      %v483 = vld [vmem:[%s1 + $0x228] sm:$0xf]
      %v484 = vld [vmem:[%s1 + $0x22c] sm:$0xf]
      %v485 = vld [vmem:[%s1 + $0x230] sm:$0xf]
      %v486 = vld [vmem:[%s1 + $0x234] sm:$0xf]
      %v487 = vld [vmem:[%s1 + $0x238] sm:$0xf]
      %v488 = vld [vmem:[%s1 + $0x23c] sm:$0xf]
      %v489 = vld [vmem:[%s1 + $0x240] sm:$0xf]
      %v490 = vld [vmem:[%s1 + $0x244] sm:$0xf]
      %v491 = vld [vmem:[%s1 + $0x248] sm:$0xf]
      %v492 = vld [vmem:[%s1 + $0x24c] sm:$0xf]
      %v493 = vld [vmem:[%s1 + $0x250] sm:$0xf]
      %v494 = vld [vmem:[%s1 + $0x254] sm:$0xf]
      %v495 = vld [vmem:[%s1 + $0x258] sm:$0xf]
      %v496 = vld [vmem:[%s1 + $0x25c] sm:$0xf]
      %v497 = vld [vmem:[%s1 + $0x260] sm:$0xf]
      %v498 = vld [vmem:[%s1 + $0x264] sm:$0xf]
      %v499 = vld [vmem:[%s1 + $0x268] sm:$0xf]
      %v500 = vld [vmem:[%s1 + $0x26c] sm:$0xf]
      %v501 = vld [vmem:[%s1 + $0x270] sm:$0xf]
      %v502 = vld [vmem:[%s1 + $0x274] sm:$0xf]
      %v503 = vld [vmem:[%s1 + $0x278] sm:$0xf]
      %v504 = vld [vmem:[%s1 + $0x27c] sm:$0xf]
      %v505 = vld [vmem:[%s1 + $0x280] sm:$0xf]
      %v506 = vld [vmem:[%s1 + $0x284] sm:$0xf]
      %v507 = vld [vmem:[%s1 + $0x288] sm:$0xf]
      %v508 = vld [vmem:[%s1 + $0x28c] sm:$0xf]
      %v509 = vld [vmem:[%s1 + $0x290] sm:$0xf]
      %v510 = vld [vmem:[%s1 + $0x294] sm:$0xf]
      %v511 = vld [vmem:[%s1 + $0x298] sm:$0xf]
      %v512 = vld [vmem:[%s1 + $0x29c] sm:$0xf]
      %v513 = vld [vmem:[%s1 + $0x2a0] sm:$0xf]
      %v514 = vld [vmem:[%s1 + $0x2a4] sm:$0xf]
      %v515 = vld [vmem:[%s1 + $0x2a8] sm:$0xf]
      %v516 = vld [vmem:[%s1 + $0x2ac] sm:$0xf]
      %v517 = vld [vmem:[%s1 + $0x2b0] sm:$0xf]
      %v518 = vld [vmem:[%s1 + $0x2b4] sm:$0xf]
      %v519 = vld [vmem:[%s1 + $0x2b8] sm:$0xf]
      %v520 = vld [vmem:[%s1 + $0x2bc] sm:$0xf]
      %v521 = vld [vmem:[%s1 + $0x2c0] sm:$0xf]
      %v522 = vld [vmem:[%s1 + $0x2c4] sm:$0xf]
      %v523 = vld [vmem:[%s1 + $0x2c8] sm:$0xf]
      %v524 = vld [vmem:[%s1 + $0x2cc] sm:$0xf]
      %v525 = vld [vmem:[%s1 + $0x2d0] sm:$0xf]
      %v526 = vld [vmem:[%s1 + $0x2d4] sm:$0xf]
      %v527 = vld [vmem:[%s1 + $0x2d8] sm:$0xf]
      %v528 = vld [vmem:[%s1 + $0x2dc] sm:$0xf]
      %v529 = vld [vmem:[%s1 + $0x2e0] sm:$0xf]
      %v530 = vld [vmem:[%s1 + $0x2e4] sm:$0xf]
      %v531 = vld [vmem:[%s1 + $0x2e8] sm:$0xf]
      %v532 = vld [vmem:[%s1 + $0x2ec] sm:$0xf]
      %v533 = vld [vmem:[%s1 + $0x2f0] sm:$0xf]
      %v534 = vld [vmem:[%s1 + $0x2f4] sm:$0xf]
      %v535 = vld [vmem:[%s1 + $0x2f8] sm:$0xf]
      %v536 = vld [vmem:[%s1 + $0x2fc] sm:$0xf]
      %v537 = vld [vmem:[%s1 + $0x300] sm:$0xf]
      %v538 = vld [vmem:[%s1 + $0x304] sm:$0xf]
      %v539 = vld [vmem:[%s1 + $0x308] sm:$0xf]
      %v540 = vld [vmem:[%s1 + $0x30c] sm:$0xf]
      %v541 = vld [vmem:[%s1 + $0x310] sm:$0xf]
      %v542 = vld [vmem:[%s1 + $0x314] sm:$0xf]
      %v543 = vld [vmem:[%s1 + $0x318] sm:$0xf]
      %v544 = vld [vmem:[%s1 + $0x31c] sm:$0xf]
      %v545 = vld [vmem:[%s1 + $0x320] sm:$0xf]
      %v546 = vld [vmem:[%s1 + $0x324] sm:$0xf]
      %v547 = vld [vmem:[%s1 + $0x328] sm:$0xf]
      %v548 = vld [vmem:[%s1 + $0x32c] sm:$0xf]
      %v549 = vld [vmem:[%s1 + $0x330] sm:$0xf]
      %v550 = vld [vmem:[%s1 + $0x334] sm:$0xf]
      %v551 = vld [vmem:[%s1 + $0x338] sm:$0xf]
      %v552 = vld [vmem:[%s1 + $0x33c] sm:$0xf]
      %v553 = vld [vmem:[%s1 + $0x340] sm:$0xf]
      %v554 = vld [vmem:[%s1 + $0x344] sm:$0xf]
      %v555 = vld [vmem:[%s1 + $0x348] sm:$0xf]
      %v556 = vld [vmem:[%s1 + $0x34c] sm:$0xf]
      %v557 = vld [vmem:[%s1 + $0x350] sm:$0xf]
      %v558 = vld [vmem:[%s1 + $0x354] sm:$0xf]
      %v559 = vld [vmem:[%s1 + $0x358] sm:$0xf]
      %v560 = vld [vmem:[%s1 + $0x35c] sm:$0xf]
      %v561 = vld [vmem:[%s1 + $0x360] sm:$0xf]
      %v562 = vld [vmem:[%s1 + $0x364] sm:$0xf]
      %v563 = vld [vmem:[%s1 + $0x368] sm:$0xf]
      %v564 = vld [vmem:[%s1 + $0x36c] sm:$0xf]
      %v565 = vld [vmem:[%s1 + $0x370] sm:$0xf]
      %v566 = vld [vmem:[%s1 + $0x374] sm:$0xf]
      %v567 = vld [vmem:[%s1 + $0x378] sm:$0xf]
      %v568 = vld [vmem:[%s1 + $0x37c] sm:$0xf]
      %v569 = vld [vmem:[%s1 + $0x380] sm:$0xf]
      %v570 = vld [vmem:[%s1 + $0x384] sm:$0xf]
      %v571 = vld [vmem:[%s1 + $0x388] sm:$0xf]
      %v572 = vld [vmem:[%s1 + $0x38c] sm:$0xf]
      %v573 = vld [vmem:[%s1 + $0x390] sm:$0xf]
      %v574 = vld [vmem:[%s1 + $0x394] sm:$0xf]
      %v575 = vld [vmem:[%s1 + $0x398] sm:$0xf]
      %v576 = vld [vmem:[%s1 + $0x39c] sm:$0xf]
      %v577 = vld [vmem:[%s1 + $0x3a0] sm:$0xf]
      %v578 = vld [vmem:[%s1 + $0x3a4] sm:$0xf]
      %v579 = vld [vmem:[%s1 + $0x3a8] sm:$0xf]
      %v580 = vld [vmem:[%s1 + $0x3ac] sm:$0xf]
      %v581 = vld [vmem:[%s1 + $0x3b0] sm:$0xf]
      %v582 = vld [vmem:[%s1 + $0x3b4] sm:$0xf]
      %v583 = vld [vmem:[%s1 + $0x3b8] sm:$0xf]
      %v584 = vld [vmem:[%s1 + $0x3bc] sm:$0xf]
      %v585 = vld [vmem:[%s1 + $0x3c0] sm:$0xf]
      %v586 = vld [vmem:[%s1 + $0x3c4] sm:$0xf]
      %v587 = vld [vmem:[%s1 + $0x3c8] sm:$0xf]
      %v588 = vld [vmem:[%s1 + $0x3cc] sm:$0xf]
      %v589 = vld [vmem:[%s1 + $0x3d0] sm:$0xf]
      %v590 = vld [vmem:[%s1 + $0x3d4] sm:$0xf]
      %v591 = vld [vmem:[%s1 + $0x3d8] sm:$0xf]
      %v592 = vld [vmem:[%s1 + $0x3dc] sm:$0xf]
      %v593 = vld [vmem:[%s1 + $0x3e0] sm:$0xf]
      %v594 = vld [vmem:[%s1 + $0x3e4] sm:$0xf]
      %v595 = vld [vmem:[%s1 + $0x3e8] sm:$0xf]
      %v596 = vld [vmem:[%s1 + $0x3ec] sm:$0xf]
      %v597 = vld [vmem:[%s1 + $0x3f0] sm:$0xf]
      %v598 = vld [vmem:[%s1 + $0x3f4] sm:$0xf]
      %v599 = vld [vmem:[%s1 + $0x3f8] sm:$0xf]
      %v600 = vld [vmem:[%s1 + $0x3fc] sm:$0xf]
      %v601 = vld [vmem:[%s1 + $0x400] sm:$0xf]
      %v602 = vld [vmem:[%s1 + $0x404] sm:$0xf]
      %v603 = vld [vmem:[%s1 + $0x408] sm:$0xf]
      %v604 = vld [vmem:[%s1 + $0x40c] sm:$0xf]
      %v605 = vld [vmem:[%s1 + $0x410] sm:$0xf]
      %v606 = vld [vmem:[%s1 + $0x414] sm:$0xf]
      %v607 = vld [vmem:[%s1 + $0x418] sm:$0xf]
      %v608 = vld [vmem:[%s1 + $0x41c] sm:$0xf]
      %v609 = vld [vmem:[%s1 + $0x420] sm:$0xf]
      %v610 = vld [vmem:[%s1 + $0x424] sm:$0xf]
      %v611 = vld [vmem:[%s1 + $0x428] sm:$0xf]
      %v612 = vld [vmem:[%s1 + $0x42c] sm:$0xf]
      %v613 = vld [vmem:[%s1 + $0x430] sm:$0xf]
      %v614 = vld [vmem:[%s1 + $0x434] sm:$0xf]
      %v615 = vld [vmem:[%s1 + $0x438] sm:$0xf]
      %v616 = vld [vmem:[%s1 + $0x43c] sm:$0xf]
      %v617 = vld [vmem:[%s1 + $0x440] sm:$0xf]
      %v618 = vld [vmem:[%s1 + $0x444] sm:$0xf]
      %v619 = vld [vmem:[%s1 + $0x448] sm:$0xf]
      %v620 = vld [vmem:[%s1 + $0x44c] sm:$0xf]
      %v621 = vld [vmem:[%s1 + $0x450] sm:$0xf]
      %v622 = vld [vmem:[%s1 + $0x454] sm:$0xf]
      %v623 = vld [vmem:[%s1 + $0x458] sm:$0xf]
      %v624 = vld [vmem:[%s1 + $0x45c] sm:$0xf]
      %v625 = vld [vmem:[%s1 + $0x460] sm:$0xf]
      %v626 = vld [vmem:[%s1 + $0x464] sm:$0xf]
      %v627 = vld [vmem:[%s1 + $0x468] sm:$0xf]
      %v628 = vld [vmem:[%s1 + $0x46c] sm:$0xf]
      %v629 = vld [vmem:[%s1 + $0x470] sm:$0xf]
      %v630 = vld [vmem:[%s1 + $0x474] sm:$0xf]
      %v631 = vld [vmem:[%s1 + $0x478] sm:$0xf]
      %v632 = vld [vmem:[%s1 + $0x47c] sm:$0xf]
      %v633 = vld [vmem:[%s1 + $0x480] sm:$0xf]
      %v634 = vld [vmem:[%s1 + $0x484] sm:$0xf]
      %v635 = vld [vmem:[%s1 + $0x488] sm:$0xf]
      %v636 = vld [vmem:[%s1 + $0x48c] sm:$0xf]
      %v637 = vld [vmem:[%s1 + $0x490] sm:$0xf]
      %v638 = vld [vmem:[%s1 + $0x494] sm:$0xf]
      %v639 = vld [vmem:[%s1 + $0x498] sm:$0xf]
      %v640 = vld [vmem:[%s1 + $0x49c] sm:$0xf]
      %v641 = vld [vmem:[%s1 + $0x4a0] sm:$0xf]
      %v642 = vld [vmem:[%s1 + $0x4a4] sm:$0xf]
      %v643 = vld [vmem:[%s1 + $0x4a8] sm:$0xf]
      %v644 = vld [vmem:[%s1 + $0x4ac] sm:$0xf]
      %v645 = vld [vmem:[%s1 + $0x4b0] sm:$0xf]
      %v646 = vld [vmem:[%s1 + $0x4b4] sm:$0xf]
      %v647 = vld [vmem:[%s1 + $0x4b8] sm:$0xf]
      %v648 = vld [vmem:[%s1 + $0x4bc] sm:$0xf]
      %v649 = vld [vmem:[%s1 + $0x4c0] sm:$0xf]
      %v650 = vld [vmem:[%s1 + $0x4c4] sm:$0xf]
      %v651 = vld [vmem:[%s1 + $0x4c8] sm:$0xf]
      %v652 = vld [vmem:[%s1 + $0x4cc] sm:$0xf]
      %v653 = vld [vmem:[%s1 + $0x4d0] sm:$0xf]
      %v654 = vld [vmem:[%s1 + $0x4d4] sm:$0xf]
      %v655 = vld [vmem:[%s1 + $0x4d8] sm:$0xf]
      %v656 = vld [vmem:[%s1 + $0x4dc] sm:$0xf]
      %v657 = vld [vmem:[%s1 + $0x4e0] sm:$0xf]
      %v658 = vld [vmem:[%s1 + $0x4e4] sm:$0xf]
      %v659 = vld [vmem:[%s1 + $0x4e8] sm:$0xf]
      %v660 = vld [vmem:[%s1 + $0x4ec] sm:$0xf]
      %v661 = vld [vmem:[%s1 + $0x4f0] sm:$0xf]
      %v662 = vld [vmem:[%s1 + $0x4f4] sm:$0xf]
      %v663 = vld [vmem:[%s1 + $0x4f8] sm:$0xf]
      %v664 = vld [vmem:[%s1 + $0x4fc] sm:$0xf]
      %v665 = vld [vmem:[%s1 + $0x500] sm:$0xf]
      %v666 = vld [vmem:[%s1 + $0x504] sm:$0xf]
      %v667 = vld [vmem:[%s1 + $0x508] sm:$0xf]
      %v668 = vld [vmem:[%s1 + $0x50c] sm:$0xf]
      %v669 = vld [vmem:[%s1 + $0x510] sm:$0xf]
      %v670 = vld [vmem:[%s1 + $0x514] sm:$0xf]
      %v671 = vld [vmem:[%s1 + $0x518] sm:$0xf]
      %v672 = vld [vmem:[%s1 + $0x51c] sm:$0xf]
      %v673 = vld [vmem:[%s1 + $0x520] sm:$0xf]
      %v674 = vld [vmem:[%s1 + $0x524] sm:$0xf]
      %v675 = vld [vmem:[%s1 + $0x528] sm:$0xf]
      %v676 = vld [vmem:[%s1 + $0x52c] sm:$0xf]
      %v677 = vld [vmem:[%s1 + $0x530] sm:$0xf]
      %v678 = vld [vmem:[%s1 + $0x534] sm:$0xf]
      %v679 = vld [vmem:[%s1 + $0x538] sm:$0xf]
      %v680 = vld [vmem:[%s1 + $0x53c] sm:$0xf]
      %v681 = vld [vmem:[%s1 + $0x540] sm:$0xf]
      %v682 = vld [vmem:[%s1 + $0x544] sm:$0xf]
      %v683 = vld [vmem:[%s1 + $0x548] sm:$0xf]
      %v684 = vld [vmem:[%s1 + $0x54c] sm:$0xf]
      %v685 = vld [vmem:[%s1 + $0x550] sm:$0xf]
      %v686 = vld [vmem:[%s1 + $0x554] sm:$0xf]
      %v687 = vld [vmem:[%s1 + $0x558] sm:$0xf]
      %v688 = vld [vmem:[%s1 + $0x55c] sm:$0xf]
      %v689 = vld [vmem:[%s1 + $0x560] sm:$0xf]
      %v690 = vld [vmem:[%s1 + $0x564] sm:$0xf]
      %v691 = vld [vmem:[%s1 + $0x568] sm:$0xf]
      %v692 = vld [vmem:[%s1 + $0x56c] sm:$0xf]
      %v693 = vld [vmem:[%s1 + $0x570] sm:$0xf]
      %v694 = vld [vmem:[%s1 + $0x574] sm:$0xf]
      %v695 = vld [vmem:[%s1 + $0x578] sm:$0xf]
      %v696 = vld [vmem:[%s1 + $0x57c] sm:$0xf]
      %v697 = vld [vmem:[%s1 + $0x580] sm:$0xf]
      %v698 = vld [vmem:[%s1 + $0x584] sm:$0xf]
      %v699 = vld [vmem:[%s1 + $0x588] sm:$0xf]
      %v700 = vld [vmem:[%s1 + $0x58c] sm:$0xf]
      %v701 = vld [vmem:[%s1 + $0x590] sm:$0xf]
      %v702 = vld [vmem:[%s1 + $0x594] sm:$0xf]
      %v703 = vld [vmem:[%s1 + $0x598] sm:$0xf]
      %v704 = vld [vmem:[%s1 + $0x59c] sm:$0xf]
      %v705 = vld [vmem:[%s1 + $0x5a0] sm:$0xf]
      %v706 = vld [vmem:[%s1 + $0x5a4] sm:$0xf]
      %v707 = vld [vmem:[%s1 + $0x5a8] sm:$0xf]
      %v708 = vld [vmem:[%s1 + $0x5ac] sm:$0xf]
      %v709 = vld [vmem:[%s1 + $0x5b0] sm:$0xf]
      %v710 = vld [vmem:[%s1 + $0x5b4] sm:$0xf]
      %v711 = vld [vmem:[%s1 + $0x5b8] sm:$0xf]
      %v712 = vld [vmem:[%s1 + $0x5bc] sm:$0xf]
      %v713 = vld [vmem:[%s1 + $0x5c0] sm:$0xf]
      %v714 = vld [vmem:[%s1 + $0x5c4] sm:$0xf]
      %v715 = vld [vmem:[%s1 + $0x5c8] sm:$0xf]
      %v716 = vld [vmem:[%s1 + $0x5cc] sm:$0xf]
      %v717 = vld [vmem:[%s1 + $0x5d0] sm:$0xf]
      %v718 = vld [vmem:[%s1 + $0x5d4] sm:$0xf]
      %v719 = vld [vmem:[%s1 + $0x5d8] sm:$0xf]
      %v720 = vld [vmem:[%s1 + $0x5dc] sm:$0xf]
      %v721 = vld [vmem:[%s1 + $0x5e0] sm:$0xf]
      %v722 = vld [vmem:[%s1 + $0x5e4] sm:$0xf]
      %v723 = vld [vmem:[%s1 + $0x5e8] sm:$0xf]
      %v724 = vld [vmem:[%s1 + $0x5ec] sm:$0xf]
      %v725 = vld [vmem:[%s1 + $0x5f0] sm:$0xf]
      %v726 = vld [vmem:[%s1 + $0x5f4] sm:$0xf]
      %v727 = vld [vmem:[%s1 + $0x5f8] sm:$0xf]
      %v728 = vld [vmem:[%s1 + $0x5fc] sm:$0xf]
      %v729 = vld [vmem:[%s1 + $0x600] sm:$0xf]
      %v730 = vld [vmem:[%s1 + $0x604] sm:$0xf]
      %v731 = vld [vmem:[%s1 + $0x608] sm:$0xf]
      %v732 = vld [vmem:[%s1 + $0x60c] sm:$0xf]
      %v733 = vld [vmem:[%s1 + $0x610] sm:$0xf]
      %v734 = vld [vmem:[%s1 + $0x614] sm:$0xf]
      %v735 = vld [vmem:[%s1 + $0x618] sm:$0xf]
      %v736 = vld [vmem:[%s1 + $0x61c] sm:$0xf]
      %v841 = vunpack.c.l.b16 %v241
      %v842 = vunpack.c.h.b16 %v241
      %v843 = vunpack.c.l.b16 %v242
      %v844 = vunpack.c.h.b16 %v242
      %v845 = vunpack.c.l.b16 %v243
      %v846 = vunpack.c.h.b16 %v243
      %v847 = vunpack.c.l.b16 %v244
      %v848 = vunpack.c.h.b16 %v244
      %v849 = vunpack.c.l.b16 %v245
      %v850 = vunpack.c.h.b16 %v245
      %v851 = vunpack.c.l.b16 %v246
      %v852 = vunpack.c.h.b16 %v246
      %v853 = vunpack.c.l.b16 %v247
      %v854 = vunpack.c.h.b16 %v247
      %v855 = vunpack.c.l.b16 %v248
      %v856 = vunpack.c.h.b16 %v248
      %v857 = vunpack.c.l.b16 %v249
      %v858 = vunpack.c.h.b16 %v249
      %v859 = vunpack.c.l.b16 %v250
      %v860 = vunpack.c.h.b16 %v250
      %v861 = vunpack.c.l.b16 %v251
      %v862 = vunpack.c.h.b16 %v251
      %v863 = vunpack.c.l.b16 %v252
      %v864 = vunpack.c.h.b16 %v252
      %v865 = vunpack.c.l.b16 %v253
      %v866 = vunpack.c.l.b16 %v254
      %v867 = vunpack.c.h.b16 %v254
      %v868 = vunpack.c.l.b16 %v255
      %v869 = vunpack.c.h.b16 %v255
      %v870 = vunpack.c.l.b16 %v256
      %v871 = vunpack.c.h.b16 %v256
      %v872 = vunpack.c.l.b16 %v257
      %v873 = vunpack.c.h.b16 %v257
      %v874 = vunpack.c.l.b16 %v258
      %v875 = vunpack.c.h.b16 %v258
      %v876 = vunpack.c.l.b16 %v259
      %v877 = vunpack.c.h.b16 %v259
      %v878 = vunpack.c.l.b16 %v260
      %v879 = vunpack.c.h.b16 %v260
      %v880 = vunpack.c.l.b16 %v261
      %v881 = vunpack.c.h.b16 %v261
      %v882 = vunpack.c.l.b16 %v262
      %v883 = vunpack.c.h.b16 %v262
      %v884 = vunpack.c.l.b16 %v263
      %v885 = vunpack.c.h.b16 %v263
      %v886 = vunpack.c.l.b16 %v264
      %v887 = vunpack.c.h.b16 %v264
      %v888 = vunpack.c.l.b16 %v265
      %v889 = vunpack.c.h.b16 %v265
      %v890 = vunpack.c.l.b16 %v266
      %v891 = vunpack.c.l.b16 %v267
      %v892 = vunpack.c.h.b16 %v267
      %v893 = vunpack.c.l.b16 %v268
      %v894 = vunpack.c.h.b16 %v268
      %v895 = vunpack.c.l.b16 %v269
      %v896 = vunpack.c.h.b16 %v269
      %v897 = vunpack.c.l.b16 %v270
      %v898 = vunpack.c.h.b16 %v270
      %v899 = vunpack.c.l.b16 %v271
      %v900 = vunpack.c.h.b16 %v271
      %v901 = vunpack.c.l.b16 %v272
      %v902 = vunpack.c.h.b16 %v272
      %v903 = vunpack.c.l.b16 %v273
      %v904 = vunpack.c.h.b16 %v273
      %v905 = vunpack.c.l.b16 %v274
      %v906 = vunpack.c.h.b16 %v274
      %v907 = vunpack.c.l.b16 %v275
      %v908 = vunpack.c.h.b16 %v275
      %v909 = vunpack.c.l.b16 %v276
      %v910 = vunpack.c.h.b16 %v276
      %v911 = vunpack.c.l.b16 %v277
      %v912 = vunpack.c.h.b16 %v277
      %v913 = vunpack.c.l.b16 %v278
      %v914 = vunpack.c.h.b16 %v278
      %v915 = vunpack.c.l.b16 %v279
      %v916 = vunpack.c.l.b16 %v280
      %v917 = vunpack.c.h.b16 %v280
      %v918 = vunpack.c.l.b16 %v281
      %v919 = vunpack.c.h.b16 %v281
      %v920 = vunpack.c.l.b16 %v282
      %v921 = vunpack.c.h.b16 %v282
      %v922 = vunpack.c.l.b16 %v283
      %v923 = vunpack.c.h.b16 %v283
      %v924 = vunpack.c.l.b16 %v284
      %v925 = vunpack.c.h.b16 %v284
      %v926 = vunpack.c.l.b16 %v285
      %v927 = vunpack.c.h.b16 %v285
      %v928 = vunpack.c.l.b16 %v286
      %v929 = vunpack.c.h.b16 %v286
      %v930 = vunpack.c.l.b16 %v287
      %v931 = vunpack.c.h.b16 %v287
      %v932 = vunpack.c.l.b16 %v288
      %v933 = vunpack.c.h.b16 %v288
      %v934 = vunpack.c.l.b16 %v289
      %v935 = vunpack.c.h.b16 %v289
      %v936 = vunpack.c.l.b16 %v290
      %v937 = vunpack.c.h.b16 %v290
      %v938 = vunpack.c.l.b16 %v291
      %v939 = vunpack.c.h.b16 %v291
      %v940 = vunpack.c.l.b16 %v292
      %v941 = vunpack.c.l.b16 %v293
      %v942 = vunpack.c.h.b16 %v293
      %v943 = vunpack.c.l.b16 %v294
      %v944 = vunpack.c.h.b16 %v294
      %v945 = vunpack.c.l.b16 %v295
      %v946 = vunpack.c.h.b16 %v295
      %v947 = vunpack.c.l.b16 %v296
      %v948 = vunpack.c.h.b16 %v296
      %v949 = vunpack.c.l.b16 %v297
      %v950 = vunpack.c.h.b16 %v297
      %v951 = vunpack.c.l.b16 %v298
      %v952 = vunpack.c.h.b16 %v298
      %v953 = vunpack.c.l.b16 %v299
      %v954 = vunpack.c.h.b16 %v299
      %v955 = vunpack.c.l.b16 %v300
      %v956 = vunpack.c.h.b16 %v300
      %v957 = vunpack.c.l.b16 %v301
      %v958 = vunpack.c.h.b16 %v301
      %v959 = vunpack.c.l.b16 %v302
      %v960 = vunpack.c.h.b16 %v302
      %v961 = vunpack.c.l.b16 %v303
      %v962 = vunpack.c.h.b16 %v303
      %v963 = vunpack.c.l.b16 %v304
      %v964 = vunpack.c.h.b16 %v304
      %v965 = vunpack.c.l.b16 %v305
      %v966 = vunpack.c.l.b16 %v306
      %v967 = vunpack.c.h.b16 %v306
      %v968 = vunpack.c.l.b16 %v307
      %v969 = vunpack.c.h.b16 %v307
      %v970 = vunpack.c.l.b16 %v308
      %v971 = vunpack.c.h.b16 %v308
      %v972 = vunpack.c.l.b16 %v309
      %v973 = vunpack.c.h.b16 %v309
      %v974 = vunpack.c.l.b16 %v310
      %v975 = vunpack.c.h.b16 %v310
      %v976 = vunpack.c.l.b16 %v311
      %v977 = vunpack.c.h.b16 %v311
      %v978 = vunpack.c.l.b16 %v312
      %v979 = vunpack.c.h.b16 %v312
      %v980 = vunpack.c.l.b16 %v313
      %v981 = vunpack.c.h.b16 %v313
      %v982 = vunpack.c.l.b16 %v314
      %v983 = vunpack.c.h.b16 %v314
      %v984 = vunpack.c.l.b16 %v315
      %v985 = vunpack.c.h.b16 %v315
      %v986 = vunpack.c.l.b16 %v316
      %v987 = vunpack.c.h.b16 %v316
      %v988 = vunpack.c.l.b16 %v317
      %v989 = vunpack.c.h.b16 %v317
      %v990 = vunpack.c.l.b16 %v318
      %v991 = vunpack.c.l.b16 %v319
      %v992 = vunpack.c.h.b16 %v319
      %v993 = vunpack.c.l.b16 %v320
      %v994 = vunpack.c.h.b16 %v320
      %v995 = vunpack.c.l.b16 %v321
      %v996 = vunpack.c.h.b16 %v321
      %v997 = vunpack.c.l.b16 %v322
      %v998 = vunpack.c.h.b16 %v322
      %v999 = vunpack.c.l.b16 %v323
      %v1000 = vunpack.c.h.b16 %v323
      %v1001 = vunpack.c.l.b16 %v324
      %v1002 = vunpack.c.h.b16 %v324
      %v1003 = vunpack.c.l.b16 %v325
      %v1004 = vunpack.c.h.b16 %v325
      %v1005 = vunpack.c.l.b16 %v326
      %v1006 = vunpack.c.h.b16 %v326
      %v1007 = vunpack.c.l.b16 %v327
      %v1008 = vunpack.c.h.b16 %v327
      %v1009 = vunpack.c.l.b16 %v328
      %v1010 = vunpack.c.h.b16 %v328
      %v1011 = vunpack.c.l.b16 %v329
      %v1012 = vunpack.c.h.b16 %v329
      %v1013 = vunpack.c.l.b16 %v330
      %v1014 = vunpack.c.h.b16 %v330
      %v1015 = vunpack.c.l.b16 %v331
      %v1016 = vunpack.c.l.b16 %v332
      %v1017 = vunpack.c.h.b16 %v332
      %v1018 = vunpack.c.l.b16 %v333
      %v1019 = vunpack.c.h.b16 %v333
      %v1020 = vunpack.c.l.b16 %v334
      %v1021 = vunpack.c.h.b16 %v334
      %v1022 = vunpack.c.l.b16 %v335
      %v1023 = vunpack.c.h.b16 %v335
      %v1024 = vunpack.c.l.b16 %v336
      %v1025 = vunpack.c.h.b16 %v336
      %v1026 = vunpack.c.l.b16 %v337
      %v1027 = vunpack.c.h.b16 %v337
      %v1028 = vunpack.c.l.b16 %v338
      %v1029 = vunpack.c.h.b16 %v338
      %v1030 = vunpack.c.l.b16 %v339
      %v1031 = vunpack.c.h.b16 %v339
      %v1032 = vunpack.c.l.b16 %v340
      %v1033 = vunpack.c.h.b16 %v340
      %v1034 = vunpack.c.l.b16 %v341
      %v1035 = vunpack.c.h.b16 %v341
      %v1036 = vunpack.c.l.b16 %v342
      %v1037 = vunpack.c.h.b16 %v342
      %v1038 = vunpack.c.l.b16 %v343
      %v1039 = vunpack.c.h.b16 %v343
      %v1040 = vunpack.c.l.b16 %v344
      %v1041 = vpack.c.b16 %v866, %v841
      %v1042 = vpack.c.b16 %v867, %v842
      %v1043 = vpack.c.b16 %v868, %v843
      %v1044 = vpack.c.b16 %v869, %v844
      %v1045 = vpack.c.b16 %v870, %v845
      %v1046 = vpack.c.b16 %v871, %v846
      %v1047 = vpack.c.b16 %v872, %v847
      %v1048 = vpack.c.b16 %v873, %v848
      %v1049 = vpack.c.b16 %v874, %v849
      %v1050 = vpack.c.b16 %v875, %v850
      %v1051 = vpack.c.b16 %v876, %v851
      %v1052 = vpack.c.b16 %v877, %v852
      %v1053 = vpack.c.b16 %v878, %v853
      %v1054 = vpack.c.b16 %v879, %v854
      %v1055 = vpack.c.b16 %v880, %v855
      %v1056 = vpack.c.b16 %v881, %v856
      %v1057 = vpack.c.b16 %v882, %v857
      %v1058 = vpack.c.b16 %v883, %v858
      %v1059 = vpack.c.b16 %v884, %v859
      %v1060 = vpack.c.b16 %v885, %v860
      %v1061 = vpack.c.b16 %v886, %v861
      %v1062 = vpack.c.b16 %v887, %v862
      %v1063 = vpack.c.b16 %v888, %v863
      %v1064 = vpack.c.b16 %v889, %v864
      %v1065 = vpack.c.b16 %v890, %v865
      %v1066 = vpack.c.b16 %v916, %v891
      %v1067 = vpack.c.b16 %v917, %v892
      %v1068 = vpack.c.b16 %v918, %v893
      %v1069 = vpack.c.b16 %v919, %v894
      %v1070 = vpack.c.b16 %v920, %v895
      %v1071 = vpack.c.b16 %v921, %v896
      %v1072 = vpack.c.b16 %v922, %v897
      %v1073 = vpack.c.b16 %v923, %v898
      %v1074 = vpack.c.b16 %v924, %v899
      %v1075 = vpack.c.b16 %v925, %v900
      %v1076 = vpack.c.b16 %v926, %v901
      %v1077 = vpack.c.b16 %v927, %v902
      %v1078 = vpack.c.b16 %v928, %v903
      %v1079 = vpack.c.b16 %v929, %v904
      %v1080 = vpack.c.b16 %v930, %v905
      %v1081 = vpack.c.b16 %v931, %v906
      %v1082 = vpack.c.b16 %v932, %v907
      %v1083 = vpack.c.b16 %v933, %v908
      %v1084 = vpack.c.b16 %v934, %v909
      %v1085 = vpack.c.b16 %v935, %v910
      %v1086 = vpack.c.b16 %v936, %v911
      %v1087 = vpack.c.b16 %v937, %v912
      %v1088 = vpack.c.b16 %v938, %v913
      %v1089 = vpack.c.b16 %v939, %v914
      %v1090 = vpack.c.b16 %v940, %v915
      %v1091 = vpack.c.b16 %v966, %v941
      %v1092 = vpack.c.b16 %v967, %v942
      %v1093 = vpack.c.b16 %v968, %v943
      %v1094 = vpack.c.b16 %v969, %v944
      %v1095 = vpack.c.b16 %v970, %v945
      %v1096 = vpack.c.b16 %v971, %v946
      %v1097 = vpack.c.b16 %v972, %v947
      %v1098 = vpack.c.b16 %v973, %v948
      %v1099 = vpack.c.b16 %v974, %v949
      %v1100 = vpack.c.b16 %v975, %v950
      %v1101 = vpack.c.b16 %v976, %v951
      %v1102 = vpack.c.b16 %v977, %v952
      %v1103 = vpack.c.b16 %v978, %v953
      %v1104 = vpack.c.b16 %v979, %v954
      %v1105 = vpack.c.b16 %v980, %v955
      %v1106 = vpack.c.b16 %v981, %v956
      %v1107 = vpack.c.b16 %v982, %v957
      %v1108 = vpack.c.b16 %v983, %v958
      %v1109 = vpack.c.b16 %v984, %v959
      %v1110 = vpack.c.b16 %v985, %v960
      %v1111 = vpack.c.b16 %v986, %v961
      %v1112 = vpack.c.b16 %v987, %v962
      %v1113 = vpack.c.b16 %v988, %v963
      %v1114 = vpack.c.b16 %v989, %v964
      %v1115 = vpack.c.b16 %v990, %v965
      %v1116 = vpack.c.b16 %v1016, %v991
      %v1117 = vpack.c.b16 %v1017, %v992
      %v1118 = vpack.c.b16 %v1018, %v993
      %v1119 = vpack.c.b16 %v1019, %v994
      %v1120 = vpack.c.b16 %v1020, %v995
      %v1121 = vpack.c.b16 %v1021, %v996
      %v1122 = vpack.c.b16 %v1022, %v997
      %v1123 = vpack.c.b16 %v1023, %v998
      %v1124 = vpack.c.b16 %v1024, %v999
      %v1125 = vpack.c.b16 %v1025, %v1000
      %v1126 = vpack.c.b16 %v1026, %v1001
      %v1127 = vpack.c.b16 %v1027, %v1002
      %v1128 = vpack.c.b16 %v1028, %v1003
      %v1129 = vpack.c.b16 %v1029, %v1004
      %v1130 = vpack.c.b16 %v1030, %v1005
      %v1131 = vpack.c.b16 %v1031, %v1006
      %v1132 = vpack.c.b16 %v1032, %v1007
      %v1133 = vpack.c.b16 %v1033, %v1008
      %v1134 = vpack.c.b16 %v1034, %v1009
      %v1135 = vpack.c.b16 %v1035, %v1010
      %v1136 = vpack.c.b16 %v1036, %v1011
      %v1137 = vpack.c.b16 %v1037, %v1012
      %v1138 = vpack.c.b16 %v1038, %v1013
      %v1139 = vpack.c.b16 %v1039, %v1014
      %v1140 = vpack.c.b16 %v1040, %v1015
      %v1629 = vunpack.c.l.b16 %v345
      %v1630 = vunpack.c.l.b16 %v346
      %v1631 = vunpack.c.l.b16 %v347
      %v1632 = vunpack.c.l.b16 %v348
      %v1633 = vunpack.c.l.b16 %v349
      %v1634 = vunpack.c.l.b16 %v350
      %v1635 = vunpack.c.l.b16 %v351
      %v1636 = vunpack.c.l.b16 %v352
      %v1637 = vunpack.c.l.b16 %v353
      %v1638 = vunpack.c.l.b16 %v354
      %v1639 = vunpack.c.l.b16 %v355
      %v1640 = vunpack.c.l.b16 %v356
      %v1641 = vunpack.c.l.b16 %v357
      %v1642 = vunpack.c.l.b16 %v358
      %v1643 = vunpack.c.l.b16 %v359
      %v1644 = vunpack.c.l.b16 %v360
      %v1645 = vunpack.c.l.b16 %v361
      %v1646 = vunpack.c.l.b16 %v362
      %v1647 = vunpack.c.l.b16 %v363
      %v1648 = vunpack.c.l.b16 %v364
      %v1649 = vunpack.c.l.b16 %v365
      %v1650 = vunpack.c.l.b16 %v366
      %v1651 = vunpack.c.l.b16 %v367
      %v1652 = vunpack.c.l.b16 %v368
      %v1653 = vunpack.c.l.b16 %v369
      %v1654 = vunpack.c.l.b16 %v370
      %v1655 = vunpack.c.l.b16 %v371
      %v1656 = vunpack.c.l.b16 %v372
      %v1657 = vunpack.c.l.b16 %v373
      %v1658 = vunpack.c.l.b16 %v374
      %v1659 = vunpack.c.l.b16 %v375
      %v1660 = vunpack.c.l.b16 %v376
      %v1661 = vunpack.c.l.b16 %v377
      %v1662 = vunpack.c.l.b16 %v378
      %v1663 = vunpack.c.l.b16 %v379
      %v1664 = vunpack.c.l.b16 %v380
      %v1665 = vunpack.c.l.b16 %v381
      %v1666 = vunpack.c.l.b16 %v382
      %v1667 = vunpack.c.l.b16 %v383
      %v1668 = vunpack.c.l.b16 %v384
      %v1669 = vunpack.c.l.b16 %v385
      %v1670 = vunpack.c.l.b16 %v386
      %v1671 = vunpack.c.l.b16 %v387
      %v1672 = vunpack.c.l.b16 %v388
      %v1673 = vunpack.c.l.b16 %v389
      %v1674 = vunpack.c.l.b16 %v390
      %v1675 = vunpack.c.l.b16 %v391
      %v1676 = vunpack.c.l.b16 %v392
      %v1677 = vunpack.c.l.b16 %v393
      %v1678 = vunpack.c.l.b16 %v394
      %v1679 = vunpack.c.l.b16 %v395
      %v1680 = vunpack.c.l.b16 %v396
      %v1681 = vunpack.c.l.b16 %v397
      %v1682 = vunpack.c.l.b16 %v398
      %v1683 = vunpack.c.l.b16 %v399
      %v1684 = vunpack.c.l.b16 %v400
      %v1685 = vunpack.c.l.b16 %v401
      %v1686 = vunpack.c.l.b16 %v402
      %v1687 = vunpack.c.l.b16 %v403
      %v1688 = vunpack.c.l.b16 %v404
      %v1689 = vunpack.c.l.b16 %v405
      %v1690 = vunpack.c.l.b16 %v406
      %v1691 = vunpack.c.l.b16 %v407
      %v1692 = vunpack.c.l.b16 %v408
      %v1693 = vunpack.c.l.b16 %v409
      %v1694 = vunpack.c.l.b16 %v410
      %v1695 = vunpack.c.l.b16 %v411
      %v1696 = vunpack.c.l.b16 %v412
      %v1697 = vunpack.c.l.b16 %v413
      %v1698 = vunpack.c.l.b16 %v414
      %v1699 = vunpack.c.l.b16 %v415
      %v1700 = vunpack.c.l.b16 %v416
      %v1701 = vunpack.c.l.b16 %v417
      %v1702 = vunpack.c.l.b16 %v418
      %v1703 = vunpack.c.l.b16 %v419
      %v1704 = vunpack.c.l.b16 %v420
      %v1705 = vunpack.c.l.b16 %v421
      %v1706 = vunpack.c.l.b16 %v422
      %v1707 = vunpack.c.l.b16 %v423
      %v1708 = vunpack.c.l.b16 %v424
      %v1709 = vunpack.c.l.b16 %v425
      %v1710 = vunpack.c.l.b16 %v426
      %v1711 = vunpack.c.l.b16 %v427
      %v1712 = vunpack.c.l.b16 %v428
      %v1713 = vunpack.c.l.b16 %v429
      %v1714 = vunpack.c.l.b16 %v430
      %v1715 = vunpack.c.l.b16 %v431
      %v1716 = vunpack.c.l.b16 %v432
      %v1717 = vunpack.c.l.b16 %v433
      %v1718 = vunpack.c.l.b16 %v434
      %v1719 = vunpack.c.l.b16 %v435
      %v1720 = vunpack.c.l.b16 %v436
      %v1721 = vunpack.c.l.b16 %v437
      %v1722 = vunpack.c.l.b16 %v438
      %v1723 = vunpack.c.l.b16 %v439
      %v1724 = vunpack.c.l.b16 %v440
      %v1725 = vunpack.c.l.b16 %v441
      %v1726 = vunpack.c.l.b16 %v442
      %v1727 = vunpack.c.l.b16 %v443
      %v1728 = vunpack.c.l.b16 %v444
      %v1729 = vunpack.c.l.b16 %v445
      %v1730 = vunpack.c.l.b16 %v446
      %v1731 = vunpack.c.l.b16 %v447
      %v1732 = vunpack.c.l.b16 %v448
      %v1733 = vunpack.c.l.b16 %v449
      %v1734 = vunpack.c.l.b16 %v450
      %v1735 = vunpack.c.l.b16 %v451
      %v1736 = vunpack.c.l.b16 %v452
      %v1737 = vunpack.c.l.b16 %v453
      %v1738 = vunpack.c.l.b16 %v454
      %v1739 = vunpack.c.l.b16 %v455
      %v1740 = vunpack.c.l.b16 %v456
      %v1741 = vunpack.c.l.b16 %v457
      %v1742 = vunpack.c.l.b16 %v458
      %v1743 = vunpack.c.l.b16 %v459
      %v1744 = vunpack.c.l.b16 %v460
      %v1745 = vunpack.c.l.b16 %v461
      %v1746 = vunpack.c.l.b16 %v462
      %v1747 = vunpack.c.l.b16 %v463
      %v1748 = vunpack.c.l.b16 %v464
      %v1749 = vunpack.c.l.b16 %v465
      %v1750 = vunpack.c.l.b16 %v466
      %v1751 = vunpack.c.l.b16 %v467
      %v1752 = vunpack.c.l.b16 %v468
      %v1753 = vunpack.c.l.b16 %v469
      %v1754 = vunpack.c.l.b16 %v470
      %v1755 = vunpack.c.l.b16 %v471
      %v1756 = vunpack.c.l.b16 %v472
      %v1757 = vunpack.c.l.b16 %v473
      %v1758 = vunpack.c.l.b16 %v474
      %v1759 = vunpack.c.l.b16 %v475
      %v1760 = vunpack.c.l.b16 %v476
      %v1761 = vunpack.c.l.b16 %v477
      %v1762 = vunpack.c.l.b16 %v478
      %v1763 = vunpack.c.l.b16 %v479
      %v1764 = vunpack.c.l.b16 %v480
      %v1765 = vunpack.c.l.b16 %v481
      %v1766 = vunpack.c.l.b16 %v482
      %v1767 = vunpack.c.l.b16 %v483
      %v1768 = vunpack.c.l.b16 %v484
      %v1769 = vunpack.c.l.b16 %v485
      %v1770 = vunpack.c.l.b16 %v486
      %v1771 = vunpack.c.l.b16 %v487
      %v1772 = vunpack.c.l.b16 %v488
      %v1773 = vunpack.c.l.b16 %v489
      %v1774 = vunpack.c.l.b16 %v490
      %v1775 = vunpack.c.l.b16 %v491
      %v1776 = vunpack.c.l.b16 %v492
      %v1777 = vunpack.c.l.b16 %v493
      %v1778 = vunpack.c.l.b16 %v494
      %v1779 = vunpack.c.l.b16 %v495
      %v1780 = vunpack.c.l.b16 %v496
      %v1781 = vunpack.c.l.b16 %v497
      %v1782 = vunpack.c.l.b16 %v498
      %v1783 = vunpack.c.l.b16 %v499
      %v1784 = vunpack.c.l.b16 %v500
      %v1785 = vunpack.c.l.b16 %v501
      %v1786 = vunpack.c.l.b16 %v502
      %v1787 = vunpack.c.l.b16 %v503
      %v1788 = vunpack.c.l.b16 %v504
      %v1789 = vunpack.c.l.b16 %v505
      %v1790 = vunpack.c.l.b16 %v506
      %v1791 = vunpack.c.l.b16 %v507
      %v1792 = vunpack.c.l.b16 %v508
      %v1793 = vunpack.c.l.b16 %v509
      %v1794 = vunpack.c.l.b16 %v510
      %v1795 = vunpack.c.l.b16 %v511
      %v1796 = vunpack.c.l.b16 %v512
      %v1797 = vunpack.c.l.b16 %v513
      %v1798 = vunpack.c.l.b16 %v514
      %v1799 = vunpack.c.l.b16 %v515
      %v1800 = vunpack.c.l.b16 %v516
      %v1801 = vunpack.c.l.b16 %v517
      %v1802 = vunpack.c.l.b16 %v518
      %v1803 = vunpack.c.l.b16 %v519
      %v1804 = vunpack.c.l.b16 %v520
      %v1805 = vunpack.c.l.b16 %v521
      %v1806 = vunpack.c.l.b16 %v522
      %v1807 = vunpack.c.l.b16 %v523
      %v1808 = vunpack.c.l.b16 %v524
      %v1809 = vunpack.c.l.b16 %v525
      %v1810 = vunpack.c.l.b16 %v526
      %v1811 = vunpack.c.l.b16 %v527
      %v1812 = vunpack.c.l.b16 %v528
      %v1813 = vunpack.c.l.b16 %v529
      %v1814 = vunpack.c.l.b16 %v530
      %v1815 = vunpack.c.l.b16 %v531
      %v1816 = vunpack.c.l.b16 %v532
      %v1817 = vunpack.c.l.b16 %v533
      %v1818 = vunpack.c.l.b16 %v534
      %v1819 = vunpack.c.l.b16 %v535
      %v1820 = vunpack.c.l.b16 %v536
      %v1821 = vunpack.c.l.b16 %v537
      %v1822 = vunpack.c.l.b16 %v538
      %v1823 = vunpack.c.l.b16 %v539
      %v1824 = vunpack.c.l.b16 %v540
      %v1825 = vunpack.c.l.b16 %v541
      %v1826 = vunpack.c.l.b16 %v542
      %v1827 = vunpack.c.l.b16 %v543
      %v1828 = vunpack.c.l.b16 %v544
      %v1829 = vunpack.c.l.b16 %v545
      %v1830 = vunpack.c.l.b16 %v546
      %v1831 = vunpack.c.l.b16 %v547
      %v1832 = vunpack.c.l.b16 %v548
      %v1833 = vunpack.c.l.b16 %v549
      %v1834 = vunpack.c.l.b16 %v550
      %v1835 = vunpack.c.l.b16 %v551
      %v1836 = vunpack.c.l.b16 %v552
      %v1837 = vunpack.c.l.b16 %v553
      %v1838 = vunpack.c.l.b16 %v554
      %v1839 = vunpack.c.l.b16 %v555
      %v1840 = vunpack.c.l.b16 %v556
      %v1841 = vunpack.c.l.b16 %v557
      %v1842 = vunpack.c.l.b16 %v558
      %v1843 = vunpack.c.l.b16 %v559
      %v1844 = vunpack.c.l.b16 %v560
      %v1845 = vunpack.c.l.b16 %v561
      %v1846 = vunpack.c.l.b16 %v562
      %v1847 = vunpack.c.l.b16 %v563
      %v1848 = vunpack.c.l.b16 %v564
      %v1849 = vunpack.c.l.b16 %v565
      %v1850 = vunpack.c.l.b16 %v566
      %v1851 = vunpack.c.l.b16 %v567
      %v1852 = vunpack.c.l.b16 %v568
      %v1853 = vunpack.c.l.b16 %v569
      %v1854 = vunpack.c.l.b16 %v570
      %v1855 = vunpack.c.l.b16 %v571
      %v1856 = vunpack.c.l.b16 %v572
      %v1857 = vunpack.c.l.b16 %v573
      %v1858 = vunpack.c.l.b16 %v574
      %v1859 = vunpack.c.l.b16 %v575
      %v1860 = vunpack.c.l.b16 %v576
      %v1861 = vunpack.c.l.b16 %v577
      %v1862 = vunpack.c.l.b16 %v578
      %v1863 = vunpack.c.l.b16 %v579
      %v1864 = vunpack.c.l.b16 %v580
      %v1865 = vunpack.c.l.b16 %v581
      %v1866 = vunpack.c.l.b16 %v582
      %v1867 = vunpack.c.l.b16 %v583
      %v1868 = vunpack.c.l.b16 %v584
      %v1869 = vunpack.c.l.b16 %v585
      %v1870 = vunpack.c.l.b16 %v586
      %v1871 = vunpack.c.l.b16 %v587
      %v1872 = vunpack.c.l.b16 %v588
      %v1873 = vunpack.c.l.b16 %v589
      %v1874 = vunpack.c.l.b16 %v590
      %v1875 = vunpack.c.l.b16 %v591
      %v1876 = vunpack.c.l.b16 %v592
      %v1877 = vunpack.c.l.b16 %v593
      %v1878 = vunpack.c.l.b16 %v594
      %v1879 = vunpack.c.l.b16 %v595
      %v1880 = vunpack.c.l.b16 %v596
      %v1881 = vunpack.c.l.b16 %v597
      %v1882 = vunpack.c.l.b16 %v598
      %v1883 = vunpack.c.l.b16 %v599
      %v1884 = vunpack.c.l.b16 %v600
      %v1885 = vunpack.c.l.b16 %v601
      %v1886 = vunpack.c.l.b16 %v602
      %v1887 = vunpack.c.l.b16 %v603
      %v1888 = vunpack.c.l.b16 %v604
      %v1889 = vunpack.c.l.b16 %v605
      %v1890 = vunpack.c.l.b16 %v606
      %v1891 = vunpack.c.l.b16 %v607
      %v1892 = vunpack.c.l.b16 %v608
      %v1893 = vunpack.c.l.b16 %v609
      %v1894 = vunpack.c.l.b16 %v610
      %v1895 = vunpack.c.l.b16 %v611
      %v1896 = vunpack.c.l.b16 %v612
      %v1897 = vunpack.c.l.b16 %v613
      %v1898 = vunpack.c.l.b16 %v614
      %v1899 = vunpack.c.l.b16 %v615
      %v1900 = vunpack.c.l.b16 %v616
      %v1901 = vunpack.c.l.b16 %v617
      %v1902 = vunpack.c.l.b16 %v618
      %v1903 = vunpack.c.l.b16 %v619
      %v1904 = vunpack.c.l.b16 %v620
      %v1905 = vunpack.c.l.b16 %v621
      %v1906 = vunpack.c.l.b16 %v622
      %v1907 = vunpack.c.l.b16 %v623
      %v1908 = vunpack.c.l.b16 %v624
      %v1909 = vunpack.c.l.b16 %v625
      %v1910 = vunpack.c.l.b16 %v626
      %v1911 = vunpack.c.l.b16 %v627
      %v1912 = vunpack.c.l.b16 %v628
      %v1913 = vunpack.c.l.b16 %v629
      %v1914 = vunpack.c.l.b16 %v630
      %v1915 = vunpack.c.l.b16 %v631
      %v1916 = vunpack.c.l.b16 %v632
      %v1917 = vunpack.c.l.b16 %v633
      %v1918 = vunpack.c.l.b16 %v634
      %v1919 = vunpack.c.l.b16 %v635
      %v1920 = vunpack.c.l.b16 %v636
      %v1921 = vunpack.c.l.b16 %v637
      %v1922 = vunpack.c.l.b16 %v638
      %v1923 = vunpack.c.l.b16 %v639
      %v1924 = vunpack.c.l.b16 %v640
      %v1925 = vunpack.c.l.b16 %v641
      %v1926 = vunpack.c.l.b16 %v642
      %v1927 = vunpack.c.l.b16 %v643
      %v1928 = vunpack.c.l.b16 %v644
      %v1929 = vunpack.c.l.b16 %v645
      %v1930 = vunpack.c.l.b16 %v646
      %v1931 = vunpack.c.l.b16 %v647
      %v1932 = vunpack.c.l.b16 %v648
      %v1933 = vunpack.c.l.b16 %v649
      %v1934 = vunpack.c.l.b16 %v650
      %v1935 = vunpack.c.l.b16 %v651
      %v1936 = vunpack.c.l.b16 %v652
      %v1937 = vunpack.c.l.b16 %v653
      %v1938 = vunpack.c.l.b16 %v654
      %v1939 = vunpack.c.l.b16 %v655
      %v1940 = vunpack.c.l.b16 %v656
      %v1941 = vunpack.c.l.b16 %v657
      %v1942 = vunpack.c.l.b16 %v658
      %v1943 = vunpack.c.l.b16 %v659
      %v1944 = vunpack.c.l.b16 %v660
      %v1945 = vunpack.c.l.b16 %v661
      %v1946 = vunpack.c.l.b16 %v662
      %v1947 = vunpack.c.l.b16 %v663
      %v1948 = vunpack.c.l.b16 %v664
      %v1949 = vunpack.c.l.b16 %v665
      %v1950 = vunpack.c.l.b16 %v666
      %v1951 = vunpack.c.l.b16 %v667
      %v1952 = vunpack.c.l.b16 %v668
      %v1953 = vunpack.c.l.b16 %v669
      %v1954 = vunpack.c.l.b16 %v670
      %v1955 = vunpack.c.l.b16 %v671
      %v1956 = vunpack.c.l.b16 %v672
      %v1957 = vunpack.c.l.b16 %v673
      %v1958 = vunpack.c.l.b16 %v674
      %v1959 = vunpack.c.l.b16 %v675
      %v1960 = vunpack.c.l.b16 %v676
      %v1961 = vunpack.c.l.b16 %v677
      %v1962 = vunpack.c.l.b16 %v678
      %v1963 = vunpack.c.l.b16 %v679
      %v1964 = vunpack.c.l.b16 %v680
      %v1965 = vunpack.c.l.b16 %v681
      %v1966 = vunpack.c.l.b16 %v682
      %v1967 = vunpack.c.l.b16 %v683
      %v1968 = vunpack.c.l.b16 %v684
      %v1969 = vunpack.c.l.b16 %v685
      %v1970 = vunpack.c.l.b16 %v686
      %v1971 = vunpack.c.l.b16 %v687
      %v1972 = vunpack.c.l.b16 %v688
      %v1973 = vunpack.c.l.b16 %v689
      %v1974 = vunpack.c.l.b16 %v690
      %v1975 = vunpack.c.l.b16 %v691
      %v1976 = vunpack.c.l.b16 %v692
      %v1977 = vunpack.c.l.b16 %v693
      %v1978 = vunpack.c.l.b16 %v694
      %v1979 = vunpack.c.l.b16 %v695
      %v1980 = vunpack.c.l.b16 %v696
      %v1981 = vunpack.c.l.b16 %v697
      %v1982 = vunpack.c.l.b16 %v698
      %v1983 = vunpack.c.l.b16 %v699
      %v1984 = vunpack.c.l.b16 %v700
      %v1985 = vunpack.c.l.b16 %v701
      %v1986 = vunpack.c.l.b16 %v702
      %v1987 = vunpack.c.l.b16 %v703
      %v1988 = vunpack.c.l.b16 %v704
      %v1989 = vunpack.c.l.b16 %v705
      %v1990 = vunpack.c.l.b16 %v706
      %v1991 = vunpack.c.l.b16 %v707
      %v1992 = vunpack.c.l.b16 %v708
      %v1993 = vunpack.c.l.b16 %v709
      %v1994 = vunpack.c.l.b16 %v710
      %v1995 = vunpack.c.l.b16 %v711
      %v1996 = vunpack.c.l.b16 %v712
      %v1997 = vunpack.c.l.b16 %v713
      %v1998 = vunpack.c.l.b16 %v714
      %v1999 = vunpack.c.l.b16 %v715
      %v2000 = vunpack.c.l.b16 %v716
      %v2001 = vunpack.c.l.b16 %v717
      %v2002 = vunpack.c.l.b16 %v718
      %v2003 = vunpack.c.l.b16 %v719
      %v2004 = vunpack.c.l.b16 %v720
      %v2005 = vunpack.c.l.b16 %v721
      %v2006 = vunpack.c.l.b16 %v722
      %v2007 = vunpack.c.l.b16 %v723
      %v2008 = vunpack.c.l.b16 %v724
      %v2009 = vunpack.c.l.b16 %v725
      %v2010 = vunpack.c.l.b16 %v726
      %v2011 = vunpack.c.l.b16 %v727
      %v2012 = vunpack.c.l.b16 %v728
      %v2013 = vunpack.c.l.b16 %v729
      %v2014 = vunpack.c.l.b16 %v730
      %v2015 = vunpack.c.l.b16 %v731
      %v2016 = vunpack.c.l.b16 %v732
      %v2017 = vunpack.c.l.b16 %v733
      %v2018 = vunpack.c.l.b16 %v734
      %v2019 = vunpack.c.l.b16 %v735
      %v2020 = vunpack.c.l.b16 %v736
      %v2021 = vpack.c.b16 %v1630, %v1629
      %v2022 = vpack.c.b16 %v1632, %v1631
      %v2023 = vpack.c.b16 %v1634, %v1633
      %v2024 = vpack.c.b16 %v1636, %v1635
      %v2025 = vpack.c.b16 %v1638, %v1637
      %v2026 = vpack.c.b16 %v1640, %v1639
      %v2027 = vpack.c.b16 %v1642, %v1641
      %v2028 = vpack.c.b16 %v1644, %v1643
      %v2029 = vpack.c.b16 %v1646, %v1645
      %v2030 = vpack.c.b16 %v1648, %v1647
      %v2031 = vpack.c.b16 %v1650, %v1649
      %v2032 = vpack.c.b16 %v1652, %v1651
      %v2033 = vpack.c.b16 %v1654, %v1653
      %v2034 = vpack.c.b16 %v1656, %v1655
      %v2035 = vpack.c.b16 %v1658, %v1657
      %v2036 = vpack.c.b16 %v1660, %v1659
      %v2037 = vpack.c.b16 %v1662, %v1661
      %v2038 = vpack.c.b16 %v1664, %v1663
      %v2039 = vpack.c.b16 %v1666, %v1665
      %v2040 = vpack.c.b16 %v1668, %v1667
      %v2041 = vpack.c.b16 %v1670, %v1669
      %v2042 = vpack.c.b16 %v1672, %v1671
      %v2043 = vpack.c.b16 %v1674, %v1673
      %v2044 = vpack.c.b16 %v1676, %v1675
      %v2045 = vpack.c.b16 %v1678, %v1677
      %v2046 = vpack.c.b16 %v1680, %v1679
      %v2047 = vpack.c.b16 %v1682, %v1681
      %v2048 = vpack.c.b16 %v1684, %v1683
      %v2049 = vpack.c.b16 %v1686, %v1685
      %v2050 = vpack.c.b16 %v1688, %v1687
      %v2051 = vpack.c.b16 %v1690, %v1689
      %v2052 = vpack.c.b16 %v1692, %v1691
      %v2053 = vpack.c.b16 %v1694, %v1693
      %v2054 = vpack.c.b16 %v1696, %v1695
      %v2055 = vpack.c.b16 %v1698, %v1697
      %v2056 = vpack.c.b16 %v1700, %v1699
      %v2057 = vpack.c.b16 %v1702, %v1701
      %v2058 = vpack.c.b16 %v1704, %v1703
      %v2059 = vpack.c.b16 %v1706, %v1705
      %v2060 = vpack.c.b16 %v1708, %v1707
      %v2061 = vpack.c.b16 %v1710, %v1709
      %v2062 = vpack.c.b16 %v1712, %v1711
      %v2063 = vpack.c.b16 %v1714, %v1713
      %v2064 = vpack.c.b16 %v1716, %v1715
      %v2065 = vpack.c.b16 %v1718, %v1717
      %v2066 = vpack.c.b16 %v1720, %v1719
      %v2067 = vpack.c.b16 %v1722, %v1721
      %v2068 = vpack.c.b16 %v1724, %v1723
      %v2069 = vpack.c.b16 %v1726, %v1725
      %v2070 = vpack.c.b16 %v1728, %v1727
      %v2071 = vpack.c.b16 %v1730, %v1729
      %v2072 = vpack.c.b16 %v1732, %v1731
      %v2073 = vpack.c.b16 %v1734, %v1733
      %v2074 = vpack.c.b16 %v1736, %v1735
      %v2075 = vpack.c.b16 %v1738, %v1737
      %v2076 = vpack.c.b16 %v1740, %v1739
      %v2077 = vpack.c.b16 %v1742, %v1741
      %v2078 = vpack.c.b16 %v1744, %v1743
      %v2079 = vpack.c.b16 %v1746, %v1745
      %v2080 = vpack.c.b16 %v1748, %v1747
      %v2081 = vpack.c.b16 %v1750, %v1749
      %v2082 = vpack.c.b16 %v1752, %v1751
      %v2083 = vpack.c.b16 %v1754, %v1753
      %v2084 = vpack.c.b16 %v1756, %v1755
      %v2085 = vpack.c.b16 %v1758, %v1757
      %v2086 = vpack.c.b16 %v1760, %v1759
      %v2087 = vpack.c.b16 %v1762, %v1761
      %v2088 = vpack.c.b16 %v1764, %v1763
      %v2089 = vpack.c.b16 %v1766, %v1765
      %v2090 = vpack.c.b16 %v1768, %v1767
      %v2091 = vpack.c.b16 %v1770, %v1769
      %v2092 = vpack.c.b16 %v1772, %v1771
      %v2093 = vpack.c.b16 %v1774, %v1773
      %v2094 = vpack.c.b16 %v1776, %v1775
      %v2095 = vpack.c.b16 %v1778, %v1777
      %v2096 = vpack.c.b16 %v1780, %v1779
      %v2097 = vpack.c.b16 %v1782, %v1781
      %v2098 = vpack.c.b16 %v1784, %v1783
      %v2099 = vpack.c.b16 %v1786, %v1785
      %v2100 = vpack.c.b16 %v1788, %v1787
      %v2101 = vpack.c.b16 %v1790, %v1789
      %v2102 = vpack.c.b16 %v1792, %v1791
      %v2103 = vpack.c.b16 %v1794, %v1793
      %v2104 = vpack.c.b16 %v1796, %v1795
      %v2105 = vpack.c.b16 %v1798, %v1797
      %v2106 = vpack.c.b16 %v1800, %v1799
      %v2107 = vpack.c.b16 %v1802, %v1801
      %v2108 = vpack.c.b16 %v1804, %v1803
      %v2109 = vpack.c.b16 %v1806, %v1805
      %v2110 = vpack.c.b16 %v1808, %v1807
      %v2111 = vpack.c.b16 %v1810, %v1809
      %v2112 = vpack.c.b16 %v1812, %v1811
      %v2113 = vpack.c.b16 %v1814, %v1813
      %v2114 = vpack.c.b16 %v1816, %v1815
      %v2115 = vpack.c.b16 %v1818, %v1817
      %v2116 = vpack.c.b16 %v1820, %v1819
      %v2117 = vpack.c.b16 %v1822, %v1821
      %v2118 = vpack.c.b16 %v1824, %v1823
      %v2119 = vpack.c.b16 %v1826, %v1825
      %v2120 = vpack.c.b16 %v1828, %v1827
      %v2121 = vpack.c.b16 %v1830, %v1829
      %v2122 = vpack.c.b16 %v1832, %v1831
      %v2123 = vpack.c.b16 %v1834, %v1833
      %v2124 = vpack.c.b16 %v1836, %v1835
      %v2125 = vpack.c.b16 %v1838, %v1837
      %v2126 = vpack.c.b16 %v1840, %v1839
      %v2127 = vpack.c.b16 %v1842, %v1841
      %v2128 = vpack.c.b16 %v1844, %v1843
      %v2129 = vpack.c.b16 %v1846, %v1845
      %v2130 = vpack.c.b16 %v1848, %v1847
      %v2131 = vpack.c.b16 %v1850, %v1849
      %v2132 = vpack.c.b16 %v1852, %v1851
      %v2133 = vpack.c.b16 %v1854, %v1853
      %v2134 = vpack.c.b16 %v1856, %v1855
      %v2135 = vpack.c.b16 %v1858, %v1857
      %v2136 = vpack.c.b16 %v1860, %v1859
      %v2137 = vpack.c.b16 %v1862, %v1861
      %v2138 = vpack.c.b16 %v1864, %v1863
      %v2139 = vpack.c.b16 %v1866, %v1865
      %v2140 = vpack.c.b16 %v1868, %v1867
      %v2141 = vpack.c.b16 %v1870, %v1869
      %v2142 = vpack.c.b16 %v1872, %v1871
      %v2143 = vpack.c.b16 %v1874, %v1873
      %v2144 = vpack.c.b16 %v1876, %v1875
      %v2145 = vpack.c.b16 %v1878, %v1877
      %v2146 = vpack.c.b16 %v1880, %v1879
      %v2147 = vpack.c.b16 %v1882, %v1881
      %v2148 = vpack.c.b16 %v1884, %v1883
      %v2149 = vpack.c.b16 %v1886, %v1885
      %v2150 = vpack.c.b16 %v1888, %v1887
      %v2151 = vpack.c.b16 %v1890, %v1889
      %v2152 = vpack.c.b16 %v1892, %v1891
      %v2153 = vpack.c.b16 %v1894, %v1893
      %v2154 = vpack.c.b16 %v1896, %v1895
      %v2155 = vpack.c.b16 %v1898, %v1897
      %v2156 = vpack.c.b16 %v1900, %v1899
      %v2157 = vpack.c.b16 %v1902, %v1901
      %v2158 = vpack.c.b16 %v1904, %v1903
      %v2159 = vpack.c.b16 %v1906, %v1905
      %v2160 = vpack.c.b16 %v1908, %v1907
      %v2161 = vpack.c.b16 %v1910, %v1909
      %v2162 = vpack.c.b16 %v1912, %v1911
      %v2163 = vpack.c.b16 %v1914, %v1913
      %v2164 = vpack.c.b16 %v1916, %v1915
      %v2165 = vpack.c.b16 %v1918, %v1917
      %v2166 = vpack.c.b16 %v1920, %v1919
      %v2167 = vpack.c.b16 %v1922, %v1921
      %v2168 = vpack.c.b16 %v1924, %v1923
      %v2169 = vpack.c.b16 %v1926, %v1925
      %v2170 = vpack.c.b16 %v1928, %v1927
      %v2171 = vpack.c.b16 %v1930, %v1929
      %v2172 = vpack.c.b16 %v1932, %v1931
      %v2173 = vpack.c.b16 %v1934, %v1933
      %v2174 = vpack.c.b16 %v1936, %v1935
      %v2175 = vpack.c.b16 %v1938, %v1937
      %v2176 = vpack.c.b16 %v1940, %v1939
      %v2177 = vpack.c.b16 %v1942, %v1941
      %v2178 = vpack.c.b16 %v1944, %v1943
      %v2179 = vpack.c.b16 %v1946, %v1945
      %v2180 = vpack.c.b16 %v1948, %v1947
      %v2181 = vpack.c.b16 %v1950, %v1949
      %v2182 = vpack.c.b16 %v1952, %v1951
      %v2183 = vpack.c.b16 %v1954, %v1953
      %v2184 = vpack.c.b16 %v1956, %v1955
      %v2185 = vpack.c.b16 %v1958, %v1957
      %v2186 = vpack.c.b16 %v1960, %v1959
      %v2187 = vpack.c.b16 %v1962, %v1961
      %v2188 = vpack.c.b16 %v1964, %v1963
      %v2189 = vpack.c.b16 %v1966, %v1965
      %v2190 = vpack.c.b16 %v1968, %v1967
      %v2191 = vpack.c.b16 %v1970, %v1969
      %v2192 = vpack.c.b16 %v1972, %v1971
      %v2193 = vpack.c.b16 %v1974, %v1973
      %v2194 = vpack.c.b16 %v1976, %v1975
      %v2195 = vpack.c.b16 %v1978, %v1977
      %v2196 = vpack.c.b16 %v1980, %v1979
      %v2197 = vpack.c.b16 %v1982, %v1981
      %v2198 = vpack.c.b16 %v1984, %v1983
      %v2199 = vpack.c.b16 %v1986, %v1985
      %v2200 = vpack.c.b16 %v1988, %v1987
      %v2201 = vpack.c.b16 %v1990, %v1989
      %v2202 = vpack.c.b16 %v1992, %v1991
      %v2203 = vpack.c.b16 %v1994, %v1993
      %v2204 = vpack.c.b16 %v1996, %v1995
      %v2205 = vpack.c.b16 %v1998, %v1997
      %v2206 = vpack.c.b16 %v2000, %v1999
      %v2207 = vpack.c.b16 %v2002, %v2001
      %v2208 = vpack.c.b16 %v2004, %v2003
      %v2209 = vpack.c.b16 %v2006, %v2005
      %v2210 = vpack.c.b16 %v2008, %v2007
      %v2211 = vpack.c.b16 %v2010, %v2009
      %v2212 = vpack.c.b16 %v2012, %v2011
      %v2213 = vpack.c.b16 %v2014, %v2013
      %v2214 = vpack.c.b16 %v2016, %v2015
      %v2215 = vpack.c.b16 %v2018, %v2017
      %v2216 = vpack.c.b16 %v2020, %v2019
      %vm2413 = vcmask 523264
      %v2415 = vsel %vm2413, %v1065, 0
      %v2418 = vsel %vm2413, %v1090, 0
      %v2421 = vsel %vm2413, %v1115, 0
      %v2424 = vsel %vm2413, %v1140, 0
      %2426 = vmatprep.subr.bf16.mxu0 0
      %2427 = vmatpush1.bf16.msra.mxu0 %v2021
      %2428 = vmatprep.subr.bf16.mxu0 0
      %2429 = vmatpush1.bf16.msra.mxu0 %v2022
      %2430 = vmatprep.subr.bf16.mxu0 0
      %2431 = vmatpush1.bf16.msra.mxu0 %v2023
      %2432 = vmatprep.subr.bf16.mxu0 0
      %2433 = vmatpush1.bf16.msra.mxu0 %v2024
      %2434 = vmatprep.subr.bf16.mxu0 0
      %2435 = vmatpush1.bf16.msra.mxu0 %v2025
      %2436 = vmatprep.subr.bf16.mxu0 0
      %2437 = vmatpush1.bf16.msra.mxu0 %v2026
      %2438 = vmatprep.subr.bf16.mxu0 0
      %2439 = vmatpush1.bf16.msra.mxu0 %v2027
      %2440 = vmatprep.subr.bf16.mxu0 0
      %2441 = vmatpush1.bf16.msra.mxu0 %v2028
      %2442 = vmatprep.subr.bf16.mxu0 0
      %2443 = vmatpush1.bf16.msra.mxu0 %v2029
      %2444 = vmatprep.subr.bf16.mxu0 0
      %2445 = vmatpush1.bf16.msra.mxu0 %v2030
      %2446 = vmatprep.subr.bf16.mxu0 0
      %2447 = vmatpush1.bf16.msra.mxu0 %v2031
      %2448 = vmatprep.subr.bf16.mxu0 0
      %2449 = vmatpush1.bf16.msra.mxu0 %v2032
      %2450 = vmatprep.subr.bf16.mxu0 0
      %2451 = vmatpush1.bf16.msra.mxu0 %v2033
      %2452 = vmatprep.subr.bf16.mxu0 0
      %2453 = vmatpush1.bf16.msra.mxu0 %v2034
      %2454 = vmatprep.subr.bf16.mxu0 0
      %2455 = vmatpush1.bf16.msra.mxu0 %v2035
      %2456 = vmatprep.subr.bf16.mxu0 0
      %2457 = vmatpush1.bf16.msra.mxu0 %v2036
      %2458 = vmatprep.mubr.bf16.mxu0 %v1042
      %2459 = vmatmul.mubr.bf16.gmra.mrb[0].mxu0 %v1041
      %v2460 = vpop.f32.mrb[0].mxu0
      %v2461 = vadd.f32 0.0, %v2460
      %v2462 = vpop.f32.mrb[0].mxu0
      %v2463 = vpop.f32.mrb[0].mxu0
      %v2464 = vadd.f32 0.0, %v2463
      %v2465 = vpop.f32.mrb[0].mxu0
      %2466 = vmatprep.mubr.bf16.mxu0 %v1067
      %2467 = vmatmul.mubr.bf16.gmra.mrb[0].mxu0 %v1066
      %v2468 = vpop.f32.mrb[0].mxu0
      %v2469 = vadd.f32 0.0, %v2468
      %v2470 = vpop.f32.mrb[0].mxu0
      %v2471 = vpop.f32.mrb[0].mxu0
      %v2472 = vadd.f32 0.0, %v2471
      %v2473 = vpop.f32.mrb[0].mxu0
      %2474 = vmatprep.mubr.bf16.mxu0 %v1092
      %2475 = vmatmul.mubr.bf16.gmra.mrb[0].mxu0 %v1091
      %v2476 = vpop.f32.mrb[0].mxu0
      %v2477 = vadd.f32 0.0, %v2476
      %v2478 = vpop.f32.mrb[0].mxu0
      %v2479 = vpop.f32.mrb[0].mxu0
      %v2480 = vadd.f32 0.0, %v2479
      %v2481 = vpop.f32.mrb[0].mxu0
      %2482 = vmatprep.mubr.bf16.mxu0 %v1117
      %2483 = vmatmul.mubr.bf16.gmra.mrb[0].mxu0 %v1116
      %v2484 = vpop.f32.mrb[0].mxu0
      %v2485 = vadd.f32 0.0, %v2484
      %v2486 = vpop.f32.mrb[0].mxu0
      %v2487 = vpop.f32.mrb[0].mxu0
      %v2488 = vadd.f32 0.0, %v2487
      %v2489 = vpop.f32.mrb[0].mxu0
      %2490 = vdwg.mxu0
      %2491 = vmatprep.subr.bf16.mxu0 0
      %2492 = vmatpush1.bf16.msra.mxu0 %v2037
      %2493 = vmatprep.subr.bf16.mxu0 0
      %2494 = vmatpush1.bf16.msra.mxu0 %v2038
      %2495 = vmatprep.subr.bf16.mxu0 0
      %2496 = vmatpush1.bf16.msra.mxu0 %v2039
      %2497 = vmatprep.subr.bf16.mxu0 0
      %2498 = vmatpush1.bf16.msra.mxu0 %v2040
      %2499 = vmatprep.subr.bf16.mxu0 0
      %2500 = vmatpush1.bf16.msra.mxu0 %v2041
      %2501 = vmatprep.subr.bf16.mxu0 0
      %2502 = vmatpush1.bf16.msra.mxu0 %v2042
      %2503 = vmatprep.subr.bf16.mxu0 0
      %2504 = vmatpush1.bf16.msra.mxu0 %v2043
      %2505 = vmatprep.subr.bf16.mxu0 0
      %2506 = vmatpush1.bf16.msra.mxu0 %v2044
      %2507 = vmatprep.subr.bf16.mxu0 0
      %2508 = vmatpush1.bf16.msra.mxu0 %v2045
      %2509 = vmatprep.subr.bf16.mxu0 0
      %2510 = vmatpush1.bf16.msra.mxu0 %v2046
      %2511 = vmatprep.subr.bf16.mxu0 0
      %2512 = vmatpush1.bf16.msra.mxu0 %v2047
      %2513 = vmatprep.subr.bf16.mxu0 0
      %2514 = vmatpush1.bf16.msra.mxu0 %v2048
      %2515 = vmatprep.subr.bf16.mxu0 0
      %2516 = vmatpush1.bf16.msra.mxu0 %v2049
      %2517 = vmatprep.subr.bf16.mxu0 0
      %2518 = vmatpush1.bf16.msra.mxu0 %v2050
      %2519 = vmatprep.subr.bf16.mxu0 0
      %2520 = vmatpush1.bf16.msra.mxu0 %v2051
      %2521 = vmatprep.subr.bf16.mxu0 0
      %2522 = vmatpush1.bf16.msra.mxu0 %v2052
      %2523 = vmatprep.mubr.bf16.mxu0 %v1044
      %2524 = vmatmul.mubr.bf16.gmra.mrb[0].mxu0 %v1043
      %v2525 = vpop.f32.mrb[0].mxu0
      %v2526 = vadd.f32 %v2461, %v2525
      %v2527 = vpop.f32.mrb[0].mxu0
      %v2528 = vpop.f32.mrb[0].mxu0
      %v2529 = vadd.f32 %v2464, %v2528
      %v2530 = vpop.f32.mrb[0].mxu0
      %2531 = vmatprep.mubr.bf16.mxu0 %v1069
      %2532 = vmatmul.mubr.bf16.gmra.mrb[0].mxu0 %v1068
      %v2533 = vpop.f32.mrb[0].mxu0
      %v2534 = vadd.f32 %v2469, %v2533
      %v2535 = vpop.f32.mrb[0].mxu0
      %v2536 = vpop.f32.mrb[0].mxu0
      %v2537 = vadd.f32 %v2472, %v2536
      %v2538 = vpop.f32.mrb[0].mxu0
      %2539 = vmatprep.mubr.bf16.mxu0 %v1094
      %2540 = vmatmul.mubr.bf16.gmra.mrb[0].mxu0 %v1093
      %v2541 = vpop.f32.mrb[0].mxu0
      %v2542 = vadd.f32 %v2477, %v2541
      %v2543 = vpop.f32.mrb[0].mxu0
      %v2544 = vpop.f32.mrb[0].mxu0
      %v2545 = vadd.f32 %v2480, %v2544
      %v2546 = vpop.f32.mrb[0].mxu0
      %2547 = vmatprep.mubr.bf16.mxu0 %v1119
      %2548 = vmatmul.mubr.bf16.gmra.mrb[0].mxu0 %v1118
      %v2549 = vpop.f32.mrb[0].mxu0
      %v2550 = vadd.f32 %v2485, %v2549
      %v2551 = vpop.f32.mrb[0].mxu0
      %v2552 = vpop.f32.mrb[0].mxu0
      %v2553 = vadd.f32 %v2488, %v2552
      %v2554 = vpop.f32.mrb[0].mxu0
      %2555 = vdwg.mxu0
      %2556 = vmatprep.subr.bf16.mxu0 0
      %2557 = vmatpush1.bf16.msra.mxu0 %v2053
      %2558 = vmatprep.subr.bf16.mxu0 0
      %2559 = vmatpush1.bf16.msra.mxu0 %v2054
      %2560 = vmatprep.subr.bf16.mxu0 0
      %2561 = vmatpush1.bf16.msra.mxu0 %v2055
      %2562 = vmatprep.subr.bf16.mxu0 0
      %2563 = vmatpush1.bf16.msra.mxu0 %v2056
      %2564 = vmatprep.subr.bf16.mxu0 0
      %2565 = vmatpush1.bf16.msra.mxu0 %v2057
      %2566 = vmatprep.subr.bf16.mxu0 0
      %2567 = vmatpush1.bf16.msra.mxu0 %v2058
      %2568 = vmatprep.subr.bf16.mxu0 0
      %2569 = vmatpush1.bf16.msra.mxu0 %v2059
      %2570 = vmatprep.subr.bf16.mxu0 0
      %2571 = vmatpush1.bf16.msra.mxu0 %v2060
      %2572 = vmatprep.subr.bf16.mxu0 0
      %2573 = vmatpush1.bf16.msra.mxu0 %v2061
      %2574 = vmatprep.subr.bf16.mxu0 0
      %2575 = vmatpush1.bf16.msra.mxu0 %v2062
      %2576 = vmatprep.subr.bf16.mxu0 0
      %2577 = vmatpush1.bf16.msra.mxu0 %v2063
      %2578 = vmatprep.subr.bf16.mxu0 0
      %2579 = vmatpush1.bf16.msra.mxu0 %v2064
      %2580 = vmatprep.subr.bf16.mxu0 0
      %2581 = vmatpush1.bf16.msra.mxu0 %v2065
      %2582 = vmatprep.subr.bf16.mxu0 0
      %2583 = vmatpush1.bf16.msra.mxu0 %v2066
      %2584 = vmatprep.subr.bf16.mxu0 0
      %2585 = vmatpush1.bf16.msra.mxu0 %v2067
      %2586 = vmatprep.subr.bf16.mxu0 0
      %2587 = vmatpush1.bf16.msra.mxu0 %v2068
      %2588 = vmatprep.mubr.bf16.mxu0 %v1046
      %2589 = vmatmul.mubr.bf16.gmra.mrb[0].mxu0 %v1045
      %v2590 = vpop.f32.mrb[0].mxu0
      %v2591 = vadd.f32 %v2526, %v2590
      %v2592 = vpop.f32.mrb[0].mxu0
      %v2593 = vpop.f32.mrb[0].mxu0
      %v2594 = vadd.f32 %v2529, %v2593
      %v2595 = vpop.f32.mrb[0].mxu0
      %2596 = vmatprep.mubr.bf16.mxu0 %v1071
      %2597 = vmatmul.mubr.bf16.gmra.mrb[0].mxu0 %v1070
      %v2598 = vpop.f32.mrb[0].mxu0
      %v2599 = vadd.f32 %v2534, %v2598
      %v2600 = vpop.f32.mrb[0].mxu0
      %v2601 = vpop.f32.mrb[0].mxu0
      %v2602 = vadd.f32 %v2537, %v2601
      %v2603 = vpop.f32.mrb[0].mxu0
      %2604 = vmatprep.mubr.bf16.mxu0 %v1096
      %2605 = vmatmul.mubr.bf16.gmra.mrb[0].mxu0 %v1095
      %v2606 = vpop.f32.mrb[0].mxu0
      %v2607 = vadd.f32 %v2542, %v2606
      %v2608 = vpop.f32.mrb[0].mxu0
      %v2609 = vpop.f32.mrb[0].mxu0
      %v2610 = vadd.f32 %v2545, %v2609
      %v2611 = vpop.f32.mrb[0].mxu0
      %2612 = vmatprep.mubr.bf16.mxu0 %v1121
      %2613 = vmatmul.mubr.bf16.gmra.mrb[0].mxu0 %v1120
      %v2614 = vpop.f32.mrb[0].mxu0
      %v2615 = vadd.f32 %v2550, %v2614
      %v2616 = vpop.f32.mrb[0].mxu0
      %v2617 = vpop.f32.mrb[0].mxu0
      %v2618 = vadd.f32 %v2553, %v2617
      %v2619 = vpop.f32.mrb[0].mxu0
      %2620 = vdwg.mxu0
      %2621 = vmatprep.subr.bf16.mxu0 0
      %2622 = vmatpush1.bf16.msra.mxu0 %v2069
      %2623 = vmatprep.subr.bf16.mxu0 0
      %2624 = vmatpush1.bf16.msra.mxu0 %v2070
      %2625 = vmatprep.subr.bf16.mxu0 0
      %2626 = vmatpush1.bf16.msra.mxu0 %v2071
      %2627 = vmatprep.subr.bf16.mxu0 0
      %2628 = vmatpush1.bf16.msra.mxu0 %v2072
      %2629 = vmatprep.subr.bf16.mxu0 0
      %2630 = vmatpush1.bf16.msra.mxu0 %v2073
      %2631 = vmatprep.subr.bf16.mxu0 0
      %2632 = vmatpush1.bf16.msra.mxu0 %v2074
      %2633 = vmatprep.subr.bf16.mxu0 0
      %2634 = vmatpush1.bf16.msra.mxu0 %v2075
      %2635 = vmatprep.subr.bf16.mxu0 0
      %2636 = vmatpush1.bf16.msra.mxu0 %v2076
      %2637 = vmatprep.subr.bf16.mxu0 0
      %2638 = vmatpush1.bf16.msra.mxu0 %v2077
      %2639 = vmatprep.subr.bf16.mxu0 0
      %2640 = vmatpush1.bf16.msra.mxu0 %v2078
      %2641 = vmatprep.subr.bf16.mxu0 0
      %2642 = vmatpush1.bf16.msra.mxu0 %v2079
      %2643 = vmatprep.subr.bf16.mxu0 0
      %2644 = vmatpush1.bf16.msra.mxu0 %v2080
      %2645 = vmatprep.subr.bf16.mxu0 0
      %2646 = vmatpush1.bf16.msra.mxu0 %v2081
      %2647 = vmatprep.subr.bf16.mxu0 0
      %2648 = vmatpush1.bf16.msra.mxu0 %v2082
      %2649 = vmatprep.subr.bf16.mxu0 0
      %2650 = vmatpush1.bf16.msra.mxu0 %v2083
      %2651 = vmatprep.subr.bf16.mxu0 0
      %2652 = vmatpush1.bf16.msra.mxu0 %v2084
      %2653 = vmatprep.mubr.bf16.mxu0 %v1048
      %2654 = vmatmul.mubr.bf16.gmra.mrb[0].mxu0 %v1047
      %v2655 = vpop.f32.mrb[0].mxu0
      %v2656 = vadd.f32 %v2591, %v2655
      %v2657 = vpop.f32.mrb[0].mxu0
      %v2658 = vpop.f32.mrb[0].mxu0
      %v2659 = vadd.f32 %v2594, %v2658
      %v2660 = vpop.f32.mrb[0].mxu0
      %2661 = vmatprep.mubr.bf16.mxu0 %v1073
      %2662 = vmatmul.mubr.bf16.gmra.mrb[0].mxu0 %v1072
      %v2663 = vpop.f32.mrb[0].mxu0
      %v2664 = vadd.f32 %v2599, %v2663
      %v2665 = vpop.f32.mrb[0].mxu0
      %v2666 = vpop.f32.mrb[0].mxu0
      %v2667 = vadd.f32 %v2602, %v2666
      %v2668 = vpop.f32.mrb[0].mxu0
      %2669 = vmatprep.mubr.bf16.mxu0 %v1098
      %2670 = vmatmul.mubr.bf16.gmra.mrb[0].mxu0 %v1097
      %v2671 = vpop.f32.mrb[0].mxu0
      %v2672 = vadd.f32 %v2607, %v2671
      %v2673 = vpop.f32.mrb[0].mxu0
      %v2674 = vpop.f32.mrb[0].mxu0
      %v2675 = vadd.f32 %v2610, %v2674
      %v2676 = vpop.f32.mrb[0].mxu0
      %2677 = vmatprep.mubr.bf16.mxu0 %v1123
      %2678 = vmatmul.mubr.bf16.gmra.mrb[0].mxu0 %v1122
      %v2679 = vpop.f32.mrb[0].mxu0
      %v2680 = vadd.f32 %v2615, %v2679
      %v2681 = vpop.f32.mrb[0].mxu0
      %v2682 = vpop.f32.mrb[0].mxu0
      %v2683 = vadd.f32 %v2618, %v2682
      %v2684 = vpop.f32.mrb[0].mxu0
      %2685 = vdwg.mxu0
      %2686 = vmatprep.subr.bf16.mxu0 0
      %2687 = vmatpush1.bf16.msra.mxu0 %v2085
      %2688 = vmatprep.subr.bf16.mxu0 0
      %2689 = vmatpush1.bf16.msra.mxu0 %v2086
      %2690 = vmatprep.subr.bf16.mxu0 0
      %2691 = vmatpush1.bf16.msra.mxu0 %v2087
      %2692 = vmatprep.subr.bf16.mxu0 0
      %2693 = vmatpush1.bf16.msra.mxu0 %v2088
      %2694 = vmatprep.subr.bf16.mxu0 0
      %2695 = vmatpush1.bf16.msra.mxu0 %v2089
      %2696 = vmatprep.subr.bf16.mxu0 0
      %2697 = vmatpush1.bf16.msra.mxu0 %v2090
      %2698 = vmatprep.subr.bf16.mxu0 0
      %2699 = vmatpush1.bf16.msra.mxu0 %v2091
      %2700 = vmatprep.subr.bf16.mxu0 0
      %2701 = vmatpush1.bf16.msra.mxu0 %v2092
      %2702 = vmatprep.subr.bf16.mxu0 0
      %2703 = vmatpush1.bf16.msra.mxu0 %v2093
      %2704 = vmatprep.subr.bf16.mxu0 0
      %2705 = vmatpush1.bf16.msra.mxu0 %v2094
      %2706 = vmatprep.subr.bf16.mxu0 0
      %2707 = vmatpush1.bf16.msra.mxu0 %v2095
      %2708 = vmatprep.subr.bf16.mxu0 0
      %2709 = vmatpush1.bf16.msra.mxu0 %v2096
      %2710 = vmatprep.subr.bf16.mxu0 0
      %2711 = vmatpush1.bf16.msra.mxu0 %v2097
      %2712 = vmatprep.subr.bf16.mxu0 0
      %2713 = vmatpush1.bf16.msra.mxu0 %v2098
      %2714 = vmatprep.subr.bf16.mxu0 0
      %2715 = vmatpush1.bf16.msra.mxu0 %v2099
      %2716 = vmatprep.subr.bf16.mxu0 0
      %2717 = vmatpush1.bf16.msra.mxu0 %v2100
      %2718 = vmatprep.mubr.bf16.mxu0 %v1050
      %2719 = vmatmul.mubr.bf16.gmra.mrb[0].mxu0 %v1049
      %v2720 = vpop.f32.mrb[0].mxu0
      %v2721 = vadd.f32 %v2656, %v2720
      %v2722 = vpop.f32.mrb[0].mxu0
      %v2723 = vpop.f32.mrb[0].mxu0
      %v2724 = vadd.f32 %v2659, %v2723
      %v2725 = vpop.f32.mrb[0].mxu0
      %2726 = vmatprep.mubr.bf16.mxu0 %v1075
      %2727 = vmatmul.mubr.bf16.gmra.mrb[0].mxu0 %v1074
      %v2728 = vpop.f32.mrb[0].mxu0
      %v2729 = vadd.f32 %v2664, %v2728
      %v2730 = vpop.f32.mrb[0].mxu0
      %v2731 = vpop.f32.mrb[0].mxu0
      %v2732 = vadd.f32 %v2667, %v2731
      %v2733 = vpop.f32.mrb[0].mxu0
      %2734 = vmatprep.mubr.bf16.mxu0 %v1100
      %2735 = vmatmul.mubr.bf16.gmra.mrb[0].mxu0 %v1099
      %v2736 = vpop.f32.mrb[0].mxu0
      %v2737 = vadd.f32 %v2672, %v2736
      %v2738 = vpop.f32.mrb[0].mxu0
      %v2739 = vpop.f32.mrb[0].mxu0
      %v2740 = vadd.f32 %v2675, %v2739
      %v2741 = vpop.f32.mrb[0].mxu0
      %2742 = vmatprep.mubr.bf16.mxu0 %v1125
      %2743 = vmatmul.mubr.bf16.gmra.mrb[0].mxu0 %v1124
      %v2744 = vpop.f32.mrb[0].mxu0
      %v2745 = vadd.f32 %v2680, %v2744
      %v2746 = vpop.f32.mrb[0].mxu0
      %v2747 = vpop.f32.mrb[0].mxu0
      %v2748 = vadd.f32 %v2683, %v2747
      %v2749 = vpop.f32.mrb[0].mxu0
      %2750 = vdwg.mxu0
      %2751 = vmatprep.subr.bf16.mxu0 0
      %2752 = vmatpush1.bf16.msra.mxu0 %v2101
      %2753 = vmatprep.subr.bf16.mxu0 0
      %2754 = vmatpush1.bf16.msra.mxu0 %v2102
      %2755 = vmatprep.subr.bf16.mxu0 0
      %2756 = vmatpush1.bf16.msra.mxu0 %v2103
      %2757 = vmatprep.subr.bf16.mxu0 0
      %2758 = vmatpush1.bf16.msra.mxu0 %v2104
      %2759 = vmatprep.subr.bf16.mxu0 0
      %2760 = vmatpush1.bf16.msra.mxu0 %v2105
      %2761 = vmatprep.subr.bf16.mxu0 0
      %2762 = vmatpush1.bf16.msra.mxu0 %v2106
      %2763 = vmatprep.subr.bf16.mxu0 0
      %2764 = vmatpush1.bf16.msra.mxu0 %v2107
      %2765 = vmatprep.subr.bf16.mxu0 0
      %2766 = vmatpush1.bf16.msra.mxu0 %v2108
      %2767 = vmatprep.subr.bf16.mxu0 0
      %2768 = vmatpush1.bf16.msra.mxu0 %v2109
      %2769 = vmatprep.subr.bf16.mxu0 0
      %2770 = vmatpush1.bf16.msra.mxu0 %v2110
      %2771 = vmatprep.subr.bf16.mxu0 0
      %2772 = vmatpush1.bf16.msra.mxu0 %v2111
      %2773 = vmatprep.subr.bf16.mxu0 0
      %2774 = vmatpush1.bf16.msra.mxu0 %v2112
      %2775 = vmatprep.subr.bf16.mxu0 0
      %2776 = vmatpush1.bf16.msra.mxu0 %v2113
      %2777 = vmatprep.subr.bf16.mxu0 0
      %2778 = vmatpush1.bf16.msra.mxu0 %v2114
      %2779 = vmatprep.subr.bf16.mxu0 0
      %2780 = vmatpush1.bf16.msra.mxu0 %v2115
      %2781 = vmatprep.subr.bf16.mxu0 0
      %2782 = vmatpush1.bf16.msra.mxu0 %v2116
      %2783 = vmatprep.mubr.bf16.mxu0 %v1052
      %2784 = vmatmul.mubr.bf16.gmra.mrb[0].mxu0 %v1051
      %v2785 = vpop.f32.mrb[0].mxu0
      %v2786 = vadd.f32 %v2721, %v2785
      %v2787 = vpop.f32.mrb[0].mxu0
      %v2788 = vpop.f32.mrb[0].mxu0
      %v2789 = vadd.f32 %v2724, %v2788
      %v2790 = vpop.f32.mrb[0].mxu0
      %2791 = vmatprep.mubr.bf16.mxu0 %v1077
      %2792 = vmatmul.mubr.bf16.gmra.mrb[0].mxu0 %v1076
      %v2793 = vpop.f32.mrb[0].mxu0
      %v2794 = vadd.f32 %v2729, %v2793
      %v2795 = vpop.f32.mrb[0].mxu0
      %v2796 = vpop.f32.mrb[0].mxu0
      %v2797 = vadd.f32 %v2732, %v2796
      %v2798 = vpop.f32.mrb[0].mxu0
      %2799 = vmatprep.mubr.bf16.mxu0 %v1102
      %2800 = vmatmul.mubr.bf16.gmra.mrb[0].mxu0 %v1101
      %v2801 = vpop.f32.mrb[0].mxu0
      %v2802 = vadd.f32 %v2737, %v2801
      %v2803 = vpop.f32.mrb[0].mxu0
      %v2804 = vpop.f32.mrb[0].mxu0
      %v2805 = vadd.f32 %v2740, %v2804
      %v2806 = vpop.f32.mrb[0].mxu0
      %2807 = vmatprep.mubr.bf16.mxu0 %v1127
      %2808 = vmatmul.mubr.bf16.gmra.mrb[0].mxu0 %v1126
      %v2809 = vpop.f32.mrb[0].mxu0
      %v2810 = vadd.f32 %v2745, %v2809
      %v2811 = vpop.f32.mrb[0].mxu0
      %v2812 = vpop.f32.mrb[0].mxu0
      %v2813 = vadd.f32 %v2748, %v2812
      %v2814 = vpop.f32.mrb[0].mxu0
      %2815 = vdwg.mxu0
      %2816 = vmatprep.subr.bf16.mxu0 0
      %2817 = vmatpush1.bf16.msra.mxu0 %v2117
      %2818 = vmatprep.subr.bf16.mxu0 0
      %2819 = vmatpush1.bf16.msra.mxu0 %v2118
      %2820 = vmatprep.subr.bf16.mxu0 0
      %2821 = vmatpush1.bf16.msra.mxu0 %v2119
      %2822 = vmatprep.subr.bf16.mxu0 0
      %2823 = vmatpush1.bf16.msra.mxu0 %v2120
      %2824 = vmatprep.subr.bf16.mxu0 0
      %2825 = vmatpush1.bf16.msra.mxu0 %v2121
      %2826 = vmatprep.subr.bf16.mxu0 0
      %2827 = vmatpush1.bf16.msra.mxu0 %v2122
      %2828 = vmatprep.subr.bf16.mxu0 0
      %2829 = vmatpush1.bf16.msra.mxu0 %v2123
      %2830 = vmatprep.subr.bf16.mxu0 0
      %2831 = vmatpush1.bf16.msra.mxu0 %v2124
      %2832 = vmatprep.subr.bf16.mxu0 0
      %2833 = vmatpush1.bf16.msra.mxu0 %v2125
      %2834 = vmatprep.subr.bf16.mxu0 0
      %2835 = vmatpush1.bf16.msra.mxu0 %v2126
      %2836 = vmatprep.subr.bf16.mxu0 0
      %2837 = vmatpush1.bf16.msra.mxu0 %v2127
      %2838 = vmatprep.subr.bf16.mxu0 0
      %2839 = vmatpush1.bf16.msra.mxu0 %v2128
      %2840 = vmatprep.subr.bf16.mxu0 0
      %2841 = vmatpush1.bf16.msra.mxu0 %v2129
      %2842 = vmatprep.subr.bf16.mxu0 0
      %2843 = vmatpush1.bf16.msra.mxu0 %v2130
      %2844 = vmatprep.subr.bf16.mxu0 0
      %2845 = vmatpush1.bf16.msra.mxu0 %v2131
      %2846 = vmatprep.subr.bf16.mxu0 0
      %2847 = vmatpush1.bf16.msra.mxu0 %v2132
      %2848 = vmatprep.mubr.bf16.mxu0 %v1054
      %2849 = vmatmul.mubr.bf16.gmra.mrb[0].mxu0 %v1053
      %v2850 = vpop.f32.mrb[0].mxu0
      %v2851 = vadd.f32 %v2786, %v2850
      %v2852 = vpop.f32.mrb[0].mxu0
      %v2853 = vpop.f32.mrb[0].mxu0
      %v2854 = vadd.f32 %v2789, %v2853
      %v2855 = vpop.f32.mrb[0].mxu0
      %2856 = vmatprep.mubr.bf16.mxu0 %v1079
      %2857 = vmatmul.mubr.bf16.gmra.mrb[0].mxu0 %v1078
      %v2858 = vpop.f32.mrb[0].mxu0
      %v2859 = vadd.f32 %v2794, %v2858
      %v2860 = vpop.f32.mrb[0].mxu0
      %v2861 = vpop.f32.mrb[0].mxu0
      %v2862 = vadd.f32 %v2797, %v2861
      %v2863 = vpop.f32.mrb[0].mxu0
      %2864 = vmatprep.mubr.bf16.mxu0 %v1104
      %2865 = vmatmul.mubr.bf16.gmra.mrb[0].mxu0 %v1103
      %v2866 = vpop.f32.mrb[0].mxu0
      %v2867 = vadd.f32 %v2802, %v2866
      %v2868 = vpop.f32.mrb[0].mxu0
      %v2869 = vpop.f32.mrb[0].mxu0
      %v2870 = vadd.f32 %v2805, %v2869
      %v2871 = vpop.f32.mrb[0].mxu0
      %2872 = vmatprep.mubr.bf16.mxu0 %v1129
      %2873 = vmatmul.mubr.bf16.gmra.mrb[0].mxu0 %v1128
      %v2874 = vpop.f32.mrb[0].mxu0
      %v2875 = vadd.f32 %v2810, %v2874
      %v2876 = vpop.f32.mrb[0].mxu0
      %v2877 = vpop.f32.mrb[0].mxu0
      %v2878 = vadd.f32 %v2813, %v2877
      %v2879 = vpop.f32.mrb[0].mxu0
      %2880 = vdwg.mxu0
      %2881 = vmatprep.subr.bf16.mxu0 0
      %2882 = vmatpush1.bf16.msra.mxu0 %v2133
      %2883 = vmatprep.subr.bf16.mxu0 0
      %2884 = vmatpush1.bf16.msra.mxu0 %v2134
      %2885 = vmatprep.subr.bf16.mxu0 0
      %2886 = vmatpush1.bf16.msra.mxu0 %v2135
      %2887 = vmatprep.subr.bf16.mxu0 0
      %2888 = vmatpush1.bf16.msra.mxu0 %v2136
      %2889 = vmatprep.subr.bf16.mxu0 0
      %2890 = vmatpush1.bf16.msra.mxu0 %v2137
      %2891 = vmatprep.subr.bf16.mxu0 0
      %2892 = vmatpush1.bf16.msra.mxu0 %v2138
      %2893 = vmatprep.subr.bf16.mxu0 0
      %2894 = vmatpush1.bf16.msra.mxu0 %v2139
      %2895 = vmatprep.subr.bf16.mxu0 0
      %2896 = vmatpush1.bf16.msra.mxu0 %v2140
      %2897 = vmatprep.subr.bf16.mxu0 0
      %2898 = vmatpush1.bf16.msra.mxu0 %v2141
      %2899 = vmatprep.subr.bf16.mxu0 0
      %2900 = vmatpush1.bf16.msra.mxu0 %v2142
      %2901 = vmatprep.subr.bf16.mxu0 0
      %2902 = vmatpush1.bf16.msra.mxu0 %v2143
      %2903 = vmatprep.subr.bf16.mxu0 0
      %2904 = vmatpush1.bf16.msra.mxu0 %v2144
      %2905 = vmatprep.subr.bf16.mxu0 0
      %2906 = vmatpush1.bf16.msra.mxu0 %v2145
      %2907 = vmatprep.subr.bf16.mxu0 0
      %2908 = vmatpush1.bf16.msra.mxu0 %v2146
      %2909 = vmatprep.subr.bf16.mxu0 0
      %2910 = vmatpush1.bf16.msra.mxu0 %v2147
      %2911 = vmatprep.subr.bf16.mxu0 0
      %2912 = vmatpush1.bf16.msra.mxu0 %v2148
      %2913 = vmatprep.mubr.bf16.mxu0 %v1056
      %2914 = vmatmul.mubr.bf16.gmra.mrb[0].mxu0 %v1055
      %v2915 = vpop.f32.mrb[0].mxu0
      %v2916 = vadd.f32 %v2851, %v2915
      %v2917 = vpop.f32.mrb[0].mxu0
      %v2918 = vpop.f32.mrb[0].mxu0
      %v2919 = vadd.f32 %v2854, %v2918
      %v2920 = vpop.f32.mrb[0].mxu0
      %2921 = vmatprep.mubr.bf16.mxu0 %v1081
      %2922 = vmatmul.mubr.bf16.gmra.mrb[0].mxu0 %v1080
      %v2923 = vpop.f32.mrb[0].mxu0
      %v2924 = vadd.f32 %v2859, %v2923
      %v2925 = vpop.f32.mrb[0].mxu0
      %v2926 = vpop.f32.mrb[0].mxu0
      %v2927 = vadd.f32 %v2862, %v2926
      %v2928 = vpop.f32.mrb[0].mxu0
      %2929 = vmatprep.mubr.bf16.mxu0 %v1106
      %2930 = vmatmul.mubr.bf16.gmra.mrb[0].mxu0 %v1105
      %v2931 = vpop.f32.mrb[0].mxu0
      %v2932 = vadd.f32 %v2867, %v2931
      %v2933 = vpop.f32.mrb[0].mxu0
      %v2934 = vpop.f32.mrb[0].mxu0
      %v2935 = vadd.f32 %v2870, %v2934
      %v2936 = vpop.f32.mrb[0].mxu0
      %2937 = vmatprep.mubr.bf16.mxu0 %v1131
      %2938 = vmatmul.mubr.bf16.gmra.mrb[0].mxu0 %v1130
      %v2939 = vpop.f32.mrb[0].mxu0
      %v2940 = vadd.f32 %v2875, %v2939
      %v2941 = vpop.f32.mrb[0].mxu0
      %v2942 = vpop.f32.mrb[0].mxu0
      %v2943 = vadd.f32 %v2878, %v2942
      %v2944 = vpop.f32.mrb[0].mxu0
      %2945 = vdwg.mxu0
      %2946 = vmatprep.subr.bf16.mxu0 0
      %2947 = vmatpush1.bf16.msra.mxu0 %v2149
      %2948 = vmatprep.subr.bf16.mxu0 0
      %2949 = vmatpush1.bf16.msra.mxu0 %v2150
      %2950 = vmatprep.subr.bf16.mxu0 0
      %2951 = vmatpush1.bf16.msra.mxu0 %v2151
      %2952 = vmatprep.subr.bf16.mxu0 0
      %2953 = vmatpush1.bf16.msra.mxu0 %v2152
      %2954 = vmatprep.subr.bf16.mxu0 0
      %2955 = vmatpush1.bf16.msra.mxu0 %v2153
      %2956 = vmatprep.subr.bf16.mxu0 0
      %2957 = vmatpush1.bf16.msra.mxu0 %v2154
      %2958 = vmatprep.subr.bf16.mxu0 0
      %2959 = vmatpush1.bf16.msra.mxu0 %v2155
      %2960 = vmatprep.subr.bf16.mxu0 0
      %2961 = vmatpush1.bf16.msra.mxu0 %v2156
      %2962 = vmatprep.subr.bf16.mxu0 0
      %2963 = vmatpush1.bf16.msra.mxu0 %v2157
      %2964 = vmatprep.subr.bf16.mxu0 0
      %2965 = vmatpush1.bf16.msra.mxu0 %v2158
      %2966 = vmatprep.subr.bf16.mxu0 0
      %2967 = vmatpush1.bf16.msra.mxu0 %v2159
      %2968 = vmatprep.subr.bf16.mxu0 0
      %2969 = vmatpush1.bf16.msra.mxu0 %v2160
      %2970 = vmatprep.subr.bf16.mxu0 0
      %2971 = vmatpush1.bf16.msra.mxu0 %v2161
      %2972 = vmatprep.subr.bf16.mxu0 0
      %2973 = vmatpush1.bf16.msra.mxu0 %v2162
      %2974 = vmatprep.subr.bf16.mxu0 0
      %2975 = vmatpush1.bf16.msra.mxu0 %v2163
      %2976 = vmatprep.subr.bf16.mxu0 0
      %2977 = vmatpush1.bf16.msra.mxu0 %v2164
      %2978 = vmatprep.mubr.bf16.mxu0 %v1058
      %2979 = vmatmul.mubr.bf16.gmra.mrb[0].mxu0 %v1057
      %v2980 = vpop.f32.mrb[0].mxu0
      %v2981 = vadd.f32 %v2916, %v2980
      %v2982 = vpop.f32.mrb[0].mxu0
      %v2983 = vpop.f32.mrb[0].mxu0
      %v2984 = vadd.f32 %v2919, %v2983
      %v2985 = vpop.f32.mrb[0].mxu0
      %2986 = vmatprep.mubr.bf16.mxu0 %v1083
      %2987 = vmatmul.mubr.bf16.gmra.mrb[0].mxu0 %v1082
      %v2988 = vpop.f32.mrb[0].mxu0
      %v2989 = vadd.f32 %v2924, %v2988
      %v2990 = vpop.f32.mrb[0].mxu0
      %v2991 = vpop.f32.mrb[0].mxu0
      %v2992 = vadd.f32 %v2927, %v2991
      %v2993 = vpop.f32.mrb[0].mxu0
      %2994 = vmatprep.mubr.bf16.mxu0 %v1108
      %2995 = vmatmul.mubr.bf16.gmra.mrb[0].mxu0 %v1107
      %v2996 = vpop.f32.mrb[0].mxu0
      %v2997 = vadd.f32 %v2932, %v2996
      %v2998 = vpop.f32.mrb[0].mxu0
      %v2999 = vpop.f32.mrb[0].mxu0
      %v3000 = vadd.f32 %v2935, %v2999
      %v3001 = vpop.f32.mrb[0].mxu0
      %3002 = vmatprep.mubr.bf16.mxu0 %v1133
      %3003 = vmatmul.mubr.bf16.gmra.mrb[0].mxu0 %v1132
      %v3004 = vpop.f32.mrb[0].mxu0
      %v3005 = vadd.f32 %v2940, %v3004
      %v3006 = vpop.f32.mrb[0].mxu0
      %v3007 = vpop.f32.mrb[0].mxu0
      %v3008 = vadd.f32 %v2943, %v3007
      %v3009 = vpop.f32.mrb[0].mxu0
      %3010 = vdwg.mxu0
      %3011 = vmatprep.subr.bf16.mxu0 0
      %3012 = vmatpush1.bf16.msra.mxu0 %v2165
      %3013 = vmatprep.subr.bf16.mxu0 0
      %3014 = vmatpush1.bf16.msra.mxu0 %v2166
      %3015 = vmatprep.subr.bf16.mxu0 0
      %3016 = vmatpush1.bf16.msra.mxu0 %v2167
      %3017 = vmatprep.subr.bf16.mxu0 0
      %3018 = vmatpush1.bf16.msra.mxu0 %v2168
      %3019 = vmatprep.subr.bf16.mxu0 0
      %3020 = vmatpush1.bf16.msra.mxu0 %v2169
      %3021 = vmatprep.subr.bf16.mxu0 0
      %3022 = vmatpush1.bf16.msra.mxu0 %v2170
      %3023 = vmatprep.subr.bf16.mxu0 0
      %3024 = vmatpush1.bf16.msra.mxu0 %v2171
      %3025 = vmatprep.subr.bf16.mxu0 0
      %3026 = vmatpush1.bf16.msra.mxu0 %v2172
      %3027 = vmatprep.subr.bf16.mxu0 0
      %3028 = vmatpush1.bf16.msra.mxu0 %v2173
      %3029 = vmatprep.subr.bf16.mxu0 0
      %3030 = vmatpush1.bf16.msra.mxu0 %v2174
      %3031 = vmatprep.subr.bf16.mxu0 0
      %3032 = vmatpush1.bf16.msra.mxu0 %v2175
      %3033 = vmatprep.subr.bf16.mxu0 0
      %3034 = vmatpush1.bf16.msra.mxu0 %v2176
      %3035 = vmatprep.subr.bf16.mxu0 0
      %3036 = vmatpush1.bf16.msra.mxu0 %v2177
      %3037 = vmatprep.subr.bf16.mxu0 0
      %3038 = vmatpush1.bf16.msra.mxu0 %v2178
      %3039 = vmatprep.subr.bf16.mxu0 0
      %3040 = vmatpush1.bf16.msra.mxu0 %v2179
      %3041 = vmatprep.subr.bf16.mxu0 0
      %3042 = vmatpush1.bf16.msra.mxu0 %v2180
      %3043 = vmatprep.mubr.bf16.mxu0 %v1060
      %3044 = vmatmul.mubr.bf16.gmra.mrb[0].mxu0 %v1059
      %v3045 = vpop.f32.mrb[0].mxu0
      %v3046 = vadd.f32 %v2981, %v3045
      %v3047 = vpop.f32.mrb[0].mxu0
      %v3048 = vpop.f32.mrb[0].mxu0
      %v3049 = vadd.f32 %v2984, %v3048
      %v3050 = vpop.f32.mrb[0].mxu0
      %3051 = vmatprep.mubr.bf16.mxu0 %v1085
      %3052 = vmatmul.mubr.bf16.gmra.mrb[0].mxu0 %v1084
      %v3053 = vpop.f32.mrb[0].mxu0
      %v3054 = vadd.f32 %v2989, %v3053
      %v3055 = vpop.f32.mrb[0].mxu0
      %v3056 = vpop.f32.mrb[0].mxu0
      %v3057 = vadd.f32 %v2992, %v3056
      %v3058 = vpop.f32.mrb[0].mxu0
      %3059 = vmatprep.mubr.bf16.mxu0 %v1110
      %3060 = vmatmul.mubr.bf16.gmra.mrb[0].mxu0 %v1109
      %v3061 = vpop.f32.mrb[0].mxu0
      %v3062 = vadd.f32 %v2997, %v3061
      %v3063 = vpop.f32.mrb[0].mxu0
      %v3064 = vpop.f32.mrb[0].mxu0
      %v3065 = vadd.f32 %v3000, %v3064
      %v3066 = vpop.f32.mrb[0].mxu0
      %3067 = vmatprep.mubr.bf16.mxu0 %v1135
      %3068 = vmatmul.mubr.bf16.gmra.mrb[0].mxu0 %v1134
      %v3069 = vpop.f32.mrb[0].mxu0
      %v3070 = vadd.f32 %v3005, %v3069
      %v3071 = vpop.f32.mrb[0].mxu0
      %v3072 = vpop.f32.mrb[0].mxu0
      %v3073 = vadd.f32 %v3008, %v3072
      %v3074 = vpop.f32.mrb[0].mxu0
      %3075 = vdwg.mxu0
      %3076 = vmatprep.subr.bf16.mxu0 0
      %3077 = vmatpush1.bf16.msra.mxu0 %v2181
      %3078 = vmatprep.subr.bf16.mxu0 0
      %3079 = vmatpush1.bf16.msra.mxu0 %v2182
      %3080 = vmatprep.subr.bf16.mxu0 0
      %3081 = vmatpush1.bf16.msra.mxu0 %v2183
      %3082 = vmatprep.subr.bf16.mxu0 0
      %3083 = vmatpush1.bf16.msra.mxu0 %v2184
      %3084 = vmatprep.subr.bf16.mxu0 0
      %3085 = vmatpush1.bf16.msra.mxu0 %v2185
      %3086 = vmatprep.subr.bf16.mxu0 0
      %3087 = vmatpush1.bf16.msra.mxu0 %v2186
      %3088 = vmatprep.subr.bf16.mxu0 0
      %3089 = vmatpush1.bf16.msra.mxu0 %v2187
      %3090 = vmatprep.subr.bf16.mxu0 0
      %3091 = vmatpush1.bf16.msra.mxu0 %v2188
      %3092 = vmatprep.subr.bf16.mxu0 0
      %3093 = vmatpush1.bf16.msra.mxu0 %v2189
      %3094 = vmatprep.subr.bf16.mxu0 0
      %3095 = vmatpush1.bf16.msra.mxu0 %v2190
      %3096 = vmatprep.subr.bf16.mxu0 0
      %3097 = vmatpush1.bf16.msra.mxu0 %v2191
      %3098 = vmatprep.subr.bf16.mxu0 0
      %3099 = vmatpush1.bf16.msra.mxu0 %v2192
      %3100 = vmatprep.subr.bf16.mxu0 0
      %3101 = vmatpush1.bf16.msra.mxu0 %v2193
      %3102 = vmatprep.subr.bf16.mxu0 0
      %3103 = vmatpush1.bf16.msra.mxu0 %v2194
      %3104 = vmatprep.subr.bf16.mxu0 0
      %3105 = vmatpush1.bf16.msra.mxu0 %v2195
      %3106 = vmatprep.subr.bf16.mxu0 0
      %3107 = vmatpush1.bf16.msra.mxu0 %v2196
      %3108 = vmatprep.mubr.bf16.mxu0 %v1062
      %3109 = vmatmul.mubr.bf16.gmra.mrb[0].mxu0 %v1061
      %v3110 = vpop.f32.mrb[0].mxu0
      %v3111 = vadd.f32 %v3046, %v3110
      %v3112 = vpop.f32.mrb[0].mxu0
      %v3113 = vpop.f32.mrb[0].mxu0
      %v3114 = vadd.f32 %v3049, %v3113
      %v3115 = vpop.f32.mrb[0].mxu0
      %3116 = vmatprep.mubr.bf16.mxu0 %v1087
      %3117 = vmatmul.mubr.bf16.gmra.mrb[0].mxu0 %v1086
      %v3118 = vpop.f32.mrb[0].mxu0
      %v3119 = vadd.f32 %v3054, %v3118
      %v3120 = vpop.f32.mrb[0].mxu0
      %v3121 = vpop.f32.mrb[0].mxu0
      %v3122 = vadd.f32 %v3057, %v3121
      %v3123 = vpop.f32.mrb[0].mxu0
      %3124 = vmatprep.mubr.bf16.mxu0 %v1112
      %3125 = vmatmul.mubr.bf16.gmra.mrb[0].mxu0 %v1111
      %v3126 = vpop.f32.mrb[0].mxu0
      %v3127 = vadd.f32 %v3062, %v3126
      %v3128 = vpop.f32.mrb[0].mxu0
      %v3129 = vpop.f32.mrb[0].mxu0
      %v3130 = vadd.f32 %v3065, %v3129
      %v3131 = vpop.f32.mrb[0].mxu0
      %3132 = vmatprep.mubr.bf16.mxu0 %v1137
      %3133 = vmatmul.mubr.bf16.gmra.mrb[0].mxu0 %v1136
      %v3134 = vpop.f32.mrb[0].mxu0
      %v3135 = vadd.f32 %v3070, %v3134
      %v3136 = vpop.f32.mrb[0].mxu0
      %v3137 = vpop.f32.mrb[0].mxu0
      %v3138 = vadd.f32 %v3073, %v3137
      %v3139 = vpop.f32.mrb[0].mxu0
      %3140 = vdwg.mxu0
      %3141 = vmatprep.subr.bf16.mxu0 0
      %3142 = vmatpush1.bf16.msra.mxu0 %v2197
      %3143 = vmatprep.subr.bf16.mxu0 0
      %3144 = vmatpush1.bf16.msra.mxu0 %v2198
      %3145 = vmatprep.subr.bf16.mxu0 0
      %3146 = vmatpush1.bf16.msra.mxu0 %v2199
      %3147 = vmatprep.subr.bf16.mxu0 0
      %3148 = vmatpush1.bf16.msra.mxu0 %v2200
      %3149 = vmatprep.subr.bf16.mxu0 0
      %3150 = vmatpush1.bf16.msra.mxu0 %v2201
      %3151 = vmatprep.subr.bf16.mxu0 0
      %3152 = vmatpush1.bf16.msra.mxu0 %v2202
      %3153 = vmatprep.subr.bf16.mxu0 0
      %3154 = vmatpush1.bf16.msra.mxu0 %v2203
      %3155 = vmatprep.subr.bf16.mxu0 0
      %3156 = vmatpush1.bf16.msra.mxu0 %v2204
      %3157 = vmatprep.subr.bf16.mxu0 0
      %3158 = vmatpush1.bf16.msra.mxu0 %v2205
      %3159 = vmatprep.subr.bf16.mxu0 0
      %3160 = vmatpush1.bf16.msra.mxu0 %v2206
      %3161 = vmatprep.subr.bf16.mxu0 0
      %3162 = vmatpush1.bf16.msra.mxu0 %v2207
      %3163 = vmatprep.subr.bf16.mxu0 0
      %3164 = vmatpush1.bf16.msra.mxu0 %v2208
      %3165 = vmatprep.subr.bf16.mxu0 0
      %3166 = vmatpush1.bf16.msra.mxu0 %v2209
      %3167 = vmatprep.subr.bf16.mxu0 0
      %3168 = vmatpush1.bf16.msra.mxu0 %v2210
      %3169 = vmatprep.subr.bf16.mxu0 0
      %3170 = vmatpush1.bf16.msra.mxu0 %v2211
      %3171 = vmatprep.subr.bf16.mxu0 0
      %3172 = vmatpush1.bf16.msra.mxu0 %v2212
      %3173 = vmatprep.mubr.bf16.mxu0 %v1064
      %3174 = vmatmul.mubr.bf16.gmra.mrb[0].mxu0 %v1063
      %v3175 = vpop.f32.mrb[0].mxu0
      %v3176 = vadd.f32 %v3111, %v3175
      %v3177 = vpop.f32.mrb[0].mxu0
      %v3178 = vpop.f32.mrb[0].mxu0
      %v3179 = vadd.f32 %v3114, %v3178
      %v3180 = vpop.f32.mrb[0].mxu0
      %3181 = vmatprep.mubr.bf16.mxu0 %v1089
      %3182 = vmatmul.mubr.bf16.gmra.mrb[0].mxu0 %v1088
      %v3183 = vpop.f32.mrb[0].mxu0
      %v3184 = vadd.f32 %v3119, %v3183
      %v3185 = vpop.f32.mrb[0].mxu0
      %v3186 = vpop.f32.mrb[0].mxu0
      %v3187 = vadd.f32 %v3122, %v3186
      %v3188 = vpop.f32.mrb[0].mxu0
      %3189 = vmatprep.mubr.bf16.mxu0 %v1114
      %3190 = vmatmul.mubr.bf16.gmra.mrb[0].mxu0 %v1113
      %v3191 = vpop.f32.mrb[0].mxu0
      %v3192 = vadd.f32 %v3127, %v3191
      %v3193 = vpop.f32.mrb[0].mxu0
      %v3194 = vpop.f32.mrb[0].mxu0
      %v3195 = vadd.f32 %v3130, %v3194
      %v3196 = vpop.f32.mrb[0].mxu0
      %3197 = vmatprep.mubr.bf16.mxu0 %v1139
      %3198 = vmatmul.mubr.bf16.gmra.mrb[0].mxu0 %v1138
      %v3199 = vpop.f32.mrb[0].mxu0
      %v3200 = vadd.f32 %v3135, %v3199
      %v3201 = vpop.f32.mrb[0].mxu0
      %v3202 = vpop.f32.mrb[0].mxu0
      %v3203 = vadd.f32 %v3138, %v3202
      %v3204 = vpop.f32.mrb[0].mxu0
      %3205 = vdwg.mxu0
      %3206 = vmatprep.subr.bf16.mxu0 0
      %3207 = vmatpush1.bf16.msra.mxu0 %v2213
      %3208 = vmatprep.subr.bf16.mxu0 0
      %3209 = vmatpush1.bf16.msra.mxu0 %v2214
      %3210 = vmatprep.subr.bf16.mxu0 0
      %3211 = vmatpush1.bf16.msra.mxu0 %v2215
      %3212 = vmatprep.subr.bf16.mxu0 0
      %3213 = vmatpush1.bf16.msra.mxu0 %v2216
      %3214 = vmatprep.subr.bf16.mxu0 0
      %3215 = vmatpush1.bf16.msra.mxu0 0
      %3216 = vmatprep.subr.bf16.mxu0 0
      %3217 = vmatpush1.bf16.msra.mxu0 0
      %3218 = vmatprep.subr.bf16.mxu0 0
      %3219 = vmatpush1.bf16.msra.mxu0 0
      %3220 = vmatprep.subr.bf16.mxu0 0
      %3221 = vmatpush1.bf16.msra.mxu0 0
      %3222 = vmatprep.subr.bf16.mxu0 0
      %3223 = vmatpush1.bf16.msra.mxu0 0
      %3224 = vmatprep.subr.bf16.mxu0 0
      %3225 = vmatpush1.bf16.msra.mxu0 0
      %3226 = vmatprep.subr.bf16.mxu0 0
      %3227 = vmatpush1.bf16.msra.mxu0 0
      %3228 = vmatprep.subr.bf16.mxu0 0
      %3229 = vmatpush1.bf16.msra.mxu0 0
      %3230 = vmatprep.subr.bf16.mxu0 0
      %3231 = vmatpush1.bf16.msra.mxu0 0
      %3232 = vmatprep.subr.bf16.mxu0 0
      %3233 = vmatpush1.bf16.msra.mxu0 0
      %3234 = vmatprep.subr.bf16.mxu0 0
      %3235 = vmatpush1.bf16.msra.mxu0 0
      %3236 = vmatprep.subr.bf16.mxu0 0
      %3237 = vmatpush1.bf16.msra.mxu0 0
      %3238 = vmatprep.mubr.bf16.mxu0 0
      %3239 = vmatmul.mubr.bf16.gmra.mrb[0].mxu0 %v2415
      %v3240 = vpop.f32.mrb[0].mxu0
      %v3241 = vadd.f32 %v3176, %v3240
      %v3242 = vpop.f32.mrb[0].mxu0
      %v3243 = vpop.f32.mrb[0].mxu0
      %v3244 = vadd.f32 %v3179, %v3243
      %v3245 = vpop.f32.mrb[0].mxu0
      %3246 = vmatprep.mubr.bf16.mxu0 0
      %3247 = vmatmul.mubr.bf16.gmra.mrb[0].mxu0 %v2418
      %v3248 = vpop.f32.mrb[0].mxu0
      %v3249 = vadd.f32 %v3184, %v3248
      %v3250 = vpop.f32.mrb[0].mxu0
      %v3251 = vpop.f32.mrb[0].mxu0
      %v3252 = vadd.f32 %v3187, %v3251
      %v3253 = vpop.f32.mrb[0].mxu0
      %3254 = vmatprep.mubr.bf16.mxu0 0
      %3255 = vmatmul.mubr.bf16.gmra.mrb[0].mxu0 %v2421
      %v3256 = vpop.f32.mrb[0].mxu0
      %v3257 = vadd.f32 %v3192, %v3256
      %v3258 = vpop.f32.mrb[0].mxu0
      %v3259 = vpop.f32.mrb[0].mxu0
      %v3260 = vadd.f32 %v3195, %v3259
      %v3261 = vpop.f32.mrb[0].mxu0
      %3262 = vmatprep.mubr.bf16.mxu0 0
      %3263 = vmatmul.mubr.bf16.gmra.mrb[0].mxu0 %v2424
      %v3264 = vpop.f32.mrb[0].mxu0
      %v3265 = vadd.f32 %v3200, %v3264
      %v3266 = vpop.f32.mrb[0].mxu0
      %v3267 = vpop.f32.mrb[0].mxu0
      %v3268 = vadd.f32 %v3203, %v3267
      %v3269 = vpop.f32.mrb[0].mxu0
      %3270 = vdwg.mxu0
      %v3271 = vld [vmem:[%s2] sm:$0x1]
      %v3273 = vlaneseq
      %v3274 = vshrl.u32 %v3273, 7
      %v3275 = vsub.s32 0, %v3274
      %v3276 = vrot.slane %v3271, %v3275
      %v3278 = vmul.f32 %v3241, %v3276
      %v3279 = vmul.f32 %v3244, %v3276
      %v3280 = vmul.f32 %v3249, %v3276
      %v3281 = vmul.f32 %v3252, %v3276
      %v3282 = vmul.f32 %v3257, %v3276
      %v3283 = vmul.f32 %v3260, %v3276
      %v3284 = vmul.f32 %v3265, %v3276
      %v3285 = vmul.f32 %v3268, %v3276
      %v3286 = vld [vmem:[%s3] sm:$0x1]
      %v3288 = vlaneseq
      %v3289 = vshrl.u32 %v3288, 7
      %v3290 = vsub.s32 0, %v3289
      %v3291 = vrot.slane %v3286, %v3290
      %v3293 = vadd.f32 %v3278, %v3291
      %v3294 = vadd.f32 %v3279, %v3291
      %v3295 = vadd.f32 %v3280, %v3291
      %v3296 = vadd.f32 %v3281, %v3291
      %v3297 = vadd.f32 %v3282, %v3291
      %v3298 = vadd.f32 %v3283, %v3291
      %v3299 = vadd.f32 %v3284, %v3291
      %v3300 = vadd.f32 %v3285, %v3291
      %v3301 = vmul.f32 %v3293, 0.5
      %v3302 = vmul.f32 %v3294, 0.5
      %v3303 = vmul.f32 %v3295, 0.5
      %v3304 = vmul.f32 %v3296, 0.5
      %v3305 = vmul.f32 %v3297, 0.5
      %v3306 = vmul.f32 %v3298, 0.5
      %v3307 = vmul.f32 %v3299, 0.5
      %v3308 = vmul.f32 %v3300, 0.5
      %v3309 = vmul.f32 %v3293, 0.70710677
      %v3310 = vmul.f32 %v3294, 0.70710677
      %v3311 = vmul.f32 %v3295, 0.70710677
      %v3312 = vmul.f32 %v3296, 0.70710677
      %v3313 = vmul.f32 %v3297, 0.70710677
      %v3314 = vmul.f32 %v3298, 0.70710677
      %v3315 = vmul.f32 %v3299, 0.70710677
      %v3316 = vmul.f32 %v3300, 0.70710677
      %v3317 = verf.f32.pop %v3309
      %v3318 = verf.f32.pop %v3310
      %v3319 = verf.f32.pop %v3311
      %v3320 = verf.f32.pop %v3312
      %v3321 = verf.f32.pop %v3313
      %v3322 = verf.f32.pop %v3314
      %v3323 = verf.f32.pop %v3315
      %v3324 = verf.f32.pop %v3316
      %v3325 = vadd.f32 %v3317, 1.0
      %v3326 = vadd.f32 %v3318, 1.0
      %v3327 = vadd.f32 %v3319, 1.0
      %v3328 = vadd.f32 %v3320, 1.0
      %v3329 = vadd.f32 %v3321, 1.0
      %v3330 = vadd.f32 %v3322, 1.0
      %v3331 = vadd.f32 %v3323, 1.0
      %v3332 = vadd.f32 %v3324, 1.0
      %v3333 = vmul.f32 %v3301, %v3325
      %v3334 = vmul.f32 %v3302, %v3326
      %v3335 = vmul.f32 %v3303, %v3327
      %v3336 = vmul.f32 %v3304, %v3328
      %v3337 = vmul.f32 %v3305, %v3329
      %v3338 = vmul.f32 %v3306, %v3330
      %v3339 = vmul.f32 %v3307, %v3331
      %v3340 = vmul.f32 %v3308, %v3332
      %vm3341 = vcmask 261120
      %3342 = vst.msk [vmem:[%s238] sm:$0xff] %vm3341, %v3333
      %3343 = vst.msk [vmem:[%s238 + $0x8] sm:$0xff] %vm3341, %v3334
      %3344 = vst.msk [vmem:[%s238 + $0x10] sm:$0xff] %vm3341, %v3335
      %3345 = vst.msk [vmem:[%s238 + $0x18] sm:$0xff] %vm3341, %v3336
      %3346 = vst.msk [vmem:[%s238 + $0x20] sm:$0xff] %vm3341, %v3337
      %3347 = vst.msk [vmem:[%s238 + $0x28] sm:$0xff] %vm3341, %v3338
      %3348 = vst.msk [vmem:[%s238 + $0x30] sm:$0xff] %vm3341, %v3339
      %3349 = vst.msk [vmem:[%s238 + $0x38] sm:$0xff] %vm3341, %v3340
      %s3350 = smul.u32 8, %s20
      %p3351 = scmp.lt.s32.totalorder %s19, 1
      %s3352 = scalar_select %p3351, %s19, 1
      %p3353 = scmp.lt.s32.totalorder %s3350, 7
      %s3354 = scalar_select %p3353, %s3350, 7
      %s3355 = smul.addr %s3352, 8
      %s3356 = sadd.s32 %s3354, %s3355
      %s3357 = smul.addr %s3356, 8
      %s3358 = scalar_lea.vmem %s4, %s3357
      // Predicated region
      $region37: #{fgc_forward.7} parent=35 // pred_check
        %p3359 = pneg %p138
      $region38: #{fgc_forward.7} parent=35 // pred_check_branch
        %3361 = sbr.rel (%p3359) target = $region40
      $region39: #{fgc_forward.7} parent=35 // pred_region
        %s3362 = smul.u32 8, %s20
      $region40: #{fgc_forward.7} parent=35 // pred_fallthru
        _
    $region36: #{fgc_forward.7} parent=5 // pred_fallthru
      _
    %p3363 = scmp.le.s32.totalorder 2, %s10
    // Predicated region
    $region41: #{fgc_forward.7} parent=5 // pred_check
      %p3364 = pneg %p3363
    $region42: #{fgc_forward.7} parent=5 // pred_check_branch
      %3366 = sbr.rel (%p3364) target = $region44
    $region43: #{fgc_forward.7} parent=5 // pred_region
      %s3367 = ssub.s32 %s10, 2
      // Predicated region
      $region45: #{fgc_forward.7} parent=43 // pred_check
        %p3368 = pneg %p144
      $region46: #{fgc_forward.7} parent=43 // pred_check_branch
        %3370 = sbr.rel (%p3368) target = $region48
      $region47: #{fgc_forward.7} parent=43 // pred_region
        %s3371 = smul.u32 8, %s22
        %p3372 = scmp.lt.s32.totalorder %s21, 1
        %s3373 = scalar_select %p3372, %s21, 1
        %p3374 = scmp.lt.s32.totalorder %s3371, 7
        %s3375 = scalar_select %p3374, %s3371, 7
        %s3376 = smul.addr %s3373, 8
        %s3377 = sadd.s32 %s3375, %s3376
        %s3378 = smul.addr %s3377, 8
        %s3379 = scalar_lea.vmem %s4, %s3378
      $region48: #{fgc_forward.7} parent=43 // pred_fallthru
        _
    $region44: #{fgc_forward.7} parent=5 // pred_fallthru
      _
  $region6: #{fgc_forward.7} parent=0 // loop_footer
    %s14 = sadd.s32 1, %s10
  $region7: #{fgc_forward.7} parent=0 // loop_footer_branch
    %9 = sbr.rel target = $region3
  $region8: #{fgc_forward.7} parent=0 // loop_exit
    _

// kernel: fgc_forward.9
$region0: #{fgc_forward.9}
  #allocation0 [shape = 'u32[]', space=smem, size = 0x4, offset = 0x4, fixed_abs, tag = 'smem constant byte address 0x4 - core index']
  #allocation1 [shape = 'u32[144,128]{1,0:T(1,128)}', space=vmem, size = 0x12000, scoped, tag = 'internal scratch']
  %s0 = inlined_call_operand.vmem [shape: bf16[2,256,288], index: 0, kind: input, shape index: {}]
  %s1 = inlined_call_operand.vmem [shape: bf16[288,32], index: 1, kind: input, shape index: {}]
  %s2 = inlined_call_operand.vmem [shape: f32[1,32], index: 2, kind: input, shape index: {}]
  %s3 = inlined_call_operand.vmem [shape: f32[1,32], index: 3, kind: input, shape index: {}]
  %s4 = inlined_call_operand.vmem [shape: bf16[2,256,32], index: 4, kind: output, shape index: {}]
  %s5 = sld [smem:[#allocation0]]
  $region49: #{fgc_forward.9} parent=0
    _
  %s7 = ssub.s32 1, %s5
  %s8 = scalar_select 0, %s7, %s5
  loop: start=0, step=1, limit=6
  $region2: #{fgc_forward.9} parent=0 // loop_pre_header
    _
  $region3: #{fgc_forward.9} parent=0 // loop_header
    %s10 = sphi 0, %s14
    %p11 = scmp.ge.s32.totalorder %s10, 6
    %s17 = sphi 0, %s29
    %s18 = sphi 0, %s25
    %s19 = sphi 0, %s17
    %s20 = sphi 0, %s18
    %s21 = sphi 0, %s19
    %s22 = sphi 0, %s20
    %s34 = sphi 0, %s36
    %s37 = sphi 0, %s34
    %s38 = sphi 0, %s37
    %s54 = sphi 0, %s38
    %s58 = sphi 0, %s58
    %s60 = sphi 0, %s58
    %s61 = sphi 0, %s60
    %s75 = sphi 0, %s61
    %s79 = sphi 0, %s79
    %s81 = sphi 0, %s79
    %s82 = sphi 0, %s81
    %s96 = sphi 0, %s82
    %s100 = sphi 0, %s100
    %s102 = sphi 0, %s100
    %s103 = sphi 0, %s102
    %s117 = sphi 0, %s103
    %s125 = sphi 0, %s127
    %s128 = sphi 0, %s125
    %s129 = sphi 0, %s128
    %s145 = sphi 0, %s129
  $region4: #{fgc_forward.9} parent=0 // loop_header_branch
    %13 = sbr.rel (%p11) target = $region8
  $region5: #{fgc_forward.9} parent=0 // loop_body
    %s15 = ssub.s32 %s10, 1
    %s16 = ssub.s32 %s10, 2
    %s23 = sadd.s32 1, %s18
    %p24 = scmp.ge.s32.totalorder %s23, 2
    %s25 = scalar_select %p24, 0, %s23
    %s26 = sadd.s32 1, %s17
    %s27 = scalar_select %p24, %s26, %s17
    %p28 = scmp.ge.s32.totalorder %s27, 2
    %s29 = scalar_select %p28, 0, %s27
    %s30 = ssub.s32 %s17, %s29
    %s31 = ssub.s32 %s18, %s25
    %s32 = sor.u32 %s30, %s31
    %p33 = scmp.eq.s32.totalorder %s32, 0
    %s35 = sadd.s32 %s34, 1
    %s36 = scalar_select %p33, %s34, %s35
    %p39 = pneg %p33
    %p40 = scmp.eq.s32.totalorder %s10, 3
    %p41 = por %p39, %p40
    %p42 = scmp.ne.s32.totalorder %s34, %s37
    %p43 = scmp.eq.s32.totalorder %s10, 0
    %p44 = por %p42, %p43
    %p45 = scmp.ne.s32.totalorder %s34, %s37
    %p46 = scmp.eq.s32.totalorder %s15, 3
    %p47 = por %p45, %p46
    %p48 = scmp.ne.s32.totalorder %s37, %s38
    %p49 = scmp.eq.s32.totalorder %s15, 0
    %p50 = por %p48, %p49
    %p51 = scmp.ne.s32.totalorder %s37, %s38
    %p52 = scmp.eq.s32.totalorder %s16, 3
    %p53 = por %p51, %p52
    %p55 = scmp.ne.s32.totalorder %s38, %s54
    %p56 = scmp.eq.s32.totalorder %s16, 0
    %p57 = por %p55, %p56
    %s59 = sadd.s32 %s58, 1
    %p62 = scmp.eq.s32.totalorder %s10, 3
    %p63 = scmp.ne.s32.totalorder %s58, %s60
    %p64 = scmp.eq.s32.totalorder %s10, 0
    %p65 = por %p63, %p64
    %p66 = scmp.ne.s32.totalorder %s58, %s60
    %p67 = scmp.eq.s32.totalorder %s15, 3
    %p68 = por %p66, %p67
    %p69 = scmp.ne.s32.totalorder %s60, %s61
    %p70 = scmp.eq.s32.totalorder %s15, 0
    %p71 = por %p69, %p70
    %p72 = scmp.ne.s32.totalorder %s60, %s61
    %p73 = scmp.eq.s32.totalorder %s16, 3
    %p74 = por %p72, %p73
    %p76 = scmp.ne.s32.totalorder %s61, %s75
    %p77 = scmp.eq.s32.totalorder %s16, 0
    %p78 = por %p76, %p77
    %s80 = sadd.s32 %s79, 1
    %p83 = scmp.eq.s32.totalorder %s10, 3
    %p84 = scmp.ne.s32.totalorder %s79, %s81
    %p85 = scmp.eq.s32.totalorder %s10, 0
    %p86 = por %p84, %p85
    %p87 = scmp.ne.s32.totalorder %s79, %s81
    %p88 = scmp.eq.s32.totalorder %s15, 3
    %p89 = por %p87, %p88
    %p90 = scmp.ne.s32.totalorder %s81, %s82
    %p91 = scmp.eq.s32.totalorder %s15, 0
    %p92 = por %p90, %p91
    %p93 = scmp.ne.s32.totalorder %s81, %s82
    %p94 = scmp.eq.s32.totalorder %s16, 3
    %p95 = por %p93, %p94
    %p97 = scmp.ne.s32.totalorder %s82, %s96
    %p98 = scmp.eq.s32.totalorder %s16, 0
    %p99 = por %p97, %p98
    %s101 = sadd.s32 %s100, 1
    %p104 = scmp.eq.s32.totalorder %s10, 3
    %p105 = scmp.ne.s32.totalorder %s100, %s102
    %p106 = scmp.eq.s32.totalorder %s10, 0
    %p107 = por %p105, %p106
    %p108 = scmp.ne.s32.totalorder %s100, %s102
    %p109 = scmp.eq.s32.totalorder %s15, 3
    %p110 = por %p108, %p109
    %p111 = scmp.ne.s32.totalorder %s102, %s103
    %p112 = scmp.eq.s32.totalorder %s15, 0
    %p113 = por %p111, %p112
    %p114 = scmp.ne.s32.totalorder %s102, %s103
    %p115 = scmp.eq.s32.totalorder %s16, 3
    %p116 = por %p114, %p115
    %p118 = scmp.ne.s32.totalorder %s103, %s117
    %p119 = scmp.eq.s32.totalorder %s16, 0
    %p120 = por %p118, %p119
    %s121 = ssub.s32 %s17, %s29
    %s122 = ssub.s32 %s18, %s25
    %s123 = sor.u32 %s121, %s122
    %p124 = scmp.eq.s32.totalorder %s123, 0
    %s126 = sadd.s32 %s125, 1
    %s127 = scalar_select %p124, %s125, %s126
    %p130 = pneg %p124
    %p131 = scmp.eq.s32.totalorder %s10, 3
    %p132 = por %p130, %p131
    %p133 = scmp.ne.s32.totalorder %s125, %s128
    %p134 = scmp.eq.s32.totalorder %s10, 0
    %p135 = por %p133, %p134
    %p136 = scmp.ne.s32.totalorder %s125, %s128
    %p137 = scmp.eq.s32.totalorder %s15, 3
    %p138 = por %p136, %p137
    %p139 = scmp.ne.s32.totalorder %s128, %s129
    %p140 = scmp.eq.s32.totalorder %s15, 0
    %p141 = por %p139, %p140
    %p142 = scmp.ne.s32.totalorder %s128, %s129
    %p143 = scmp.eq.s32.totalorder %s16, 3
    %p144 = por %p142, %p143
    %p146 = scmp.ne.s32.totalorder %s129, %s145
    %p147 = scmp.eq.s32.totalorder %s16, 0
    %p148 = por %p146, %p147
    %p149 = scmp.le.s32.totalorder 1, %s10
    %p150 = scmp.lt.s32.totalorder %s10, 5
    %p151 = pnand %p149, %p150
    %p152 = pneg %p151
    // Predicated region
    $region9: #{fgc_forward.9} parent=5 // pred_check
      _
    $region10: #{fgc_forward.9} parent=5 // pred_check_branch
      %154 = sbr.rel (%p151) target = $region12
    $region11: #{fgc_forward.9} parent=5 // pred_region
      %s155 = ssub.s32 %s10, 1
      // Predicated region
      $region13: #{fgc_forward.9} parent=11 // pred_check
        %p156 = pneg %p71
      $region14: #{fgc_forward.9} parent=11 // pred_check_branch
        %158 = sbr.rel (%p156) target = $region16
      $region15: #{fgc_forward.9} parent=11 // pred_region
        _
      $region16: #{fgc_forward.9} parent=11 // pred_fallthru
        _
      // Predicated region
      $region17: #{fgc_forward.9} parent=11 // pred_check
        %p159 = pneg %p92
      $region18: #{fgc_forward.9} parent=11 // pred_check_branch
        %161 = sbr.rel (%p159) target = $region20
      $region19: #{fgc_forward.9} parent=11 // pred_region
        _
      $region20: #{fgc_forward.9} parent=11 // pred_fallthru
        _
      // Predicated region
      $region21: #{fgc_forward.9} parent=11 // pred_check
        %p162 = pneg %p113
      $region22: #{fgc_forward.9} parent=11 // pred_check_branch
        %164 = sbr.rel (%p162) target = $region24
      $region23: #{fgc_forward.9} parent=11 // pred_region
        _
      $region24: #{fgc_forward.9} parent=11 // pred_fallthru
        _
    $region12: #{fgc_forward.9} parent=5 // pred_fallthru
      _
    %p165 = scmp.lt.s32.totalorder %s10, 4
    // Predicated region
    $region25: #{fgc_forward.9} parent=5 // pred_check
      %p166 = pneg %p165
    $region26: #{fgc_forward.9} parent=5 // pred_check_branch
      %168 = sbr.rel (%p166) target = $region28
    $region27: #{fgc_forward.9} parent=5 // pred_region
      // Predicated region
      $region29: #{fgc_forward.9} parent=27 // pred_check
        %p169 = pneg %p44
      $region30: #{fgc_forward.9} parent=27 // pred_check_branch
        %171 = sbr.rel (%p169) target = $region32
      $region31: #{fgc_forward.9} parent=27 // pred_region
        %s172 = smul.u32 16, %s18
        %p173 = scmp.lt.s32.totalorder %s17, 1
        %s174 = scalar_select %p173, %s17, 1
        %p175 = scmp.lt.s32.totalorder %s172, 31
        %s176 = scalar_select %p175, %s172, 31
        %s177 = smul.addr %s176, 3
        %s178 = smul.addr %s174, 96
        %s179 = sadd.s32 %s177, %s178
        %s180 = smul.addr %s179, 4
        %s181 = scalar_lea.vmem %s0, %s180
        %s182 = smul.u32 16, %s18
      $region32: #{fgc_forward.9} parent=27 // pred_fallthru
        _
    $region28: #{fgc_forward.9} parent=5 // pred_fallthru
      _
    %p183 = scmp.le.s32.totalorder 1, %s10
    %p184 = scmp.lt.s32.totalorder %s10, 5
    %p185 = pnand %p183, %p184
    %p186 = pneg %p185
    // Predicated region
    $region33: #{fgc_forward.9} parent=5 // pred_check
      _
    $region34: #{fgc_forward.9} parent=5 // pred_check_branch
      %188 = sbr.rel (%p185) target = $region36
    $region35: #{fgc_forward.9} parent=5 // pred_region
      %s189 = ssub.s32 %s10, 1
      %s190 = smul.u32 16, %s20
      %p191 = scmp.lt.s32.totalorder %s19, 1
      %s192 = scalar_select %p191, %s19, 1
      %p193 = scmp.lt.s32.totalorder %s190, 31
      %s194 = scalar_select %p193, %s190, 31
      %s195 = smul.addr %s194, 3
      %s196 = smul.addr %s192, 96
      %s197 = sadd.s32 %s195, %s196
      %s198 = smul.addr %s197, 4
      %s199 = scalar_lea.vmem %s0, %s198
      %p200 = pneg %p50
      %p201 = pneg %p47
      %p202 = pneg %p71
      %p203 = pneg %p68
      %p204 = pneg %p92
      %p205 = pneg %p89
      %p206 = pneg %p113
      %p207 = pneg %p110
      %p208 = pneg %p141
      %p209 = pneg %p138
      %s210 = smul.u32 16, %s20
      %p211 = scmp.lt.s32.totalorder %s19, 1
      %s212 = scalar_select %p211, %s19, 1
      %p213 = scmp.lt.s32.totalorder %s210, 31
      %s214 = scalar_select %p213, %s210, 31
      %s215 = smul.addr %s212, 32
      %s216 = sadd.s32 %s214, %s215
      %s217 = smul.addr %s216, 4
      %s218 = scalar_lea.vmem %s4, %s217
      %s219 = smul.u32 16, %s20
      %p220 = scmp.lt.s32.totalorder %s19, 1
      %s221 = scalar_select %p220, %s19, 1
      %p222 = scmp.lt.s32.totalorder %s219, 31
      %s223 = scalar_select %p222, %s219, 31
      %s224 = smul.addr %s223, 3
      %s225 = smul.addr %s221, 96
      %s226 = sadd.s32 %s224, %s225
      %s227 = smul.addr %s226, 4
      %s228 = scalar_lea.vmem %s0, %s227
      %s229 = smul.u32 16, %s20
      %s230 = smul.u32 16, %s20
      %p231 = scmp.lt.s32.totalorder %s19, 1
      %s232 = scalar_select %p231, %s19, 1
      %p233 = scmp.lt.s32.totalorder %s230, 31
      %s234 = scalar_select %p233, %s230, 31
      %s235 = smul.addr %s232, 32
      %s236 = sadd.s32 %s234, %s235
      %s237 = smul.addr %s236, 4
      %s238 = scalar_lea.vmem %s4, %s237
      %s239 = smul.u32 16, %s20
      %v241 = vld [vmem:[%s228] sm:$0xff]
      %v242 = vld [vmem:[%s228 + $0x8] sm:$0xf]
      %v243 = vld [vmem:[%s228 + $0xc] sm:$0xff]
      %v244 = vld [vmem:[%s228 + $0x14] sm:$0xf]
      %v245 = vld [vmem:[%s228 + $0x18] sm:$0xff]
      %v246 = vld [vmem:[%s228 + $0x20] sm:$0xf]
      %v247 = vld [vmem:[%s228 + $0x24] sm:$0xff]
      %v248 = vld [vmem:[%s228 + $0x2c] sm:$0xf]
      %v249 = vld [vmem:[%s228 + $0x30] sm:$0xff]
      %v250 = vld [vmem:[%s228 + $0x38] sm:$0xf]
      %v251 = vld [vmem:[%s228 + $0x3c] sm:$0xff]
      %v252 = vld [vmem:[%s228 + $0x44] sm:$0xf]
      %v253 = vld [vmem:[%s228 + $0x48] sm:$0xff]
      %v254 = vld [vmem:[%s228 + $0x50] sm:$0xf]
      %v255 = vld [vmem:[%s228 + $0x54] sm:$0xff]
      %v256 = vld [vmem:[%s228 + $0x5c] sm:$0xf]
      %v257 = vld [vmem:[%s228 + $0x60] sm:$0xff]
      %v258 = vld [vmem:[%s228 + $0x68] sm:$0xf]
      %v259 = vld [vmem:[%s228 + $0x6c] sm:$0xff]
      %v260 = vld [vmem:[%s228 + $0x74] sm:$0xf]
      %v261 = vld [vmem:[%s228 + $0x78] sm:$0xff]
      %v262 = vld [vmem:[%s228 + $0x80] sm:$0xf]
      %v263 = vld [vmem:[%s228 + $0x84] sm:$0xff]
      %v264 = vld [vmem:[%s228 + $0x8c] sm:$0xf]
      %v265 = vld [vmem:[%s228 + $0x90] sm:$0xff]
      %v266 = vld [vmem:[%s228 + $0x98] sm:$0xf]
      %v267 = vld [vmem:[%s228 + $0x9c] sm:$0xff]
      %v268 = vld [vmem:[%s228 + $0xa4] sm:$0xf]
      %v269 = vld [vmem:[%s228 + $0xa8] sm:$0xff]
      %v270 = vld [vmem:[%s228 + $0xb0] sm:$0xf]
      %v271 = vld [vmem:[%s228 + $0xb4] sm:$0xff]
      %v272 = vld [vmem:[%s228 + $0xbc] sm:$0xf]
      %v273 = vld [vmem:[%s1] sm:$0xf]
      %v274 = vld [vmem:[%s1 + $0x4] sm:$0xf]
      %v275 = vld [vmem:[%s1 + $0x8] sm:$0xf]
      %v276 = vld [vmem:[%s1 + $0xc] sm:$0xf]
      %v277 = vld [vmem:[%s1 + $0x10] sm:$0xf]
      %v278 = vld [vmem:[%s1 + $0x14] sm:$0xf]
      %v279 = vld [vmem:[%s1 + $0x18] sm:$0xf]
      %v280 = vld [vmem:[%s1 + $0x1c] sm:$0xf]
      %v281 = vld [vmem:[%s1 + $0x20] sm:$0xf]
      %v282 = vld [vmem:[%s1 + $0x24] sm:$0xf]
      %v283 = vld [vmem:[%s1 + $0x28] sm:$0xf]
      %v284 = vld [vmem:[%s1 + $0x2c] sm:$0xf]
      %v285 = vld [vmem:[%s1 + $0x30] sm:$0xf]
      %v286 = vld [vmem:[%s1 + $0x34] sm:$0xf]
      %v287 = vld [vmem:[%s1 + $0x38] sm:$0xf]
      %v288 = vld [vmem:[%s1 + $0x3c] sm:$0xf]
      %v289 = vld [vmem:[%s1 + $0x40] sm:$0xf]
      %v290 = vld [vmem:[%s1 + $0x44] sm:$0xf]
      %v291 = vld [vmem:[%s1 + $0x48] sm:$0xf]
      %v292 = vld [vmem:[%s1 + $0x4c] sm:$0xf]
      %v293 = vld [vmem:[%s1 + $0x50] sm:$0xf]
      %v294 = vld [vmem:[%s1 + $0x54] sm:$0xf]
      %v295 = vld [vmem:[%s1 + $0x58] sm:$0xf]
      %v296 = vld [vmem:[%s1 + $0x5c] sm:$0xf]
      %v297 = vld [vmem:[%s1 + $0x60] sm:$0xf]
      %v298 = vld [vmem:[%s1 + $0x64] sm:$0xf]
      %v299 = vld [vmem:[%s1 + $0x68] sm:$0xf]
      %v300 = vld [vmem:[%s1 + $0x6c] sm:$0xf]
      %v301 = vld [vmem:[%s1 + $0x70] sm:$0xf]
      %v302 = vld [vmem:[%s1 + $0x74] sm:$0xf]
      %v303 = vld [vmem:[%s1 + $0x78] sm:$0xf]
      %v304 = vld [vmem:[%s1 + $0x7c] sm:$0xf]
      %v305 = vld [vmem:[%s1 + $0x80] sm:$0xf]
      %v306 = vld [vmem:[%s1 + $0x84] sm:$0xf]
      %v307 = vld [vmem:[%s1 + $0x88] sm:$0xf]
      %v308 = vld [vmem:[%s1 + $0x8c] sm:$0xf]
      %v341 = vunpack.c.l.b16 %v241
      %v342 = vunpack.c.h.b16 %v241
      %v343 = vunpack.c.l.b16 %v242
      %v344 = vunpack.c.l.b16 %v243
      %v345 = vunpack.c.h.b16 %v243
      %v346 = vunpack.c.l.b16 %v244
      %v347 = vunpack.c.l.b16 %v245
      %v348 = vunpack.c.h.b16 %v245
      %v349 = vunpack.c.l.b16 %v246
      %v350 = vunpack.c.l.b16 %v247
      %v351 = vunpack.c.h.b16 %v247
      %v352 = vunpack.c.l.b16 %v248
      %v353 = vunpack.c.l.b16 %v249
      %v354 = vunpack.c.h.b16 %v249
      %v355 = vunpack.c.l.b16 %v250
      %v356 = vunpack.c.l.b16 %v251
      %v357 = vunpack.c.h.b16 %v251
      %v358 = vunpack.c.l.b16 %v252
      %v359 = vunpack.c.l.b16 %v253
      %v360 = vunpack.c.h.b16 %v253
      %v361 = vunpack.c.l.b16 %v254
      %v362 = vunpack.c.l.b16 %v255
      %v363 = vunpack.c.h.b16 %v255
      %v364 = vunpack.c.l.b16 %v256
      %v365 = vunpack.c.l.b16 %v257
      %v366 = vunpack.c.h.b16 %v257
      %v367 = vunpack.c.l.b16 %v258
      %v368 = vunpack.c.l.b16 %v259
      %v369 = vunpack.c.h.b16 %v259
      %v370 = vunpack.c.l.b16 %v260
      %v371 = vunpack.c.l.b16 %v261
      %v372 = vunpack.c.h.b16 %v261
      %v373 = vunpack.c.l.b16 %v262
      %v374 = vunpack.c.l.b16 %v263
      %v375 = vunpack.c.h.b16 %v263
      %v376 = vunpack.c.l.b16 %v264
      %v377 = vunpack.c.l.b16 %v265
      %v378 = vunpack.c.h.b16 %v265
      %v379 = vunpack.c.l.b16 %v266
      %v380 = vunpack.c.l.b16 %v267
      %v381 = vunpack.c.h.b16 %v267
      %v382 = vunpack.c.l.b16 %v268
      %v383 = vunpack.c.l.b16 %v269
      %v384 = vunpack.c.h.b16 %v269
      %v385 = vunpack.c.l.b16 %v270
      %v386 = vunpack.c.l.b16 %v271
      %v387 = vunpack.c.h.b16 %v271
      %v388 = vunpack.c.l.b16 %v272
      %v389 = vpack.c.b16 %v344, %v341
      %v390 = vpack.c.b16 %v345, %v342
      %v391 = vpack.c.b16 %v346, %v343
      %v392 = vpack.c.b16 %v350, %v347
      %v393 = vpack.c.b16 %v351, %v348
      %v394 = vpack.c.b16 %v352, %v349
      %v395 = vpack.c.b16 %v356, %v353
      %v396 = vpack.c.b16 %v357, %v354
      %v397 = vpack.c.b16 %v358, %v355
      %v398 = vpack.c.b16 %v362, %v359
      %v399 = vpack.c.b16 %v363, %v360
      %v400 = vpack.c.b16 %v364, %v361
      %v401 = vpack.c.b16 %v368, %v365
      %v402 = vpack.c.b16 %v369, %v366
      %v403 = vpack.c.b16 %v370, %v367
      %v404 = vpack.c.b16 %v374, %v371
      %v405 = vpack.c.b16 %v375, %v372
      %v406 = vpack.c.b16 %v376, %v373
      %v407 = vpack.c.b16 %v380, %v377
      %v408 = vpack.c.b16 %v381, %v378
      %v409 = vpack.c.b16 %v382, %v379
      %v410 = vpack.c.b16 %v386, %v383
      %v411 = vpack.c.b16 %v387, %v384
      %v412 = vpack.c.b16 %v388, %v385
      %v465 = vunpack.c.l.b16 %v273
      %v466 = vunpack.c.l.b16 %v274
      %v467 = vunpack.c.l.b16 %v275
      %v468 = vunpack.c.l.b16 %v276
      %v469 = vunpack.c.l.b16 %v277
      %v470 = vunpack.c.l.b16 %v278
      %v471 = vunpack.c.l.b16 %v279
      %v472 = vunpack.c.l.b16 %v280
      %v473 = vunpack.c.l.b16 %v281
      %v474 = vunpack.c.l.b16 %v282
      %v475 = vunpack.c.l.b16 %v283
      %v476 = vunpack.c.l.b16 %v284
      %v477 = vunpack.c.l.b16 %v285
      %v478 = vunpack.c.l.b16 %v286
      %v479 = vunpack.c.l.b16 %v287
      %v480 = vunpack.c.l.b16 %v288
      %v481 = vunpack.c.l.b16 %v289
      %v482 = vunpack.c.l.b16 %v290
      %v483 = vunpack.c.l.b16 %v291
      %v484 = vunpack.c.l.b16 %v292
      %v485 = vunpack.c.l.b16 %v293
      %v486 = vunpack.c.l.b16 %v294
      %v487 = vunpack.c.l.b16 %v295
      %v488 = vunpack.c.l.b16 %v296
      %v489 = vunpack.c.l.b16 %v297
      %v490 = vunpack.c.l.b16 %v298
      %v491 = vunpack.c.l.b16 %v299
      %v492 = vunpack.c.l.b16 %v300
      %v493 = vunpack.c.l.b16 %v301
      %v494 = vunpack.c.l.b16 %v302
      %v495 = vunpack.c.l.b16 %v303
      %v496 = vunpack.c.l.b16 %v304
      %v497 = vunpack.c.l.b16 %v305
      %v498 = vunpack.c.l.b16 %v306
      %v499 = vunpack.c.l.b16 %v307
      %v500 = vunpack.c.l.b16 %v308
      %v501 = vpack.c.b16 %v466, %v465
      %v502 = vpack.c.b16 %v468, %v467
      %v503 = vpack.c.b16 %v470, %v469
      %v504 = vpack.c.b16 %v472, %v471
      %v505 = vpack.c.b16 %v474, %v473
      %v506 = vpack.c.b16 %v476, %v475
      %v507 = vpack.c.b16 %v478, %v477
      %v508 = vpack.c.b16 %v480, %v479
      %v509 = vpack.c.b16 %v482, %v481
      %v510 = vpack.c.b16 %v484, %v483
      %v511 = vpack.c.b16 %v486, %v485
      %v512 = vpack.c.b16 %v488, %v487
      %v513 = vpack.c.b16 %v490, %v489
      %v514 = vpack.c.b16 %v492, %v491
      %v515 = vpack.c.b16 %v494, %v493
      %v516 = vpack.c.b16 %v496, %v495
      %v517 = vpack.c.b16 %v498, %v497
      %v518 = vpack.c.b16 %v500, %v499
      %vm537 = vcmask 261120
      %v539 = vsel %vm537, %v391, 0
      %v542 = vsel %vm537, %v394, 0
      %v545 = vsel %vm537, %v397, 0
      %v548 = vsel %vm537, %v400, 0
      %v551 = vsel %vm537, %v403, 0
      %v554 = vsel %vm537, %v406, 0
      %v557 = vsel %vm537, %v409, 0
      %v560 = vsel %vm537, %v412, 0
      %562 = vmatprep.subr.bf16.mxu0 0
      %563 = vmatpush1.bf16.msra.mxu0 %v501
      %564 = vmatprep.subr.bf16.mxu0 0
      %565 = vmatpush1.bf16.msra.mxu0 %v502
      %566 = vmatprep.subr.bf16.mxu0 0
      %567 = vmatpush1.bf16.msra.mxu0 %v503
      %568 = vmatprep.subr.bf16.mxu0 0
      %569 = vmatpush1.bf16.msra.mxu0 %v504
      %570 = vmatprep.subr.bf16.mxu0 0
      %571 = vmatpush1.bf16.msra.mxu0 %v505
      %572 = vmatprep.subr.bf16.mxu0 0
      %573 = vmatpush1.bf16.msra.mxu0 %v506
      %574 = vmatprep.subr.bf16.mxu0 0
      %575 = vmatpush1.bf16.msra.mxu0 %v507
      %576 = vmatprep.subr.bf16.mxu0 0
      %577 = vmatpush1.bf16.msra.mxu0 %v508
      %578 = vmatprep.subr.bf16.mxu0 0
      %579 = vmatpush1.bf16.msra.mxu0 %v509
      %580 = vmatprep.subr.bf16.mxu0 0
      %581 = vmatpush1.bf16.msra.mxu0 %v510
      %582 = vmatprep.subr.bf16.mxu0 0
      %583 = vmatpush1.bf16.msra.mxu0 %v511
      %584 = vmatprep.subr.bf16.mxu0 0
      %585 = vmatpush1.bf16.msra.mxu0 %v512
      %586 = vmatprep.subr.bf16.mxu0 0
      %587 = vmatpush1.bf16.msra.mxu0 %v513
      %588 = vmatprep.subr.bf16.mxu0 0
      %589 = vmatpush1.bf16.msra.mxu0 %v514
      %590 = vmatprep.subr.bf16.mxu0 0
      %591 = vmatpush1.bf16.msra.mxu0 %v515
      %592 = vmatprep.subr.bf16.mxu0 0
      %593 = vmatpush1.bf16.msra.mxu0 %v516
      %594 = vmatprep.mubr.bf16.mxu0 %v390
      %595 = vmatmul.mubr.bf16.gmra.mrb[0].mxu0 %v389
      %v596 = vpop.f32.mrb[0].mxu0
      %v597 = vadd.f32 0.0, %v596
      %v598 = vpop.f32.mrb[0].mxu0
      %v599 = vpop.f32.mrb[0].mxu0
      %v600 = vadd.f32 0.0, %v599
      %v601 = vpop.f32.mrb[0].mxu0
      %602 = vmatprep.mubr.bf16.mxu0 %v393
      %603 = vmatmul.mubr.bf16.gmra.mrb[0].mxu0 %v392
      %v604 = vpop.f32.mrb[0].mxu0
      %v605 = vadd.f32 0.0, %v604
      %v606 = vpop.f32.mrb[0].mxu0
      %v607 = vpop.f32.mrb[0].mxu0
      %v608 = vadd.f32 0.0, %v607
      %v609 = vpop.f32.mrb[0].mxu0
      %610 = vmatprep.mubr.bf16.mxu0 %v396
      %611 = vmatmul.mubr.bf16.gmra.mrb[0].mxu0 %v395
      %v612 = vpop.f32.mrb[0].mxu0
      %v613 = vadd.f32 0.0, %v612
      %v614 = vpop.f32.mrb[0].mxu0
      %v615 = vpop.f32.mrb[0].mxu0
      %v616 = vadd.f32 0.0, %v615
      %v617 = vpop.f32.mrb[0].mxu0
      %618 = vmatprep.mubr.bf16.mxu0 %v399
      %619 = vmatmul.mubr.bf16.gmra.mrb[0].mxu0 %v398
      %v620 = vpop.f32.mrb[0].mxu0
      %v621 = vadd.f32 0.0, %v620
      %v622 = vpop.f32.mrb[0].mxu0
      %v623 = vpop.f32.mrb[0].mxu0
      %v624 = vadd.f32 0.0, %v623
      %v625 = vpop.f32.mrb[0].mxu0
      %626 = vmatprep.mubr.bf16.mxu0 %v402
      %627 = vmatmul.mubr.bf16.gmra.mrb[0].mxu0 %v401
      %v628 = vpop.f32.mrb[0].mxu0
      %v629 = vadd.f32 0.0, %v628
      %v630 = vpop.f32.mrb[0].mxu0
      %v631 = vpop.f32.mrb[0].mxu0
      %v632 = vadd.f32 0.0, %v631
      %v633 = vpop.f32.mrb[0].mxu0
      %634 = vmatprep.mubr.bf16.mxu0 %v405
      %635 = vmatmul.mubr.bf16.gmra.mrb[0].mxu0 %v404
      %v636 = vpop.f32.mrb[0].mxu0
      %v637 = vadd.f32 0.0, %v636
      %v638 = vpop.f32.mrb[0].mxu0
      %v639 = vpop.f32.mrb[0].mxu0
      %v640 = vadd.f32 0.0, %v639
      %v641 = vpop.f32.mrb[0].mxu0
      %642 = vmatprep.mubr.bf16.mxu0 %v408
      %643 = vmatmul.mubr.bf16.gmra.mrb[0].mxu0 %v407
      %v644 = vpop.f32.mrb[0].mxu0
      %v645 = vadd.f32 0.0, %v644
      %v646 = vpop.f32.mrb[0].mxu0
      %v647 = vpop.f32.mrb[0].mxu0
      %v648 = vadd.f32 0.0, %v647
      %v649 = vpop.f32.mrb[0].mxu0
      %650 = vmatprep.mubr.bf16.mxu0 %v411
      %651 = vmatmul.mubr.bf16.gmra.mrb[0].mxu0 %v410
      %v652 = vpop.f32.mrb[0].mxu0
      %v653 = vadd.f32 0.0, %v652
      %v654 = vpop.f32.mrb[0].mxu0
      %v655 = vpop.f32.mrb[0].mxu0
      %v656 = vadd.f32 0.0, %v655
      %v657 = vpop.f32.mrb[0].mxu0
      %658 = vdwg.mxu0
      %659 = vmatprep.subr.bf16.mxu0 0
      %660 = vmatpush1.bf16.msra.mxu0 %v517
      %661 = vmatprep.subr.bf16.mxu0 0
      %662 = vmatpush1.bf16.msra.mxu0 %v518
      %663 = vmatprep.subr.bf16.mxu0 0
      %664 = vmatpush1.bf16.msra.mxu0 0
      %665 = vmatprep.subr.bf16.mxu0 0
      %666 = vmatpush1.bf16.msra.mxu0 0
      %667 = vmatprep.subr.bf16.mxu0 0
      %668 = vmatpush1.bf16.msra.mxu0 0
      %669 = vmatprep.subr.bf16.mxu0 0
      %670 = vmatpush1.bf16.msra.mxu0 0
      %671 = vmatprep.subr.bf16.mxu0 0
      %672 = vmatpush1.bf16.msra.mxu0 0
      %673 = vmatprep.subr.bf16.mxu0 0
      %674 = vmatpush1.bf16.msra.mxu0 0
      %675 = vmatprep.subr.bf16.mxu0 0
      %676 = vmatpush1.bf16.msra.mxu0 0
      %677 = vmatprep.subr.bf16.mxu0 0
      %678 = vmatpush1.bf16.msra.mxu0 0
      %679 = vmatprep.subr.bf16.mxu0 0
      %680 = vmatpush1.bf16.msra.mxu0 0
      %681 = vmatprep.subr.bf16.mxu0 0
      %682 = vmatpush1.bf16.msra.mxu0 0
      %683 = vmatprep.subr.bf16.mxu0 0
      %684 = vmatpush1.bf16.msra.mxu0 0
      %685 = vmatprep.subr.bf16.mxu0 0
      %686 = vmatpush1.bf16.msra.mxu0 0
      %687 = vmatprep.subr.bf16.mxu0 0
      %688 = vmatpush1.bf16.msra.mxu0 0
      %689 = vmatprep.subr.bf16.mxu0 0
      %690 = vmatpush1.bf16.msra.mxu0 0
      %691 = vmatprep.mubr.bf16.mxu0 0
      %692 = vmatmul.mubr.bf16.gmra.mrb[0].mxu0 %v539
      %v693 = vpop.f32.mrb[0].mxu0
      %v694 = vadd.f32 %v597, %v693
      %v695 = vpop.f32.mrb[0].mxu0
      %v696 = vpop.f32.mrb[0].mxu0
      %v697 = vadd.f32 %v600, %v696
      %v698 = vpop.f32.mrb[0].mxu0
      %699 = vmatprep.mubr.bf16.mxu0 0
      %700 = vmatmul.mubr.bf16.gmra.mrb[0].mxu0 %v542
      %v701 = vpop.f32.mrb[0].mxu0
      %v702 = vadd.f32 %v605, %v701
      %v703 = vpop.f32.mrb[0].mxu0
      %v704 = vpop.f32.mrb[0].mxu0
      %v705 = vadd.f32 %v608, %v704
      %v706 = vpop.f32.mrb[0].mxu0
      %707 = vmatprep.mubr.bf16.mxu0 0
      %708 = vmatmul.mubr.bf16.gmra.mrb[0].mxu0 %v545
      %v709 = vpop.f32.mrb[0].mxu0
      %v710 = vadd.f32 %v613, %v709
      %v711 = vpop.f32.mrb[0].mxu0
      %v712 = vpop.f32.mrb[0].mxu0
      %v713 = vadd.f32 %v616, %v712
      %v714 = vpop.f32.mrb[0].mxu0
      %715 = vmatprep.mubr.bf16.mxu0 0
      %716 = vmatmul.mubr.bf16.gmra.mrb[0].mxu0 %v548
      %v717 = vpop.f32.mrb[0].mxu0
      %v718 = vadd.f32 %v621, %v717
      %v719 = vpop.f32.mrb[0].mxu0
      %v720 = vpop.f32.mrb[0].mxu0
      %v721 = vadd.f32 %v624, %v720
      %v722 = vpop.f32.mrb[0].mxu0
      %723 = vmatprep.mubr.bf16.mxu0 0
      %724 = vmatmul.mubr.bf16.gmra.mrb[0].mxu0 %v551
      %v725 = vpop.f32.mrb[0].mxu0
      %v726 = vadd.f32 %v629, %v725
      %v727 = vpop.f32.mrb[0].mxu0
      %v728 = vpop.f32.mrb[0].mxu0
      %v729 = vadd.f32 %v632, %v728
      %v730 = vpop.f32.mrb[0].mxu0
      %731 = vmatprep.mubr.bf16.mxu0 0
      %732 = vmatmul.mubr.bf16.gmra.mrb[0].mxu0 %v554
      %v733 = vpop.f32.mrb[0].mxu0
      %v734 = vadd.f32 %v637, %v733
      %v735 = vpop.f32.mrb[0].mxu0
      %v736 = vpop.f32.mrb[0].mxu0
      %v737 = vadd.f32 %v640, %v736
      %v738 = vpop.f32.mrb[0].mxu0
      %739 = vmatprep.mubr.bf16.mxu0 0
      %740 = vmatmul.mubr.bf16.gmra.mrb[0].mxu0 %v557
      %v741 = vpop.f32.mrb[0].mxu0
      %v742 = vadd.f32 %v645, %v741
      %v743 = vpop.f32.mrb[0].mxu0
      %v744 = vpop.f32.mrb[0].mxu0
      %v745 = vadd.f32 %v648, %v744
      %v746 = vpop.f32.mrb[0].mxu0
      %747 = vmatprep.mubr.bf16.mxu0 0
      %748 = vmatmul.mubr.bf16.gmra.mrb[0].mxu0 %v560
      %v749 = vpop.f32.mrb[0].mxu0
      %v750 = vadd.f32 %v653, %v749
      %v751 = vpop.f32.mrb[0].mxu0
      %v752 = vpop.f32.mrb[0].mxu0
      %v753 = vadd.f32 %v656, %v752
      %v754 = vpop.f32.mrb[0].mxu0
      %755 = vdwg.mxu0
      %v756 = vld [vmem:[%s2] sm:$0x1]
      %v758 = vlaneseq
      %v759 = vshrl.u32 %v758, 7
      %v760 = vsub.s32 0, %v759
      %v761 = vrot.slane %v756, %v760
      %v763 = vmul.f32 %v694, %v761
      %v764 = vmul.f32 %v697, %v761
      %v765 = vmul.f32 %v702, %v761
      %v766 = vmul.f32 %v705, %v761
      %v767 = vmul.f32 %v710, %v761
      %v768 = vmul.f32 %v713, %v761
      %v769 = vmul.f32 %v718, %v761
      %v770 = vmul.f32 %v721, %v761
      %v771 = vmul.f32 %v726, %v761
      %v772 = vmul.f32 %v729, %v761
      %v773 = vmul.f32 %v734, %v761
      %v774 = vmul.f32 %v737, %v761
      %v775 = vmul.f32 %v742, %v761
      %v776 = vmul.f32 %v745, %v761
      %v777 = vmul.f32 %v750, %v761
      %v778 = vmul.f32 %v753, %v761
      %v779 = vld [vmem:[%s3] sm:$0x1]
      %v781 = vlaneseq
      %v782 = vshrl.u32 %v781, 7
      %v783 = vsub.s32 0, %v782
      %v784 = vrot.slane %v779, %v783
      %v786 = vadd.f32 %v763, %v784
      %v787 = vadd.f32 %v764, %v784
      %v788 = vadd.f32 %v765, %v784
      %v789 = vadd.f32 %v766, %v784
      %v790 = vadd.f32 %v767, %v784
      %v791 = vadd.f32 %v768, %v784
      %v792 = vadd.f32 %v769, %v784
      %v793 = vadd.f32 %v770, %v784
      %v794 = vadd.f32 %v771, %v784
      %v795 = vadd.f32 %v772, %v784
      %v796 = vadd.f32 %v773, %v784
      %v797 = vadd.f32 %v774, %v784
      %v798 = vadd.f32 %v775, %v784
      %v799 = vadd.f32 %v776, %v784
      %v800 = vadd.f32 %v777, %v784
      %v801 = vadd.f32 %v778, %v784
      %v802 = vpack.c.bf16 %v787, %v786
      %v803 = vpack.c.bf16 %v789, %v788
      %v804 = vpack.c.bf16 %v791, %v790
      %v805 = vpack.c.bf16 %v793, %v792
      %v806 = vpack.c.bf16 %v795, %v794
      %v807 = vpack.c.bf16 %v797, %v796
      %v808 = vpack.c.bf16 %v799, %v798
      %v809 = vpack.c.bf16 %v801, %v800
      %v818 = vunpack.c.l.b16 %v802
      %v819 = vunpack.c.h.b16 %v802
      %v820 = vunpack.c.l.b16 %v803
      %v821 = vunpack.c.h.b16 %v803
      %v822 = vunpack.c.l.b16 %v804
      %v823 = vunpack.c.h.b16 %v804
      %v824 = vunpack.c.l.b16 %v805
      %v825 = vunpack.c.h.b16 %v805
      %v826 = vunpack.c.l.b16 %v806
      %v827 = vunpack.c.h.b16 %v806
      %v828 = vunpack.c.l.b16 %v807
      %v829 = vunpack.c.h.b16 %v807
      %v830 = vunpack.c.l.b16 %v808
      %v831 = vunpack.c.h.b16 %v808
      %v832 = vunpack.c.l.b16 %v809
      %v833 = vunpack.c.h.b16 %v809
      %v834 = vpack.c.b16 %v818, %v818
      %v835 = vpack.c.b16 %v819, %v819
      %v836 = vpack.c.b16 %v820, %v820
      %v837 = vpack.c.b16 %v821, %v821
      %v838 = vpack.c.b16 %v822, %v822
      %v839 = vpack.c.b16 %v823, %v823
      %v840 = vpack.c.b16 %v824, %v824
      %v841 = vpack.c.b16 %v825, %v825
      %v842 = vpack.c.b16 %v826, %v826
      %v843 = vpack.c.b16 %v827, %v827
      %v844 = vpack.c.b16 %v828, %v828
      %v845 = vpack.c.b16 %v829, %v829
      %v846 = vpack.c.b16 %v830, %v830
      %v847 = vpack.c.b16 %v831, %v831
      %v848 = vpack.c.b16 %v832, %v832
      %v849 = vpack.c.b16 %v833, %v833
      %vm866 = vcmask 257024
      %867 = vst.msk [vmem:[%s238] sm:$0xf] %vm866, %v834
      %868 = vst.msk [vmem:[%s238 + $0x4] sm:$0xf] %vm866, %v835
      %869 = vst.msk [vmem:[%s238 + $0x8] sm:$0xf] %vm866, %v836
      %870 = vst.msk [vmem:[%s238 + $0xc] sm:$0xf] %vm866, %v837
      %871 = vst.msk [vmem:[%s238 + $0x10] sm:$0xf] %vm866, %v838
      %872 = vst.msk [vmem:[%s238 + $0x14] sm:$0xf] %vm866, %v839
      %873 = vst.msk [vmem:[%s238 + $0x18] sm:$0xf] %vm866, %v840
      %874 = vst.msk [vmem:[%s238 + $0x1c] sm:$0xf] %vm866, %v841
      %875 = vst.msk [vmem:[%s238 + $0x20] sm:$0xf] %vm866, %v842
      %876 = vst.msk [vmem:[%s238 + $0x24] sm:$0xf] %vm866, %v843
      %877 = vst.msk [vmem:[%s238 + $0x28] sm:$0xf] %vm866, %v844
      %878 = vst.msk [vmem:[%s238 + $0x2c] sm:$0xf] %vm866, %v845
      %879 = vst.msk [vmem:[%s238 + $0x30] sm:$0xf] %vm866, %v846
      %880 = vst.msk [vmem:[%s238 + $0x34] sm:$0xf] %vm866, %v847
      %881 = vst.msk [vmem:[%s238 + $0x38] sm:$0xf] %vm866, %v848
      %882 = vst.msk [vmem:[%s238 + $0x3c] sm:$0xf] %vm866, %v849
      %s883 = smul.u32 16, %s20
      %p884 = scmp.lt.s32.totalorder %s19, 1
      %s885 = scalar_select %p884, %s19, 1
      %p886 = scmp.lt.s32.totalorder %s883, 31
      %s887 = scalar_select %p886, %s883, 31
      %s888 = smul.addr %s885, 32
      %s889 = sadd.s32 %s887, %s888
      %s890 = smul.addr %s889, 4
      %s891 = scalar_lea.vmem %s4, %s890
      // Predicated region
      $region37: #{fgc_forward.9} parent=35 // pred_check
        %p892 = pneg %p138
      $region38: #{fgc_forward.9} parent=35 // pred_check_branch
        %894 = sbr.rel (%p892) target = $region40
      $region39: #{fgc_forward.9} parent=35 // pred_region
        %s895 = smul.u32 16, %s20
      $region40: #{fgc_forward.9} parent=35 // pred_fallthru
        _
    $region36: #{fgc_forward.9} parent=5 // pred_fallthru
      _
    %p896 = scmp.le.s32.totalorder 2, %s10
    // Predicated region
    $region41: #{fgc_forward.9} parent=5 // pred_check
      %p897 = pneg %p896
    $region42: #{fgc_forward.9} parent=5 // pred_check_branch
      %899 = sbr.rel (%p897) target = $region44
    $region43: #{fgc_forward.9} parent=5 // pred_region
      %s900 = ssub.s32 %s10, 2
      // Predicated region
      $region45: #{fgc_forward.9} parent=43 // pred_check
        %p901 = pneg %p144
      $region46: #{fgc_forward.9} parent=43 // pred_check_branch
        %903 = sbr.rel (%p901) target = $region48
      $region47: #{fgc_forward.9} parent=43 // pred_region
        %s904 = smul.u32 16, %s22
        %p905 = scmp.lt.s32.totalorder %s21, 1
        %s906 = scalar_select %p905, %s21, 1
        %p907 = scmp.lt.s32.totalorder %s904, 31
        %s908 = scalar_select %p907, %s904, 31
        %s909 = smul.addr %s906, 32
        %s910 = sadd.s32 %s908, %s909
        %s911 = smul.addr %s910, 4
        %s912 = scalar_lea.vmem %s4, %s911
      $region48: #{fgc_forward.9} parent=43 // pred_fallthru
        _
    $region44: #{fgc_forward.9} parent=5 // pred_fallthru
      _
  $region6: #{fgc_forward.9} parent=0 // loop_footer
    %s14 = sadd.s32 1, %s10
  $region7: #{fgc_forward.9} parent=0 // loop_footer_branch
    %9 = sbr.rel target = $region3
  $region8: #{fgc_forward.9} parent=0 // loop_exit
    _

// kernel: fgc_forward.10
$region0: #{fgc_forward.10}
  #allocation0 [shape = 'u32[]', space=smem, size = 0x4, offset = 0x4, fixed_abs, tag = 'smem constant byte address 0x4 - core index']
  #allocation1 [shape = 'u32[144,128]{1,0:T(1,128)}', space=vmem, size = 0x12000, scoped, tag = 'internal scratch']
  %s0 = inlined_call_operand.vmem [shape: bf16[2,256,576], index: 0, kind: input, shape index: {}]
  %s1 = inlined_call_operand.vmem [shape: bf16[576,32], index: 1, kind: input, shape index: {}]
  %s2 = inlined_call_operand.vmem [shape: f32[1,32], index: 2, kind: input, shape index: {}]
  %s3 = inlined_call_operand.vmem [shape: f32[1,32], index: 3, kind: input, shape index: {}]
  %s4 = inlined_call_operand.vmem [shape: bf16[2,256,32], index: 4, kind: output, shape index: {}]
  %s5 = sld [smem:[#allocation0]]
  $region49: #{fgc_forward.10} parent=0
    _
  %s7 = ssub.s32 1, %s5
  %s8 = scalar_select 0, %s7, %s5
  loop: start=0, step=1, limit=6
  $region2: #{fgc_forward.10} parent=0 // loop_pre_header
    _
  $region3: #{fgc_forward.10} parent=0 // loop_header
    %s10 = sphi 0, %s14
    %p11 = scmp.ge.s32.totalorder %s10, 6
    %s17 = sphi 0, %s29
    %s18 = sphi 0, %s25
    %s19 = sphi 0, %s17
    %s20 = sphi 0, %s18
    %s21 = sphi 0, %s19
    %s22 = sphi 0, %s20
    %s34 = sphi 0, %s36
    %s37 = sphi 0, %s34
    %s38 = sphi 0, %s37
    %s54 = sphi 0, %s38
    %s58 = sphi 0, %s58
    %s60 = sphi 0, %s58
    %s61 = sphi 0, %s60
    %s75 = sphi 0, %s61
    %s79 = sphi 0, %s79
    %s81 = sphi 0, %s79
    %s82 = sphi 0, %s81
    %s96 = sphi 0, %s82
    %s100 = sphi 0, %s100
    %s102 = sphi 0, %s100
    %s103 = sphi 0, %s102
    %s117 = sphi 0, %s103
    %s125 = sphi 0, %s127
    %s128 = sphi 0, %s125
    %s129 = sphi 0, %s128
    %s145 = sphi 0, %s129
  $region4: #{fgc_forward.10} parent=0 // loop_header_branch
    %13 = sbr.rel (%p11) target = $region8
  $region5: #{fgc_forward.10} parent=0 // loop_body
    %s15 = ssub.s32 %s10, 1
    %s16 = ssub.s32 %s10, 2
    %s23 = sadd.s32 1, %s18
    %p24 = scmp.ge.s32.totalorder %s23, 2
    %s25 = scalar_select %p24, 0, %s23
    %s26 = sadd.s32 1, %s17
    %s27 = scalar_select %p24, %s26, %s17
    %p28 = scmp.ge.s32.totalorder %s27, 2
    %s29 = scalar_select %p28, 0, %s27
    %s30 = ssub.s32 %s17, %s29
    %s31 = ssub.s32 %s18, %s25
    %s32 = sor.u32 %s30, %s31
    %p33 = scmp.eq.s32.totalorder %s32, 0
    %s35 = sadd.s32 %s34, 1
    %s36 = scalar_select %p33, %s34, %s35
    %p39 = pneg %p33
    %p40 = scmp.eq.s32.totalorder %s10, 3
    %p41 = por %p39, %p40
    %p42 = scmp.ne.s32.totalorder %s34, %s37
    %p43 = scmp.eq.s32.totalorder %s10, 0
    %p44 = por %p42, %p43
    %p45 = scmp.ne.s32.totalorder %s34, %s37
    %p46 = scmp.eq.s32.totalorder %s15, 3
    %p47 = por %p45, %p46
    %p48 = scmp.ne.s32.totalorder %s37, %s38
    %p49 = scmp.eq.s32.totalorder %s15, 0
    %p50 = por %p48, %p49
    %p51 = scmp.ne.s32.totalorder %s37, %s38
    %p52 = scmp.eq.s32.totalorder %s16, 3
    %p53 = por %p51, %p52
    %p55 = scmp.ne.s32.totalorder %s38, %s54
    %p56 = scmp.eq.s32.totalorder %s16, 0
    %p57 = por %p55, %p56
    %s59 = sadd.s32 %s58, 1
    %p62 = scmp.eq.s32.totalorder %s10, 3
    %p63 = scmp.ne.s32.totalorder %s58, %s60
    %p64 = scmp.eq.s32.totalorder %s10, 0
    %p65 = por %p63, %p64
    %p66 = scmp.ne.s32.totalorder %s58, %s60
    %p67 = scmp.eq.s32.totalorder %s15, 3
    %p68 = por %p66, %p67
    %p69 = scmp.ne.s32.totalorder %s60, %s61
    %p70 = scmp.eq.s32.totalorder %s15, 0
    %p71 = por %p69, %p70
    %p72 = scmp.ne.s32.totalorder %s60, %s61
    %p73 = scmp.eq.s32.totalorder %s16, 3
    %p74 = por %p72, %p73
    %p76 = scmp.ne.s32.totalorder %s61, %s75
    %p77 = scmp.eq.s32.totalorder %s16, 0
    %p78 = por %p76, %p77
    %s80 = sadd.s32 %s79, 1
    %p83 = scmp.eq.s32.totalorder %s10, 3
    %p84 = scmp.ne.s32.totalorder %s79, %s81
    %p85 = scmp.eq.s32.totalorder %s10, 0
    %p86 = por %p84, %p85
    %p87 = scmp.ne.s32.totalorder %s79, %s81
    %p88 = scmp.eq.s32.totalorder %s15, 3
    %p89 = por %p87, %p88
    %p90 = scmp.ne.s32.totalorder %s81, %s82
    %p91 = scmp.eq.s32.totalorder %s15, 0
    %p92 = por %p90, %p91
    %p93 = scmp.ne.s32.totalorder %s81, %s82
    %p94 = scmp.eq.s32.totalorder %s16, 3
    %p95 = por %p93, %p94
    %p97 = scmp.ne.s32.totalorder %s82, %s96
    %p98 = scmp.eq.s32.totalorder %s16, 0
    %p99 = por %p97, %p98
    %s101 = sadd.s32 %s100, 1
    %p104 = scmp.eq.s32.totalorder %s10, 3
    %p105 = scmp.ne.s32.totalorder %s100, %s102
    %p106 = scmp.eq.s32.totalorder %s10, 0
    %p107 = por %p105, %p106
    %p108 = scmp.ne.s32.totalorder %s100, %s102
    %p109 = scmp.eq.s32.totalorder %s15, 3
    %p110 = por %p108, %p109
    %p111 = scmp.ne.s32.totalorder %s102, %s103
    %p112 = scmp.eq.s32.totalorder %s15, 0
    %p113 = por %p111, %p112
    %p114 = scmp.ne.s32.totalorder %s102, %s103
    %p115 = scmp.eq.s32.totalorder %s16, 3
    %p116 = por %p114, %p115
    %p118 = scmp.ne.s32.totalorder %s103, %s117
    %p119 = scmp.eq.s32.totalorder %s16, 0
    %p120 = por %p118, %p119
    %s121 = ssub.s32 %s17, %s29
    %s122 = ssub.s32 %s18, %s25
    %s123 = sor.u32 %s121, %s122
    %p124 = scmp.eq.s32.totalorder %s123, 0
    %s126 = sadd.s32 %s125, 1
    %s127 = scalar_select %p124, %s125, %s126
    %p130 = pneg %p124
    %p131 = scmp.eq.s32.totalorder %s10, 3
    %p132 = por %p130, %p131
    %p133 = scmp.ne.s32.totalorder %s125, %s128
    %p134 = scmp.eq.s32.totalorder %s10, 0
    %p135 = por %p133, %p134
    %p136 = scmp.ne.s32.totalorder %s125, %s128
    %p137 = scmp.eq.s32.totalorder %s15, 3
    %p138 = por %p136, %p137
    %p139 = scmp.ne.s32.totalorder %s128, %s129
    %p140 = scmp.eq.s32.totalorder %s15, 0
    %p141 = por %p139, %p140
    %p142 = scmp.ne.s32.totalorder %s128, %s129
    %p143 = scmp.eq.s32.totalorder %s16, 3
    %p144 = por %p142, %p143
    %p146 = scmp.ne.s32.totalorder %s129, %s145
    %p147 = scmp.eq.s32.totalorder %s16, 0
    %p148 = por %p146, %p147
    %p149 = scmp.le.s32.totalorder 1, %s10
    %p150 = scmp.lt.s32.totalorder %s10, 5
    %p151 = pnand %p149, %p150
    %p152 = pneg %p151
    // Predicated region
    $region9: #{fgc_forward.10} parent=5 // pred_check
      _
    $region10: #{fgc_forward.10} parent=5 // pred_check_branch
      %154 = sbr.rel (%p151) target = $region12
    $region11: #{fgc_forward.10} parent=5 // pred_region
      %s155 = ssub.s32 %s10, 1
      // Predicated region
      $region13: #{fgc_forward.10} parent=11 // pred_check
        %p156 = pneg %p71
      $region14: #{fgc_forward.10} parent=11 // pred_check_branch
        %158 = sbr.rel (%p156) target = $region16
      $region15: #{fgc_forward.10} parent=11 // pred_region
        _
      $region16: #{fgc_forward.10} parent=11 // pred_fallthru
        _
      // Predicated region
      $region17: #{fgc_forward.10} parent=11 // pred_check
        %p159 = pneg %p92
      $region18: #{fgc_forward.10} parent=11 // pred_check_branch
        %161 = sbr.rel (%p159) target = $region20
      $region19: #{fgc_forward.10} parent=11 // pred_region
        _
      $region20: #{fgc_forward.10} parent=11 // pred_fallthru
        _
      // Predicated region
      $region21: #{fgc_forward.10} parent=11 // pred_check
        %p162 = pneg %p113
      $region22: #{fgc_forward.10} parent=11 // pred_check_branch
        %164 = sbr.rel (%p162) target = $region24
      $region23: #{fgc_forward.10} parent=11 // pred_region
        _
      $region24: #{fgc_forward.10} parent=11 // pred_fallthru
        _
    $region12: #{fgc_forward.10} parent=5 // pred_fallthru
      _
    %p165 = scmp.lt.s32.totalorder %s10, 4
    // Predicated region
    $region25: #{fgc_forward.10} parent=5 // pred_check
      %p166 = pneg %p165
    $region26: #{fgc_forward.10} parent=5 // pred_check_branch
      %168 = sbr.rel (%p166) target = $region28
    $region27: #{fgc_forward.10} parent=5 // pred_region
      // Predicated region
      $region29: #{fgc_forward.10} parent=27 // pred_check
        %p169 = pneg %p44
      $region30: #{fgc_forward.10} parent=27 // pred_check_branch
        %171 = sbr.rel (%p169) target = $region32
      $region31: #{fgc_forward.10} parent=27 // pred_region
        %s172 = smul.u32 16, %s18
        %p173 = scmp.lt.s32.totalorder %s17, 1
        %s174 = scalar_select %p173, %s17, 1
        %p175 = scmp.lt.s32.totalorder %s172, 31
        %s176 = scalar_select %p175, %s172, 31
        %s177 = smul.addr %s176, 5
        %s178 = smul.addr %s174, 160
        %s179 = sadd.s32 %s177, %s178
        %s180 = smul.addr %s179, 4
        %s181 = scalar_lea.vmem %s0, %s180
        %s182 = smul.u32 16, %s18
      $region32: #{fgc_forward.10} parent=27 // pred_fallthru
        _
    $region28: #{fgc_forward.10} parent=5 // pred_fallthru
      _
    %p183 = scmp.le.s32.totalorder 1, %s10
    %p184 = scmp.lt.s32.totalorder %s10, 5
    %p185 = pnand %p183, %p184
    %p186 = pneg %p185
    // Predicated region
    $region33: #{fgc_forward.10} parent=5 // pred_check
      _
    $region34: #{fgc_forward.10} parent=5 // pred_check_branch
      %188 = sbr.rel (%p185) target = $region36
    $region35: #{fgc_forward.10} parent=5 // pred_region
      %s189 = ssub.s32 %s10, 1
      %s190 = smul.u32 16, %s20
      %p191 = scmp.lt.s32.totalorder %s19, 1
      %s192 = scalar_select %p191, %s19, 1
      %p193 = scmp.lt.s32.totalorder %s190, 31
      %s194 = scalar_select %p193, %s190, 31
      %s195 = smul.addr %s194, 5
      %s196 = smul.addr %s192, 160
      %s197 = sadd.s32 %s195, %s196
      %s198 = smul.addr %s197, 4
      %s199 = scalar_lea.vmem %s0, %s198
      %p200 = pneg %p50
      %p201 = pneg %p47
      %p202 = pneg %p71
      %p203 = pneg %p68
      %p204 = pneg %p92
      %p205 = pneg %p89
      %p206 = pneg %p113
      %p207 = pneg %p110
      %p208 = pneg %p141
      %p209 = pneg %p138
      %s210 = smul.u32 16, %s20
      %p211 = scmp.lt.s32.totalorder %s19, 1
      %s212 = scalar_select %p211, %s19, 1
      %p213 = scmp.lt.s32.totalorder %s210, 31
      %s214 = scalar_select %p213, %s210, 31
      %s215 = smul.addr %s212, 32
      %s216 = sadd.s32 %s214, %s215
      %s217 = smul.addr %s216, 4
      %s218 = scalar_lea.vmem %s4, %s217
      %s219 = smul.u32 16, %s20
      %p220 = scmp.lt.s32.totalorder %s19, 1
      %s221 = scalar_select %p220, %s19, 1
      %p222 = scmp.lt.s32.totalorder %s219, 31
      %s223 = scalar_select %p222, %s219, 31
      %s224 = smul.addr %s223, 5
      %s225 = smul.addr %s221, 160
      %s226 = sadd.s32 %s224, %s225
      %s227 = smul.addr %s226, 4
      %s228 = scalar_lea.vmem %s0, %s227
      %s229 = smul.u32 16, %s20
      %s230 = smul.u32 16, %s20
      %p231 = scmp.lt.s32.totalorder %s19, 1
      %s232 = scalar_select %p231, %s19, 1
      %p233 = scmp.lt.s32.totalorder %s230, 31
      %s234 = scalar_select %p233, %s230, 31
      %s235 = smul.addr %s232, 32
      %s236 = sadd.s32 %s234, %s235
      %s237 = smul.addr %s236, 4
      %s238 = scalar_lea.vmem %s4, %s237
      %s239 = smul.u32 16, %s20
      %v241 = vld [vmem:[%s228] sm:$0xff]
      %v242 = vld [vmem:[%s228 + $0x8] sm:$0xff]
      %v243 = vld [vmem:[%s228 + $0x10] sm:$0xf]
      %v244 = vld [vmem:[%s228 + $0x14] sm:$0xff]
      %v245 = vld [vmem:[%s228 + $0x1c] sm:$0xff]
      %v246 = vld [vmem:[%s228 + $0x24] sm:$0xf]
      %v247 = vld [vmem:[%s228 + $0x28] sm:$0xff]
      %v248 = vld [vmem:[%s228 + $0x30] sm:$0xff]
      %v249 = vld [vmem:[%s228 + $0x38] sm:$0xf]
      %v250 = vld [vmem:[%s228 + $0x3c] sm:$0xff]
      %v251 = vld [vmem:[%s228 + $0x44] sm:$0xff]
      %v252 = vld [vmem:[%s228 + $0x4c] sm:$0xf]
      %v253 = vld [vmem:[%s228 + $0x50] sm:$0xff]
      %v254 = vld [vmem:[%s228 + $0x58] sm:$0xff]
      %v255 = vld [vmem:[%s228 + $0x60] sm:$0xf]
      %v256 = vld [vmem:[%s228 + $0x64] sm:$0xff]
      %v257 = vld [vmem:[%s228 + $0x6c] sm:$0xff]
      %v258 = vld [vmem:[%s228 + $0x74] sm:$0xf]
      %v259 = vld [vmem:[%s228 + $0x78] sm:$0xff]
      %v260 = vld [vmem:[%s228 + $0x80] sm:$0xff]
      %v261 = vld [vmem:[%s228 + $0x88] sm:$0xf]
      %v262 = vld [vmem:[%s228 + $0x8c] sm:$0xff]
      %v263 = vld [vmem:[%s228 + $0x94] sm:$0xff]
      %v264 = vld [vmem:[%s228 + $0x9c] sm:$0xf]
      %v265 = vld [vmem:[%s228 + $0xa0] sm:$0xff]
      %v266 = vld [vmem:[%s228 + $0xa8] sm:$0xff]
      %v267 = vld [vmem:[%s228 + $0xb0] sm:$0xf]
      %v268 = vld [vmem:[%s228 + $0xb4] sm:$0xff]
      %v269 = vld [vmem:[%s228 + $0xbc] sm:$0xff]
      %v270 = vld [vmem:[%s228 + $0xc4] sm:$0xf]
      %v271 = vld [vmem:[%s228 + $0xc8] sm:$0xff]
      %v272 = vld [vmem:[%s228 + $0xd0] sm:$0xff]
      %v273 = vld [vmem:[%s228 + $0xd8] sm:$0xf]
      %v274 = vld [vmem:[%s228 + $0xdc] sm:$0xff]
      %v275 = vld [vmem:[%s228 + $0xe4] sm:$0xff]
      %v276 = vld [vmem:[%s228 + $0xec] sm:$0xf]
      %v277 = vld [vmem:[%s228 + $0xf0] sm:$0xff]
      %v278 = vld [vmem:[%s228 + $0xf8] sm:$0xff]
      %v279 = vld [vmem:[%s228 + $0x100] sm:$0xf]
      %v280 = vld [vmem:[%s228 + $0x104] sm:$0xff]
      %v281 = vld [vmem:[%s228 + $0x10c] sm:$0xff]
      %v282 = vld [vmem:[%s228 + $0x114] sm:$0xf]
      %v283 = vld [vmem:[%s228 + $0x118] sm:$0xff]
      %v284 = vld [vmem:[%s228 + $0x120] sm:$0xff]
      %v285 = vld [vmem:[%s228 + $0x128] sm:$0xf]
      %v286 = vld [vmem:[%s228 + $0x12c] sm:$0xff]
      %v287 = vld [vmem:[%s228 + $0x134] sm:$0xff]
      %v288 = vld [vmem:[%s228 + $0x13c] sm:$0xf]
      %v289 = vld [vmem:[%s1] sm:$0xf]
      %v290 = vld [vmem:[%s1 + $0x4] sm:$0xf]
      %v291 = vld [vmem:[%s1 + $0x8] sm:$0xf]
      %v292 = vld [vmem:[%s1 + $0xc] sm:$0xf]
      %v293 = vld [vmem:[%s1 + $0x10] sm:$0xf]
      %v294 = vld [vmem:[%s1 + $0x14] sm:$0xf]
      %v295 = vld [vmem:[%s1 + $0x18] sm:$0xf]
      %v296 = vld [vmem:[%s1 + $0x1c] sm:$0xf]
      %v297 = vld [vmem:[%s1 + $0x20] sm:$0xf]
      %v298 = vld [vmem:[%s1 + $0x24] sm:$0xf]
      %v299 = vld [vmem:[%s1 + $0x28] sm:$0xf]
      %v300 = vld [vmem:[%s1 + $0x2c] sm:$0xf]
      %v301 = vld [vmem:[%s1 + $0x30] sm:$0xf]
      %v302 = vld [vmem:[%s1 + $0x34] sm:$0xf]
      %v303 = vld [vmem:[%s1 + $0x38] sm:$0xf]
      %v304 = vld [vmem:[%s1 + $0x3c] sm:$0xf]
      %v305 = vld [vmem:[%s1 + $0x40] sm:$0xf]
      %v306 = vld [vmem:[%s1 + $0x44] sm:$0xf]
      %v307 = vld [vmem:[%s1 + $0x48] sm:$0xf]
      %v308 = vld [vmem:[%s1 + $0x4c] sm:$0xf]
      %v309 = vld [vmem:[%s1 + $0x50] sm:$0xf]
      %v310 = vld [vmem:[%s1 + $0x54] sm:$0xf]
      %v311 = vld [vmem:[%s1 + $0x58] sm:$0xf]
      %v312 = vld [vmem:[%s1 + $0x5c] sm:$0xf]
      %v313 = vld [vmem:[%s1 + $0x60] sm:$0xf]
      %v314 = vld [vmem:[%s1 + $0x64] sm:$0xf]
      %v315 = vld [vmem:[%s1 + $0x68] sm:$0xf]
      %v316 = vld [vmem:[%s1 + $0x6c] sm:$0xf]
      %v317 = vld [vmem:[%s1 + $0x70] sm:$0xf]
      %v318 = vld [vmem:[%s1 + $0x74] sm:$0xf]
      %v319 = vld [vmem:[%s1 + $0x78] sm:$0xf]
      %v320 = vld [vmem:[%s1 + $0x7c] sm:$0xf]
      %v321 = vld [vmem:[%s1 + $0x80] sm:$0xf]
      %v322 = vld [vmem:[%s1 + $0x84] sm:$0xf]
      %v323 = vld [vmem:[%s1 + $0x88] sm:$0xf]
      %v324 = vld [vmem:[%s1 + $0x8c] sm:$0xf]
      %v325 = vld [vmem:[%s1 + $0x90] sm:$0xf]
      %v326 = vld [vmem:[%s1 + $0x94] sm:$0xf]
      %v327 = vld [vmem:[%s1 + $0x98] sm:$0xf]
      %v328 = vld [vmem:[%s1 + $0x9c] sm:$0xf]
      %v329 = vld [vmem:[%s1 + $0xa0] sm:$0xf]
      %v330 = vld [vmem:[%s1 + $0xa4] sm:$0xf]
      %v331 = vld [vmem:[%s1 + $0xa8] sm:$0xf]
      %v332 = vld [vmem:[%s1 + $0xac] sm:$0xf]
      %v333 = vld [vmem:[%s1 + $0xb0] sm:$0xf]
      %v334 = vld [vmem:[%s1 + $0xb4] sm:$0xf]
      %v335 = vld [vmem:[%s1 + $0xb8] sm:$0xf]
      %v336 = vld [vmem:[%s1 + $0xbc] sm:$0xf]
      %v337 = vld [vmem:[%s1 + $0xc0] sm:$0xf]
      %v338 = vld [vmem:[%s1 + $0xc4] sm:$0xf]
      %v339 = vld [vmem:[%s1 + $0xc8] sm:$0xf]
      %v340 = vld [vmem:[%s1 + $0xcc] sm:$0xf]
      %v341 = vld [vmem:[%s1 + $0xd0] sm:$0xf]
      %v342 = vld [vmem:[%s1 + $0xd4] sm:$0xf]
      %v343 = vld [vmem:[%s1 + $0xd8] sm:$0xf]
      %v344 = vld [vmem:[%s1 + $0xdc] sm:$0xf]
      %v345 = vld [vmem:[%s1 + $0xe0] sm:$0xf]
      %v346 = vld [vmem:[%s1 + $0xe4] sm:$0xf]
      %v347 = vld [vmem:[%s1 + $0xe8] sm:$0xf]
      %v348 = vld [vmem:[%s1 + $0xec] sm:$0xf]
      %v349 = vld [vmem:[%s1 + $0xf0] sm:$0xf]
      %v350 = vld [vmem:[%s1 + $0xf4] sm:$0xf]
      %v351 = vld [vmem:[%s1 + $0xf8] sm:$0xf]
      %v352 = vld [vmem:[%s1 + $0xfc] sm:$0xf]
      %v353 = vld [vmem:[%s1 + $0x100] sm:$0xf]
      %v354 = vld [vmem:[%s1 + $0x104] sm:$0xf]
      %v355 = vld [vmem:[%s1 + $0x108] sm:$0xf]
      %v356 = vld [vmem:[%s1 + $0x10c] sm:$0xf]
      %v357 = vld [vmem:[%s1 + $0x110] sm:$0xf]
      %v358 = vld [vmem:[%s1 + $0x114] sm:$0xf]
      %v359 = vld [vmem:[%s1 + $0x118] sm:$0xf]
      %v360 = vld [vmem:[%s1 + $0x11c] sm:$0xf]
      %v409 = vunpack.c.l.b16 %v241
      %v410 = vunpack.c.h.b16 %v241
      %v411 = vunpack.c.l.b16 %v242
      %v412 = vunpack.c.h.b16 %v242
      %v413 = vunpack.c.l.b16 %v243
      %v414 = vunpack.c.l.b16 %v244
      %v415 = vunpack.c.h.b16 %v244
      %v416 = vunpack.c.l.b16 %v245
      %v417 = vunpack.c.h.b16 %v245
      %v418 = vunpack.c.l.b16 %v246
      %v419 = vunpack.c.l.b16 %v247
      %v420 = vunpack.c.h.b16 %v247
      %v421 = vunpack.c.l.b16 %v248
      %v422 = vunpack.c.h.b16 %v248
      %v423 = vunpack.c.l.b16 %v249
      %v424 = vunpack.c.l.b16 %v250
      %v425 = vunpack.c.h.b16 %v250
      %v426 = vunpack.c.l.b16 %v251
      %v427 = vunpack.c.h.b16 %v251
      %v428 = vunpack.c.l.b16 %v252
      %v429 = vunpack.c.l.b16 %v253
      %v430 = vunpack.c.h.b16 %v253
      %v431 = vunpack.c.l.b16 %v254
      %v432 = vunpack.c.h.b16 %v254
      %v433 = vunpack.c.l.b16 %v255
      %v434 = vunpack.c.l.b16 %v256
      %v435 = vunpack.c.h.b16 %v256
      %v436 = vunpack.c.l.b16 %v257
      %v437 = vunpack.c.h.b16 %v257
      %v438 = vunpack.c.l.b16 %v258
      %v439 = vunpack.c.l.b16 %v259
      %v440 = vunpack.c.h.b16 %v259
      %v441 = vunpack.c.l.b16 %v260
      %v442 = vunpack.c.h.b16 %v260
      %v443 = vunpack.c.l.b16 %v261
      %v444 = vunpack.c.l.b16 %v262
      %v445 = vunpack.c.h.b16 %v262
      %v446 = vunpack.c.l.b16 %v263
      %v447 = vunpack.c.h.b16 %v263
      %v448 = vunpack.c.l.b16 %v264
      %v449 = vunpack.c.l.b16 %v265
      %v450 = vunpack.c.h.b16 %v265
      %v451 = vunpack.c.l.b16 %v266
      %v452 = vunpack.c.h.b16 %v266
      %v453 = vunpack.c.l.b16 %v267
      %v454 = vunpack.c.l.b16 %v268
      %v455 = vunpack.c.h.b16 %v268
      %v456 = vunpack.c.l.b16 %v269
      %v457 = vunpack.c.h.b16 %v269
      %v458 = vunpack.c.l.b16 %v270
      %v459 = vunpack.c.l.b16 %v271
      %v460 = vunpack.c.h.b16 %v271
      %v461 = vunpack.c.l.b16 %v272
      %v462 = vunpack.c.h.b16 %v272
      %v463 = vunpack.c.l.b16 %v273
      %v464 = vunpack.c.l.b16 %v274
      %v465 = vunpack.c.h.b16 %v274
      %v466 = vunpack.c.l.b16 %v275
      %v467 = vunpack.c.h.b16 %v275
      %v468 = vunpack.c.l.b16 %v276
      %v469 = vunpack.c.l.b16 %v277
      %v470 = vunpack.c.h.b16 %v277
      %v471 = vunpack.c.l.b16 %v278
      %v472 = vunpack.c.h.b16 %v278
      %v473 = vunpack.c.l.b16 %v279
      %v474 = vunpack.c.l.b16 %v280
      %v475 = vunpack.c.h.b16 %v280
      %v476 = vunpack.c.l.b16 %v281
      %v477 = vunpack.c.h.b16 %v281
      %v478 = vunpack.c.l.b16 %v282
      %v479 = vunpack.c.l.b16 %v283
      %v480 = vunpack.c.h.b16 %v283
      %v481 = vunpack.c.l.b16 %v284
      %v482 = vunpack.c.h.b16 %v284
      %v483 = vunpack.c.l.b16 %v285
      %v484 = vunpack.c.l.b16 %v286
      %v485 = vunpack.c.h.b16 %v286
      %v486 = vunpack.c.l.b16 %v287
      %v487 = vunpack.c.h.b16 %v287
      %v488 = vunpack.c.l.b16 %v288
      %v489 = vpack.c.b16 %v414, %v409
      %v490 = vpack.c.b16 %v415, %v410
      %v491 = vpack.c.b16 %v416, %v411
      %v492 = vpack.c.b16 %v417, %v412
      %v493 = vpack.c.b16 %v418, %v413
      %v494 = vpack.c.b16 %v424, %v419
      %v495 = vpack.c.b16 %v425, %v420
      %v496 = vpack.c.b16 %v426, %v421
      %v497 = vpack.c.b16 %v427, %v422
      %v498 = vpack.c.b16 %v428, %v423
      %v499 = vpack.c.b16 %v434, %v429
      %v500 = vpack.c.b16 %v435, %v430
      %v501 = vpack.c.b16 %v436, %v431
      %v502 = vpack.c.b16 %v437, %v432
      %v503 = vpack.c.b16 %v438, %v433
      %v504 = vpack.c.b16 %v444, %v439
      %v505 = vpack.c.b16 %v445, %v440
      %v506 = vpack.c.b16 %v446, %v441
      %v507 = vpack.c.b16 %v447, %v442
      %v508 = vpack.c.b16 %v448, %v443
      %v509 = vpack.c.b16 %v454, %v449
      %v510 = vpack.c.b16 %v455, %v450
      %v511 = vpack.c.b16 %v456, %v451
      %v512 = vpack.c.b16 %v457, %v452
      %v513 = vpack.c.b16 %v458, %v453
      %v514 = vpack.c.b16 %v464, %v459
      %v515 = vpack.c.b16 %v465, %v460
      %v516 = vpack.c.b16 %v466, %v461
      %v517 = vpack.c.b16 %v467, %v462
      %v518 = vpack.c.b16 %v468, %v463
      %v519 = vpack.c.b16 %v474, %v469
      %v520 = vpack.c.b16 %v475, %v470
      %v521 = vpack.c.b16 %v476, %v471
      %v522 = vpack.c.b16 %v477, %v472
      %v523 = vpack.c.b16 %v478, %v473
      %v524 = vpack.c.b16 %v484, %v479
      %v525 = vpack.c.b16 %v485, %v480
      %v526 = vpack.c.b16 %v486, %v481
      %v527 = vpack.c.b16 %v487, %v482
      %v528 = vpack.c.b16 %v488, %v483
      %v633 = vunpack.c.l.b16 %v289
      %v634 = vunpack.c.l.b16 %v290
      %v635 = vunpack.c.l.b16 %v291
      %v636 = vunpack.c.l.b16 %v292
      %v637 = vunpack.c.l.b16 %v293
      %v638 = vunpack.c.l.b16 %v294
      %v639 = vunpack.c.l.b16 %v295
      %v640 = vunpack.c.l.b16 %v296
      %v641 = vunpack.c.l.b16 %v297
      %v642 = vunpack.c.l.b16 %v298
      %v643 = vunpack.c.l.b16 %v299
      %v644 = vunpack.c.l.b16 %v300
      %v645 = vunpack.c.l.b16 %v301
      %v646 = vunpack.c.l.b16 %v302
      %v647 = vunpack.c.l.b16 %v303
      %v648 = vunpack.c.l.b16 %v304
      %v649 = vunpack.c.l.b16 %v305
      %v650 = vunpack.c.l.b16 %v306
      %v651 = vunpack.c.l.b16 %v307
      %v652 = vunpack.c.l.b16 %v308
      %v653 = vunpack.c.l.b16 %v309
      %v654 = vunpack.c.l.b16 %v310
      %v655 = vunpack.c.l.b16 %v311
      %v656 = vunpack.c.l.b16 %v312
      %v657 = vunpack.c.l.b16 %v313
      %v658 = vunpack.c.l.b16 %v314
      %v659 = vunpack.c.l.b16 %v315
      %v660 = vunpack.c.l.b16 %v316
      %v661 = vunpack.c.l.b16 %v317
      %v662 = vunpack.c.l.b16 %v318
      %v663 = vunpack.c.l.b16 %v319
      %v664 = vunpack.c.l.b16 %v320
      %v665 = vunpack.c.l.b16 %v321
      %v666 = vunpack.c.l.b16 %v322
      %v667 = vunpack.c.l.b16 %v323
      %v668 = vunpack.c.l.b16 %v324
      %v669 = vunpack.c.l.b16 %v325
      %v670 = vunpack.c.l.b16 %v326
      %v671 = vunpack.c.l.b16 %v327
      %v672 = vunpack.c.l.b16 %v328
      %v673 = vunpack.c.l.b16 %v329
      %v674 = vunpack.c.l.b16 %v330
      %v675 = vunpack.c.l.b16 %v331
      %v676 = vunpack.c.l.b16 %v332
      %v677 = vunpack.c.l.b16 %v333
      %v678 = vunpack.c.l.b16 %v334
      %v679 = vunpack.c.l.b16 %v335
      %v680 = vunpack.c.l.b16 %v336
      %v681 = vunpack.c.l.b16 %v337
      %v682 = vunpack.c.l.b16 %v338
      %v683 = vunpack.c.l.b16 %v339
      %v684 = vunpack.c.l.b16 %v340
      %v685 = vunpack.c.l.b16 %v341
      %v686 = vunpack.c.l.b16 %v342
      %v687 = vunpack.c.l.b16 %v343
      %v688 = vunpack.c.l.b16 %v344
      %v689 = vunpack.c.l.b16 %v345
      %v690 = vunpack.c.l.b16 %v346
      %v691 = vunpack.c.l.b16 %v347
      %v692 = vunpack.c.l.b16 %v348
      %v693 = vunpack.c.l.b16 %v349
      %v694 = vunpack.c.l.b16 %v350
      %v695 = vunpack.c.l.b16 %v351
      %v696 = vunpack.c.l.b16 %v352
      %v697 = vunpack.c.l.b16 %v353
      %v698 = vunpack.c.l.b16 %v354
      %v699 = vunpack.c.l.b16 %v355
      %v700 = vunpack.c.l.b16 %v356
      %v701 = vunpack.c.l.b16 %v357
      %v702 = vunpack.c.l.b16 %v358
      %v703 = vunpack.c.l.b16 %v359
      %v704 = vunpack.c.l.b16 %v360
      %v705 = vpack.c.b16 %v634, %v633
      %v706 = vpack.c.b16 %v636, %v635
      %v707 = vpack.c.b16 %v638, %v637
      %v708 = vpack.c.b16 %v640, %v639
      %v709 = vpack.c.b16 %v642, %v641
      %v710 = vpack.c.b16 %v644, %v643
      %v711 = vpack.c.b16 %v646, %v645
      %v712 = vpack.c.b16 %v648, %v647
      %v713 = vpack.c.b16 %v650, %v649
      %v714 = vpack.c.b16 %v652, %v651
      %v715 = vpack.c.b16 %v654, %v653
      %v716 = vpack.c.b16 %v656, %v655
      %v717 = vpack.c.b16 %v658, %v657
      %v718 = vpack.c.b16 %v660, %v659
      %v719 = vpack.c.b16 %v662, %v661
      %v720 = vpack.c.b16 %v664, %v663
      %v721 = vpack.c.b16 %v666, %v665
      %v722 = vpack.c.b16 %v668, %v667
      %v723 = vpack.c.b16 %v670, %v669
      %v724 = vpack.c.b16 %v672, %v671
      %v725 = vpack.c.b16 %v674, %v673
      %v726 = vpack.c.b16 %v676, %v675
      %v727 = vpack.c.b16 %v678, %v677
      %v728 = vpack.c.b16 %v680, %v679
      %v729 = vpack.c.b16 %v682, %v681
      %v730 = vpack.c.b16 %v684, %v683
      %v731 = vpack.c.b16 %v686, %v685
      %v732 = vpack.c.b16 %v688, %v687
      %v733 = vpack.c.b16 %v690, %v689
      %v734 = vpack.c.b16 %v692, %v691
      %v735 = vpack.c.b16 %v694, %v693
      %v736 = vpack.c.b16 %v696, %v695
      %v737 = vpack.c.b16 %v698, %v697
      %v738 = vpack.c.b16 %v700, %v699
      %v739 = vpack.c.b16 %v702, %v701
      %v740 = vpack.c.b16 %v704, %v703
      %vm777 = vcmask 523264
      %v779 = vsel %vm777, %v493, 0
      %v782 = vsel %vm777, %v498, 0
      %v785 = vsel %vm777, %v503, 0
      %v788 = vsel %vm777, %v508, 0
      %v791 = vsel %vm777, %v513, 0
      %v794 = vsel %vm777, %v518, 0
      %v797 = vsel %vm777, %v523, 0
      %v800 = vsel %vm777, %v528, 0
      %802 = vmatprep.subr.bf16.mxu0 0
      %803 = vmatpush1.bf16.msra.mxu0 %v705
      %804 = vmatprep.subr.bf16.mxu0 0
      %805 = vmatpush1.bf16.msra.mxu0 %v706
      %806 = vmatprep.subr.bf16.mxu0 0
      %807 = vmatpush1.bf16.msra.mxu0 %v707
      %808 = vmatprep.subr.bf16.mxu0 0
      %809 = vmatpush1.bf16.msra.mxu0 %v708
      %810 = vmatprep.subr.bf16.mxu0 0
      %811 = vmatpush1.bf16.msra.mxu0 %v709
      %812 = vmatprep.subr.bf16.mxu0 0
      %813 = vmatpush1.bf16.msra.mxu0 %v710
      %814 = vmatprep.subr.bf16.mxu0 0
      %815 = vmatpush1.bf16.msra.mxu0 %v711
      %816 = vmatprep.subr.bf16.mxu0 0
      %817 = vmatpush1.bf16.msra.mxu0 %v712
      %818 = vmatprep.subr.bf16.mxu0 0
      %819 = vmatpush1.bf16.msra.mxu0 %v713
      %820 = vmatprep.subr.bf16.mxu0 0
      %821 = vmatpush1.bf16.msra.mxu0 %v714
      %822 = vmatprep.subr.bf16.mxu0 0
      %823 = vmatpush1.bf16.msra.mxu0 %v715
      %824 = vmatprep.subr.bf16.mxu0 0
      %825 = vmatpush1.bf16.msra.mxu0 %v716
      %826 = vmatprep.subr.bf16.mxu0 0
      %827 = vmatpush1.bf16.msra.mxu0 %v717
      %828 = vmatprep.subr.bf16.mxu0 0
      %829 = vmatpush1.bf16.msra.mxu0 %v718
      %830 = vmatprep.subr.bf16.mxu0 0
      %831 = vmatpush1.bf16.msra.mxu0 %v719
      %832 = vmatprep.subr.bf16.mxu0 0
      %833 = vmatpush1.bf16.msra.mxu0 %v720
      %834 = vmatprep.mubr.bf16.mxu0 %v490
      %835 = vmatmul.mubr.bf16.gmra.mrb[0].mxu0 %v489
      %v836 = vpop.f32.mrb[0].mxu0
      %v837 = vadd.f32 0.0, %v836
      %v838 = vpop.f32.mrb[0].mxu0
      %v839 = vpop.f32.mrb[0].mxu0
      %v840 = vadd.f32 0.0, %v839
      %v841 = vpop.f32.mrb[0].mxu0
      %842 = vmatprep.mubr.bf16.mxu0 %v495
      %843 = vmatmul.mubr.bf16.gmra.mrb[0].mxu0 %v494
      %v844 = vpop.f32.mrb[0].mxu0
      %v845 = vadd.f32 0.0, %v844
      %v846 = vpop.f32.mrb[0].mxu0
      %v847 = vpop.f32.mrb[0].mxu0
      %v848 = vadd.f32 0.0, %v847
      %v849 = vpop.f32.mrb[0].mxu0
      %850 = vmatprep.mubr.bf16.mxu0 %v500
      %851 = vmatmul.mubr.bf16.gmra.mrb[0].mxu0 %v499
      %v852 = vpop.f32.mrb[0].mxu0
      %v853 = vadd.f32 0.0, %v852
      %v854 = vpop.f32.mrb[0].mxu0
      %v855 = vpop.f32.mrb[0].mxu0
      %v856 = vadd.f32 0.0, %v855
      %v857 = vpop.f32.mrb[0].mxu0
      %858 = vmatprep.mubr.bf16.mxu0 %v505
      %859 = vmatmul.mubr.bf16.gmra.mrb[0].mxu0 %v504
      %v860 = vpop.f32.mrb[0].mxu0
      %v861 = vadd.f32 0.0, %v860
      %v862 = vpop.f32.mrb[0].mxu0
      %v863 = vpop.f32.mrb[0].mxu0
      %v864 = vadd.f32 0.0, %v863
      %v865 = vpop.f32.mrb[0].mxu0
      %866 = vmatprep.mubr.bf16.mxu0 %v510
      %867 = vmatmul.mubr.bf16.gmra.mrb[0].mxu0 %v509
      %v868 = vpop.f32.mrb[0].mxu0
      %v869 = vadd.f32 0.0, %v868
      %v870 = vpop.f32.mrb[0].mxu0
      %v871 = vpop.f32.mrb[0].mxu0
      %v872 = vadd.f32 0.0, %v871
      %v873 = vpop.f32.mrb[0].mxu0
      %874 = vmatprep.mubr.bf16.mxu0 %v515
      %875 = vmatmul.mubr.bf16.gmra.mrb[0].mxu0 %v514
      %v876 = vpop.f32.mrb[0].mxu0
      %v877 = vadd.f32 0.0, %v876
      %v878 = vpop.f32.mrb[0].mxu0
      %v879 = vpop.f32.mrb[0].mxu0
      %v880 = vadd.f32 0.0, %v879
      %v881 = vpop.f32.mrb[0].mxu0
      %882 = vmatprep.mubr.bf16.mxu0 %v520
      %883 = vmatmul.mubr.bf16.gmra.mrb[0].mxu0 %v519
      %v884 = vpop.f32.mrb[0].mxu0
      %v885 = vadd.f32 0.0, %v884
      %v886 = vpop.f32.mrb[0].mxu0
      %v887 = vpop.f32.mrb[0].mxu0
      %v888 = vadd.f32 0.0, %v887
      %v889 = vpop.f32.mrb[0].mxu0
      %890 = vmatprep.mubr.bf16.mxu0 %v525
      %891 = vmatmul.mubr.bf16.gmra.mrb[0].mxu0 %v524
      %v892 = vpop.f32.mrb[0].mxu0
      %v893 = vadd.f32 0.0, %v892
      %v894 = vpop.f32.mrb[0].mxu0
      %v895 = vpop.f32.mrb[0].mxu0
      %v896 = vadd.f32 0.0, %v895
      %v897 = vpop.f32.mrb[0].mxu0
      %898 = vdwg.mxu0
      %899 = vmatprep.subr.bf16.mxu0 0
      %900 = vmatpush1.bf16.msra.mxu0 %v721
      %901 = vmatprep.subr.bf16.mxu0 0
      %902 = vmatpush1.bf16.msra.mxu0 %v722
      %903 = vmatprep.subr.bf16.mxu0 0
      %904 = vmatpush1.bf16.msra.mxu0 %v723
      %905 = vmatprep.subr.bf16.mxu0 0
      %906 = vmatpush1.bf16.msra.mxu0 %v724
      %907 = vmatprep.subr.bf16.mxu0 0
      %908 = vmatpush1.bf16.msra.mxu0 %v725
      %909 = vmatprep.subr.bf16.mxu0 0
      %910 = vmatpush1.bf16.msra.mxu0 %v726
      %911 = vmatprep.subr.bf16.mxu0 0
      %912 = vmatpush1.bf16.msra.mxu0 %v727
      %913 = vmatprep.subr.bf16.mxu0 0
      %914 = vmatpush1.bf16.msra.mxu0 %v728
      %915 = vmatprep.subr.bf16.mxu0 0
      %916 = vmatpush1.bf16.msra.mxu0 %v729
      %917 = vmatprep.subr.bf16.mxu0 0
      %918 = vmatpush1.bf16.msra.mxu0 %v730
      %919 = vmatprep.subr.bf16.mxu0 0
      %920 = vmatpush1.bf16.msra.mxu0 %v731
      %921 = vmatprep.subr.bf16.mxu0 0
      %922 = vmatpush1.bf16.msra.mxu0 %v732
      %923 = vmatprep.subr.bf16.mxu0 0
      %924 = vmatpush1.bf16.msra.mxu0 %v733
      %925 = vmatprep.subr.bf16.mxu0 0
      %926 = vmatpush1.bf16.msra.mxu0 %v734
      %927 = vmatprep.subr.bf16.mxu0 0
      %928 = vmatpush1.bf16.msra.mxu0 %v735
      %929 = vmatprep.subr.bf16.mxu0 0
      %930 = vmatpush1.bf16.msra.mxu0 %v736
      %931 = vmatprep.mubr.bf16.mxu0 %v492
      %932 = vmatmul.mubr.bf16.gmra.mrb[0].mxu0 %v491
      %v933 = vpop.f32.mrb[0].mxu0
      %v934 = vadd.f32 %v837, %v933
      %v935 = vpop.f32.mrb[0].mxu0
      %v936 = vpop.f32.mrb[0].mxu0
      %v937 = vadd.f32 %v840, %v936
      %v938 = vpop.f32.mrb[0].mxu0
      %939 = vmatprep.mubr.bf16.mxu0 %v497
      %940 = vmatmul.mubr.bf16.gmra.mrb[0].mxu0 %v496
      %v941 = vpop.f32.mrb[0].mxu0
      %v942 = vadd.f32 %v845, %v941
      %v943 = vpop.f32.mrb[0].mxu0
      %v944 = vpop.f32.mrb[0].mxu0
      %v945 = vadd.f32 %v848, %v944
      %v946 = vpop.f32.mrb[0].mxu0
      %947 = vmatprep.mubr.bf16.mxu0 %v502
      %948 = vmatmul.mubr.bf16.gmra.mrb[0].mxu0 %v501
      %v949 = vpop.f32.mrb[0].mxu0
      %v950 = vadd.f32 %v853, %v949
      %v951 = vpop.f32.mrb[0].mxu0
      %v952 = vpop.f32.mrb[0].mxu0
      %v953 = vadd.f32 %v856, %v952
      %v954 = vpop.f32.mrb[0].mxu0
      %955 = vmatprep.mubr.bf16.mxu0 %v507
      %956 = vmatmul.mubr.bf16.gmra.mrb[0].mxu0 %v506
      %v957 = vpop.f32.mrb[0].mxu0
      %v958 = vadd.f32 %v861, %v957
      %v959 = vpop.f32.mrb[0].mxu0
      %v960 = vpop.f32.mrb[0].mxu0
      %v961 = vadd.f32 %v864, %v960
      %v962 = vpop.f32.mrb[0].mxu0
      %963 = vmatprep.mubr.bf16.mxu0 %v512
      %964 = vmatmul.mubr.bf16.gmra.mrb[0].mxu0 %v511
      %v965 = vpop.f32.mrb[0].mxu0
      %v966 = vadd.f32 %v869, %v965
      %v967 = vpop.f32.mrb[0].mxu0
      %v968 = vpop.f32.mrb[0].mxu0
      %v969 = vadd.f32 %v872, %v968
      %v970 = vpop.f32.mrb[0].mxu0
      %971 = vmatprep.mubr.bf16.mxu0 %v517
      %972 = vmatmul.mubr.bf16.gmra.mrb[0].mxu0 %v516
      %v973 = vpop.f32.mrb[0].mxu0
      %v974 = vadd.f32 %v877, %v973
      %v975 = vpop.f32.mrb[0].mxu0
      %v976 = vpop.f32.mrb[0].mxu0
      %v977 = vadd.f32 %v880, %v976
      %v978 = vpop.f32.mrb[0].mxu0
      %979 = vmatprep.mubr.bf16.mxu0 %v522
      %980 = vmatmul.mubr.bf16.gmra.mrb[0].mxu0 %v521
      %v981 = vpop.f32.mrb[0].mxu0
      %v982 = vadd.f32 %v885, %v981
      %v983 = vpop.f32.mrb[0].mxu0
      %v984 = vpop.f32.mrb[0].mxu0
      %v985 = vadd.f32 %v888, %v984
      %v986 = vpop.f32.mrb[0].mxu0
      %987 = vmatprep.mubr.bf16.mxu0 %v527
      %988 = vmatmul.mubr.bf16.gmra.mrb[0].mxu0 %v526
      %v989 = vpop.f32.mrb[0].mxu0
      %v990 = vadd.f32 %v893, %v989
      %v991 = vpop.f32.mrb[0].mxu0
      %v992 = vpop.f32.mrb[0].mxu0
      %v993 = vadd.f32 %v896, %v992
      %v994 = vpop.f32.mrb[0].mxu0
      %995 = vdwg.mxu0
      %996 = vmatprep.subr.bf16.mxu0 0
      %997 = vmatpush1.bf16.msra.mxu0 %v737
      %998 = vmatprep.subr.bf16.mxu0 0
      %999 = vmatpush1.bf16.msra.mxu0 %v738
      %1000 = vmatprep.subr.bf16.mxu0 0
      %1001 = vmatpush1.bf16.msra.mxu0 %v739
      %1002 = vmatprep.subr.bf16.mxu0 0
      %1003 = vmatpush1.bf16.msra.mxu0 %v740
      %1004 = vmatprep.subr.bf16.mxu0 0
      %1005 = vmatpush1.bf16.msra.mxu0 0
      %1006 = vmatprep.subr.bf16.mxu0 0
      %1007 = vmatpush1.bf16.msra.mxu0 0
      %1008 = vmatprep.subr.bf16.mxu0 0
      %1009 = vmatpush1.bf16.msra.mxu0 0
      %1010 = vmatprep.subr.bf16.mxu0 0
      %1011 = vmatpush1.bf16.msra.mxu0 0
      %1012 = vmatprep.subr.bf16.mxu0 0
      %1013 = vmatpush1.bf16.msra.mxu0 0
      %1014 = vmatprep.subr.bf16.mxu0 0
      %1015 = vmatpush1.bf16.msra.mxu0 0
      %1016 = vmatprep.subr.bf16.mxu0 0
      %1017 = vmatpush1.bf16.msra.mxu0 0
      %1018 = vmatprep.subr.bf16.mxu0 0
      %1019 = vmatpush1.bf16.msra.mxu0 0
      %1020 = vmatprep.subr.bf16.mxu0 0
      %1021 = vmatpush1.bf16.msra.mxu0 0
      %1022 = vmatprep.subr.bf16.mxu0 0
      %1023 = vmatpush1.bf16.msra.mxu0 0
      %1024 = vmatprep.subr.bf16.mxu0 0
      %1025 = vmatpush1.bf16.msra.mxu0 0
      %1026 = vmatprep.subr.bf16.mxu0 0
      %1027 = vmatpush1.bf16.msra.mxu0 0
      %1028 = vmatprep.mubr.bf16.mxu0 0
      %1029 = vmatmul.mubr.bf16.gmra.mrb[0].mxu0 %v779
      %v1030 = vpop.f32.mrb[0].mxu0
      %v1031 = vadd.f32 %v934, %v1030
      %v1032 = vpop.f32.mrb[0].mxu0
      %v1033 = vpop.f32.mrb[0].mxu0
      %v1034 = vadd.f32 %v937, %v1033
      %v1035 = vpop.f32.mrb[0].mxu0
      %1036 = vmatprep.mubr.bf16.mxu0 0
      %1037 = vmatmul.mubr.bf16.gmra.mrb[0].mxu0 %v782
      %v1038 = vpop.f32.mrb[0].mxu0
      %v1039 = vadd.f32 %v942, %v1038
      %v1040 = vpop.f32.mrb[0].mxu0
      %v1041 = vpop.f32.mrb[0].mxu0
      %v1042 = vadd.f32 %v945, %v1041
      %v1043 = vpop.f32.mrb[0].mxu0
      %1044 = vmatprep.mubr.bf16.mxu0 0
      %1045 = vmatmul.mubr.bf16.gmra.mrb[0].mxu0 %v785
      %v1046 = vpop.f32.mrb[0].mxu0
      %v1047 = vadd.f32 %v950, %v1046
      %v1048 = vpop.f32.mrb[0].mxu0
      %v1049 = vpop.f32.mrb[0].mxu0
      %v1050 = vadd.f32 %v953, %v1049
      %v1051 = vpop.f32.mrb[0].mxu0
      %1052 = vmatprep.mubr.bf16.mxu0 0
      %1053 = vmatmul.mubr.bf16.gmra.mrb[0].mxu0 %v788
      %v1054 = vpop.f32.mrb[0].mxu0
      %v1055 = vadd.f32 %v958, %v1054
      %v1056 = vpop.f32.mrb[0].mxu0
      %v1057 = vpop.f32.mrb[0].mxu0
      %v1058 = vadd.f32 %v961, %v1057
      %v1059 = vpop.f32.mrb[0].mxu0
      %1060 = vmatprep.mubr.bf16.mxu0 0
      %1061 = vmatmul.mubr.bf16.gmra.mrb[0].mxu0 %v791
      %v1062 = vpop.f32.mrb[0].mxu0
      %v1063 = vadd.f32 %v966, %v1062
      %v1064 = vpop.f32.mrb[0].mxu0
      %v1065 = vpop.f32.mrb[0].mxu0
      %v1066 = vadd.f32 %v969, %v1065
      %v1067 = vpop.f32.mrb[0].mxu0
      %1068 = vmatprep.mubr.bf16.mxu0 0
      %1069 = vmatmul.mubr.bf16.gmra.mrb[0].mxu0 %v794
      %v1070 = vpop.f32.mrb[0].mxu0
      %v1071 = vadd.f32 %v974, %v1070
      %v1072 = vpop.f32.mrb[0].mxu0
      %v1073 = vpop.f32.mrb[0].mxu0
      %v1074 = vadd.f32 %v977, %v1073
      %v1075 = vpop.f32.mrb[0].mxu0
      %1076 = vmatprep.mubr.bf16.mxu0 0
      %1077 = vmatmul.mubr.bf16.gmra.mrb[0].mxu0 %v797
      %v1078 = vpop.f32.mrb[0].mxu0
      %v1079 = vadd.f32 %v982, %v1078
      %v1080 = vpop.f32.mrb[0].mxu0
      %v1081 = vpop.f32.mrb[0].mxu0
      %v1082 = vadd.f32 %v985, %v1081
      %v1083 = vpop.f32.mrb[0].mxu0
      %1084 = vmatprep.mubr.bf16.mxu0 0
      %1085 = vmatmul.mubr.bf16.gmra.mrb[0].mxu0 %v800
      %v1086 = vpop.f32.mrb[0].mxu0
      %v1087 = vadd.f32 %v990, %v1086
      %v1088 = vpop.f32.mrb[0].mxu0
      %v1089 = vpop.f32.mrb[0].mxu0
      %v1090 = vadd.f32 %v993, %v1089
      %v1091 = vpop.f32.mrb[0].mxu0
      %1092 = vdwg.mxu0
      %v1093 = vld [vmem:[%s2] sm:$0x1]
      %v1095 = vlaneseq
      %v1096 = vshrl.u32 %v1095, 7
      %v1097 = vsub.s32 0, %v1096
      %v1098 = vrot.slane %v1093, %v1097
      %v1100 = vmul.f32 %v1031, %v1098
      %v1101 = vmul.f32 %v1034, %v1098
      %v1102 = vmul.f32 %v1039, %v1098
      %v1103 = vmul.f32 %v1042, %v1098
      %v1104 = vmul.f32 %v1047, %v1098
      %v1105 = vmul.f32 %v1050, %v1098
      %v1106 = vmul.f32 %v1055, %v1098
      %v1107 = vmul.f32 %v1058, %v1098
      %v1108 = vmul.f32 %v1063, %v1098
      %v1109 = vmul.f32 %v1066, %v1098
      %v1110 = vmul.f32 %v1071, %v1098
      %v1111 = vmul.f32 %v1074, %v1098
      %v1112 = vmul.f32 %v1079, %v1098
      %v1113 = vmul.f32 %v1082, %v1098
      %v1114 = vmul.f32 %v1087, %v1098
      %v1115 = vmul.f32 %v1090, %v1098
      %v1116 = vld [vmem:[%s3] sm:$0x1]
      %v1118 = vlaneseq
      %v1119 = vshrl.u32 %v1118, 7
      %v1120 = vsub.s32 0, %v1119
      %v1121 = vrot.slane %v1116, %v1120
      %v1123 = vadd.f32 %v1100, %v1121
      %v1124 = vadd.f32 %v1101, %v1121
      %v1125 = vadd.f32 %v1102, %v1121
      %v1126 = vadd.f32 %v1103, %v1121
      %v1127 = vadd.f32 %v1104, %v1121
      %v1128 = vadd.f32 %v1105, %v1121
      %v1129 = vadd.f32 %v1106, %v1121
      %v1130 = vadd.f32 %v1107, %v1121
      %v1131 = vadd.f32 %v1108, %v1121
      %v1132 = vadd.f32 %v1109, %v1121
      %v1133 = vadd.f32 %v1110, %v1121
      %v1134 = vadd.f32 %v1111, %v1121
      %v1135 = vadd.f32 %v1112, %v1121
      %v1136 = vadd.f32 %v1113, %v1121
      %v1137 = vadd.f32 %v1114, %v1121
      %v1138 = vadd.f32 %v1115, %v1121
      %v1139 = vmul.f32 %v1123, 0.5
      %v1140 = vmul.f32 %v1124, 0.5
      %v1141 = vmul.f32 %v1125, 0.5
      %v1142 = vmul.f32 %v1126, 0.5
      %v1143 = vmul.f32 %v1127, 0.5
      %v1144 = vmul.f32 %v1128, 0.5
      %v1145 = vmul.f32 %v1129, 0.5
      %v1146 = vmul.f32 %v1130, 0.5
      %v1147 = vmul.f32 %v1131, 0.5
      %v1148 = vmul.f32 %v1132, 0.5
      %v1149 = vmul.f32 %v1133, 0.5
      %v1150 = vmul.f32 %v1134, 0.5
      %v1151 = vmul.f32 %v1135, 0.5
      %v1152 = vmul.f32 %v1136, 0.5
      %v1153 = vmul.f32 %v1137, 0.5
      %v1154 = vmul.f32 %v1138, 0.5
      %v1155 = vmul.f32 %v1123, 0.70710677
      %v1156 = vmul.f32 %v1124, 0.70710677
      %v1157 = vmul.f32 %v1125, 0.70710677
      %v1158 = vmul.f32 %v1126, 0.70710677
      %v1159 = vmul.f32 %v1127, 0.70710677
      %v1160 = vmul.f32 %v1128, 0.70710677
      %v1161 = vmul.f32 %v1129, 0.70710677
      %v1162 = vmul.f32 %v1130, 0.70710677
      %v1163 = vmul.f32 %v1131, 0.70710677
      %v1164 = vmul.f32 %v1132, 0.70710677
      %v1165 = vmul.f32 %v1133, 0.70710677
      %v1166 = vmul.f32 %v1134, 0.70710677
      %v1167 = vmul.f32 %v1135, 0.70710677
      %v1168 = vmul.f32 %v1136, 0.70710677
      %v1169 = vmul.f32 %v1137, 0.70710677
      %v1170 = vmul.f32 %v1138, 0.70710677
      %v1171 = verf.f32.pop %v1155
      %v1172 = verf.f32.pop %v1156
      %v1173 = verf.f32.pop %v1157
      %v1174 = verf.f32.pop %v1158
      %v1175 = verf.f32.pop %v1159
      %v1176 = verf.f32.pop %v1160
      %v1177 = verf.f32.pop %v1161
      %v1178 = verf.f32.pop %v1162
      %v1179 = verf.f32.pop %v1163
      %v1180 = verf.f32.pop %v1164
      %v1181 = verf.f32.pop %v1165
      %v1182 = verf.f32.pop %v1166
      %v1183 = verf.f32.pop %v1167
      %v1184 = verf.f32.pop %v1168
      %v1185 = verf.f32.pop %v1169
      %v1186 = verf.f32.pop %v1170
      %v1187 = vadd.f32 %v1171, 1.0
      %v1188 = vadd.f32 %v1172, 1.0
      %v1189 = vadd.f32 %v1173, 1.0
      %v1190 = vadd.f32 %v1174, 1.0
      %v1191 = vadd.f32 %v1175, 1.0
      %v1192 = vadd.f32 %v1176, 1.0
      %v1193 = vadd.f32 %v1177, 1.0
      %v1194 = vadd.f32 %v1178, 1.0
      %v1195 = vadd.f32 %v1179, 1.0
      %v1196 = vadd.f32 %v1180, 1.0
      %v1197 = vadd.f32 %v1181, 1.0
      %v1198 = vadd.f32 %v1182, 1.0
      %v1199 = vadd.f32 %v1183, 1.0
      %v1200 = vadd.f32 %v1184, 1.0
      %v1201 = vadd.f32 %v1185, 1.0
      %v1202 = vadd.f32 %v1186, 1.0
      %v1203 = vmul.f32 %v1139, %v1187
      %v1204 = vmul.f32 %v1140, %v1188
      %v1205 = vmul.f32 %v1141, %v1189
      %v1206 = vmul.f32 %v1142, %v1190
      %v1207 = vmul.f32 %v1143, %v1191
      %v1208 = vmul.f32 %v1144, %v1192
      %v1209 = vmul.f32 %v1145, %v1193
      %v1210 = vmul.f32 %v1146, %v1194
      %v1211 = vmul.f32 %v1147, %v1195
      %v1212 = vmul.f32 %v1148, %v1196
      %v1213 = vmul.f32 %v1149, %v1197
      %v1214 = vmul.f32 %v1150, %v1198
      %v1215 = vmul.f32 %v1151, %v1199
      %v1216 = vmul.f32 %v1152, %v1200
      %v1217 = vmul.f32 %v1153, %v1201
      %v1218 = vmul.f32 %v1154, %v1202
      %v1219 = vpack.c.bf16 %v1204, %v1203
      %v1220 = vpack.c.bf16 %v1206, %v1205
      %v1221 = vpack.c.bf16 %v1208, %v1207
      %v1222 = vpack.c.bf16 %v1210, %v1209
      %v1223 = vpack.c.bf16 %v1212, %v1211
      %v1224 = vpack.c.bf16 %v1214, %v1213
      %v1225 = vpack.c.bf16 %v1216, %v1215
      %v1226 = vpack.c.bf16 %v1218, %v1217
      %v1235 = vunpack.c.l.b16 %v1219
      %v1236 = vunpack.c.h.b16 %v1219
      %v1237 = vunpack.c.l.b16 %v1220
      %v1238 = vunpack.c.h.b16 %v1220
      %v1239 = vunpack.c.l.b16 %v1221
      %v1240 = vunpack.c.h.b16 %v1221
      %v1241 = vunpack.c.l.b16 %v1222
      %v1242 = vunpack.c.h.b16 %v1222
      %v1243 = vunpack.c.l.b16 %v1223
      %v1244 = vunpack.c.h.b16 %v1223
      %v1245 = vunpack.c.l.b16 %v1224
      %v1246 = vunpack.c.h.b16 %v1224
      %v1247 = vunpack.c.l.b16 %v1225
      %v1248 = vunpack.c.h.b16 %v1225
      %v1249 = vunpack.c.l.b16 %v1226
      %v1250 = vunpack.c.h.b16 %v1226
      %v1251 = vpack.c.b16 %v1235, %v1235
      %v1252 = vpack.c.b16 %v1236, %v1236
      %v1253 = vpack.c.b16 %v1237, %v1237
      %v1254 = vpack.c.b16 %v1238, %v1238
      %v1255 = vpack.c.b16 %v1239, %v1239
      %v1256 = vpack.c.b16 %v1240, %v1240
      %v1257 = vpack.c.b16 %v1241, %v1241
      %v1258 = vpack.c.b16 %v1242, %v1242
      %v1259 = vpack.c.b16 %v1243, %v1243
      %v1260 = vpack.c.b16 %v1244, %v1244
      %v1261 = vpack.c.b16 %v1245, %v1245
      %v1262 = vpack.c.b16 %v1246, %v1246
      %v1263 = vpack.c.b16 %v1247, %v1247
      %v1264 = vpack.c.b16 %v1248, %v1248
      %v1265 = vpack.c.b16 %v1249, %v1249
      %v1266 = vpack.c.b16 %v1250, %v1250
      %vm1283 = vcmask 257024
      %1284 = vst.msk [vmem:[%s238] sm:$0xf] %vm1283, %v1251
      %1285 = vst.msk [vmem:[%s238 + $0x4] sm:$0xf] %vm1283, %v1252
      %1286 = vst.msk [vmem:[%s238 + $0x8] sm:$0xf] %vm1283, %v1253
      %1287 = vst.msk [vmem:[%s238 + $0xc] sm:$0xf] %vm1283, %v1254
      %1288 = vst.msk [vmem:[%s238 + $0x10] sm:$0xf] %vm1283, %v1255
      %1289 = vst.msk [vmem:[%s238 + $0x14] sm:$0xf] %vm1283, %v1256
      %1290 = vst.msk [vmem:[%s238 + $0x18] sm:$0xf] %vm1283, %v1257
      %1291 = vst.msk [vmem:[%s238 + $0x1c] sm:$0xf] %vm1283, %v1258
      %1292 = vst.msk [vmem:[%s238 + $0x20] sm:$0xf] %vm1283, %v1259
      %1293 = vst.msk [vmem:[%s238 + $0x24] sm:$0xf] %vm1283, %v1260
      %1294 = vst.msk [vmem:[%s238 + $0x28] sm:$0xf] %vm1283, %v1261
      %1295 = vst.msk [vmem:[%s238 + $0x2c] sm:$0xf] %vm1283, %v1262
      %1296 = vst.msk [vmem:[%s238 + $0x30] sm:$0xf] %vm1283, %v1263
      %1297 = vst.msk [vmem:[%s238 + $0x34] sm:$0xf] %vm1283, %v1264
      %1298 = vst.msk [vmem:[%s238 + $0x38] sm:$0xf] %vm1283, %v1265
      %1299 = vst.msk [vmem:[%s238 + $0x3c] sm:$0xf] %vm1283, %v1266
      %s1300 = smul.u32 16, %s20
      %p1301 = scmp.lt.s32.totalorder %s19, 1
      %s1302 = scalar_select %p1301, %s19, 1
      %p1303 = scmp.lt.s32.totalorder %s1300, 31
      %s1304 = scalar_select %p1303, %s1300, 31
      %s1305 = smul.addr %s1302, 32
      %s1306 = sadd.s32 %s1304, %s1305
      %s1307 = smul.addr %s1306, 4
      %s1308 = scalar_lea.vmem %s4, %s1307
      // Predicated region
      $region37: #{fgc_forward.10} parent=35 // pred_check
        %p1309 = pneg %p138
      $region38: #{fgc_forward.10} parent=35 // pred_check_branch
        %1311 = sbr.rel (%p1309) target = $region40
      $region39: #{fgc_forward.10} parent=35 // pred_region
        %s1312 = smul.u32 16, %s20
      $region40: #{fgc_forward.10} parent=35 // pred_fallthru
        _
    $region36: #{fgc_forward.10} parent=5 // pred_fallthru
      _
    %p1313 = scmp.le.s32.totalorder 2, %s10
    // Predicated region
    $region41: #{fgc_forward.10} parent=5 // pred_check
      %p1314 = pneg %p1313
    $region42: #{fgc_forward.10} parent=5 // pred_check_branch
      %1316 = sbr.rel (%p1314) target = $region44
    $region43: #{fgc_forward.10} parent=5 // pred_region
      %s1317 = ssub.s32 %s10, 2
      // Predicated region
      $region45: #{fgc_forward.10} parent=43 // pred_check
        %p1318 = pneg %p144
      $region46: #{fgc_forward.10} parent=43 // pred_check_branch
        %1320 = sbr.rel (%p1318) target = $region48
      $region47: #{fgc_forward.10} parent=43 // pred_region
        %s1321 = smul.u32 16, %s22
        %p1322 = scmp.lt.s32.totalorder %s21, 1
        %s1323 = scalar_select %p1322, %s21, 1
        %p1324 = scmp.lt.s32.totalorder %s1321, 31
        %s1325 = scalar_select %p1324, %s1321, 31
        %s1326 = smul.addr %s1323, 32
        %s1327 = sadd.s32 %s1325, %s1326
        %s1328 = smul.addr %s1327, 4
        %s1329 = scalar_lea.vmem %s4, %s1328
      $region48: #{fgc_forward.10} parent=43 // pred_fallthru
        _
    $region44: #{fgc_forward.10} parent=5 // pred_fallthru
      _
  $region6: #{fgc_forward.10} parent=0 // loop_footer
    %s14 = sadd.s32 1, %s10
  $region7: #{fgc_forward.10} parent=0 // loop_footer_branch
    %9 = sbr.rel target = $region3
  $region8: #{fgc_forward.10} parent=0 // loop_exit
    _

// kernel: fgc_forward.11
$region0: #{fgc_forward.11}
  #allocation0 [shape = 'u32[]', space=smem, size = 0x4, offset = 0x4, fixed_abs, tag = 'smem constant byte address 0x4 - core index']
  #allocation1 [shape = 'u32[144,128]{1,0:T(1,128)}', space=vmem, size = 0x12000, scoped, tag = 'internal scratch']
  %s0 = inlined_call_operand.vmem [shape: bf16[2,256,288], index: 0, kind: input, shape index: {}]
  %s1 = inlined_call_operand.vmem [shape: bf16[288,32], index: 1, kind: input, shape index: {}]
  %s2 = inlined_call_operand.vmem [shape: f32[1,32], index: 2, kind: input, shape index: {}]
  %s3 = inlined_call_operand.vmem [shape: f32[1,32], index: 3, kind: input, shape index: {}]
  %s4 = inlined_call_operand.vmem [shape: bf16[2,256,32], index: 4, kind: output, shape index: {}]
  %s5 = sld [smem:[#allocation0]]
  $region49: #{fgc_forward.11} parent=0
    _
  %s7 = ssub.s32 1, %s5
  %s8 = scalar_select 0, %s7, %s5
  loop: start=0, step=1, limit=6
  $region2: #{fgc_forward.11} parent=0 // loop_pre_header
    _
  $region3: #{fgc_forward.11} parent=0 // loop_header
    %s10 = sphi 0, %s14
    %p11 = scmp.ge.s32.totalorder %s10, 6
    %s17 = sphi 0, %s29
    %s18 = sphi 0, %s25
    %s19 = sphi 0, %s17
    %s20 = sphi 0, %s18
    %s21 = sphi 0, %s19
    %s22 = sphi 0, %s20
    %s34 = sphi 0, %s36
    %s37 = sphi 0, %s34
    %s38 = sphi 0, %s37
    %s54 = sphi 0, %s38
    %s58 = sphi 0, %s58
    %s60 = sphi 0, %s58
    %s61 = sphi 0, %s60
    %s75 = sphi 0, %s61
    %s79 = sphi 0, %s79
    %s81 = sphi 0, %s79
    %s82 = sphi 0, %s81
    %s96 = sphi 0, %s82
    %s100 = sphi 0, %s100
    %s102 = sphi 0, %s100
    %s103 = sphi 0, %s102
    %s117 = sphi 0, %s103
    %s125 = sphi 0, %s127
    %s128 = sphi 0, %s125
    %s129 = sphi 0, %s128
    %s145 = sphi 0, %s129
  $region4: #{fgc_forward.11} parent=0 // loop_header_branch
    %13 = sbr.rel (%p11) target = $region8
  $region5: #{fgc_forward.11} parent=0 // loop_body
    %s15 = ssub.s32 %s10, 1
    %s16 = ssub.s32 %s10, 2
    %s23 = sadd.s32 1, %s18
    %p24 = scmp.ge.s32.totalorder %s23, 2
    %s25 = scalar_select %p24, 0, %s23
    %s26 = sadd.s32 1, %s17
    %s27 = scalar_select %p24, %s26, %s17
    %p28 = scmp.ge.s32.totalorder %s27, 2
    %s29 = scalar_select %p28, 0, %s27
    %s30 = ssub.s32 %s17, %s29
    %s31 = ssub.s32 %s18, %s25
    %s32 = sor.u32 %s30, %s31
    %p33 = scmp.eq.s32.totalorder %s32, 0
    %s35 = sadd.s32 %s34, 1
    %s36 = scalar_select %p33, %s34, %s35
    %p39 = pneg %p33
    %p40 = scmp.eq.s32.totalorder %s10, 3
    %p41 = por %p39, %p40
    %p42 = scmp.ne.s32.totalorder %s34, %s37
    %p43 = scmp.eq.s32.totalorder %s10, 0
    %p44 = por %p42, %p43
    %p45 = scmp.ne.s32.totalorder %s34, %s37
    %p46 = scmp.eq.s32.totalorder %s15, 3
    %p47 = por %p45, %p46
    %p48 = scmp.ne.s32.totalorder %s37, %s38
    %p49 = scmp.eq.s32.totalorder %s15, 0
    %p50 = por %p48, %p49
    %p51 = scmp.ne.s32.totalorder %s37, %s38
    %p52 = scmp.eq.s32.totalorder %s16, 3
    %p53 = por %p51, %p52
    %p55 = scmp.ne.s32.totalorder %s38, %s54
    %p56 = scmp.eq.s32.totalorder %s16, 0
    %p57 = por %p55, %p56
    %s59 = sadd.s32 %s58, 1
    %p62 = scmp.eq.s32.totalorder %s10, 3
    %p63 = scmp.ne.s32.totalorder %s58, %s60
    %p64 = scmp.eq.s32.totalorder %s10, 0
    %p65 = por %p63, %p64
    %p66 = scmp.ne.s32.totalorder %s58, %s60
    %p67 = scmp.eq.s32.totalorder %s15, 3
    %p68 = por %p66, %p67
    %p69 = scmp.ne.s32.totalorder %s60, %s61
    %p70 = scmp.eq.s32.totalorder %s15, 0
    %p71 = por %p69, %p70
    %p72 = scmp.ne.s32.totalorder %s60, %s61
    %p73 = scmp.eq.s32.totalorder %s16, 3
    %p74 = por %p72, %p73
    %p76 = scmp.ne.s32.totalorder %s61, %s75
    %p77 = scmp.eq.s32.totalorder %s16, 0
    %p78 = por %p76, %p77
    %s80 = sadd.s32 %s79, 1
    %p83 = scmp.eq.s32.totalorder %s10, 3
    %p84 = scmp.ne.s32.totalorder %s79, %s81
    %p85 = scmp.eq.s32.totalorder %s10, 0
    %p86 = por %p84, %p85
    %p87 = scmp.ne.s32.totalorder %s79, %s81
    %p88 = scmp.eq.s32.totalorder %s15, 3
    %p89 = por %p87, %p88
    %p90 = scmp.ne.s32.totalorder %s81, %s82
    %p91 = scmp.eq.s32.totalorder %s15, 0
    %p92 = por %p90, %p91
    %p93 = scmp.ne.s32.totalorder %s81, %s82
    %p94 = scmp.eq.s32.totalorder %s16, 3
    %p95 = por %p93, %p94
    %p97 = scmp.ne.s32.totalorder %s82, %s96
    %p98 = scmp.eq.s32.totalorder %s16, 0
    %p99 = por %p97, %p98
    %s101 = sadd.s32 %s100, 1
    %p104 = scmp.eq.s32.totalorder %s10, 3
    %p105 = scmp.ne.s32.totalorder %s100, %s102
    %p106 = scmp.eq.s32.totalorder %s10, 0
    %p107 = por %p105, %p106
    %p108 = scmp.ne.s32.totalorder %s100, %s102
    %p109 = scmp.eq.s32.totalorder %s15, 3
    %p110 = por %p108, %p109
    %p111 = scmp.ne.s32.totalorder %s102, %s103
    %p112 = scmp.eq.s32.totalorder %s15, 0
    %p113 = por %p111, %p112
    %p114 = scmp.ne.s32.totalorder %s102, %s103
    %p115 = scmp.eq.s32.totalorder %s16, 3
    %p116 = por %p114, %p115
    %p118 = scmp.ne.s32.totalorder %s103, %s117
    %p119 = scmp.eq.s32.totalorder %s16, 0
    %p120 = por %p118, %p119
    %s121 = ssub.s32 %s17, %s29
    %s122 = ssub.s32 %s18, %s25
    %s123 = sor.u32 %s121, %s122
    %p124 = scmp.eq.s32.totalorder %s123, 0
    %s126 = sadd.s32 %s125, 1
    %s127 = scalar_select %p124, %s125, %s126
    %p130 = pneg %p124
    %p131 = scmp.eq.s32.totalorder %s10, 3
    %p132 = por %p130, %p131
    %p133 = scmp.ne.s32.totalorder %s125, %s128
    %p134 = scmp.eq.s32.totalorder %s10, 0
    %p135 = por %p133, %p134
    %p136 = scmp.ne.s32.totalorder %s125, %s128
    %p137 = scmp.eq.s32.totalorder %s15, 3
    %p138 = por %p136, %p137
    %p139 = scmp.ne.s32.totalorder %s128, %s129
    %p140 = scmp.eq.s32.totalorder %s15, 0
    %p141 = por %p139, %p140
    %p142 = scmp.ne.s32.totalorder %s128, %s129
    %p143 = scmp.eq.s32.totalorder %s16, 3
    %p144 = por %p142, %p143
    %p146 = scmp.ne.s32.totalorder %s129, %s145
    %p147 = scmp.eq.s32.totalorder %s16, 0
    %p148 = por %p146, %p147
    %p149 = scmp.le.s32.totalorder 1, %s10
    %p150 = scmp.lt.s32.totalorder %s10, 5
    %p151 = pnand %p149, %p150
    %p152 = pneg %p151
    // Predicated region
    $region9: #{fgc_forward.11} parent=5 // pred_check
      _
    $region10: #{fgc_forward.11} parent=5 // pred_check_branch
      %154 = sbr.rel (%p151) target = $region12
    $region11: #{fgc_forward.11} parent=5 // pred_region
      %s155 = ssub.s32 %s10, 1
      // Predicated region
      $region13: #{fgc_forward.11} parent=11 // pred_check
        %p156 = pneg %p71
      $region14: #{fgc_forward.11} parent=11 // pred_check_branch
        %158 = sbr.rel (%p156) target = $region16
      $region15: #{fgc_forward.11} parent=11 // pred_region
        _
      $region16: #{fgc_forward.11} parent=11 // pred_fallthru
        _
      // Predicated region
      $region17: #{fgc_forward.11} parent=11 // pred_check
        %p159 = pneg %p92
      $region18: #{fgc_forward.11} parent=11 // pred_check_branch
        %161 = sbr.rel (%p159) target = $region20
      $region19: #{fgc_forward.11} parent=11 // pred_region
        _
      $region20: #{fgc_forward.11} parent=11 // pred_fallthru
        _
      // Predicated region
      $region21: #{fgc_forward.11} parent=11 // pred_check
        %p162 = pneg %p113
      $region22: #{fgc_forward.11} parent=11 // pred_check_branch
        %164 = sbr.rel (%p162) target = $region24
      $region23: #{fgc_forward.11} parent=11 // pred_region
        _
      $region24: #{fgc_forward.11} parent=11 // pred_fallthru
        _
    $region12: #{fgc_forward.11} parent=5 // pred_fallthru
      _
    %p165 = scmp.lt.s32.totalorder %s10, 4
    // Predicated region
    $region25: #{fgc_forward.11} parent=5 // pred_check
      %p166 = pneg %p165
    $region26: #{fgc_forward.11} parent=5 // pred_check_branch
      %168 = sbr.rel (%p166) target = $region28
    $region27: #{fgc_forward.11} parent=5 // pred_region
      // Predicated region
      $region29: #{fgc_forward.11} parent=27 // pred_check
        %p169 = pneg %p44
      $region30: #{fgc_forward.11} parent=27 // pred_check_branch
        %171 = sbr.rel (%p169) target = $region32
      $region31: #{fgc_forward.11} parent=27 // pred_region
        %s172 = smul.u32 16, %s18
        %p173 = scmp.lt.s32.totalorder %s17, 1
        %s174 = scalar_select %p173, %s17, 1
        %p175 = scmp.lt.s32.totalorder %s172, 31
        %s176 = scalar_select %p175, %s172, 31
        %s177 = smul.addr %s176, 3
        %s178 = smul.addr %s174, 96
        %s179 = sadd.s32 %s177, %s178
        %s180 = smul.addr %s179, 4
        %s181 = scalar_lea.vmem %s0, %s180
        %s182 = smul.u32 16, %s18
      $region32: #{fgc_forward.11} parent=27 // pred_fallthru
        _
    $region28: #{fgc_forward.11} parent=5 // pred_fallthru
      _
    %p183 = scmp.le.s32.totalorder 1, %s10
    %p184 = scmp.lt.s32.totalorder %s10, 5
    %p185 = pnand %p183, %p184
    %p186 = pneg %p185
    // Predicated region
    $region33: #{fgc_forward.11} parent=5 // pred_check
      _
    $region34: #{fgc_forward.11} parent=5 // pred_check_branch
      %188 = sbr.rel (%p185) target = $region36
    $region35: #{fgc_forward.11} parent=5 // pred_region
      %s189 = ssub.s32 %s10, 1
      %s190 = smul.u32 16, %s20
      %p191 = scmp.lt.s32.totalorder %s19, 1
      %s192 = scalar_select %p191, %s19, 1
      %p193 = scmp.lt.s32.totalorder %s190, 31
      %s194 = scalar_select %p193, %s190, 31
      %s195 = smul.addr %s194, 3
      %s196 = smul.addr %s192, 96
      %s197 = sadd.s32 %s195, %s196
      %s198 = smul.addr %s197, 4
      %s199 = scalar_lea.vmem %s0, %s198
      %p200 = pneg %p50
      %p201 = pneg %p47
      %p202 = pneg %p71
      %p203 = pneg %p68
      %p204 = pneg %p92
      %p205 = pneg %p89
      %p206 = pneg %p113
      %p207 = pneg %p110
      %p208 = pneg %p141
      %p209 = pneg %p138
      %s210 = smul.u32 16, %s20
      %p211 = scmp.lt.s32.totalorder %s19, 1
      %s212 = scalar_select %p211, %s19, 1
      %p213 = scmp.lt.s32.totalorder %s210, 31
      %s214 = scalar_select %p213, %s210, 31
      %s215 = smul.addr %s212, 32
      %s216 = sadd.s32 %s214, %s215
      %s217 = smul.addr %s216, 4
      %s218 = scalar_lea.vmem %s4, %s217
      %s219 = smul.u32 16, %s20
      %p220 = scmp.lt.s32.totalorder %s19, 1
      %s221 = scalar_select %p220, %s19, 1
      %p222 = scmp.lt.s32.totalorder %s219, 31
      %s223 = scalar_select %p222, %s219, 31
      %s224 = smul.addr %s223, 3
      %s225 = smul.addr %s221, 96
      %s226 = sadd.s32 %s224, %s225
      %s227 = smul.addr %s226, 4
      %s228 = scalar_lea.vmem %s0, %s227
      %s229 = smul.u32 16, %s20
      %s230 = smul.u32 16, %s20
      %p231 = scmp.lt.s32.totalorder %s19, 1
      %s232 = scalar_select %p231, %s19, 1
      %p233 = scmp.lt.s32.totalorder %s230, 31
      %s234 = scalar_select %p233, %s230, 31
      %s235 = smul.addr %s232, 32
      %s236 = sadd.s32 %s234, %s235
      %s237 = smul.addr %s236, 4
      %s238 = scalar_lea.vmem %s4, %s237
      %s239 = smul.u32 16, %s20
      %v241 = vld [vmem:[%s228] sm:$0xff]
      %v242 = vld [vmem:[%s228 + $0x8] sm:$0xf]
      %v243 = vld [vmem:[%s228 + $0xc] sm:$0xff]
      %v244 = vld [vmem:[%s228 + $0x14] sm:$0xf]
      %v245 = vld [vmem:[%s228 + $0x18] sm:$0xff]
      %v246 = vld [vmem:[%s228 + $0x20] sm:$0xf]
      %v247 = vld [vmem:[%s228 + $0x24] sm:$0xff]
      %v248 = vld [vmem:[%s228 + $0x2c] sm:$0xf]
      %v249 = vld [vmem:[%s228 + $0x30] sm:$0xff]
      %v250 = vld [vmem:[%s228 + $0x38] sm:$0xf]
      %v251 = vld [vmem:[%s228 + $0x3c] sm:$0xff]
      %v252 = vld [vmem:[%s228 + $0x44] sm:$0xf]
      %v253 = vld [vmem:[%s228 + $0x48] sm:$0xff]
      %v254 = vld [vmem:[%s228 + $0x50] sm:$0xf]
      %v255 = vld [vmem:[%s228 + $0x54] sm:$0xff]
      %v256 = vld [vmem:[%s228 + $0x5c] sm:$0xf]
      %v257 = vld [vmem:[%s228 + $0x60] sm:$0xff]
      %v258 = vld [vmem:[%s228 + $0x68] sm:$0xf]
      %v259 = vld [vmem:[%s228 + $0x6c] sm:$0xff]
      %v260 = vld [vmem:[%s228 + $0x74] sm:$0xf]
      %v261 = vld [vmem:[%s228 + $0x78] sm:$0xff]
      %v262 = vld [vmem:[%s228 + $0x80] sm:$0xf]
      %v263 = vld [vmem:[%s228 + $0x84] sm:$0xff]
      %v264 = vld [vmem:[%s228 + $0x8c] sm:$0xf]
      %v265 = vld [vmem:[%s228 + $0x90] sm:$0xff]
      %v266 = vld [vmem:[%s228 + $0x98] sm:$0xf]
      %v267 = vld [vmem:[%s228 + $0x9c] sm:$0xff]
      %v268 = vld [vmem:[%s228 + $0xa4] sm:$0xf]
      %v269 = vld [vmem:[%s228 + $0xa8] sm:$0xff]
      %v270 = vld [vmem:[%s228 + $0xb0] sm:$0xf]
      %v271 = vld [vmem:[%s228 + $0xb4] sm:$0xff]
      %v272 = vld [vmem:[%s228 + $0xbc] sm:$0xf]
      %v273 = vld [vmem:[%s1] sm:$0xf]
      %v274 = vld [vmem:[%s1 + $0x4] sm:$0xf]
      %v275 = vld [vmem:[%s1 + $0x8] sm:$0xf]
      %v276 = vld [vmem:[%s1 + $0xc] sm:$0xf]
      %v277 = vld [vmem:[%s1 + $0x10] sm:$0xf]
      %v278 = vld [vmem:[%s1 + $0x14] sm:$0xf]
      %v279 = vld [vmem:[%s1 + $0x18] sm:$0xf]
      %v280 = vld [vmem:[%s1 + $0x1c] sm:$0xf]
      %v281 = vld [vmem:[%s1 + $0x20] sm:$0xf]
      %v282 = vld [vmem:[%s1 + $0x24] sm:$0xf]
      %v283 = vld [vmem:[%s1 + $0x28] sm:$0xf]
      %v284 = vld [vmem:[%s1 + $0x2c] sm:$0xf]
      %v285 = vld [vmem:[%s1 + $0x30] sm:$0xf]
      %v286 = vld [vmem:[%s1 + $0x34] sm:$0xf]
      %v287 = vld [vmem:[%s1 + $0x38] sm:$0xf]
      %v288 = vld [vmem:[%s1 + $0x3c] sm:$0xf]
      %v289 = vld [vmem:[%s1 + $0x40] sm:$0xf]
      %v290 = vld [vmem:[%s1 + $0x44] sm:$0xf]
      %v291 = vld [vmem:[%s1 + $0x48] sm:$0xf]
      %v292 = vld [vmem:[%s1 + $0x4c] sm:$0xf]
      %v293 = vld [vmem:[%s1 + $0x50] sm:$0xf]
      %v294 = vld [vmem:[%s1 + $0x54] sm:$0xf]
      %v295 = vld [vmem:[%s1 + $0x58] sm:$0xf]
      %v296 = vld [vmem:[%s1 + $0x5c] sm:$0xf]
      %v297 = vld [vmem:[%s1 + $0x60] sm:$0xf]
      %v298 = vld [vmem:[%s1 + $0x64] sm:$0xf]
      %v299 = vld [vmem:[%s1 + $0x68] sm:$0xf]
      %v300 = vld [vmem:[%s1 + $0x6c] sm:$0xf]
      %v301 = vld [vmem:[%s1 + $0x70] sm:$0xf]
      %v302 = vld [vmem:[%s1 + $0x74] sm:$0xf]
      %v303 = vld [vmem:[%s1 + $0x78] sm:$0xf]
      %v304 = vld [vmem:[%s1 + $0x7c] sm:$0xf]
      %v305 = vld [vmem:[%s1 + $0x80] sm:$0xf]
      %v306 = vld [vmem:[%s1 + $0x84] sm:$0xf]
      %v307 = vld [vmem:[%s1 + $0x88] sm:$0xf]
      %v308 = vld [vmem:[%s1 + $0x8c] sm:$0xf]
      %v341 = vunpack.c.l.b16 %v241
      %v342 = vunpack.c.h.b16 %v241
      %v343 = vunpack.c.l.b16 %v242
      %v344 = vunpack.c.l.b16 %v243
      %v345 = vunpack.c.h.b16 %v243
      %v346 = vunpack.c.l.b16 %v244
      %v347 = vunpack.c.l.b16 %v245
      %v348 = vunpack.c.h.b16 %v245
      %v349 = vunpack.c.l.b16 %v246
      %v350 = vunpack.c.l.b16 %v247
      %v351 = vunpack.c.h.b16 %v247
      %v352 = vunpack.c.l.b16 %v248
      %v353 = vunpack.c.l.b16 %v249
      %v354 = vunpack.c.h.b16 %v249
      %v355 = vunpack.c.l.b16 %v250
      %v356 = vunpack.c.l.b16 %v251
      %v357 = vunpack.c.h.b16 %v251
      %v358 = vunpack.c.l.b16 %v252
      %v359 = vunpack.c.l.b16 %v253
      %v360 = vunpack.c.h.b16 %v253
      %v361 = vunpack.c.l.b16 %v254
      %v362 = vunpack.c.l.b16 %v255
      %v363 = vunpack.c.h.b16 %v255
      %v364 = vunpack.c.l.b16 %v256
      %v365 = vunpack.c.l.b16 %v257
      %v366 = vunpack.c.h.b16 %v257
      %v367 = vunpack.c.l.b16 %v258
      %v368 = vunpack.c.l.b16 %v259
      %v369 = vunpack.c.h.b16 %v259
      %v370 = vunpack.c.l.b16 %v260
      %v371 = vunpack.c.l.b16 %v261
      %v372 = vunpack.c.h.b16 %v261
      %v373 = vunpack.c.l.b16 %v262
      %v374 = vunpack.c.l.b16 %v263
      %v375 = vunpack.c.h.b16 %v263
      %v376 = vunpack.c.l.b16 %v264
      %v377 = vunpack.c.l.b16 %v265
      %v378 = vunpack.c.h.b16 %v265
      %v379 = vunpack.c.l.b16 %v266
      %v380 = vunpack.c.l.b16 %v267
      %v381 = vunpack.c.h.b16 %v267
      %v382 = vunpack.c.l.b16 %v268
      %v383 = vunpack.c.l.b16 %v269
      %v384 = vunpack.c.h.b16 %v269
      %v385 = vunpack.c.l.b16 %v270
      %v386 = vunpack.c.l.b16 %v271
      %v387 = vunpack.c.h.b16 %v271
      %v388 = vunpack.c.l.b16 %v272
      %v389 = vpack.c.b16 %v344, %v341
      %v390 = vpack.c.b16 %v345, %v342
      %v391 = vpack.c.b16 %v346, %v343
      %v392 = vpack.c.b16 %v350, %v347
      %v393 = vpack.c.b16 %v351, %v348
      %v394 = vpack.c.b16 %v352, %v349
      %v395 = vpack.c.b16 %v356, %v353
      %v396 = vpack.c.b16 %v357, %v354
      %v397 = vpack.c.b16 %v358, %v355
      %v398 = vpack.c.b16 %v362, %v359
      %v399 = vpack.c.b16 %v363, %v360
      %v400 = vpack.c.b16 %v364, %v361
      %v401 = vpack.c.b16 %v368, %v365
      %v402 = vpack.c.b16 %v369, %v366
      %v403 = vpack.c.b16 %v370, %v367
      %v404 = vpack.c.b16 %v374, %v371
      %v405 = vpack.c.b16 %v375, %v372
      %v406 = vpack.c.b16 %v376, %v373
      %v407 = vpack.c.b16 %v380, %v377
      %v408 = vpack.c.b16 %v381, %v378
      %v409 = vpack.c.b16 %v382, %v379
      %v410 = vpack.c.b16 %v386, %v383
      %v411 = vpack.c.b16 %v387, %v384
      %v412 = vpack.c.b16 %v388, %v385
      %v465 = vunpack.c.l.b16 %v273
      %v466 = vunpack.c.l.b16 %v274
      %v467 = vunpack.c.l.b16 %v275
      %v468 = vunpack.c.l.b16 %v276
      %v469 = vunpack.c.l.b16 %v277
      %v470 = vunpack.c.l.b16 %v278
      %v471 = vunpack.c.l.b16 %v279
      %v472 = vunpack.c.l.b16 %v280
      %v473 = vunpack.c.l.b16 %v281
      %v474 = vunpack.c.l.b16 %v282
      %v475 = vunpack.c.l.b16 %v283
      %v476 = vunpack.c.l.b16 %v284
      %v477 = vunpack.c.l.b16 %v285
      %v478 = vunpack.c.l.b16 %v286
      %v479 = vunpack.c.l.b16 %v287
      %v480 = vunpack.c.l.b16 %v288
      %v481 = vunpack.c.l.b16 %v289
      %v482 = vunpack.c.l.b16 %v290
      %v483 = vunpack.c.l.b16 %v291
      %v484 = vunpack.c.l.b16 %v292
      %v485 = vunpack.c.l.b16 %v293
      %v486 = vunpack.c.l.b16 %v294
      %v487 = vunpack.c.l.b16 %v295
      %v488 = vunpack.c.l.b16 %v296
      %v489 = vunpack.c.l.b16 %v297
      %v490 = vunpack.c.l.b16 %v298
      %v491 = vunpack.c.l.b16 %v299
      %v492 = vunpack.c.l.b16 %v300
      %v493 = vunpack.c.l.b16 %v301
      %v494 = vunpack.c.l.b16 %v302
      %v495 = vunpack.c.l.b16 %v303
      %v496 = vunpack.c.l.b16 %v304
      %v497 = vunpack.c.l.b16 %v305
      %v498 = vunpack.c.l.b16 %v306
      %v499 = vunpack.c.l.b16 %v307
      %v500 = vunpack.c.l.b16 %v308
      %v501 = vpack.c.b16 %v466, %v465
      %v502 = vpack.c.b16 %v468, %v467
      %v503 = vpack.c.b16 %v470, %v469
      %v504 = vpack.c.b16 %v472, %v471
      %v505 = vpack.c.b16 %v474, %v473
      %v506 = vpack.c.b16 %v476, %v475
      %v507 = vpack.c.b16 %v478, %v477
      %v508 = vpack.c.b16 %v480, %v479
      %v509 = vpack.c.b16 %v482, %v481
      %v510 = vpack.c.b16 %v484, %v483
      %v511 = vpack.c.b16 %v486, %v485
      %v512 = vpack.c.b16 %v488, %v487
      %v513 = vpack.c.b16 %v490, %v489
      %v514 = vpack.c.b16 %v492, %v491
      %v515 = vpack.c.b16 %v494, %v493
      %v516 = vpack.c.b16 %v496, %v495
      %v517 = vpack.c.b16 %v498, %v497
      %v518 = vpack.c.b16 %v500, %v499
      %vm537 = vcmask 261120
      %v539 = vsel %vm537, %v391, 0
      %v542 = vsel %vm537, %v394, 0
      %v545 = vsel %vm537, %v397, 0
      %v548 = vsel %vm537, %v400, 0
      %v551 = vsel %vm537, %v403, 0
      %v554 = vsel %vm537, %v406, 0
      %v557 = vsel %vm537, %v409, 0
      %v560 = vsel %vm537, %v412, 0
      %562 = vmatprep.subr.bf16.mxu0 0
      %563 = vmatpush1.bf16.msra.mxu0 %v501
      %564 = vmatprep.subr.bf16.mxu0 0
      %565 = vmatpush1.bf16.msra.mxu0 %v502
      %566 = vmatprep.subr.bf16.mxu0 0
      %567 = vmatpush1.bf16.msra.mxu0 %v503
      %568 = vmatprep.subr.bf16.mxu0 0
      %569 = vmatpush1.bf16.msra.mxu0 %v504
      %570 = vmatprep.subr.bf16.mxu0 0
      %571 = vmatpush1.bf16.msra.mxu0 %v505
      %572 = vmatprep.subr.bf16.mxu0 0
      %573 = vmatpush1.bf16.msra.mxu0 %v506
      %574 = vmatprep.subr.bf16.mxu0 0
      %575 = vmatpush1.bf16.msra.mxu0 %v507
      %576 = vmatprep.subr.bf16.mxu0 0
      %577 = vmatpush1.bf16.msra.mxu0 %v508
      %578 = vmatprep.subr.bf16.mxu0 0
      %579 = vmatpush1.bf16.msra.mxu0 %v509
      %580 = vmatprep.subr.bf16.mxu0 0
      %581 = vmatpush1.bf16.msra.mxu0 %v510
      %582 = vmatprep.subr.bf16.mxu0 0
      %583 = vmatpush1.bf16.msra.mxu0 %v511
      %584 = vmatprep.subr.bf16.mxu0 0
      %585 = vmatpush1.bf16.msra.mxu0 %v512
      %586 = vmatprep.subr.bf16.mxu0 0
      %587 = vmatpush1.bf16.msra.mxu0 %v513
      %588 = vmatprep.subr.bf16.mxu0 0
      %589 = vmatpush1.bf16.msra.mxu0 %v514
      %590 = vmatprep.subr.bf16.mxu0 0
      %591 = vmatpush1.bf16.msra.mxu0 %v515
      %592 = vmatprep.subr.bf16.mxu0 0
      %593 = vmatpush1.bf16.msra.mxu0 %v516
      %594 = vmatprep.mubr.bf16.mxu0 %v390
      %595 = vmatmul.mubr.bf16.gmra.mrb[0].mxu0 %v389
      %v596 = vpop.f32.mrb[0].mxu0
      %v597 = vadd.f32 0.0, %v596
      %v598 = vpop.f32.mrb[0].mxu0
      %v599 = vpop.f32.mrb[0].mxu0
      %v600 = vadd.f32 0.0, %v599
      %v601 = vpop.f32.mrb[0].mxu0
      %602 = vmatprep.mubr.bf16.mxu0 %v393
      %603 = vmatmul.mubr.bf16.gmra.mrb[0].mxu0 %v392
      %v604 = vpop.f32.mrb[0].mxu0
      %v605 = vadd.f32 0.0, %v604
      %v606 = vpop.f32.mrb[0].mxu0
      %v607 = vpop.f32.mrb[0].mxu0
      %v608 = vadd.f32 0.0, %v607
      %v609 = vpop.f32.mrb[0].mxu0
      %610 = vmatprep.mubr.bf16.mxu0 %v396
      %611 = vmatmul.mubr.bf16.gmra.mrb[0].mxu0 %v395
      %v612 = vpop.f32.mrb[0].mxu0
      %v613 = vadd.f32 0.0, %v612
      %v614 = vpop.f32.mrb[0].mxu0
      %v615 = vpop.f32.mrb[0].mxu0
      %v616 = vadd.f32 0.0, %v615
      %v617 = vpop.f32.mrb[0].mxu0
      %618 = vmatprep.mubr.bf16.mxu0 %v399
      %619 = vmatmul.mubr.bf16.gmra.mrb[0].mxu0 %v398
      %v620 = vpop.f32.mrb[0].mxu0
      %v621 = vadd.f32 0.0, %v620
      %v622 = vpop.f32.mrb[0].mxu0
      %v623 = vpop.f32.mrb[0].mxu0
      %v624 = vadd.f32 0.0, %v623
      %v625 = vpop.f32.mrb[0].mxu0
      %626 = vmatprep.mubr.bf16.mxu0 %v402
      %627 = vmatmul.mubr.bf16.gmra.mrb[0].mxu0 %v401
      %v628 = vpop.f32.mrb[0].mxu0
      %v629 = vadd.f32 0.0, %v628
      %v630 = vpop.f32.mrb[0].mxu0
      %v631 = vpop.f32.mrb[0].mxu0
      %v632 = vadd.f32 0.0, %v631
      %v633 = vpop.f32.mrb[0].mxu0
      %634 = vmatprep.mubr.bf16.mxu0 %v405
      %635 = vmatmul.mubr.bf16.gmra.mrb[0].mxu0 %v404
      %v636 = vpop.f32.mrb[0].mxu0
      %v637 = vadd.f32 0.0, %v636
      %v638 = vpop.f32.mrb[0].mxu0
      %v639 = vpop.f32.mrb[0].mxu0
      %v640 = vadd.f32 0.0, %v639
      %v641 = vpop.f32.mrb[0].mxu0
      %642 = vmatprep.mubr.bf16.mxu0 %v408
      %643 = vmatmul.mubr.bf16.gmra.mrb[0].mxu0 %v407
      %v644 = vpop.f32.mrb[0].mxu0
      %v645 = vadd.f32 0.0, %v644
      %v646 = vpop.f32.mrb[0].mxu0
      %v647 = vpop.f32.mrb[0].mxu0
      %v648 = vadd.f32 0.0, %v647
      %v649 = vpop.f32.mrb[0].mxu0
      %650 = vmatprep.mubr.bf16.mxu0 %v411
      %651 = vmatmul.mubr.bf16.gmra.mrb[0].mxu0 %v410
      %v652 = vpop.f32.mrb[0].mxu0
      %v653 = vadd.f32 0.0, %v652
      %v654 = vpop.f32.mrb[0].mxu0
      %v655 = vpop.f32.mrb[0].mxu0
      %v656 = vadd.f32 0.0, %v655
      %v657 = vpop.f32.mrb[0].mxu0
      %658 = vdwg.mxu0
      %659 = vmatprep.subr.bf16.mxu0 0
      %660 = vmatpush1.bf16.msra.mxu0 %v517
      %661 = vmatprep.subr.bf16.mxu0 0
      %662 = vmatpush1.bf16.msra.mxu0 %v518
      %663 = vmatprep.subr.bf16.mxu0 0
      %664 = vmatpush1.bf16.msra.mxu0 0
      %665 = vmatprep.subr.bf16.mxu0 0
      %666 = vmatpush1.bf16.msra.mxu0 0
      %667 = vmatprep.subr.bf16.mxu0 0
      %668 = vmatpush1.bf16.msra.mxu0 0
      %669 = vmatprep.subr.bf16.mxu0 0
      %670 = vmatpush1.bf16.msra.mxu0 0
      %671 = vmatprep.subr.bf16.mxu0 0
      %672 = vmatpush1.bf16.msra.mxu0 0
      %673 = vmatprep.subr.bf16.mxu0 0
      %674 = vmatpush1.bf16.msra.mxu0 0
      %675 = vmatprep.subr.bf16.mxu0 0
      %676 = vmatpush1.bf16.msra.mxu0 0
      %677 = vmatprep.subr.bf16.mxu0 0
      %678 = vmatpush1.bf16.msra.mxu0 0
      %679 = vmatprep.subr.bf16.mxu0 0
      %680 = vmatpush1.bf16.msra.mxu0 0
      %681 = vmatprep.subr.bf16.mxu0 0
      %682 = vmatpush1.bf16.msra.mxu0 0
      %683 = vmatprep.subr.bf16.mxu0 0
      %684 = vmatpush1.bf16.msra.mxu0 0
      %685 = vmatprep.subr.bf16.mxu0 0
      %686 = vmatpush1.bf16.msra.mxu0 0
      %687 = vmatprep.subr.bf16.mxu0 0
      %688 = vmatpush1.bf16.msra.mxu0 0
      %689 = vmatprep.subr.bf16.mxu0 0
      %690 = vmatpush1.bf16.msra.mxu0 0
      %691 = vmatprep.mubr.bf16.mxu0 0
      %692 = vmatmul.mubr.bf16.gmra.mrb[0].mxu0 %v539
      %v693 = vpop.f32.mrb[0].mxu0
      %v694 = vadd.f32 %v597, %v693
      %v695 = vpop.f32.mrb[0].mxu0
      %v696 = vpop.f32.mrb[0].mxu0
      %v697 = vadd.f32 %v600, %v696
      %v698 = vpop.f32.mrb[0].mxu0
      %699 = vmatprep.mubr.bf16.mxu0 0
      %700 = vmatmul.mubr.bf16.gmra.mrb[0].mxu0 %v542
      %v701 = vpop.f32.mrb[0].mxu0
      %v702 = vadd.f32 %v605, %v701
      %v703 = vpop.f32.mrb[0].mxu0
      %v704 = vpop.f32.mrb[0].mxu0
      %v705 = vadd.f32 %v608, %v704
      %v706 = vpop.f32.mrb[0].mxu0
      %707 = vmatprep.mubr.bf16.mxu0 0
      %708 = vmatmul.mubr.bf16.gmra.mrb[0].mxu0 %v545
      %v709 = vpop.f32.mrb[0].mxu0
      %v710 = vadd.f32 %v613, %v709
      %v711 = vpop.f32.mrb[0].mxu0
      %v712 = vpop.f32.mrb[0].mxu0
      %v713 = vadd.f32 %v616, %v712
      %v714 = vpop.f32.mrb[0].mxu0
      %715 = vmatprep.mubr.bf16.mxu0 0
      %716 = vmatmul.mubr.bf16.gmra.mrb[0].mxu0 %v548
      %v717 = vpop.f32.mrb[0].mxu0
      %v718 = vadd.f32 %v621, %v717
      %v719 = vpop.f32.mrb[0].mxu0
      %v720 = vpop.f32.mrb[0].mxu0
      %v721 = vadd.f32 %v624, %v720
      %v722 = vpop.f32.mrb[0].mxu0
      %723 = vmatprep.mubr.bf16.mxu0 0
      %724 = vmatmul.mubr.bf16.gmra.mrb[0].mxu0 %v551
      %v725 = vpop.f32.mrb[0].mxu0
      %v726 = vadd.f32 %v629, %v725
      %v727 = vpop.f32.mrb[0].mxu0
      %v728 = vpop.f32.mrb[0].mxu0
      %v729 = vadd.f32 %v632, %v728
      %v730 = vpop.f32.mrb[0].mxu0
      %731 = vmatprep.mubr.bf16.mxu0 0
      %732 = vmatmul.mubr.bf16.gmra.mrb[0].mxu0 %v554
      %v733 = vpop.f32.mrb[0].mxu0
      %v734 = vadd.f32 %v637, %v733
      %v735 = vpop.f32.mrb[0].mxu0
      %v736 = vpop.f32.mrb[0].mxu0
      %v737 = vadd.f32 %v640, %v736
      %v738 = vpop.f32.mrb[0].mxu0
      %739 = vmatprep.mubr.bf16.mxu0 0
      %740 = vmatmul.mubr.bf16.gmra.mrb[0].mxu0 %v557
      %v741 = vpop.f32.mrb[0].mxu0
      %v742 = vadd.f32 %v645, %v741
      %v743 = vpop.f32.mrb[0].mxu0
      %v744 = vpop.f32.mrb[0].mxu0
      %v745 = vadd.f32 %v648, %v744
      %v746 = vpop.f32.mrb[0].mxu0
      %747 = vmatprep.mubr.bf16.mxu0 0
      %748 = vmatmul.mubr.bf16.gmra.mrb[0].mxu0 %v560
      %v749 = vpop.f32.mrb[0].mxu0
      %v750 = vadd.f32 %v653, %v749
      %v751 = vpop.f32.mrb[0].mxu0
      %v752 = vpop.f32.mrb[0].mxu0
      %v753 = vadd.f32 %v656, %v752
      %v754 = vpop.f32.mrb[0].mxu0
      %755 = vdwg.mxu0
      %v756 = vld [vmem:[%s2] sm:$0x1]
      %v758 = vlaneseq
      %v759 = vshrl.u32 %v758, 7
      %v760 = vsub.s32 0, %v759
      %v761 = vrot.slane %v756, %v760
      %v763 = vmul.f32 %v694, %v761
      %v764 = vmul.f32 %v697, %v761
      %v765 = vmul.f32 %v702, %v761
      %v766 = vmul.f32 %v705, %v761
      %v767 = vmul.f32 %v710, %v761
      %v768 = vmul.f32 %v713, %v761
      %v769 = vmul.f32 %v718, %v761
      %v770 = vmul.f32 %v721, %v761
      %v771 = vmul.f32 %v726, %v761
      %v772 = vmul.f32 %v729, %v761
      %v773 = vmul.f32 %v734, %v761
      %v774 = vmul.f32 %v737, %v761
      %v775 = vmul.f32 %v742, %v761
      %v776 = vmul.f32 %v745, %v761
      %v777 = vmul.f32 %v750, %v761
      %v778 = vmul.f32 %v753, %v761
      %v779 = vld [vmem:[%s3] sm:$0x1]
      %v781 = vlaneseq
      %v782 = vshrl.u32 %v781, 7
      %v783 = vsub.s32 0, %v782
      %v784 = vrot.slane %v779, %v783
      %v786 = vadd.f32 %v763, %v784
      %v787 = vadd.f32 %v764, %v784
      %v788 = vadd.f32 %v765, %v784
      %v789 = vadd.f32 %v766, %v784
      %v790 = vadd.f32 %v767, %v784
      %v791 = vadd.f32 %v768, %v784
      %v792 = vadd.f32 %v769, %v784
      %v793 = vadd.f32 %v770, %v784
      %v794 = vadd.f32 %v771, %v784
      %v795 = vadd.f32 %v772, %v784
      %v796 = vadd.f32 %v773, %v784
      %v797 = vadd.f32 %v774, %v784
      %v798 = vadd.f32 %v775, %v784
      %v799 = vadd.f32 %v776, %v784
      %v800 = vadd.f32 %v777, %v784
      %v801 = vadd.f32 %v778, %v784
      %v802 = vmul.f32 %v786, 0.5
      %v803 = vmul.f32 %v787, 0.5
      %v804 = vmul.f32 %v788, 0.5
      %v805 = vmul.f32 %v789, 0.5
      %v806 = vmul.f32 %v790, 0.5
      %v807 = vmul.f32 %v791, 0.5
      %v808 = vmul.f32 %v792, 0.5
      %v809 = vmul.f32 %v793, 0.5
      %v810 = vmul.f32 %v794, 0.5
      %v811 = vmul.f32 %v795, 0.5
      %v812 = vmul.f32 %v796, 0.5
      %v813 = vmul.f32 %v797, 0.5
      %v814 = vmul.f32 %v798, 0.5
      %v815 = vmul.f32 %v799, 0.5
      %v816 = vmul.f32 %v800, 0.5
      %v817 = vmul.f32 %v801, 0.5
      %v818 = vmul.f32 %v786, 0.70710677
      %v819 = vmul.f32 %v787, 0.70710677
      %v820 = vmul.f32 %v788, 0.70710677
      %v821 = vmul.f32 %v789, 0.70710677
      %v822 = vmul.f32 %v790, 0.70710677
      %v823 = vmul.f32 %v791, 0.70710677
      %v824 = vmul.f32 %v792, 0.70710677
      %v825 = vmul.f32 %v793, 0.70710677
      %v826 = vmul.f32 %v794, 0.70710677
      %v827 = vmul.f32 %v795, 0.70710677
      %v828 = vmul.f32 %v796, 0.70710677
      %v829 = vmul.f32 %v797, 0.70710677
      %v830 = vmul.f32 %v798, 0.70710677
      %v831 = vmul.f32 %v799, 0.70710677
      %v832 = vmul.f32 %v800, 0.70710677
      %v833 = vmul.f32 %v801, 0.70710677
      %v834 = verf.f32.pop %v818
      %v835 = verf.f32.pop %v819
      %v836 = verf.f32.pop %v820
      %v837 = verf.f32.pop %v821
      %v838 = verf.f32.pop %v822
      %v839 = verf.f32.pop %v823
      %v840 = verf.f32.pop %v824
      %v841 = verf.f32.pop %v825
      %v842 = verf.f32.pop %v826
      %v843 = verf.f32.pop %v827
      %v844 = verf.f32.pop %v828
      %v845 = verf.f32.pop %v829
      %v846 = verf.f32.pop %v830
      %v847 = verf.f32.pop %v831
      %v848 = verf.f32.pop %v832
      %v849 = verf.f32.pop %v833
      %v850 = vadd.f32 %v834, 1.0
      %v851 = vadd.f32 %v835, 1.0
      %v852 = vadd.f32 %v836, 1.0
      %v853 = vadd.f32 %v837, 1.0
      %v854 = vadd.f32 %v838, 1.0
      %v855 = vadd.f32 %v839, 1.0
      %v856 = vadd.f32 %v840, 1.0
      %v857 = vadd.f32 %v841, 1.0
      %v858 = vadd.f32 %v842, 1.0
      %v859 = vadd.f32 %v843, 1.0
      %v860 = vadd.f32 %v844, 1.0
      %v861 = vadd.f32 %v845, 1.0
      %v862 = vadd.f32 %v846, 1.0
      %v863 = vadd.f32 %v847, 1.0
      %v864 = vadd.f32 %v848, 1.0
      %v865 = vadd.f32 %v849, 1.0
      %v866 = vmul.f32 %v802, %v850
      %v867 = vmul.f32 %v803, %v851
      %v868 = vmul.f32 %v804, %v852
      %v869 = vmul.f32 %v805, %v853
      %v870 = vmul.f32 %v806, %v854
      %v871 = vmul.f32 %v807, %v855
      %v872 = vmul.f32 %v808, %v856
      %v873 = vmul.f32 %v809, %v857
      %v874 = vmul.f32 %v810, %v858
      %v875 = vmul.f32 %v811, %v859
      %v876 = vmul.f32 %v812, %v860
      %v877 = vmul.f32 %v813, %v861
      %v878 = vmul.f32 %v814, %v862
      %v879 = vmul.f32 %v815, %v863
      %v880 = vmul.f32 %v816, %v864
      %v881 = vmul.f32 %v817, %v865
      %v882 = vpack.c.bf16 %v867, %v866
      %v883 = vpack.c.bf16 %v869, %v868
      %v884 = vpack.c.bf16 %v871, %v870
      %v885 = vpack.c.bf16 %v873, %v872
      %v886 = vpack.c.bf16 %v875, %v874
      %v887 = vpack.c.bf16 %v877, %v876
      %v888 = vpack.c.bf16 %v879, %v878
      %v889 = vpack.c.bf16 %v881, %v880
      %v898 = vunpack.c.l.b16 %v882
      %v899 = vunpack.c.h.b16 %v882
      %v900 = vunpack.c.l.b16 %v883
      %v901 = vunpack.c.h.b16 %v883
      %v902 = vunpack.c.l.b16 %v884
      %v903 = vunpack.c.h.b16 %v884
      %v904 = vunpack.c.l.b16 %v885
      %v905 = vunpack.c.h.b16 %v885
      %v906 = vunpack.c.l.b16 %v886
      %v907 = vunpack.c.h.b16 %v886
      %v908 = vunpack.c.l.b16 %v887
      %v909 = vunpack.c.h.b16 %v887
      %v910 = vunpack.c.l.b16 %v888
      %v911 = vunpack.c.h.b16 %v888
      %v912 = vunpack.c.l.b16 %v889
      %v913 = vunpack.c.h.b16 %v889
      %v914 = vpack.c.b16 %v898, %v898
      %v915 = vpack.c.b16 %v899, %v899
      %v916 = vpack.c.b16 %v900, %v900
      %v917 = vpack.c.b16 %v901, %v901
      %v918 = vpack.c.b16 %v902, %v902
      %v919 = vpack.c.b16 %v903, %v903
      %v920 = vpack.c.b16 %v904, %v904
      %v921 = vpack.c.b16 %v905, %v905
      %v922 = vpack.c.b16 %v906, %v906
      %v923 = vpack.c.b16 %v907, %v907
      %v924 = vpack.c.b16 %v908, %v908
      %v925 = vpack.c.b16 %v909, %v909
      %v926 = vpack.c.b16 %v910, %v910
      %v927 = vpack.c.b16 %v911, %v911
      %v928 = vpack.c.b16 %v912, %v912
      %v929 = vpack.c.b16 %v913, %v913
      %vm946 = vcmask 257024
      %947 = vst.msk [vmem:[%s238] sm:$0xf] %vm946, %v914
      %948 = vst.msk [vmem:[%s238 + $0x4] sm:$0xf] %vm946, %v915
      %949 = vst.msk [vmem:[%s238 + $0x8] sm:$0xf] %vm946, %v916
      %950 = vst.msk [vmem:[%s238 + $0xc] sm:$0xf] %vm946, %v917
      %951 = vst.msk [vmem:[%s238 + $0x10] sm:$0xf] %vm946, %v918
      %952 = vst.msk [vmem:[%s238 + $0x14] sm:$0xf] %vm946, %v919
      %953 = vst.msk [vmem:[%s238 + $0x18] sm:$0xf] %vm946, %v920
      %954 = vst.msk [vmem:[%s238 + $0x1c] sm:$0xf] %vm946, %v921
      %955 = vst.msk [vmem:[%s238 + $0x20] sm:$0xf] %vm946, %v922
      %956 = vst.msk [vmem:[%s238 + $0x24] sm:$0xf] %vm946, %v923
      %957 = vst.msk [vmem:[%s238 + $0x28] sm:$0xf] %vm946, %v924
      %958 = vst.msk [vmem:[%s238 + $0x2c] sm:$0xf] %vm946, %v925
      %959 = vst.msk [vmem:[%s238 + $0x30] sm:$0xf] %vm946, %v926
      %960 = vst.msk [vmem:[%s238 + $0x34] sm:$0xf] %vm946, %v927
      %961 = vst.msk [vmem:[%s238 + $0x38] sm:$0xf] %vm946, %v928
      %962 = vst.msk [vmem:[%s238 + $0x3c] sm:$0xf] %vm946, %v929
      %s963 = smul.u32 16, %s20
      %p964 = scmp.lt.s32.totalorder %s19, 1
      %s965 = scalar_select %p964, %s19, 1
      %p966 = scmp.lt.s32.totalorder %s963, 31
      %s967 = scalar_select %p966, %s963, 31
      %s968 = smul.addr %s965, 32
      %s969 = sadd.s32 %s967, %s968
      %s970 = smul.addr %s969, 4
      %s971 = scalar_lea.vmem %s4, %s970
      // Predicated region
      $region37: #{fgc_forward.11} parent=35 // pred_check
        %p972 = pneg %p138
      $region38: #{fgc_forward.11} parent=35 // pred_check_branch
        %974 = sbr.rel (%p972) target = $region40
      $region39: #{fgc_forward.11} parent=35 // pred_region
        %s975 = smul.u32 16, %s20
      $region40: #{fgc_forward.11} parent=35 // pred_fallthru
        _
    $region36: #{fgc_forward.11} parent=5 // pred_fallthru
      _
    %p976 = scmp.le.s32.totalorder 2, %s10
    // Predicated region
    $region41: #{fgc_forward.11} parent=5 // pred_check
      %p977 = pneg %p976
    $region42: #{fgc_forward.11} parent=5 // pred_check_branch
      %979 = sbr.rel (%p977) target = $region44
    $region43: #{fgc_forward.11} parent=5 // pred_region
      %s980 = ssub.s32 %s10, 2
      // Predicated region
      $region45: #{fgc_forward.11} parent=43 // pred_check
        %p981 = pneg %p144
      $region46: #{fgc_forward.11} parent=43 // pred_check_branch
        %983 = sbr.rel (%p981) target = $region48
      $region47: #{fgc_forward.11} parent=43 // pred_region
        %s984 = smul.u32 16, %s22
        %p985 = scmp.lt.s32.totalorder %s21, 1
        %s986 = scalar_select %p985, %s21, 1
        %p987 = scmp.lt.s32.totalorder %s984, 31
        %s988 = scalar_select %p987, %s984, 31
        %s989 = smul.addr %s986, 32
        %s990 = sadd.s32 %s988, %s989
        %s991 = smul.addr %s990, 4
        %s992 = scalar_lea.vmem %s4, %s991
      $region48: #{fgc_forward.11} parent=43 // pred_fallthru
        _
    $region44: #{fgc_forward.11} parent=5 // pred_fallthru
      _
  $region6: #{fgc_forward.11} parent=0 // loop_footer
    %s14 = sadd.s32 1, %s10
  $region7: #{fgc_forward.11} parent=0 // loop_footer_branch
    %9 = sbr.rel target = $region3
  $region8: #{fgc_forward.11} parent=0 // loop_exit
    _

// kernel: fgc_forward.12
$region0: #{fgc_forward.12}
  #allocation0 [shape = 'u32[]', space=smem, size = 0x4, offset = 0x4, fixed_abs, tag = 'smem constant byte address 0x4 - core index']
  #allocation1 [shape = 'u32[144,128]{1,0:T(1,128)}', space=vmem, size = 0x12000, scoped, tag = 'internal scratch']
  %s0 = inlined_call_operand.vmem [shape: bf16[2,256,288], index: 0, kind: input, shape index: {}]
  %s1 = inlined_call_operand.vmem [shape: bf16[288,32], index: 1, kind: input, shape index: {}]
  %s2 = inlined_call_operand.vmem [shape: f32[1,32], index: 2, kind: input, shape index: {}]
  %s3 = inlined_call_operand.vmem [shape: f32[1,32], index: 3, kind: input, shape index: {}]
  %s4 = inlined_call_operand.vmem [shape: f32[2,256,32], index: 4, kind: output, shape index: {}]
  %s5 = sld [smem:[#allocation0]]
  $region49: #{fgc_forward.12} parent=0
    _
  %s7 = ssub.s32 1, %s5
  %s8 = scalar_select 0, %s7, %s5
  loop: start=0, step=1, limit=6
  $region2: #{fgc_forward.12} parent=0 // loop_pre_header
    _
  $region3: #{fgc_forward.12} parent=0 // loop_header
    %s10 = sphi 0, %s14
    %p11 = scmp.ge.s32.totalorder %s10, 6
    %s17 = sphi 0, %s29
    %s18 = sphi 0, %s25
    %s19 = sphi 0, %s17
    %s20 = sphi 0, %s18
    %s21 = sphi 0, %s19
    %s22 = sphi 0, %s20
    %s34 = sphi 0, %s36
    %s37 = sphi 0, %s34
    %s38 = sphi 0, %s37
    %s54 = sphi 0, %s38
    %s58 = sphi 0, %s58
    %s60 = sphi 0, %s58
    %s61 = sphi 0, %s60
    %s75 = sphi 0, %s61
    %s79 = sphi 0, %s79
    %s81 = sphi 0, %s79
    %s82 = sphi 0, %s81
    %s96 = sphi 0, %s82
    %s100 = sphi 0, %s100
    %s102 = sphi 0, %s100
    %s103 = sphi 0, %s102
    %s117 = sphi 0, %s103
    %s125 = sphi 0, %s127
    %s128 = sphi 0, %s125
    %s129 = sphi 0, %s128
    %s145 = sphi 0, %s129
  $region4: #{fgc_forward.12} parent=0 // loop_header_branch
    %13 = sbr.rel (%p11) target = $region8
  $region5: #{fgc_forward.12} parent=0 // loop_body
    %s15 = ssub.s32 %s10, 1
    %s16 = ssub.s32 %s10, 2
    %s23 = sadd.s32 1, %s18
    %p24 = scmp.ge.s32.totalorder %s23, 2
    %s25 = scalar_select %p24, 0, %s23
    %s26 = sadd.s32 1, %s17
    %s27 = scalar_select %p24, %s26, %s17
    %p28 = scmp.ge.s32.totalorder %s27, 2
    %s29 = scalar_select %p28, 0, %s27
    %s30 = ssub.s32 %s17, %s29
    %s31 = ssub.s32 %s18, %s25
    %s32 = sor.u32 %s30, %s31
    %p33 = scmp.eq.s32.totalorder %s32, 0
    %s35 = sadd.s32 %s34, 1
    %s36 = scalar_select %p33, %s34, %s35
    %p39 = pneg %p33
    %p40 = scmp.eq.s32.totalorder %s10, 3
    %p41 = por %p39, %p40
    %p42 = scmp.ne.s32.totalorder %s34, %s37
    %p43 = scmp.eq.s32.totalorder %s10, 0
    %p44 = por %p42, %p43
    %p45 = scmp.ne.s32.totalorder %s34, %s37
    %p46 = scmp.eq.s32.totalorder %s15, 3
    %p47 = por %p45, %p46
    %p48 = scmp.ne.s32.totalorder %s37, %s38
    %p49 = scmp.eq.s32.totalorder %s15, 0
    %p50 = por %p48, %p49
    %p51 = scmp.ne.s32.totalorder %s37, %s38
    %p52 = scmp.eq.s32.totalorder %s16, 3
    %p53 = por %p51, %p52
    %p55 = scmp.ne.s32.totalorder %s38, %s54
    %p56 = scmp.eq.s32.totalorder %s16, 0
    %p57 = por %p55, %p56
    %s59 = sadd.s32 %s58, 1
    %p62 = scmp.eq.s32.totalorder %s10, 3
    %p63 = scmp.ne.s32.totalorder %s58, %s60
    %p64 = scmp.eq.s32.totalorder %s10, 0
    %p65 = por %p63, %p64
    %p66 = scmp.ne.s32.totalorder %s58, %s60
    %p67 = scmp.eq.s32.totalorder %s15, 3
    %p68 = por %p66, %p67
    %p69 = scmp.ne.s32.totalorder %s60, %s61
    %p70 = scmp.eq.s32.totalorder %s15, 0
    %p71 = por %p69, %p70
    %p72 = scmp.ne.s32.totalorder %s60, %s61
    %p73 = scmp.eq.s32.totalorder %s16, 3
    %p74 = por %p72, %p73
    %p76 = scmp.ne.s32.totalorder %s61, %s75
    %p77 = scmp.eq.s32.totalorder %s16, 0
    %p78 = por %p76, %p77
    %s80 = sadd.s32 %s79, 1
    %p83 = scmp.eq.s32.totalorder %s10, 3
    %p84 = scmp.ne.s32.totalorder %s79, %s81
    %p85 = scmp.eq.s32.totalorder %s10, 0
    %p86 = por %p84, %p85
    %p87 = scmp.ne.s32.totalorder %s79, %s81
    %p88 = scmp.eq.s32.totalorder %s15, 3
    %p89 = por %p87, %p88
    %p90 = scmp.ne.s32.totalorder %s81, %s82
    %p91 = scmp.eq.s32.totalorder %s15, 0
    %p92 = por %p90, %p91
    %p93 = scmp.ne.s32.totalorder %s81, %s82
    %p94 = scmp.eq.s32.totalorder %s16, 3
    %p95 = por %p93, %p94
    %p97 = scmp.ne.s32.totalorder %s82, %s96
    %p98 = scmp.eq.s32.totalorder %s16, 0
    %p99 = por %p97, %p98
    %s101 = sadd.s32 %s100, 1
    %p104 = scmp.eq.s32.totalorder %s10, 3
    %p105 = scmp.ne.s32.totalorder %s100, %s102
    %p106 = scmp.eq.s32.totalorder %s10, 0
    %p107 = por %p105, %p106
    %p108 = scmp.ne.s32.totalorder %s100, %s102
    %p109 = scmp.eq.s32.totalorder %s15, 3
    %p110 = por %p108, %p109
    %p111 = scmp.ne.s32.totalorder %s102, %s103
    %p112 = scmp.eq.s32.totalorder %s15, 0
    %p113 = por %p111, %p112
    %p114 = scmp.ne.s32.totalorder %s102, %s103
    %p115 = scmp.eq.s32.totalorder %s16, 3
    %p116 = por %p114, %p115
    %p118 = scmp.ne.s32.totalorder %s103, %s117
    %p119 = scmp.eq.s32.totalorder %s16, 0
    %p120 = por %p118, %p119
    %s121 = ssub.s32 %s17, %s29
    %s122 = ssub.s32 %s18, %s25
    %s123 = sor.u32 %s121, %s122
    %p124 = scmp.eq.s32.totalorder %s123, 0
    %s126 = sadd.s32 %s125, 1
    %s127 = scalar_select %p124, %s125, %s126
    %p130 = pneg %p124
    %p131 = scmp.eq.s32.totalorder %s10, 3
    %p132 = por %p130, %p131
    %p133 = scmp.ne.s32.totalorder %s125, %s128
    %p134 = scmp.eq.s32.totalorder %s10, 0
    %p135 = por %p133, %p134
    %p136 = scmp.ne.s32.totalorder %s125, %s128
    %p137 = scmp.eq.s32.totalorder %s15, 3
    %p138 = por %p136, %p137
    %p139 = scmp.ne.s32.totalorder %s128, %s129
    %p140 = scmp.eq.s32.totalorder %s15, 0
    %p141 = por %p139, %p140
    %p142 = scmp.ne.s32.totalorder %s128, %s129
    %p143 = scmp.eq.s32.totalorder %s16, 3
    %p144 = por %p142, %p143
    %p146 = scmp.ne.s32.totalorder %s129, %s145
    %p147 = scmp.eq.s32.totalorder %s16, 0
    %p148 = por %p146, %p147
    %p149 = scmp.le.s32.totalorder 1, %s10
    %p150 = scmp.lt.s32.totalorder %s10, 5
    %p151 = pnand %p149, %p150
    %p152 = pneg %p151
    // Predicated region
    $region9: #{fgc_forward.12} parent=5 // pred_check
      _
    $region10: #{fgc_forward.12} parent=5 // pred_check_branch
      %154 = sbr.rel (%p151) target = $region12
    $region11: #{fgc_forward.12} parent=5 // pred_region
      %s155 = ssub.s32 %s10, 1
      // Predicated region
      $region13: #{fgc_forward.12} parent=11 // pred_check
        %p156 = pneg %p71
      $region14: #{fgc_forward.12} parent=11 // pred_check_branch
        %158 = sbr.rel (%p156) target = $region16
      $region15: #{fgc_forward.12} parent=11 // pred_region
        _
      $region16: #{fgc_forward.12} parent=11 // pred_fallthru
        _
      // Predicated region
      $region17: #{fgc_forward.12} parent=11 // pred_check
        %p159 = pneg %p92
      $region18: #{fgc_forward.12} parent=11 // pred_check_branch
        %161 = sbr.rel (%p159) target = $region20
      $region19: #{fgc_forward.12} parent=11 // pred_region
        _
      $region20: #{fgc_forward.12} parent=11 // pred_fallthru
        _
      // Predicated region
      $region21: #{fgc_forward.12} parent=11 // pred_check
        %p162 = pneg %p113
      $region22: #{fgc_forward.12} parent=11 // pred_check_branch
        %164 = sbr.rel (%p162) target = $region24
      $region23: #{fgc_forward.12} parent=11 // pred_region
        _
      $region24: #{fgc_forward.12} parent=11 // pred_fallthru
        _
    $region12: #{fgc_forward.12} parent=5 // pred_fallthru
      _
    %p165 = scmp.lt.s32.totalorder %s10, 4
    // Predicated region
    $region25: #{fgc_forward.12} parent=5 // pred_check
      %p166 = pneg %p165
    $region26: #{fgc_forward.12} parent=5 // pred_check_branch
      %168 = sbr.rel (%p166) target = $region28
    $region27: #{fgc_forward.12} parent=5 // pred_region
      // Predicated region
      $region29: #{fgc_forward.12} parent=27 // pred_check
        %p169 = pneg %p44
      $region30: #{fgc_forward.12} parent=27 // pred_check_branch
        %171 = sbr.rel (%p169) target = $region32
      $region31: #{fgc_forward.12} parent=27 // pred_region
        %s172 = smul.u32 16, %s18
        %p173 = scmp.lt.s32.totalorder %s17, 1
        %s174 = scalar_select %p173, %s17, 1
        %p175 = scmp.lt.s32.totalorder %s172, 31
        %s176 = scalar_select %p175, %s172, 31
        %s177 = smul.addr %s176, 3
        %s178 = smul.addr %s174, 96
        %s179 = sadd.s32 %s177, %s178
        %s180 = smul.addr %s179, 4
        %s181 = scalar_lea.vmem %s0, %s180
        %s182 = smul.u32 16, %s18
      $region32: #{fgc_forward.12} parent=27 // pred_fallthru
        _
    $region28: #{fgc_forward.12} parent=5 // pred_fallthru
      _
    %p183 = scmp.le.s32.totalorder 1, %s10
    %p184 = scmp.lt.s32.totalorder %s10, 5
    %p185 = pnand %p183, %p184
    %p186 = pneg %p185
    // Predicated region
    $region33: #{fgc_forward.12} parent=5 // pred_check
      _
    $region34: #{fgc_forward.12} parent=5 // pred_check_branch
      %188 = sbr.rel (%p185) target = $region36
    $region35: #{fgc_forward.12} parent=5 // pred_region
      %s189 = ssub.s32 %s10, 1
      %s190 = smul.u32 16, %s20
      %p191 = scmp.lt.s32.totalorder %s19, 1
      %s192 = scalar_select %p191, %s19, 1
      %p193 = scmp.lt.s32.totalorder %s190, 31
      %s194 = scalar_select %p193, %s190, 31
      %s195 = smul.addr %s194, 3
      %s196 = smul.addr %s192, 96
      %s197 = sadd.s32 %s195, %s196
      %s198 = smul.addr %s197, 4
      %s199 = scalar_lea.vmem %s0, %s198
      %p200 = pneg %p50
      %p201 = pneg %p47
      %p202 = pneg %p71
      %p203 = pneg %p68
      %p204 = pneg %p92
      %p205 = pneg %p89
      %p206 = pneg %p113
      %p207 = pneg %p110
      %p208 = pneg %p141
      %p209 = pneg %p138
      %s210 = smul.u32 16, %s20
      %p211 = scmp.lt.s32.totalorder %s19, 1
      %s212 = scalar_select %p211, %s19, 1
      %p213 = scmp.lt.s32.totalorder %s210, 31
      %s214 = scalar_select %p213, %s210, 31
      %s215 = smul.addr %s212, 32
      %s216 = sadd.s32 %s214, %s215
      %s217 = smul.addr %s216, 8
      %s218 = scalar_lea.vmem %s4, %s217
      %s219 = smul.u32 16, %s20
      %p220 = scmp.lt.s32.totalorder %s19, 1
      %s221 = scalar_select %p220, %s19, 1
      %p222 = scmp.lt.s32.totalorder %s219, 31
      %s223 = scalar_select %p222, %s219, 31
      %s224 = smul.addr %s223, 3
      %s225 = smul.addr %s221, 96
      %s226 = sadd.s32 %s224, %s225
      %s227 = smul.addr %s226, 4
      %s228 = scalar_lea.vmem %s0, %s227
      %s229 = smul.u32 16, %s20
      %s230 = smul.u32 16, %s20
      %p231 = scmp.lt.s32.totalorder %s19, 1
      %s232 = scalar_select %p231, %s19, 1
      %p233 = scmp.lt.s32.totalorder %s230, 31
      %s234 = scalar_select %p233, %s230, 31
      %s235 = smul.addr %s232, 32
      %s236 = sadd.s32 %s234, %s235
      %s237 = smul.addr %s236, 8
      %s238 = scalar_lea.vmem %s4, %s237
      %s239 = smul.u32 16, %s20
      %v241 = vld [vmem:[%s228] sm:$0xff]
      %v242 = vld [vmem:[%s228 + $0x8] sm:$0xf]
      %v243 = vld [vmem:[%s228 + $0xc] sm:$0xff]
      %v244 = vld [vmem:[%s228 + $0x14] sm:$0xf]
      %v245 = vld [vmem:[%s228 + $0x18] sm:$0xff]
      %v246 = vld [vmem:[%s228 + $0x20] sm:$0xf]
      %v247 = vld [vmem:[%s228 + $0x24] sm:$0xff]
      %v248 = vld [vmem:[%s228 + $0x2c] sm:$0xf]
      %v249 = vld [vmem:[%s228 + $0x30] sm:$0xff]
      %v250 = vld [vmem:[%s228 + $0x38] sm:$0xf]
      %v251 = vld [vmem:[%s228 + $0x3c] sm:$0xff]
      %v252 = vld [vmem:[%s228 + $0x44] sm:$0xf]
      %v253 = vld [vmem:[%s228 + $0x48] sm:$0xff]
      %v254 = vld [vmem:[%s228 + $0x50] sm:$0xf]
      %v255 = vld [vmem:[%s228 + $0x54] sm:$0xff]
      %v256 = vld [vmem:[%s228 + $0x5c] sm:$0xf]
      %v257 = vld [vmem:[%s228 + $0x60] sm:$0xff]
      %v258 = vld [vmem:[%s228 + $0x68] sm:$0xf]
      %v259 = vld [vmem:[%s228 + $0x6c] sm:$0xff]
      %v260 = vld [vmem:[%s228 + $0x74] sm:$0xf]
      %v261 = vld [vmem:[%s228 + $0x78] sm:$0xff]
      %v262 = vld [vmem:[%s228 + $0x80] sm:$0xf]
      %v263 = vld [vmem:[%s228 + $0x84] sm:$0xff]
      %v264 = vld [vmem:[%s228 + $0x8c] sm:$0xf]
      %v265 = vld [vmem:[%s228 + $0x90] sm:$0xff]
      %v266 = vld [vmem:[%s228 + $0x98] sm:$0xf]
      %v267 = vld [vmem:[%s228 + $0x9c] sm:$0xff]
      %v268 = vld [vmem:[%s228 + $0xa4] sm:$0xf]
      %v269 = vld [vmem:[%s228 + $0xa8] sm:$0xff]
      %v270 = vld [vmem:[%s228 + $0xb0] sm:$0xf]
      %v271 = vld [vmem:[%s228 + $0xb4] sm:$0xff]
      %v272 = vld [vmem:[%s228 + $0xbc] sm:$0xf]
      %v273 = vld [vmem:[%s1] sm:$0xf]
      %v274 = vld [vmem:[%s1 + $0x4] sm:$0xf]
      %v275 = vld [vmem:[%s1 + $0x8] sm:$0xf]
      %v276 = vld [vmem:[%s1 + $0xc] sm:$0xf]
      %v277 = vld [vmem:[%s1 + $0x10] sm:$0xf]
      %v278 = vld [vmem:[%s1 + $0x14] sm:$0xf]
      %v279 = vld [vmem:[%s1 + $0x18] sm:$0xf]
      %v280 = vld [vmem:[%s1 + $0x1c] sm:$0xf]
      %v281 = vld [vmem:[%s1 + $0x20] sm:$0xf]
      %v282 = vld [vmem:[%s1 + $0x24] sm:$0xf]
      %v283 = vld [vmem:[%s1 + $0x28] sm:$0xf]
      %v284 = vld [vmem:[%s1 + $0x2c] sm:$0xf]
      %v285 = vld [vmem:[%s1 + $0x30] sm:$0xf]
      %v286 = vld [vmem:[%s1 + $0x34] sm:$0xf]
      %v287 = vld [vmem:[%s1 + $0x38] sm:$0xf]
      %v288 = vld [vmem:[%s1 + $0x3c] sm:$0xf]
      %v289 = vld [vmem:[%s1 + $0x40] sm:$0xf]
      %v290 = vld [vmem:[%s1 + $0x44] sm:$0xf]
      %v291 = vld [vmem:[%s1 + $0x48] sm:$0xf]
      %v292 = vld [vmem:[%s1 + $0x4c] sm:$0xf]
      %v293 = vld [vmem:[%s1 + $0x50] sm:$0xf]
      %v294 = vld [vmem:[%s1 + $0x54] sm:$0xf]
      %v295 = vld [vmem:[%s1 + $0x58] sm:$0xf]
      %v296 = vld [vmem:[%s1 + $0x5c] sm:$0xf]
      %v297 = vld [vmem:[%s1 + $0x60] sm:$0xf]
      %v298 = vld [vmem:[%s1 + $0x64] sm:$0xf]
      %v299 = vld [vmem:[%s1 + $0x68] sm:$0xf]
      %v300 = vld [vmem:[%s1 + $0x6c] sm:$0xf]
      %v301 = vld [vmem:[%s1 + $0x70] sm:$0xf]
      %v302 = vld [vmem:[%s1 + $0x74] sm:$0xf]
      %v303 = vld [vmem:[%s1 + $0x78] sm:$0xf]
      %v304 = vld [vmem:[%s1 + $0x7c] sm:$0xf]
      %v305 = vld [vmem:[%s1 + $0x80] sm:$0xf]
      %v306 = vld [vmem:[%s1 + $0x84] sm:$0xf]
      %v307 = vld [vmem:[%s1 + $0x88] sm:$0xf]
      %v308 = vld [vmem:[%s1 + $0x8c] sm:$0xf]
      %v341 = vunpack.c.l.b16 %v241
      %v342 = vunpack.c.h.b16 %v241
      %v343 = vunpack.c.l.b16 %v242
      %v344 = vunpack.c.l.b16 %v243
      %v345 = vunpack.c.h.b16 %v243
      %v346 = vunpack.c.l.b16 %v244
      %v347 = vunpack.c.l.b16 %v245
      %v348 = vunpack.c.h.b16 %v245
      %v349 = vunpack.c.l.b16 %v246
      %v350 = vunpack.c.l.b16 %v247
      %v351 = vunpack.c.h.b16 %v247
      %v352 = vunpack.c.l.b16 %v248
      %v353 = vunpack.c.l.b16 %v249
      %v354 = vunpack.c.h.b16 %v249
      %v355 = vunpack.c.l.b16 %v250
      %v356 = vunpack.c.l.b16 %v251
      %v357 = vunpack.c.h.b16 %v251
      %v358 = vunpack.c.l.b16 %v252
      %v359 = vunpack.c.l.b16 %v253
      %v360 = vunpack.c.h.b16 %v253
      %v361 = vunpack.c.l.b16 %v254
      %v362 = vunpack.c.l.b16 %v255
      %v363 = vunpack.c.h.b16 %v255
      %v364 = vunpack.c.l.b16 %v256
      %v365 = vunpack.c.l.b16 %v257
      %v366 = vunpack.c.h.b16 %v257
      %v367 = vunpack.c.l.b16 %v258
      %v368 = vunpack.c.l.b16 %v259
      %v369 = vunpack.c.h.b16 %v259
      %v370 = vunpack.c.l.b16 %v260
      %v371 = vunpack.c.l.b16 %v261
      %v372 = vunpack.c.h.b16 %v261
      %v373 = vunpack.c.l.b16 %v262
      %v374 = vunpack.c.l.b16 %v263
      %v375 = vunpack.c.h.b16 %v263
      %v376 = vunpack.c.l.b16 %v264
      %v377 = vunpack.c.l.b16 %v265
      %v378 = vunpack.c.h.b16 %v265
      %v379 = vunpack.c.l.b16 %v266
      %v380 = vunpack.c.l.b16 %v267
      %v381 = vunpack.c.h.b16 %v267
      %v382 = vunpack.c.l.b16 %v268
      %v383 = vunpack.c.l.b16 %v269
      %v384 = vunpack.c.h.b16 %v269
      %v385 = vunpack.c.l.b16 %v270
      %v386 = vunpack.c.l.b16 %v271
      %v387 = vunpack.c.h.b16 %v271
      %v388 = vunpack.c.l.b16 %v272
      %v389 = vpack.c.b16 %v344, %v341
      %v390 = vpack.c.b16 %v345, %v342
      %v391 = vpack.c.b16 %v346, %v343
      %v392 = vpack.c.b16 %v350, %v347
      %v393 = vpack.c.b16 %v351, %v348
      %v394 = vpack.c.b16 %v352, %v349
      %v395 = vpack.c.b16 %v356, %v353
      %v396 = vpack.c.b16 %v357, %v354
      %v397 = vpack.c.b16 %v358, %v355
      %v398 = vpack.c.b16 %v362, %v359
      %v399 = vpack.c.b16 %v363, %v360
      %v400 = vpack.c.b16 %v364, %v361
      %v401 = vpack.c.b16 %v368, %v365
      %v402 = vpack.c.b16 %v369, %v366
      %v403 = vpack.c.b16 %v370, %v367
      %v404 = vpack.c.b16 %v374, %v371
      %v405 = vpack.c.b16 %v375, %v372
      %v406 = vpack.c.b16 %v376, %v373
      %v407 = vpack.c.b16 %v380, %v377
      %v408 = vpack.c.b16 %v381, %v378
      %v409 = vpack.c.b16 %v382, %v379
      %v410 = vpack.c.b16 %v386, %v383
      %v411 = vpack.c.b16 %v387, %v384
      %v412 = vpack.c.b16 %v388, %v385
      %v465 = vunpack.c.l.b16 %v273
      %v466 = vunpack.c.l.b16 %v274
      %v467 = vunpack.c.l.b16 %v275
      %v468 = vunpack.c.l.b16 %v276
      %v469 = vunpack.c.l.b16 %v277
      %v470 = vunpack.c.l.b16 %v278
      %v471 = vunpack.c.l.b16 %v279
      %v472 = vunpack.c.l.b16 %v280
      %v473 = vunpack.c.l.b16 %v281
      %v474 = vunpack.c.l.b16 %v282
      %v475 = vunpack.c.l.b16 %v283
      %v476 = vunpack.c.l.b16 %v284
      %v477 = vunpack.c.l.b16 %v285
      %v478 = vunpack.c.l.b16 %v286
      %v479 = vunpack.c.l.b16 %v287
      %v480 = vunpack.c.l.b16 %v288
      %v481 = vunpack.c.l.b16 %v289
      %v482 = vunpack.c.l.b16 %v290
      %v483 = vunpack.c.l.b16 %v291
      %v484 = vunpack.c.l.b16 %v292
      %v485 = vunpack.c.l.b16 %v293
      %v486 = vunpack.c.l.b16 %v294
      %v487 = vunpack.c.l.b16 %v295
      %v488 = vunpack.c.l.b16 %v296
      %v489 = vunpack.c.l.b16 %v297
      %v490 = vunpack.c.l.b16 %v298
      %v491 = vunpack.c.l.b16 %v299
      %v492 = vunpack.c.l.b16 %v300
      %v493 = vunpack.c.l.b16 %v301
      %v494 = vunpack.c.l.b16 %v302
      %v495 = vunpack.c.l.b16 %v303
      %v496 = vunpack.c.l.b16 %v304
      %v497 = vunpack.c.l.b16 %v305
      %v498 = vunpack.c.l.b16 %v306
      %v499 = vunpack.c.l.b16 %v307
      %v500 = vunpack.c.l.b16 %v308
      %v501 = vpack.c.b16 %v466, %v465
      %v502 = vpack.c.b16 %v468, %v467
      %v503 = vpack.c.b16 %v470, %v469
      %v504 = vpack.c.b16 %v472, %v471
      %v505 = vpack.c.b16 %v474, %v473
      %v506 = vpack.c.b16 %v476, %v475
      %v507 = vpack.c.b16 %v478, %v477
      %v508 = vpack.c.b16 %v480, %v479
      %v509 = vpack.c.b16 %v482, %v481
      %v510 = vpack.c.b16 %v484, %v483
      %v511 = vpack.c.b16 %v486, %v485
      %v512 = vpack.c.b16 %v488, %v487
      %v513 = vpack.c.b16 %v490, %v489
      %v514 = vpack.c.b16 %v492, %v491
      %v515 = vpack.c.b16 %v494, %v493
      %v516 = vpack.c.b16 %v496, %v495
      %v517 = vpack.c.b16 %v498, %v497
      %v518 = vpack.c.b16 %v500, %v499
      %vm537 = vcmask 261120
      %v539 = vsel %vm537, %v391, 0
      %v542 = vsel %vm537, %v394, 0
      %v545 = vsel %vm537, %v397, 0
      %v548 = vsel %vm537, %v400, 0
      %v551 = vsel %vm537, %v403, 0
      %v554 = vsel %vm537, %v406, 0
      %v557 = vsel %vm537, %v409, 0
      %v560 = vsel %vm537, %v412, 0
      %562 = vmatprep.subr.bf16.mxu0 0
      %563 = vmatpush1.bf16.msra.mxu0 %v501
      %564 = vmatprep.subr.bf16.mxu0 0
      %565 = vmatpush1.bf16.msra.mxu0 %v502
      %566 = vmatprep.subr.bf16.mxu0 0
      %567 = vmatpush1.bf16.msra.mxu0 %v503
      %568 = vmatprep.subr.bf16.mxu0 0
      %569 = vmatpush1.bf16.msra.mxu0 %v504
      %570 = vmatprep.subr.bf16.mxu0 0
      %571 = vmatpush1.bf16.msra.mxu0 %v505
      %572 = vmatprep.subr.bf16.mxu0 0
      %573 = vmatpush1.bf16.msra.mxu0 %v506
      %574 = vmatprep.subr.bf16.mxu0 0
      %575 = vmatpush1.bf16.msra.mxu0 %v507
      %576 = vmatprep.subr.bf16.mxu0 0
      %577 = vmatpush1.bf16.msra.mxu0 %v508
      %578 = vmatprep.subr.bf16.mxu0 0
      %579 = vmatpush1.bf16.msra.mxu0 %v509
      %580 = vmatprep.subr.bf16.mxu0 0
      %581 = vmatpush1.bf16.msra.mxu0 %v510
      %582 = vmatprep.subr.bf16.mxu0 0
      %583 = vmatpush1.bf16.msra.mxu0 %v511
      %584 = vmatprep.subr.bf16.mxu0 0
      %585 = vmatpush1.bf16.msra.mxu0 %v512
      %586 = vmatprep.subr.bf16.mxu0 0
      %587 = vmatpush1.bf16.msra.mxu0 %v513
      %588 = vmatprep.subr.bf16.mxu0 0
      %589 = vmatpush1.bf16.msra.mxu0 %v514
      %590 = vmatprep.subr.bf16.mxu0 0
      %591 = vmatpush1.bf16.msra.mxu0 %v515
      %592 = vmatprep.subr.bf16.mxu0 0
      %593 = vmatpush1.bf16.msra.mxu0 %v516
      %594 = vmatprep.mubr.bf16.mxu0 %v390
      %595 = vmatmul.mubr.bf16.gmra.mrb[0].mxu0 %v389
      %v596 = vpop.f32.mrb[0].mxu0
      %v597 = vadd.f32 0.0, %v596
      %v598 = vpop.f32.mrb[0].mxu0
      %v599 = vpop.f32.mrb[0].mxu0
      %v600 = vadd.f32 0.0, %v599
      %v601 = vpop.f32.mrb[0].mxu0
      %602 = vmatprep.mubr.bf16.mxu0 %v393
      %603 = vmatmul.mubr.bf16.gmra.mrb[0].mxu0 %v392
      %v604 = vpop.f32.mrb[0].mxu0
      %v605 = vadd.f32 0.0, %v604
      %v606 = vpop.f32.mrb[0].mxu0
      %v607 = vpop.f32.mrb[0].mxu0
      %v608 = vadd.f32 0.0, %v607
      %v609 = vpop.f32.mrb[0].mxu0
      %610 = vmatprep.mubr.bf16.mxu0 %v396
      %611 = vmatmul.mubr.bf16.gmra.mrb[0].mxu0 %v395
      %v612 = vpop.f32.mrb[0].mxu0
      %v613 = vadd.f32 0.0, %v612
      %v614 = vpop.f32.mrb[0].mxu0
      %v615 = vpop.f32.mrb[0].mxu0
      %v616 = vadd.f32 0.0, %v615
      %v617 = vpop.f32.mrb[0].mxu0
      %618 = vmatprep.mubr.bf16.mxu0 %v399
      %619 = vmatmul.mubr.bf16.gmra.mrb[0].mxu0 %v398
      %v620 = vpop.f32.mrb[0].mxu0
      %v621 = vadd.f32 0.0, %v620
      %v622 = vpop.f32.mrb[0].mxu0
      %v623 = vpop.f32.mrb[0].mxu0
      %v624 = vadd.f32 0.0, %v623
      %v625 = vpop.f32.mrb[0].mxu0
      %626 = vmatprep.mubr.bf16.mxu0 %v402
      %627 = vmatmul.mubr.bf16.gmra.mrb[0].mxu0 %v401
      %v628 = vpop.f32.mrb[0].mxu0
      %v629 = vadd.f32 0.0, %v628
      %v630 = vpop.f32.mrb[0].mxu0
      %v631 = vpop.f32.mrb[0].mxu0
      %v632 = vadd.f32 0.0, %v631
      %v633 = vpop.f32.mrb[0].mxu0
      %634 = vmatprep.mubr.bf16.mxu0 %v405
      %635 = vmatmul.mubr.bf16.gmra.mrb[0].mxu0 %v404
      %v636 = vpop.f32.mrb[0].mxu0
      %v637 = vadd.f32 0.0, %v636
      %v638 = vpop.f32.mrb[0].mxu0
      %v639 = vpop.f32.mrb[0].mxu0
      %v640 = vadd.f32 0.0, %v639
      %v641 = vpop.f32.mrb[0].mxu0
      %642 = vmatprep.mubr.bf16.mxu0 %v408
      %643 = vmatmul.mubr.bf16.gmra.mrb[0].mxu0 %v407
      %v644 = vpop.f32.mrb[0].mxu0
      %v645 = vadd.f32 0.0, %v644
      %v646 = vpop.f32.mrb[0].mxu0
      %v647 = vpop.f32.mrb[0].mxu0
      %v648 = vadd.f32 0.0, %v647
      %v649 = vpop.f32.mrb[0].mxu0
      %650 = vmatprep.mubr.bf16.mxu0 %v411
      %651 = vmatmul.mubr.bf16.gmra.mrb[0].mxu0 %v410
      %v652 = vpop.f32.mrb[0].mxu0
      %v653 = vadd.f32 0.0, %v652
      %v654 = vpop.f32.mrb[0].mxu0
      %v655 = vpop.f32.mrb[0].mxu0
      %v656 = vadd.f32 0.0, %v655
      %v657 = vpop.f32.mrb[0].mxu0
      %658 = vdwg.mxu0
      %659 = vmatprep.subr.bf16.mxu0 0
      %660 = vmatpush1.bf16.msra.mxu0 %v517
      %661 = vmatprep.subr.bf16.mxu0 0
      %662 = vmatpush1.bf16.msra.mxu0 %v518
      %663 = vmatprep.subr.bf16.mxu0 0
      %664 = vmatpush1.bf16.msra.mxu0 0
      %665 = vmatprep.subr.bf16.mxu0 0
      %666 = vmatpush1.bf16.msra.mxu0 0
      %667 = vmatprep.subr.bf16.mxu0 0
      %668 = vmatpush1.bf16.msra.mxu0 0
      %669 = vmatprep.subr.bf16.mxu0 0
      %670 = vmatpush1.bf16.msra.mxu0 0
      %671 = vmatprep.subr.bf16.mxu0 0
      %672 = vmatpush1.bf16.msra.mxu0 0
      %673 = vmatprep.subr.bf16.mxu0 0
      %674 = vmatpush1.bf16.msra.mxu0 0
      %675 = vmatprep.subr.bf16.mxu0 0
      %676 = vmatpush1.bf16.msra.mxu0 0
      %677 = vmatprep.subr.bf16.mxu0 0
      %678 = vmatpush1.bf16.msra.mxu0 0
      %679 = vmatprep.subr.bf16.mxu0 0
      %680 = vmatpush1.bf16.msra.mxu0 0
      %681 = vmatprep.subr.bf16.mxu0 0
      %682 = vmatpush1.bf16.msra.mxu0 0
      %683 = vmatprep.subr.bf16.mxu0 0
      %684 = vmatpush1.bf16.msra.mxu0 0
      %685 = vmatprep.subr.bf16.mxu0 0
      %686 = vmatpush1.bf16.msra.mxu0 0
      %687 = vmatprep.subr.bf16.mxu0 0
      %688 = vmatpush1.bf16.msra.mxu0 0
      %689 = vmatprep.subr.bf16.mxu0 0
      %690 = vmatpush1.bf16.msra.mxu0 0
      %691 = vmatprep.mubr.bf16.mxu0 0
      %692 = vmatmul.mubr.bf16.gmra.mrb[0].mxu0 %v539
      %v693 = vpop.f32.mrb[0].mxu0
      %v694 = vadd.f32 %v597, %v693
      %v695 = vpop.f32.mrb[0].mxu0
      %v696 = vpop.f32.mrb[0].mxu0
      %v697 = vadd.f32 %v600, %v696
      %v698 = vpop.f32.mrb[0].mxu0
      %699 = vmatprep.mubr.bf16.mxu0 0
      %700 = vmatmul.mubr.bf16.gmra.mrb[0].mxu0 %v542
      %v701 = vpop.f32.mrb[0].mxu0
      %v702 = vadd.f32 %v605, %v701
      %v703 = vpop.f32.mrb[0].mxu0
      %v704 = vpop.f32.mrb[0].mxu0
      %v705 = vadd.f32 %v608, %v704
      %v706 = vpop.f32.mrb[0].mxu0
      %707 = vmatprep.mubr.bf16.mxu0 0
      %708 = vmatmul.mubr.bf16.gmra.mrb[0].mxu0 %v545
      %v709 = vpop.f32.mrb[0].mxu0
      %v710 = vadd.f32 %v613, %v709
      %v711 = vpop.f32.mrb[0].mxu0
      %v712 = vpop.f32.mrb[0].mxu0
      %v713 = vadd.f32 %v616, %v712
      %v714 = vpop.f32.mrb[0].mxu0
      %715 = vmatprep.mubr.bf16.mxu0 0
      %716 = vmatmul.mubr.bf16.gmra.mrb[0].mxu0 %v548
      %v717 = vpop.f32.mrb[0].mxu0
      %v718 = vadd.f32 %v621, %v717
      %v719 = vpop.f32.mrb[0].mxu0
      %v720 = vpop.f32.mrb[0].mxu0
      %v721 = vadd.f32 %v624, %v720
      %v722 = vpop.f32.mrb[0].mxu0
      %723 = vmatprep.mubr.bf16.mxu0 0
      %724 = vmatmul.mubr.bf16.gmra.mrb[0].mxu0 %v551
      %v725 = vpop.f32.mrb[0].mxu0
      %v726 = vadd.f32 %v629, %v725
      %v727 = vpop.f32.mrb[0].mxu0
      %v728 = vpop.f32.mrb[0].mxu0
      %v729 = vadd.f32 %v632, %v728
      %v730 = vpop.f32.mrb[0].mxu0
      %731 = vmatprep.mubr.bf16.mxu0 0
      %732 = vmatmul.mubr.bf16.gmra.mrb[0].mxu0 %v554
      %v733 = vpop.f32.mrb[0].mxu0
      %v734 = vadd.f32 %v637, %v733
      %v735 = vpop.f32.mrb[0].mxu0
      %v736 = vpop.f32.mrb[0].mxu0
      %v737 = vadd.f32 %v640, %v736
      %v738 = vpop.f32.mrb[0].mxu0
      %739 = vmatprep.mubr.bf16.mxu0 0
      %740 = vmatmul.mubr.bf16.gmra.mrb[0].mxu0 %v557
      %v741 = vpop.f32.mrb[0].mxu0
      %v742 = vadd.f32 %v645, %v741
      %v743 = vpop.f32.mrb[0].mxu0
      %v744 = vpop.f32.mrb[0].mxu0
      %v745 = vadd.f32 %v648, %v744
      %v746 = vpop.f32.mrb[0].mxu0
      %747 = vmatprep.mubr.bf16.mxu0 0
      %748 = vmatmul.mubr.bf16.gmra.mrb[0].mxu0 %v560
      %v749 = vpop.f32.mrb[0].mxu0
      %v750 = vadd.f32 %v653, %v749
      %v751 = vpop.f32.mrb[0].mxu0
      %v752 = vpop.f32.mrb[0].mxu0
      %v753 = vadd.f32 %v656, %v752
      %v754 = vpop.f32.mrb[0].mxu0
      %755 = vdwg.mxu0
      %v756 = vld [vmem:[%s2] sm:$0x1]
      %v758 = vlaneseq
      %v759 = vshrl.u32 %v758, 7
      %v760 = vsub.s32 0, %v759
      %v761 = vrot.slane %v756, %v760
      %v763 = vmul.f32 %v694, %v761
      %v764 = vmul.f32 %v697, %v761
      %v765 = vmul.f32 %v702, %v761
      %v766 = vmul.f32 %v705, %v761
      %v767 = vmul.f32 %v710, %v761
      %v768 = vmul.f32 %v713, %v761
      %v769 = vmul.f32 %v718, %v761
      %v770 = vmul.f32 %v721, %v761
      %v771 = vmul.f32 %v726, %v761
      %v772 = vmul.f32 %v729, %v761
      %v773 = vmul.f32 %v734, %v761
      %v774 = vmul.f32 %v737, %v761
      %v775 = vmul.f32 %v742, %v761
      %v776 = vmul.f32 %v745, %v761
      %v777 = vmul.f32 %v750, %v761
      %v778 = vmul.f32 %v753, %v761
      %v779 = vld [vmem:[%s3] sm:$0x1]
      %v781 = vlaneseq
      %v782 = vshrl.u32 %v781, 7
      %v783 = vsub.s32 0, %v782
      %v784 = vrot.slane %v779, %v783
      %v786 = vadd.f32 %v763, %v784
      %v787 = vadd.f32 %v764, %v784
      %v788 = vadd.f32 %v765, %v784
      %v789 = vadd.f32 %v766, %v784
      %v790 = vadd.f32 %v767, %v784
      %v791 = vadd.f32 %v768, %v784
      %v792 = vadd.f32 %v769, %v784
      %v793 = vadd.f32 %v770, %v784
      %v794 = vadd.f32 %v771, %v784
      %v795 = vadd.f32 %v772, %v784
      %v796 = vadd.f32 %v773, %v784
      %v797 = vadd.f32 %v774, %v784
      %v798 = vadd.f32 %v775, %v784
      %v799 = vadd.f32 %v776, %v784
      %v800 = vadd.f32 %v777, %v784
      %v801 = vadd.f32 %v778, %v784
      %v802 = vmul.f32 %v786, 0.5
      %v803 = vmul.f32 %v787, 0.5
      %v804 = vmul.f32 %v788, 0.5
      %v805 = vmul.f32 %v789, 0.5
      %v806 = vmul.f32 %v790, 0.5
      %v807 = vmul.f32 %v791, 0.5
      %v808 = vmul.f32 %v792, 0.5
      %v809 = vmul.f32 %v793, 0.5
      %v810 = vmul.f32 %v794, 0.5
      %v811 = vmul.f32 %v795, 0.5
      %v812 = vmul.f32 %v796, 0.5
      %v813 = vmul.f32 %v797, 0.5
      %v814 = vmul.f32 %v798, 0.5
      %v815 = vmul.f32 %v799, 0.5
      %v816 = vmul.f32 %v800, 0.5
      %v817 = vmul.f32 %v801, 0.5
      %v818 = vmul.f32 %v786, 0.70710677
      %v819 = vmul.f32 %v787, 0.70710677
      %v820 = vmul.f32 %v788, 0.70710677
      %v821 = vmul.f32 %v789, 0.70710677
      %v822 = vmul.f32 %v790, 0.70710677
      %v823 = vmul.f32 %v791, 0.70710677
      %v824 = vmul.f32 %v792, 0.70710677
      %v825 = vmul.f32 %v793, 0.70710677
      %v826 = vmul.f32 %v794, 0.70710677
      %v827 = vmul.f32 %v795, 0.70710677
      %v828 = vmul.f32 %v796, 0.70710677
      %v829 = vmul.f32 %v797, 0.70710677
      %v830 = vmul.f32 %v798, 0.70710677
      %v831 = vmul.f32 %v799, 0.70710677
      %v832 = vmul.f32 %v800, 0.70710677
      %v833 = vmul.f32 %v801, 0.70710677
      %v834 = verf.f32.pop %v818
      %v835 = verf.f32.pop %v819
      %v836 = verf.f32.pop %v820
      %v837 = verf.f32.pop %v821
      %v838 = verf.f32.pop %v822
      %v839 = verf.f32.pop %v823
      %v840 = verf.f32.pop %v824
      %v841 = verf.f32.pop %v825
      %v842 = verf.f32.pop %v826
      %v843 = verf.f32.pop %v827
      %v844 = verf.f32.pop %v828
      %v845 = verf.f32.pop %v829
      %v846 = verf.f32.pop %v830
      %v847 = verf.f32.pop %v831
      %v848 = verf.f32.pop %v832
      %v849 = verf.f32.pop %v833
      %v850 = vadd.f32 %v834, 1.0
      %v851 = vadd.f32 %v835, 1.0
      %v852 = vadd.f32 %v836, 1.0
      %v853 = vadd.f32 %v837, 1.0
      %v854 = vadd.f32 %v838, 1.0
      %v855 = vadd.f32 %v839, 1.0
      %v856 = vadd.f32 %v840, 1.0
      %v857 = vadd.f32 %v841, 1.0
      %v858 = vadd.f32 %v842, 1.0
      %v859 = vadd.f32 %v843, 1.0
      %v860 = vadd.f32 %v844, 1.0
      %v861 = vadd.f32 %v845, 1.0
      %v862 = vadd.f32 %v846, 1.0
      %v863 = vadd.f32 %v847, 1.0
      %v864 = vadd.f32 %v848, 1.0
      %v865 = vadd.f32 %v849, 1.0
      %v866 = vmul.f32 %v802, %v850
      %v867 = vmul.f32 %v803, %v851
      %v868 = vmul.f32 %v804, %v852
      %v869 = vmul.f32 %v805, %v853
      %v870 = vmul.f32 %v806, %v854
      %v871 = vmul.f32 %v807, %v855
      %v872 = vmul.f32 %v808, %v856
      %v873 = vmul.f32 %v809, %v857
      %v874 = vmul.f32 %v810, %v858
      %v875 = vmul.f32 %v811, %v859
      %v876 = vmul.f32 %v812, %v860
      %v877 = vmul.f32 %v813, %v861
      %v878 = vmul.f32 %v814, %v862
      %v879 = vmul.f32 %v815, %v863
      %v880 = vmul.f32 %v816, %v864
      %v881 = vmul.f32 %v817, %v865
      %882 = vst.msk [vmem:[%s238] sm:$0xff] %vm537, %v866
      %883 = vst.msk [vmem:[%s238 + $0x8] sm:$0xff] %vm537, %v867
      %884 = vst.msk [vmem:[%s238 + $0x10] sm:$0xff] %vm537, %v868
      %885 = vst.msk [vmem:[%s238 + $0x18] sm:$0xff] %vm537, %v869
      %886 = vst.msk [vmem:[%s238 + $0x20] sm:$0xff] %vm537, %v870
      %887 = vst.msk [vmem:[%s238 + $0x28] sm:$0xff] %vm537, %v871
      %888 = vst.msk [vmem:[%s238 + $0x30] sm:$0xff] %vm537, %v872
      %889 = vst.msk [vmem:[%s238 + $0x38] sm:$0xff] %vm537, %v873
      %890 = vst.msk [vmem:[%s238 + $0x40] sm:$0xff] %vm537, %v874
      %891 = vst.msk [vmem:[%s238 + $0x48] sm:$0xff] %vm537, %v875
      %892 = vst.msk [vmem:[%s238 + $0x50] sm:$0xff] %vm537, %v876
      %893 = vst.msk [vmem:[%s238 + $0x58] sm:$0xff] %vm537, %v877
      %894 = vst.msk [vmem:[%s238 + $0x60] sm:$0xff] %vm537, %v878
      %895 = vst.msk [vmem:[%s238 + $0x68] sm:$0xff] %vm537, %v879
      %896 = vst.msk [vmem:[%s238 + $0x70] sm:$0xff] %vm537, %v880
      %897 = vst.msk [vmem:[%s238 + $0x78] sm:$0xff] %vm537, %v881
      %s898 = smul.u32 16, %s20
      %p899 = scmp.lt.s32.totalorder %s19, 1
      %s900 = scalar_select %p899, %s19, 1
      %p901 = scmp.lt.s32.totalorder %s898, 31
      %s902 = scalar_select %p901, %s898, 31
      %s903 = smul.addr %s900, 32
      %s904 = sadd.s32 %s902, %s903
      %s905 = smul.addr %s904, 8
      %s906 = scalar_lea.vmem %s4, %s905
      // Predicated region
      $region37: #{fgc_forward.12} parent=35 // pred_check
        %p907 = pneg %p138
      $region38: #{fgc_forward.12} parent=35 // pred_check_branch
        %909 = sbr.rel (%p907) target = $region40
      $region39: #{fgc_forward.12} parent=35 // pred_region
        %s910 = smul.u32 16, %s20
      $region40: #{fgc_forward.12} parent=35 // pred_fallthru
        _
    $region36: #{fgc_forward.12} parent=5 // pred_fallthru
      _
    %p911 = scmp.le.s32.totalorder 2, %s10
    // Predicated region
    $region41: #{fgc_forward.12} parent=5 // pred_check
      %p912 = pneg %p911
    $region42: #{fgc_forward.12} parent=5 // pred_check_branch
      %914 = sbr.rel (%p912) target = $region44
    $region43: #{fgc_forward.12} parent=5 // pred_region
      %s915 = ssub.s32 %s10, 2
      // Predicated region
      $region45: #{fgc_forward.12} parent=43 // pred_check
        %p916 = pneg %p144
      $region46: #{fgc_forward.12} parent=43 // pred_check_branch
        %918 = sbr.rel (%p916) target = $region48
      $region47: #{fgc_forward.12} parent=43 // pred_region
        %s919 = smul.u32 16, %s22
        %p920 = scmp.lt.s32.totalorder %s21, 1
        %s921 = scalar_select %p920, %s21, 1
        %p922 = scmp.lt.s32.totalorder %s919, 31
        %s923 = scalar_select %p922, %s919, 31
        %s924 = smul.addr %s921, 32
        %s925 = sadd.s32 %s923, %s924
        %s926 = smul.addr %s925, 8
        %s927 = scalar_lea.vmem %s4, %s926
      $region48: #{fgc_forward.12} parent=43 // pred_fallthru
        _
    $region44: #{fgc_forward.12} parent=5 // pred_fallthru
      _
  $region6: #{fgc_forward.12} parent=0 // loop_footer
    %s14 = sadd.s32 1, %s10
  $region7: #{fgc_forward.12} parent=0 // loop_footer_branch
    %9 = sbr.rel target = $region3
  $region8: #{fgc_forward.12} parent=0 // loop_exit
    _

// kernel: fgc_forward.13
$region0: #{fgc_forward.13}
  #allocation0 [shape = 'u32[]', space=smem, size = 0x4, offset = 0x4, fixed_abs, tag = 'smem constant byte address 0x4 - core index']
  #allocation1 [shape = 'u32[144,128]{1,0:T(1,128)}', space=vmem, size = 0x12000, scoped, tag = 'internal scratch']
  %s0 = inlined_call_operand.vmem [shape: bf16[2,256,1568], index: 0, kind: input, shape index: {}]
  %s1 = inlined_call_operand.vmem [shape: bf16[1568,128], index: 1, kind: input, shape index: {}]
  %s2 = inlined_call_operand.vmem [shape: f32[1,128], index: 2, kind: input, shape index: {}]
  %s3 = inlined_call_operand.vmem [shape: f32[1,128], index: 3, kind: input, shape index: {}]
  %s4 = inlined_call_operand.vmem [shape: f32[2,256,128], index: 4, kind: output, shape index: {}]
  %s5 = sld [smem:[#allocation0]]
  $region49: #{fgc_forward.13} parent=0
    _
  %s7 = ssub.s32 1, %s5
  %s8 = scalar_select 0, %s7, %s5
  loop: start=0, step=1, limit=6
  $region2: #{fgc_forward.13} parent=0 // loop_pre_header
    _
  $region3: #{fgc_forward.13} parent=0 // loop_header
    %s10 = sphi 0, %s14
    %p11 = scmp.ge.s32.totalorder %s10, 6
    %s17 = sphi 0, %s29
    %s18 = sphi 0, %s25
    %s19 = sphi 0, %s17
    %s20 = sphi 0, %s18
    %s21 = sphi 0, %s19
    %s22 = sphi 0, %s20
    %s34 = sphi 0, %s36
    %s37 = sphi 0, %s34
    %s38 = sphi 0, %s37
    %s54 = sphi 0, %s38
    %s58 = sphi 0, %s58
    %s60 = sphi 0, %s58
    %s61 = sphi 0, %s60
    %s75 = sphi 0, %s61
    %s79 = sphi 0, %s79
    %s81 = sphi 0, %s79
    %s82 = sphi 0, %s81
    %s96 = sphi 0, %s82
    %s100 = sphi 0, %s100
    %s102 = sphi 0, %s100
    %s103 = sphi 0, %s102
    %s117 = sphi 0, %s103
    %s125 = sphi 0, %s127
    %s128 = sphi 0, %s125
    %s129 = sphi 0, %s128
    %s145 = sphi 0, %s129
  $region4: #{fgc_forward.13} parent=0 // loop_header_branch
    %13 = sbr.rel (%p11) target = $region8
  $region5: #{fgc_forward.13} parent=0 // loop_body
    %s15 = ssub.s32 %s10, 1
    %s16 = ssub.s32 %s10, 2
    %s23 = sadd.s32 1, %s18
    %p24 = scmp.ge.s32.totalorder %s23, 2
    %s25 = scalar_select %p24, 0, %s23
    %s26 = sadd.s32 1, %s17
    %s27 = scalar_select %p24, %s26, %s17
    %p28 = scmp.ge.s32.totalorder %s27, 2
    %s29 = scalar_select %p28, 0, %s27
    %s30 = ssub.s32 %s17, %s29
    %s31 = ssub.s32 %s18, %s25
    %s32 = sor.u32 %s30, %s31
    %p33 = scmp.eq.s32.totalorder %s32, 0
    %s35 = sadd.s32 %s34, 1
    %s36 = scalar_select %p33, %s34, %s35
    %p39 = pneg %p33
    %p40 = scmp.eq.s32.totalorder %s10, 3
    %p41 = por %p39, %p40
    %p42 = scmp.ne.s32.totalorder %s34, %s37
    %p43 = scmp.eq.s32.totalorder %s10, 0
    %p44 = por %p42, %p43
    %p45 = scmp.ne.s32.totalorder %s34, %s37
    %p46 = scmp.eq.s32.totalorder %s15, 3
    %p47 = por %p45, %p46
    %p48 = scmp.ne.s32.totalorder %s37, %s38
    %p49 = scmp.eq.s32.totalorder %s15, 0
    %p50 = por %p48, %p49
    %p51 = scmp.ne.s32.totalorder %s37, %s38
    %p52 = scmp.eq.s32.totalorder %s16, 3
    %p53 = por %p51, %p52
    %p55 = scmp.ne.s32.totalorder %s38, %s54
    %p56 = scmp.eq.s32.totalorder %s16, 0
    %p57 = por %p55, %p56
    %s59 = sadd.s32 %s58, 1
    %p62 = scmp.eq.s32.totalorder %s10, 3
    %p63 = scmp.ne.s32.totalorder %s58, %s60
    %p64 = scmp.eq.s32.totalorder %s10, 0
    %p65 = por %p63, %p64
    %p66 = scmp.ne.s32.totalorder %s58, %s60
    %p67 = scmp.eq.s32.totalorder %s15, 3
    %p68 = por %p66, %p67
    %p69 = scmp.ne.s32.totalorder %s60, %s61
    %p70 = scmp.eq.s32.totalorder %s15, 0
    %p71 = por %p69, %p70
    %p72 = scmp.ne.s32.totalorder %s60, %s61
    %p73 = scmp.eq.s32.totalorder %s16, 3
    %p74 = por %p72, %p73
    %p76 = scmp.ne.s32.totalorder %s61, %s75
    %p77 = scmp.eq.s32.totalorder %s16, 0
    %p78 = por %p76, %p77
    %s80 = sadd.s32 %s79, 1
    %p83 = scmp.eq.s32.totalorder %s10, 3
    %p84 = scmp.ne.s32.totalorder %s79, %s81
    %p85 = scmp.eq.s32.totalorder %s10, 0
    %p86 = por %p84, %p85
    %p87 = scmp.ne.s32.totalorder %s79, %s81
    %p88 = scmp.eq.s32.totalorder %s15, 3
    %p89 = por %p87, %p88
    %p90 = scmp.ne.s32.totalorder %s81, %s82
    %p91 = scmp.eq.s32.totalorder %s15, 0
    %p92 = por %p90, %p91
    %p93 = scmp.ne.s32.totalorder %s81, %s82
    %p94 = scmp.eq.s32.totalorder %s16, 3
    %p95 = por %p93, %p94
    %p97 = scmp.ne.s32.totalorder %s82, %s96
    %p98 = scmp.eq.s32.totalorder %s16, 0
    %p99 = por %p97, %p98
    %s101 = sadd.s32 %s100, 1
    %p104 = scmp.eq.s32.totalorder %s10, 3
    %p105 = scmp.ne.s32.totalorder %s100, %s102
    %p106 = scmp.eq.s32.totalorder %s10, 0
    %p107 = por %p105, %p106
    %p108 = scmp.ne.s32.totalorder %s100, %s102
    %p109 = scmp.eq.s32.totalorder %s15, 3
    %p110 = por %p108, %p109
    %p111 = scmp.ne.s32.totalorder %s102, %s103
    %p112 = scmp.eq.s32.totalorder %s15, 0
    %p113 = por %p111, %p112
    %p114 = scmp.ne.s32.totalorder %s102, %s103
    %p115 = scmp.eq.s32.totalorder %s16, 3
    %p116 = por %p114, %p115
    %p118 = scmp.ne.s32.totalorder %s103, %s117
    %p119 = scmp.eq.s32.totalorder %s16, 0
    %p120 = por %p118, %p119
    %s121 = ssub.s32 %s17, %s29
    %s122 = ssub.s32 %s18, %s25
    %s123 = sor.u32 %s121, %s122
    %p124 = scmp.eq.s32.totalorder %s123, 0
    %s126 = sadd.s32 %s125, 1
    %s127 = scalar_select %p124, %s125, %s126
    %p130 = pneg %p124
    %p131 = scmp.eq.s32.totalorder %s10, 3
    %p132 = por %p130, %p131
    %p133 = scmp.ne.s32.totalorder %s125, %s128
    %p134 = scmp.eq.s32.totalorder %s10, 0
    %p135 = por %p133, %p134
    %p136 = scmp.ne.s32.totalorder %s125, %s128
    %p137 = scmp.eq.s32.totalorder %s15, 3
    %p138 = por %p136, %p137
    %p139 = scmp.ne.s32.totalorder %s128, %s129
    %p140 = scmp.eq.s32.totalorder %s15, 0
    %p141 = por %p139, %p140
    %p142 = scmp.ne.s32.totalorder %s128, %s129
    %p143 = scmp.eq.s32.totalorder %s16, 3
    %p144 = por %p142, %p143
    %p146 = scmp.ne.s32.totalorder %s129, %s145
    %p147 = scmp.eq.s32.totalorder %s16, 0
    %p148 = por %p146, %p147
    %p149 = scmp.le.s32.totalorder 1, %s10
    %p150 = scmp.lt.s32.totalorder %s10, 5
    %p151 = pnand %p149, %p150
    %p152 = pneg %p151
    // Predicated region
    $region9: #{fgc_forward.13} parent=5 // pred_check
      _
    $region10: #{fgc_forward.13} parent=5 // pred_check_branch
      %154 = sbr.rel (%p151) target = $region12
    $region11: #{fgc_forward.13} parent=5 // pred_region
      %s155 = ssub.s32 %s10, 1
      // Predicated region
      $region13: #{fgc_forward.13} parent=11 // pred_check
        %p156 = pneg %p71
      $region14: #{fgc_forward.13} parent=11 // pred_check_branch
        %158 = sbr.rel (%p156) target = $region16
      $region15: #{fgc_forward.13} parent=11 // pred_region
        _
      $region16: #{fgc_forward.13} parent=11 // pred_fallthru
        _
      // Predicated region
      $region17: #{fgc_forward.13} parent=11 // pred_check
        %p159 = pneg %p92
      $region18: #{fgc_forward.13} parent=11 // pred_check_branch
        %161 = sbr.rel (%p159) target = $region20
      $region19: #{fgc_forward.13} parent=11 // pred_region
        _
      $region20: #{fgc_forward.13} parent=11 // pred_fallthru
        _
      // Predicated region
      $region21: #{fgc_forward.13} parent=11 // pred_check
        %p162 = pneg %p113
      $region22: #{fgc_forward.13} parent=11 // pred_check_branch
        %164 = sbr.rel (%p162) target = $region24
      $region23: #{fgc_forward.13} parent=11 // pred_region
        _
      $region24: #{fgc_forward.13} parent=11 // pred_fallthru
        _
    $region12: #{fgc_forward.13} parent=5 // pred_fallthru
      _
    %p165 = scmp.lt.s32.totalorder %s10, 4
    // Predicated region
    $region25: #{fgc_forward.13} parent=5 // pred_check
      %p166 = pneg %p165
    $region26: #{fgc_forward.13} parent=5 // pred_check_branch
      %168 = sbr.rel (%p166) target = $region28
    $region27: #{fgc_forward.13} parent=5 // pred_region
      // Predicated region
      $region29: #{fgc_forward.13} parent=27 // pred_check
        %p169 = pneg %p44
      $region30: #{fgc_forward.13} parent=27 // pred_check_branch
        %171 = sbr.rel (%p169) target = $region32
      $region31: #{fgc_forward.13} parent=27 // pred_region
        %s172 = smul.u32 16, %s18
        %p173 = scmp.lt.s32.totalorder %s17, 1
        %s174 = scalar_select %p173, %s17, 1
        %p175 = scmp.lt.s32.totalorder %s172, 31
        %s176 = scalar_select %p175, %s172, 31
        %s177 = smul.addr %s176, 13
        %s178 = smul.addr %s174, 416
        %s179 = sadd.s32 %s177, %s178
        %s180 = smul.addr %s179, 4
        %s181 = scalar_lea.vmem %s0, %s180
        %s182 = smul.u32 16, %s18
      $region32: #{fgc_forward.13} parent=27 // pred_fallthru
        _
    $region28: #{fgc_forward.13} parent=5 // pred_fallthru
      _
    %p183 = scmp.le.s32.totalorder 1, %s10
    %p184 = scmp.lt.s32.totalorder %s10, 5
    %p185 = pnand %p183, %p184
    %p186 = pneg %p185
    // Predicated region
    $region33: #{fgc_forward.13} parent=5 // pred_check
      _
    $region34: #{fgc_forward.13} parent=5 // pred_check_branch
      %188 = sbr.rel (%p185) target = $region36
    $region35: #{fgc_forward.13} parent=5 // pred_region
      %s189 = ssub.s32 %s10, 1
      %s190 = smul.u32 16, %s20
      %p191 = scmp.lt.s32.totalorder %s19, 1
      %s192 = scalar_select %p191, %s19, 1
      %p193 = scmp.lt.s32.totalorder %s190, 31
      %s194 = scalar_select %p193, %s190, 31
      %s195 = smul.addr %s194, 13
      %s196 = smul.addr %s192, 416
      %s197 = sadd.s32 %s195, %s196
      %s198 = smul.addr %s197, 4
      %s199 = scalar_lea.vmem %s0, %s198
      %p200 = pneg %p50
      %p201 = pneg %p47
      %p202 = pneg %p71
      %p203 = pneg %p68
      %p204 = pneg %p92
      %p205 = pneg %p89
      %p206 = pneg %p113
      %p207 = pneg %p110
      %p208 = pneg %p141
      %p209 = pneg %p138
      %s210 = smul.u32 16, %s20
      %p211 = scmp.lt.s32.totalorder %s19, 1
      %s212 = scalar_select %p211, %s19, 1
      %p213 = scmp.lt.s32.totalorder %s210, 31
      %s214 = scalar_select %p213, %s210, 31
      %s215 = smul.addr %s212, 32
      %s216 = sadd.s32 %s214, %s215
      %s217 = smul.addr %s216, 8
      %s218 = scalar_lea.vmem %s4, %s217
      %s219 = smul.u32 16, %s20
      %p220 = scmp.lt.s32.totalorder %s19, 1
      %s221 = scalar_select %p220, %s19, 1
      %p222 = scmp.lt.s32.totalorder %s219, 31
      %s223 = scalar_select %p222, %s219, 31
      %s224 = smul.addr %s223, 13
      %s225 = smul.addr %s221, 416
      %s226 = sadd.s32 %s224, %s225
      %s227 = smul.addr %s226, 4
      %s228 = scalar_lea.vmem %s0, %s227
      %s229 = smul.u32 16, %s20
      %s230 = smul.u32 16, %s20
      %p231 = scmp.lt.s32.totalorder %s19, 1
      %s232 = scalar_select %p231, %s19, 1
      %p233 = scmp.lt.s32.totalorder %s230, 31
      %s234 = scalar_select %p233, %s230, 31
      %s235 = smul.addr %s232, 32
      %s236 = sadd.s32 %s234, %s235
      %s237 = smul.addr %s236, 8
      %s238 = scalar_lea.vmem %s4, %s237
      %s239 = smul.u32 16, %s20
      %v241 = vld [vmem:[%s228] sm:$0xff]
      %v242 = vld [vmem:[%s228 + $0x8] sm:$0xff]
      %v243 = vld [vmem:[%s228 + $0x10] sm:$0xff]
      %v244 = vld [vmem:[%s228 + $0x18] sm:$0xff]
      %v245 = vld [vmem:[%s228 + $0x20] sm:$0xff]
      %v246 = vld [vmem:[%s228 + $0x28] sm:$0xff]
      %v247 = vld [vmem:[%s228 + $0x30] sm:$0xf]
      %v248 = vld [vmem:[%s228 + $0x34] sm:$0xff]
      %v249 = vld [vmem:[%s228 + $0x3c] sm:$0xff]
      %v250 = vld [vmem:[%s228 + $0x44] sm:$0xff]
      %v251 = vld [vmem:[%s228 + $0x4c] sm:$0xff]
      %v252 = vld [vmem:[%s228 + $0x54] sm:$0xff]
      %v253 = vld [vmem:[%s228 + $0x5c] sm:$0xff]
      %v254 = vld [vmem:[%s228 + $0x64] sm:$0xf]
      %v255 = vld [vmem:[%s228 + $0x68] sm:$0xff]
      %v256 = vld [vmem:[%s228 + $0x70] sm:$0xff]
      %v257 = vld [vmem:[%s228 + $0x78] sm:$0xff]
      %v258 = vld [vmem:[%s228 + $0x80] sm:$0xff]
      %v259 = vld [vmem:[%s228 + $0x88] sm:$0xff]
      %v260 = vld [vmem:[%s228 + $0x90] sm:$0xff]
      %v261 = vld [vmem:[%s228 + $0x98] sm:$0xf]
      %v262 = vld [vmem:[%s228 + $0x9c] sm:$0xff]
      %v263 = vld [vmem:[%s228 + $0xa4] sm:$0xff]
      %v264 = vld [vmem:[%s228 + $0xac] sm:$0xff]
      %v265 = vld [vmem:[%s228 + $0xb4] sm:$0xff]
      %v266 = vld [vmem:[%s228 + $0xbc] sm:$0xff]
      %v267 = vld [vmem:[%s228 + $0xc4] sm:$0xff]
      %v268 = vld [vmem:[%s228 + $0xcc] sm:$0xf]
      %v269 = vld [vmem:[%s228 + $0xd0] sm:$0xff]
      %v270 = vld [vmem:[%s228 + $0xd8] sm:$0xff]
      %v271 = vld [vmem:[%s228 + $0xe0] sm:$0xff]
      %v272 = vld [vmem:[%s228 + $0xe8] sm:$0xff]
      %v273 = vld [vmem:[%s228 + $0xf0] sm:$0xff]
      %v274 = vld [vmem:[%s228 + $0xf8] sm:$0xff]
      %v275 = vld [vmem:[%s228 + $0x100] sm:$0xf]
      %v276 = vld [vmem:[%s228 + $0x104] sm:$0xff]
      %v277 = vld [vmem:[%s228 + $0x10c] sm:$0xff]
      %v278 = vld [vmem:[%s228 + $0x114] sm:$0xff]
      %v279 = vld [vmem:[%s228 + $0x11c] sm:$0xff]
      %v280 = vld [vmem:[%s228 + $0x124] sm:$0xff]
      %v281 = vld [vmem:[%s228 + $0x12c] sm:$0xff]
      %v282 = vld [vmem:[%s228 + $0x134] sm:$0xf]
      %v283 = vld [vmem:[%s228 + $0x138] sm:$0xff]
      %v284 = vld [vmem:[%s228 + $0x140] sm:$0xff]
      %v285 = vld [vmem:[%s228 + $0x148] sm:$0xff]
      %v286 = vld [vmem:[%s228 + $0x150] sm:$0xff]
      %v287 = vld [vmem:[%s228 + $0x158] sm:$0xff]
      %v288 = vld [vmem:[%s228 + $0x160] sm:$0xff]
      %v289 = vld [vmem:[%s228 + $0x168] sm:$0xf]
      %v290 = vld [vmem:[%s228 + $0x16c] sm:$0xff]
      %v291 = vld [vmem:[%s228 + $0x174] sm:$0xff]
      %v292 = vld [vmem:[%s228 + $0x17c] sm:$0xff]
      %v293 = vld [vmem:[%s228 + $0x184] sm:$0xff]
      %v294 = vld [vmem:[%s228 + $0x18c] sm:$0xff]
      %v295 = vld [vmem:[%s228 + $0x194] sm:$0xff]
      %v296 = vld [vmem:[%s228 + $0x19c] sm:$0xf]
      %v297 = vld [vmem:[%s228 + $0x1a0] sm:$0xff]
      %v298 = vld [vmem:[%s228 + $0x1a8] sm:$0xff]
      %v299 = vld [vmem:[%s228 + $0x1b0] sm:$0xff]
      %v300 = vld [vmem:[%s228 + $0x1b8] sm:$0xff]
      %v301 = vld [vmem:[%s228 + $0x1c0] sm:$0xff]
      %v302 = vld [vmem:[%s228 + $0x1c8] sm:$0xff]
      %v303 = vld [vmem:[%s228 + $0x1d0] sm:$0xf]
      %v304 = vld [vmem:[%s228 + $0x1d4] sm:$0xff]
      %v305 = vld [vmem:[%s228 + $0x1dc] sm:$0xff]
      %v306 = vld [vmem:[%s228 + $0x1e4] sm:$0xff]
      %v307 = vld [vmem:[%s228 + $0x1ec] sm:$0xff]
      %v308 = vld [vmem:[%s228 + $0x1f4] sm:$0xff]
      %v309 = vld [vmem:[%s228 + $0x1fc] sm:$0xff]
      %v310 = vld [vmem:[%s228 + $0x204] sm:$0xf]
      %v311 = vld [vmem:[%s228 + $0x208] sm:$0xff]
      %v312 = vld [vmem:[%s228 + $0x210] sm:$0xff]
      %v313 = vld [vmem:[%s228 + $0x218] sm:$0xff]
      %v314 = vld [vmem:[%s228 + $0x220] sm:$0xff]
      %v315 = vld [vmem:[%s228 + $0x228] sm:$0xff]
      %v316 = vld [vmem:[%s228 + $0x230] sm:$0xff]
      %v317 = vld [vmem:[%s228 + $0x238] sm:$0xf]
      %v318 = vld [vmem:[%s228 + $0x23c] sm:$0xff]
      %v319 = vld [vmem:[%s228 + $0x244] sm:$0xff]
      %v320 = vld [vmem:[%s228 + $0x24c] sm:$0xff]
      %v321 = vld [vmem:[%s228 + $0x254] sm:$0xff]
      %v322 = vld [vmem:[%s228 + $0x25c] sm:$0xff]
      %v323 = vld [vmem:[%s228 + $0x264] sm:$0xff]
      %v324 = vld [vmem:[%s228 + $0x26c] sm:$0xf]
      %v325 = vld [vmem:[%s228 + $0x270] sm:$0xff]
      %v326 = vld [vmem:[%s228 + $0x278] sm:$0xff]
      %v327 = vld [vmem:[%s228 + $0x280] sm:$0xff]
      %v328 = vld [vmem:[%s228 + $0x288] sm:$0xff]
      %v329 = vld [vmem:[%s228 + $0x290] sm:$0xff]
      %v330 = vld [vmem:[%s228 + $0x298] sm:$0xff]
      %v331 = vld [vmem:[%s228 + $0x2a0] sm:$0xf]
      %v332 = vld [vmem:[%s228 + $0x2a4] sm:$0xff]
      %v333 = vld [vmem:[%s228 + $0x2ac] sm:$0xff]
      %v334 = vld [vmem:[%s228 + $0x2b4] sm:$0xff]
      %v335 = vld [vmem:[%s228 + $0x2bc] sm:$0xff]
      %v336 = vld [vmem:[%s228 + $0x2c4] sm:$0xff]
      %v337 = vld [vmem:[%s228 + $0x2cc] sm:$0xff]
      %v338 = vld [vmem:[%s228 + $0x2d4] sm:$0xf]
      %v339 = vld [vmem:[%s228 + $0x2d8] sm:$0xff]
      %v340 = vld [vmem:[%s228 + $0x2e0] sm:$0xff]
      %v341 = vld [vmem:[%s228 + $0x2e8] sm:$0xff]
      %v342 = vld [vmem:[%s228 + $0x2f0] sm:$0xff]
      %v343 = vld [vmem:[%s228 + $0x2f8] sm:$0xff]
      %v344 = vld [vmem:[%s228 + $0x300] sm:$0xff]
      %v345 = vld [vmem:[%s228 + $0x308] sm:$0xf]
      %v346 = vld [vmem:[%s228 + $0x30c] sm:$0xff]
      %v347 = vld [vmem:[%s228 + $0x314] sm:$0xff]
      %v348 = vld [vmem:[%s228 + $0x31c] sm:$0xff]
      %v349 = vld [vmem:[%s228 + $0x324] sm:$0xff]
      %v350 = vld [vmem:[%s228 + $0x32c] sm:$0xff]
      %v351 = vld [vmem:[%s228 + $0x334] sm:$0xff]
      %v352 = vld [vmem:[%s228 + $0x33c] sm:$0xf]
      %v353 = vld [vmem:[%s1] sm:$0xf]
      %v354 = vld [vmem:[%s1 + $0x4] sm:$0xf]
      %v355 = vld [vmem:[%s1 + $0x8] sm:$0xf]
      %v356 = vld [vmem:[%s1 + $0xc] sm:$0xf]
      %v357 = vld [vmem:[%s1 + $0x10] sm:$0xf]
      %v358 = vld [vmem:[%s1 + $0x14] sm:$0xf]
      %v359 = vld [vmem:[%s1 + $0x18] sm:$0xf]
      %v360 = vld [vmem:[%s1 + $0x1c] sm:$0xf]
      %v361 = vld [vmem:[%s1 + $0x20] sm:$0xf]
      %v362 = vld [vmem:[%s1 + $0x24] sm:$0xf]
      %v363 = vld [vmem:[%s1 + $0x28] sm:$0xf]
      %v364 = vld [vmem:[%s1 + $0x2c] sm:$0xf]
      %v365 = vld [vmem:[%s1 + $0x30] sm:$0xf]
      %v366 = vld [vmem:[%s1 + $0x34] sm:$0xf]
      %v367 = vld [vmem:[%s1 + $0x38] sm:$0xf]
      %v368 = vld [vmem:[%s1 + $0x3c] sm:$0xf]
      %v369 = vld [vmem:[%s1 + $0x40] sm:$0xf]
      %v370 = vld [vmem:[%s1 + $0x44] sm:$0xf]
      %v371 = vld [vmem:[%s1 + $0x48] sm:$0xf]
      %v372 = vld [vmem:[%s1 + $0x4c] sm:$0xf]
      %v373 = vld [vmem:[%s1 + $0x50] sm:$0xf]
      %v374 = vld [vmem:[%s1 + $0x54] sm:$0xf]
      %v375 = vld [vmem:[%s1 + $0x58] sm:$0xf]
      %v376 = vld [vmem:[%s1 + $0x5c] sm:$0xf]
      %v377 = vld [vmem:[%s1 + $0x60] sm:$0xf]
      %v378 = vld [vmem:[%s1 + $0x64] sm:$0xf]
      %v379 = vld [vmem:[%s1 + $0x68] sm:$0xf]
      %v380 = vld [vmem:[%s1 + $0x6c] sm:$0xf]
      %v381 = vld [vmem:[%s1 + $0x70] sm:$0xf]
      %v382 = vld [vmem:[%s1 + $0x74] sm:$0xf]
      %v383 = vld [vmem:[%s1 + $0x78] sm:$0xf]
      %v384 = vld [vmem:[%s1 + $0x7c] sm:$0xf]
      %v385 = vld [vmem:[%s1 + $0x80] sm:$0xf]
      %v386 = vld [vmem:[%s1 + $0x84] sm:$0xf]
      %v387 = vld [vmem:[%s1 + $0x88] sm:$0xf]
      %v388 = vld [vmem:[%s1 + $0x8c] sm:$0xf]
      %v389 = vld [vmem:[%s1 + $0x90] sm:$0xf]
      %v390 = vld [vmem:[%s1 + $0x94] sm:$0xf]
      %v391 = vld [vmem:[%s1 + $0x98] sm:$0xf]
      %v392 = vld [vmem:[%s1 + $0x9c] sm:$0xf]
      %v393 = vld [vmem:[%s1 + $0xa0] sm:$0xf]
      %v394 = vld [vmem:[%s1 + $0xa4] sm:$0xf]
      %v395 = vld [vmem:[%s1 + $0xa8] sm:$0xf]
      %v396 = vld [vmem:[%s1 + $0xac] sm:$0xf]
      %v397 = vld [vmem:[%s1 + $0xb0] sm:$0xf]
      %v398 = vld [vmem:[%s1 + $0xb4] sm:$0xf]
      %v399 = vld [vmem:[%s1 + $0xb8] sm:$0xf]
      %v400 = vld [vmem:[%s1 + $0xbc] sm:$0xf]
      %v401 = vld [vmem:[%s1 + $0xc0] sm:$0xf]
      %v402 = vld [vmem:[%s1 + $0xc4] sm:$0xf]
      %v403 = vld [vmem:[%s1 + $0xc8] sm:$0xf]
      %v404 = vld [vmem:[%s1 + $0xcc] sm:$0xf]
      %v405 = vld [vmem:[%s1 + $0xd0] sm:$0xf]
      %v406 = vld [vmem:[%s1 + $0xd4] sm:$0xf]
      %v407 = vld [vmem:[%s1 + $0xd8] sm:$0xf]
      %v408 = vld [vmem:[%s1 + $0xdc] sm:$0xf]
      %v409 = vld [vmem:[%s1 + $0xe0] sm:$0xf]
      %v410 = vld [vmem:[%s1 + $0xe4] sm:$0xf]
      %v411 = vld [vmem:[%s1 + $0xe8] sm:$0xf]
      %v412 = vld [vmem:[%s1 + $0xec] sm:$0xf]
      %v413 = vld [vmem:[%s1 + $0xf0] sm:$0xf]
      %v414 = vld [vmem:[%s1 + $0xf4] sm:$0xf]
      %v415 = vld [vmem:[%s1 + $0xf8] sm:$0xf]
      %v416 = vld [vmem:[%s1 + $0xfc] sm:$0xf]
      %v417 = vld [vmem:[%s1 + $0x100] sm:$0xf]
      %v418 = vld [vmem:[%s1 + $0x104] sm:$0xf]
      %v419 = vld [vmem:[%s1 + $0x108] sm:$0xf]
      %v420 = vld [vmem:[%s1 + $0x10c] sm:$0xf]
      %v421 = vld [vmem:[%s1 + $0x110] sm:$0xf]
      %v422 = vld [vmem:[%s1 + $0x114] sm:$0xf]
      %v423 = vld [vmem:[%s1 + $0x118] sm:$0xf]
      %v424 = vld [vmem:[%s1 + $0x11c] sm:$0xf]
      %v425 = vld [vmem:[%s1 + $0x120] sm:$0xf]
      %v426 = vld [vmem:[%s1 + $0x124] sm:$0xf]
      %v427 = vld [vmem:[%s1 + $0x128] sm:$0xf]
      %v428 = vld [vmem:[%s1 + $0x12c] sm:$0xf]
      %v429 = vld [vmem:[%s1 + $0x130] sm:$0xf]
      %v430 = vld [vmem:[%s1 + $0x134] sm:$0xf]
      %v431 = vld [vmem:[%s1 + $0x138] sm:$0xf]
      %v432 = vld [vmem:[%s1 + $0x13c] sm:$0xf]
      %v433 = vld [vmem:[%s1 + $0x140] sm:$0xf]
      %v434 = vld [vmem:[%s1 + $0x144] sm:$0xf]
      %v435 = vld [vmem:[%s1 + $0x148] sm:$0xf]
      %v436 = vld [vmem:[%s1 + $0x14c] sm:$0xf]
      %v437 = vld [vmem:[%s1 + $0x150] sm:$0xf]
      %v438 = vld [vmem:[%s1 + $0x154] sm:$0xf]
      %v439 = vld [vmem:[%s1 + $0x158] sm:$0xf]
      %v440 = vld [vmem:[%s1 + $0x15c] sm:$0xf]
      %v441 = vld [vmem:[%s1 + $0x160] sm:$0xf]
      %v442 = vld [vmem:[%s1 + $0x164] sm:$0xf]
      %v443 = vld [vmem:[%s1 + $0x168] sm:$0xf]
      %v444 = vld [vmem:[%s1 + $0x16c] sm:$0xf]
      %v445 = vld [vmem:[%s1 + $0x170] sm:$0xf]
      %v446 = vld [vmem:[%s1 + $0x174] sm:$0xf]
      %v447 = vld [vmem:[%s1 + $0x178] sm:$0xf]
      %v448 = vld [vmem:[%s1 + $0x17c] sm:$0xf]
      %v449 = vld [vmem:[%s1 + $0x180] sm:$0xf]
      %v450 = vld [vmem:[%s1 + $0x184] sm:$0xf]
      %v451 = vld [vmem:[%s1 + $0x188] sm:$0xf]
      %v452 = vld [vmem:[%s1 + $0x18c] sm:$0xf]
      %v453 = vld [vmem:[%s1 + $0x190] sm:$0xf]
      %v454 = vld [vmem:[%s1 + $0x194] sm:$0xf]
      %v455 = vld [vmem:[%s1 + $0x198] sm:$0xf]
      %v456 = vld [vmem:[%s1 + $0x19c] sm:$0xf]
      %v457 = vld [vmem:[%s1 + $0x1a0] sm:$0xf]
      %v458 = vld [vmem:[%s1 + $0x1a4] sm:$0xf]
      %v459 = vld [vmem:[%s1 + $0x1a8] sm:$0xf]
      %v460 = vld [vmem:[%s1 + $0x1ac] sm:$0xf]
      %v461 = vld [vmem:[%s1 + $0x1b0] sm:$0xf]
      %v462 = vld [vmem:[%s1 + $0x1b4] sm:$0xf]
      %v463 = vld [vmem:[%s1 + $0x1b8] sm:$0xf]
      %v464 = vld [vmem:[%s1 + $0x1bc] sm:$0xf]
      %v465 = vld [vmem:[%s1 + $0x1c0] sm:$0xf]
      %v466 = vld [vmem:[%s1 + $0x1c4] sm:$0xf]
      %v467 = vld [vmem:[%s1 + $0x1c8] sm:$0xf]
      %v468 = vld [vmem:[%s1 + $0x1cc] sm:$0xf]
      %v469 = vld [vmem:[%s1 + $0x1d0] sm:$0xf]
      %v470 = vld [vmem:[%s1 + $0x1d4] sm:$0xf]
      %v471 = vld [vmem:[%s1 + $0x1d8] sm:$0xf]
      %v472 = vld [vmem:[%s1 + $0x1dc] sm:$0xf]
      %v473 = vld [vmem:[%s1 + $0x1e0] sm:$0xf]
      %v474 = vld [vmem:[%s1 + $0x1e4] sm:$0xf]
      %v475 = vld [vmem:[%s1 + $0x1e8] sm:$0xf]
      %v476 = vld [vmem:[%s1 + $0x1ec] sm:$0xf]
      %v477 = vld [vmem:[%s1 + $0x1f0] sm:$0xf]
      %v478 = vld [vmem:[%s1 + $0x1f4] sm:$0xf]
      %v479 = vld [vmem:[%s1 + $0x1f8] sm:$0xf]
      %v480 = vld [vmem:[%s1 + $0x1fc] sm:$0xf]
      %v481 = vld [vmem:[%s1 + $0x200] sm:$0xf]
      %v482 = vld [vmem:[%s1 + $0x204] sm:$0xf]
      %v483 = vld [vmem:[%s1 + $0x208] sm:$0xf]
      %v484 = vld [vmem:[%s1 + $0x20c] sm:$0xf]
      %v485 = vld [vmem:[%s1 + $0x210] sm:$0xf]
      %v486 = vld [vmem:[%s1 + $0x214] sm:$0xf]
      %v487 = vld [vmem:[%s1 + $0x218] sm:$0xf]
      %v488 = vld [vmem:[%s1 + $0x21c] sm:$0xf]
      %v489 = vld [vmem:[%s1 + $0x220] sm:$0xf]
      %v490 = vld [vmem:[%s1 + $0x224] sm:$0xf]
      %v491 = vld [vmem:[%s1 + $0x228] sm:$0xf]
      %v492 = vld [vmem:[%s1 + $0x22c] sm:$0xf]
      %v493 = vld [vmem:[%s1 + $0x230] sm:$0xf]
      %v494 = vld [vmem:[%s1 + $0x234] sm:$0xf]
      %v495 = vld [vmem:[%s1 + $0x238] sm:$0xf]
      %v496 = vld [vmem:[%s1 + $0x23c] sm:$0xf]
      %v497 = vld [vmem:[%s1 + $0x240] sm:$0xf]
      %v498 = vld [vmem:[%s1 + $0x244] sm:$0xf]
      %v499 = vld [vmem:[%s1 + $0x248] sm:$0xf]
      %v500 = vld [vmem:[%s1 + $0x24c] sm:$0xf]
      %v501 = vld [vmem:[%s1 + $0x250] sm:$0xf]
      %v502 = vld [vmem:[%s1 + $0x254] sm:$0xf]
      %v503 = vld [vmem:[%s1 + $0x258] sm:$0xf]
      %v504 = vld [vmem:[%s1 + $0x25c] sm:$0xf]
      %v505 = vld [vmem:[%s1 + $0x260] sm:$0xf]
      %v506 = vld [vmem:[%s1 + $0x264] sm:$0xf]
      %v507 = vld [vmem:[%s1 + $0x268] sm:$0xf]
      %v508 = vld [vmem:[%s1 + $0x26c] sm:$0xf]
      %v509 = vld [vmem:[%s1 + $0x270] sm:$0xf]
      %v510 = vld [vmem:[%s1 + $0x274] sm:$0xf]
      %v511 = vld [vmem:[%s1 + $0x278] sm:$0xf]
      %v512 = vld [vmem:[%s1 + $0x27c] sm:$0xf]
      %v513 = vld [vmem:[%s1 + $0x280] sm:$0xf]
      %v514 = vld [vmem:[%s1 + $0x284] sm:$0xf]
      %v515 = vld [vmem:[%s1 + $0x288] sm:$0xf]
      %v516 = vld [vmem:[%s1 + $0x28c] sm:$0xf]
      %v517 = vld [vmem:[%s1 + $0x290] sm:$0xf]
      %v518 = vld [vmem:[%s1 + $0x294] sm:$0xf]
      %v519 = vld [vmem:[%s1 + $0x298] sm:$0xf]
      %v520 = vld [vmem:[%s1 + $0x29c] sm:$0xf]
      %v521 = vld [vmem:[%s1 + $0x2a0] sm:$0xf]
      %v522 = vld [vmem:[%s1 + $0x2a4] sm:$0xf]
      %v523 = vld [vmem:[%s1 + $0x2a8] sm:$0xf]
      %v524 = vld [vmem:[%s1 + $0x2ac] sm:$0xf]
      %v525 = vld [vmem:[%s1 + $0x2b0] sm:$0xf]
      %v526 = vld [vmem:[%s1 + $0x2b4] sm:$0xf]
      %v527 = vld [vmem:[%s1 + $0x2b8] sm:$0xf]
      %v528 = vld [vmem:[%s1 + $0x2bc] sm:$0xf]
      %v529 = vld [vmem:[%s1 + $0x2c0] sm:$0xf]
      %v530 = vld [vmem:[%s1 + $0x2c4] sm:$0xf]
      %v531 = vld [vmem:[%s1 + $0x2c8] sm:$0xf]
      %v532 = vld [vmem:[%s1 + $0x2cc] sm:$0xf]
      %v533 = vld [vmem:[%s1 + $0x2d0] sm:$0xf]
      %v534 = vld [vmem:[%s1 + $0x2d4] sm:$0xf]
      %v535 = vld [vmem:[%s1 + $0x2d8] sm:$0xf]
      %v536 = vld [vmem:[%s1 + $0x2dc] sm:$0xf]
      %v537 = vld [vmem:[%s1 + $0x2e0] sm:$0xf]
      %v538 = vld [vmem:[%s1 + $0x2e4] sm:$0xf]
      %v539 = vld [vmem:[%s1 + $0x2e8] sm:$0xf]
      %v540 = vld [vmem:[%s1 + $0x2ec] sm:$0xf]
      %v541 = vld [vmem:[%s1 + $0x2f0] sm:$0xf]
      %v542 = vld [vmem:[%s1 + $0x2f4] sm:$0xf]
      %v543 = vld [vmem:[%s1 + $0x2f8] sm:$0xf]
      %v544 = vld [vmem:[%s1 + $0x2fc] sm:$0xf]
      %v545 = vld [vmem:[%s1 + $0x300] sm:$0xf]
      %v546 = vld [vmem:[%s1 + $0x304] sm:$0xf]
      %v547 = vld [vmem:[%s1 + $0x308] sm:$0xf]
      %v548 = vld [vmem:[%s1 + $0x30c] sm:$0xf]
      %v661 = vunpack.c.l.b16 %v241
      %v662 = vunpack.c.h.b16 %v241
      %v663 = vunpack.c.l.b16 %v242
      %v664 = vunpack.c.h.b16 %v242
      %v665 = vunpack.c.l.b16 %v243
      %v666 = vunpack.c.h.b16 %v243
      %v667 = vunpack.c.l.b16 %v244
      %v668 = vunpack.c.h.b16 %v244
      %v669 = vunpack.c.l.b16 %v245
      %v670 = vunpack.c.h.b16 %v245
      %v671 = vunpack.c.l.b16 %v246
      %v672 = vunpack.c.h.b16 %v246
      %v673 = vunpack.c.l.b16 %v247
      %v674 = vunpack.c.l.b16 %v248
      %v675 = vunpack.c.h.b16 %v248
      %v676 = vunpack.c.l.b16 %v249
      %v677 = vunpack.c.h.b16 %v249
      %v678 = vunpack.c.l.b16 %v250
      %v679 = vunpack.c.h.b16 %v250
      %v680 = vunpack.c.l.b16 %v251
      %v681 = vunpack.c.h.b16 %v251
      %v682 = vunpack.c.l.b16 %v252
      %v683 = vunpack.c.h.b16 %v252
      %v684 = vunpack.c.l.b16 %v253
      %v685 = vunpack.c.h.b16 %v253
      %v686 = vunpack.c.l.b16 %v254
      %v687 = vunpack.c.l.b16 %v255
      %v688 = vunpack.c.h.b16 %v255
      %v689 = vunpack.c.l.b16 %v256
      %v690 = vunpack.c.h.b16 %v256
      %v691 = vunpack.c.l.b16 %v257
      %v692 = vunpack.c.h.b16 %v257
      %v693 = vunpack.c.l.b16 %v258
      %v694 = vunpack.c.h.b16 %v258
      %v695 = vunpack.c.l.b16 %v259
      %v696 = vunpack.c.h.b16 %v259
      %v697 = vunpack.c.l.b16 %v260
      %v698 = vunpack.c.h.b16 %v260
      %v699 = vunpack.c.l.b16 %v261
      %v700 = vunpack.c.l.b16 %v262
      %v701 = vunpack.c.h.b16 %v262
      %v702 = vunpack.c.l.b16 %v263
      %v703 = vunpack.c.h.b16 %v263
      %v704 = vunpack.c.l.b16 %v264
      %v705 = vunpack.c.h.b16 %v264
      %v706 = vunpack.c.l.b16 %v265
      %v707 = vunpack.c.h.b16 %v265
      %v708 = vunpack.c.l.b16 %v266
      %v709 = vunpack.c.h.b16 %v266
      %v710 = vunpack.c.l.b16 %v267
      %v711 = vunpack.c.h.b16 %v267
      %v712 = vunpack.c.l.b16 %v268
      %v713 = vunpack.c.l.b16 %v269
      %v714 = vunpack.c.h.b16 %v269
      %v715 = vunpack.c.l.b16 %v270
      %v716 = vunpack.c.h.b16 %v270
      %v717 = vunpack.c.l.b16 %v271
      %v718 = vunpack.c.h.b16 %v271
      %v719 = vunpack.c.l.b16 %v272
      %v720 = vunpack.c.h.b16 %v272
      %v721 = vunpack.c.l.b16 %v273
      %v722 = vunpack.c.h.b16 %v273
      %v723 = vunpack.c.l.b16 %v274
      %v724 = vunpack.c.h.b16 %v274
      %v725 = vunpack.c.l.b16 %v275
      %v726 = vunpack.c.l.b16 %v276
      %v727 = vunpack.c.h.b16 %v276
      %v728 = vunpack.c.l.b16 %v277
      %v729 = vunpack.c.h.b16 %v277
      %v730 = vunpack.c.l.b16 %v278
      %v731 = vunpack.c.h.b16 %v278
      %v732 = vunpack.c.l.b16 %v279
      %v733 = vunpack.c.h.b16 %v279
      %v734 = vunpack.c.l.b16 %v280
      %v735 = vunpack.c.h.b16 %v280
      %v736 = vunpack.c.l.b16 %v281
      %v737 = vunpack.c.h.b16 %v281
      %v738 = vunpack.c.l.b16 %v282
      %v739 = vunpack.c.l.b16 %v283
      %v740 = vunpack.c.h.b16 %v283
      %v741 = vunpack.c.l.b16 %v284
      %v742 = vunpack.c.h.b16 %v284
      %v743 = vunpack.c.l.b16 %v285
      %v744 = vunpack.c.h.b16 %v285
      %v745 = vunpack.c.l.b16 %v286
      %v746 = vunpack.c.h.b16 %v286
      %v747 = vunpack.c.l.b16 %v287
      %v748 = vunpack.c.h.b16 %v287
      %v749 = vunpack.c.l.b16 %v288
      %v750 = vunpack.c.h.b16 %v288
      %v751 = vunpack.c.l.b16 %v289
      %v752 = vunpack.c.l.b16 %v290
      %v753 = vunpack.c.h.b16 %v290
      %v754 = vunpack.c.l.b16 %v291
      %v755 = vunpack.c.h.b16 %v291
      %v756 = vunpack.c.l.b16 %v292
      %v757 = vunpack.c.h.b16 %v292
      %v758 = vunpack.c.l.b16 %v293
      %v759 = vunpack.c.h.b16 %v293
      %v760 = vunpack.c.l.b16 %v294
      %v761 = vunpack.c.h.b16 %v294
      %v762 = vunpack.c.l.b16 %v295
      %v763 = vunpack.c.h.b16 %v295
      %v764 = vunpack.c.l.b16 %v296
      %v765 = vunpack.c.l.b16 %v297
      %v766 = vunpack.c.h.b16 %v297
      %v767 = vunpack.c.l.b16 %v298
      %v768 = vunpack.c.h.b16 %v298
      %v769 = vunpack.c.l.b16 %v299
      %v770 = vunpack.c.h.b16 %v299
      %v771 = vunpack.c.l.b16 %v300
      %v772 = vunpack.c.h.b16 %v300
      %v773 = vunpack.c.l.b16 %v301
      %v774 = vunpack.c.h.b16 %v301
      %v775 = vunpack.c.l.b16 %v302
      %v776 = vunpack.c.h.b16 %v302
      %v777 = vunpack.c.l.b16 %v303
      %v778 = vunpack.c.l.b16 %v304
      %v779 = vunpack.c.h.b16 %v304
      %v780 = vunpack.c.l.b16 %v305
      %v781 = vunpack.c.h.b16 %v305
      %v782 = vunpack.c.l.b16 %v306
      %v783 = vunpack.c.h.b16 %v306
      %v784 = vunpack.c.l.b16 %v307
      %v785 = vunpack.c.h.b16 %v307
      %v786 = vunpack.c.l.b16 %v308
      %v787 = vunpack.c.h.b16 %v308
      %v788 = vunpack.c.l.b16 %v309
      %v789 = vunpack.c.h.b16 %v309
      %v790 = vunpack.c.l.b16 %v310
      %v791 = vunpack.c.l.b16 %v311
      %v792 = vunpack.c.h.b16 %v311
      %v793 = vunpack.c.l.b16 %v312
      %v794 = vunpack.c.h.b16 %v312
      %v795 = vunpack.c.l.b16 %v313
      %v796 = vunpack.c.h.b16 %v313
      %v797 = vunpack.c.l.b16 %v314
      %v798 = vunpack.c.h.b16 %v314
      %v799 = vunpack.c.l.b16 %v315
      %v800 = vunpack.c.h.b16 %v315
      %v801 = vunpack.c.l.b16 %v316
      %v802 = vunpack.c.h.b16 %v316
      %v803 = vunpack.c.l.b16 %v317
      %v804 = vunpack.c.l.b16 %v318
      %v805 = vunpack.c.h.b16 %v318
      %v806 = vunpack.c.l.b16 %v319
      %v807 = vunpack.c.h.b16 %v319
      %v808 = vunpack.c.l.b16 %v320
      %v809 = vunpack.c.h.b16 %v320
      %v810 = vunpack.c.l.b16 %v321
      %v811 = vunpack.c.h.b16 %v321
      %v812 = vunpack.c.l.b16 %v322
      %v813 = vunpack.c.h.b16 %v322
      %v814 = vunpack.c.l.b16 %v323
      %v815 = vunpack.c.h.b16 %v323
      %v816 = vunpack.c.l.b16 %v324
      %v817 = vunpack.c.l.b16 %v325
      %v818 = vunpack.c.h.b16 %v325
      %v819 = vunpack.c.l.b16 %v326
      %v820 = vunpack.c.h.b16 %v326
      %v821 = vunpack.c.l.b16 %v327
      %v822 = vunpack.c.h.b16 %v327
      %v823 = vunpack.c.l.b16 %v328
      %v824 = vunpack.c.h.b16 %v328
      %v825 = vunpack.c.l.b16 %v329
      %v826 = vunpack.c.h.b16 %v329
      %v827 = vunpack.c.l.b16 %v330
      %v828 = vunpack.c.h.b16 %v330
      %v829 = vunpack.c.l.b16 %v331
      %v830 = vunpack.c.l.b16 %v332
      %v831 = vunpack.c.h.b16 %v332
      %v832 = vunpack.c.l.b16 %v333
      %v833 = vunpack.c.h.b16 %v333
      %v834 = vunpack.c.l.b16 %v334
      %v835 = vunpack.c.h.b16 %v334
      %v836 = vunpack.c.l.b16 %v335
      %v837 = vunpack.c.h.b16 %v335
      %v838 = vunpack.c.l.b16 %v336
      %v839 = vunpack.c.h.b16 %v336
      %v840 = vunpack.c.l.b16 %v337
      %v841 = vunpack.c.h.b16 %v337
      %v842 = vunpack.c.l.b16 %v338
      %v843 = vunpack.c.l.b16 %v339
      %v844 = vunpack.c.h.b16 %v339
      %v845 = vunpack.c.l.b16 %v340
      %v846 = vunpack.c.h.b16 %v340
      %v847 = vunpack.c.l.b16 %v341
      %v848 = vunpack.c.h.b16 %v341
      %v849 = vunpack.c.l.b16 %v342
      %v850 = vunpack.c.h.b16 %v342
      %v851 = vunpack.c.l.b16 %v343
      %v852 = vunpack.c.h.b16 %v343
      %v853 = vunpack.c.l.b16 %v344
      %v854 = vunpack.c.h.b16 %v344
      %v855 = vunpack.c.l.b16 %v345
      %v856 = vunpack.c.l.b16 %v346
      %v857 = vunpack.c.h.b16 %v346
      %v858 = vunpack.c.l.b16 %v347
      %v859 = vunpack.c.h.b16 %v347
      %v860 = vunpack.c.l.b16 %v348
      %v861 = vunpack.c.h.b16 %v348
      %v862 = vunpack.c.l.b16 %v349
      %v863 = vunpack.c.h.b16 %v349
      %v864 = vunpack.c.l.b16 %v350
      %v865 = vunpack.c.h.b16 %v350
      %v866 = vunpack.c.l.b16 %v351
      %v867 = vunpack.c.h.b16 %v351
      %v868 = vunpack.c.l.b16 %v352
      %v869 = vpack.c.b16 %v674, %v661
      %v870 = vpack.c.b16 %v675, %v662
      %v871 = vpack.c.b16 %v676, %v663
      %v872 = vpack.c.b16 %v677, %v664
      %v873 = vpack.c.b16 %v678, %v665
      %v874 = vpack.c.b16 %v679, %v666
      %v875 = vpack.c.b16 %v680, %v667
      %v876 = vpack.c.b16 %v681, %v668
      %v877 = vpack.c.b16 %v682, %v669
      %v878 = vpack.c.b16 %v683, %v670
      %v879 = vpack.c.b16 %v684, %v671
      %v880 = vpack.c.b16 %v685, %v672
      %v881 = vpack.c.b16 %v686, %v673
      %v882 = vpack.c.b16 %v700, %v687
      %v883 = vpack.c.b16 %v701, %v688
      %v884 = vpack.c.b16 %v702, %v689
      %v885 = vpack.c.b16 %v703, %v690
      %v886 = vpack.c.b16 %v704, %v691
      %v887 = vpack.c.b16 %v705, %v692
      %v888 = vpack.c.b16 %v706, %v693
      %v889 = vpack.c.b16 %v707, %v694
      %v890 = vpack.c.b16 %v708, %v695
      %v891 = vpack.c.b16 %v709, %v696
      %v892 = vpack.c.b16 %v710, %v697
      %v893 = vpack.c.b16 %v711, %v698
      %v894 = vpack.c.b16 %v712, %v699
      %v895 = vpack.c.b16 %v726, %v713
      %v896 = vpack.c.b16 %v727, %v714
      %v897 = vpack.c.b16 %v728, %v715
      %v898 = vpack.c.b16 %v729, %v716
      %v899 = vpack.c.b16 %v730, %v717
      %v900 = vpack.c.b16 %v731, %v718
      %v901 = vpack.c.b16 %v732, %v719
      %v902 = vpack.c.b16 %v733, %v720
      %v903 = vpack.c.b16 %v734, %v721
      %v904 = vpack.c.b16 %v735, %v722
      %v905 = vpack.c.b16 %v736, %v723
      %v906 = vpack.c.b16 %v737, %v724
      %v907 = vpack.c.b16 %v738, %v725
      %v908 = vpack.c.b16 %v752, %v739
      %v909 = vpack.c.b16 %v753, %v740
      %v910 = vpack.c.b16 %v754, %v741
      %v911 = vpack.c.b16 %v755, %v742
      %v912 = vpack.c.b16 %v756, %v743
      %v913 = vpack.c.b16 %v757, %v744
      %v914 = vpack.c.b16 %v758, %v745
      %v915 = vpack.c.b16 %v759, %v746
      %v916 = vpack.c.b16 %v760, %v747
      %v917 = vpack.c.b16 %v761, %v748
      %v918 = vpack.c.b16 %v762, %v749
      %v919 = vpack.c.b16 %v763, %v750
      %v920 = vpack.c.b16 %v764, %v751
      %v921 = vpack.c.b16 %v778, %v765
      %v922 = vpack.c.b16 %v779, %v766
      %v923 = vpack.c.b16 %v780, %v767
      %v924 = vpack.c.b16 %v781, %v768
      %v925 = vpack.c.b16 %v782, %v769
      %v926 = vpack.c.b16 %v783, %v770
      %v927 = vpack.c.b16 %v784, %v771
      %v928 = vpack.c.b16 %v785, %v772
      %v929 = vpack.c.b16 %v786, %v773
      %v930 = vpack.c.b16 %v787, %v774
      %v931 = vpack.c.b16 %v788, %v775
      %v932 = vpack.c.b16 %v789, %v776
      %v933 = vpack.c.b16 %v790, %v777
      %v934 = vpack.c.b16 %v804, %v791
      %v935 = vpack.c.b16 %v805, %v792
      %v936 = vpack.c.b16 %v806, %v793
      %v937 = vpack.c.b16 %v807, %v794
      %v938 = vpack.c.b16 %v808, %v795
      %v939 = vpack.c.b16 %v809, %v796
      %v940 = vpack.c.b16 %v810, %v797
      %v941 = vpack.c.b16 %v811, %v798
      %v942 = vpack.c.b16 %v812, %v799
      %v943 = vpack.c.b16 %v813, %v800
      %v944 = vpack.c.b16 %v814, %v801
      %v945 = vpack.c.b16 %v815, %v802
      %v946 = vpack.c.b16 %v816, %v803
      %v947 = vpack.c.b16 %v830, %v817
      %v948 = vpack.c.b16 %v831, %v818
      %v949 = vpack.c.b16 %v832, %v819
      %v950 = vpack.c.b16 %v833, %v820
      %v951 = vpack.c.b16 %v834, %v821
      %v952 = vpack.c.b16 %v835, %v822
      %v953 = vpack.c.b16 %v836, %v823
      %v954 = vpack.c.b16 %v837, %v824
      %v955 = vpack.c.b16 %v838, %v825
      %v956 = vpack.c.b16 %v839, %v826
      %v957 = vpack.c.b16 %v840, %v827
      %v958 = vpack.c.b16 %v841, %v828
      %v959 = vpack.c.b16 %v842, %v829
      %v960 = vpack.c.b16 %v856, %v843
      %v961 = vpack.c.b16 %v857, %v844
      %v962 = vpack.c.b16 %v858, %v845
      %v963 = vpack.c.b16 %v859, %v846
      %v964 = vpack.c.b16 %v860, %v847
      %v965 = vpack.c.b16 %v861, %v848
      %v966 = vpack.c.b16 %v862, %v849
      %v967 = vpack.c.b16 %v863, %v850
      %v968 = vpack.c.b16 %v864, %v851
      %v969 = vpack.c.b16 %v865, %v852
      %v970 = vpack.c.b16 %v866, %v853
      %v971 = vpack.c.b16 %v867, %v854
      %v972 = vpack.c.b16 %v868, %v855
      %v1265 = vunpack.c.l.b16 %v353
      %v1266 = vunpack.c.l.b16 %v354
      %v1267 = vunpack.c.l.b16 %v355
      %v1268 = vunpack.c.l.b16 %v356
      %v1269 = vunpack.c.l.b16 %v357
      %v1270 = vunpack.c.l.b16 %v358
      %v1271 = vunpack.c.l.b16 %v359
      %v1272 = vunpack.c.l.b16 %v360
      %v1273 = vunpack.c.l.b16 %v361
      %v1274 = vunpack.c.l.b16 %v362
      %v1275 = vunpack.c.l.b16 %v363
      %v1276 = vunpack.c.l.b16 %v364
      %v1277 = vunpack.c.l.b16 %v365
      %v1278 = vunpack.c.l.b16 %v366
      %v1279 = vunpack.c.l.b16 %v367
      %v1280 = vunpack.c.l.b16 %v368
      %v1281 = vunpack.c.l.b16 %v369
      %v1282 = vunpack.c.l.b16 %v370
      %v1283 = vunpack.c.l.b16 %v371
      %v1284 = vunpack.c.l.b16 %v372
      %v1285 = vunpack.c.l.b16 %v373
      %v1286 = vunpack.c.l.b16 %v374
      %v1287 = vunpack.c.l.b16 %v375
      %v1288 = vunpack.c.l.b16 %v376
      %v1289 = vunpack.c.l.b16 %v377
      %v1290 = vunpack.c.l.b16 %v378
      %v1291 = vunpack.c.l.b16 %v379
      %v1292 = vunpack.c.l.b16 %v380
      %v1293 = vunpack.c.l.b16 %v381
      %v1294 = vunpack.c.l.b16 %v382
      %v1295 = vunpack.c.l.b16 %v383
      %v1296 = vunpack.c.l.b16 %v384
      %v1297 = vunpack.c.l.b16 %v385
      %v1298 = vunpack.c.l.b16 %v386
      %v1299 = vunpack.c.l.b16 %v387
      %v1300 = vunpack.c.l.b16 %v388
      %v1301 = vunpack.c.l.b16 %v389
      %v1302 = vunpack.c.l.b16 %v390
      %v1303 = vunpack.c.l.b16 %v391
      %v1304 = vunpack.c.l.b16 %v392
      %v1305 = vunpack.c.l.b16 %v393
      %v1306 = vunpack.c.l.b16 %v394
      %v1307 = vunpack.c.l.b16 %v395
      %v1308 = vunpack.c.l.b16 %v396
      %v1309 = vunpack.c.l.b16 %v397
      %v1310 = vunpack.c.l.b16 %v398
      %v1311 = vunpack.c.l.b16 %v399
      %v1312 = vunpack.c.l.b16 %v400
      %v1313 = vunpack.c.l.b16 %v401
      %v1314 = vunpack.c.l.b16 %v402
      %v1315 = vunpack.c.l.b16 %v403
      %v1316 = vunpack.c.l.b16 %v404
      %v1317 = vunpack.c.l.b16 %v405
      %v1318 = vunpack.c.l.b16 %v406
      %v1319 = vunpack.c.l.b16 %v407
      %v1320 = vunpack.c.l.b16 %v408
      %v1321 = vunpack.c.l.b16 %v409
      %v1322 = vunpack.c.l.b16 %v410
      %v1323 = vunpack.c.l.b16 %v411
      %v1324 = vunpack.c.l.b16 %v412
      %v1325 = vunpack.c.l.b16 %v413
      %v1326 = vunpack.c.l.b16 %v414
      %v1327 = vunpack.c.l.b16 %v415
      %v1328 = vunpack.c.l.b16 %v416
      %v1329 = vunpack.c.l.b16 %v417
      %v1330 = vunpack.c.l.b16 %v418
      %v1331 = vunpack.c.l.b16 %v419
      %v1332 = vunpack.c.l.b16 %v420
      %v1333 = vunpack.c.l.b16 %v421
      %v1334 = vunpack.c.l.b16 %v422
      %v1335 = vunpack.c.l.b16 %v423
      %v1336 = vunpack.c.l.b16 %v424
      %v1337 = vunpack.c.l.b16 %v425
      %v1338 = vunpack.c.l.b16 %v426
      %v1339 = vunpack.c.l.b16 %v427
      %v1340 = vunpack.c.l.b16 %v428
      %v1341 = vunpack.c.l.b16 %v429
      %v1342 = vunpack.c.l.b16 %v430
      %v1343 = vunpack.c.l.b16 %v431
      %v1344 = vunpack.c.l.b16 %v432
      %v1345 = vunpack.c.l.b16 %v433
      %v1346 = vunpack.c.l.b16 %v434
      %v1347 = vunpack.c.l.b16 %v435
      %v1348 = vunpack.c.l.b16 %v436
      %v1349 = vunpack.c.l.b16 %v437
      %v1350 = vunpack.c.l.b16 %v438
      %v1351 = vunpack.c.l.b16 %v439
      %v1352 = vunpack.c.l.b16 %v440
      %v1353 = vunpack.c.l.b16 %v441
      %v1354 = vunpack.c.l.b16 %v442
      %v1355 = vunpack.c.l.b16 %v443
      %v1356 = vunpack.c.l.b16 %v444
      %v1357 = vunpack.c.l.b16 %v445
      %v1358 = vunpack.c.l.b16 %v446
      %v1359 = vunpack.c.l.b16 %v447
      %v1360 = vunpack.c.l.b16 %v448
      %v1361 = vunpack.c.l.b16 %v449
      %v1362 = vunpack.c.l.b16 %v450
      %v1363 = vunpack.c.l.b16 %v451
      %v1364 = vunpack.c.l.b16 %v452
      %v1365 = vunpack.c.l.b16 %v453
      %v1366 = vunpack.c.l.b16 %v454
      %v1367 = vunpack.c.l.b16 %v455
      %v1368 = vunpack.c.l.b16 %v456
      %v1369 = vunpack.c.l.b16 %v457
      %v1370 = vunpack.c.l.b16 %v458
      %v1371 = vunpack.c.l.b16 %v459
      %v1372 = vunpack.c.l.b16 %v460
      %v1373 = vunpack.c.l.b16 %v461
      %v1374 = vunpack.c.l.b16 %v462
      %v1375 = vunpack.c.l.b16 %v463
      %v1376 = vunpack.c.l.b16 %v464
      %v1377 = vunpack.c.l.b16 %v465
      %v1378 = vunpack.c.l.b16 %v466
      %v1379 = vunpack.c.l.b16 %v467
      %v1380 = vunpack.c.l.b16 %v468
      %v1381 = vunpack.c.l.b16 %v469
      %v1382 = vunpack.c.l.b16 %v470
      %v1383 = vunpack.c.l.b16 %v471
      %v1384 = vunpack.c.l.b16 %v472
      %v1385 = vunpack.c.l.b16 %v473
      %v1386 = vunpack.c.l.b16 %v474
      %v1387 = vunpack.c.l.b16 %v475
      %v1388 = vunpack.c.l.b16 %v476
      %v1389 = vunpack.c.l.b16 %v477
      %v1390 = vunpack.c.l.b16 %v478
      %v1391 = vunpack.c.l.b16 %v479
      %v1392 = vunpack.c.l.b16 %v480
      %v1393 = vunpack.c.l.b16 %v481
      %v1394 = vunpack.c.l.b16 %v482
      %v1395 = vunpack.c.l.b16 %v483
      %v1396 = vunpack.c.l.b16 %v484
      %v1397 = vunpack.c.l.b16 %v485
      %v1398 = vunpack.c.l.b16 %v486
      %v1399 = vunpack.c.l.b16 %v487
      %v1400 = vunpack.c.l.b16 %v488
      %v1401 = vunpack.c.l.b16 %v489
      %v1402 = vunpack.c.l.b16 %v490
      %v1403 = vunpack.c.l.b16 %v491
      %v1404 = vunpack.c.l.b16 %v492
      %v1405 = vunpack.c.l.b16 %v493
      %v1406 = vunpack.c.l.b16 %v494
      %v1407 = vunpack.c.l.b16 %v495
      %v1408 = vunpack.c.l.b16 %v496
      %v1409 = vunpack.c.l.b16 %v497
      %v1410 = vunpack.c.l.b16 %v498
      %v1411 = vunpack.c.l.b16 %v499
      %v1412 = vunpack.c.l.b16 %v500
      %v1413 = vunpack.c.l.b16 %v501
      %v1414 = vunpack.c.l.b16 %v502
      %v1415 = vunpack.c.l.b16 %v503
      %v1416 = vunpack.c.l.b16 %v504
      %v1417 = vunpack.c.l.b16 %v505
      %v1418 = vunpack.c.l.b16 %v506
      %v1419 = vunpack.c.l.b16 %v507
      %v1420 = vunpack.c.l.b16 %v508
      %v1421 = vunpack.c.l.b16 %v509
      %v1422 = vunpack.c.l.b16 %v510
      %v1423 = vunpack.c.l.b16 %v511
      %v1424 = vunpack.c.l.b16 %v512
      %v1425 = vunpack.c.l.b16 %v513
      %v1426 = vunpack.c.l.b16 %v514
      %v1427 = vunpack.c.l.b16 %v515
      %v1428 = vunpack.c.l.b16 %v516
      %v1429 = vunpack.c.l.b16 %v517
      %v1430 = vunpack.c.l.b16 %v518
      %v1431 = vunpack.c.l.b16 %v519
      %v1432 = vunpack.c.l.b16 %v520
      %v1433 = vunpack.c.l.b16 %v521
      %v1434 = vunpack.c.l.b16 %v522
      %v1435 = vunpack.c.l.b16 %v523
      %v1436 = vunpack.c.l.b16 %v524
      %v1437 = vunpack.c.l.b16 %v525
      %v1438 = vunpack.c.l.b16 %v526
      %v1439 = vunpack.c.l.b16 %v527
      %v1440 = vunpack.c.l.b16 %v528
      %v1441 = vunpack.c.l.b16 %v529
      %v1442 = vunpack.c.l.b16 %v530
      %v1443 = vunpack.c.l.b16 %v531
      %v1444 = vunpack.c.l.b16 %v532
      %v1445 = vunpack.c.l.b16 %v533
      %v1446 = vunpack.c.l.b16 %v534
      %v1447 = vunpack.c.l.b16 %v535
      %v1448 = vunpack.c.l.b16 %v536
      %v1449 = vunpack.c.l.b16 %v537
      %v1450 = vunpack.c.l.b16 %v538
      %v1451 = vunpack.c.l.b16 %v539
      %v1452 = vunpack.c.l.b16 %v540
      %v1453 = vunpack.c.l.b16 %v541
      %v1454 = vunpack.c.l.b16 %v542
      %v1455 = vunpack.c.l.b16 %v543
      %v1456 = vunpack.c.l.b16 %v544
      %v1457 = vunpack.c.l.b16 %v545
      %v1458 = vunpack.c.l.b16 %v546
      %v1459 = vunpack.c.l.b16 %v547
      %v1460 = vunpack.c.l.b16 %v548
      %v1461 = vpack.c.b16 %v1266, %v1265
      %v1462 = vpack.c.b16 %v1268, %v1267
      %v1463 = vpack.c.b16 %v1270, %v1269
      %v1464 = vpack.c.b16 %v1272, %v1271
      %v1465 = vpack.c.b16 %v1274, %v1273
      %v1466 = vpack.c.b16 %v1276, %v1275
      %v1467 = vpack.c.b16 %v1278, %v1277
      %v1468 = vpack.c.b16 %v1280, %v1279
      %v1469 = vpack.c.b16 %v1282, %v1281
      %v1470 = vpack.c.b16 %v1284, %v1283
      %v1471 = vpack.c.b16 %v1286, %v1285
      %v1472 = vpack.c.b16 %v1288, %v1287
      %v1473 = vpack.c.b16 %v1290, %v1289
      %v1474 = vpack.c.b16 %v1292, %v1291
      %v1475 = vpack.c.b16 %v1294, %v1293
      %v1476 = vpack.c.b16 %v1296, %v1295
      %v1477 = vpack.c.b16 %v1298, %v1297
      %v1478 = vpack.c.b16 %v1300, %v1299
      %v1479 = vpack.c.b16 %v1302, %v1301
      %v1480 = vpack.c.b16 %v1304, %v1303
      %v1481 = vpack.c.b16 %v1306, %v1305
      %v1482 = vpack.c.b16 %v1308, %v1307
      %v1483 = vpack.c.b16 %v1310, %v1309
      %v1484 = vpack.c.b16 %v1312, %v1311
      %v1485 = vpack.c.b16 %v1314, %v1313
      %v1486 = vpack.c.b16 %v1316, %v1315
      %v1487 = vpack.c.b16 %v1318, %v1317
      %v1488 = vpack.c.b16 %v1320, %v1319
      %v1489 = vpack.c.b16 %v1322, %v1321
      %v1490 = vpack.c.b16 %v1324, %v1323
      %v1491 = vpack.c.b16 %v1326, %v1325
      %v1492 = vpack.c.b16 %v1328, %v1327
      %v1493 = vpack.c.b16 %v1330, %v1329
      %v1494 = vpack.c.b16 %v1332, %v1331
      %v1495 = vpack.c.b16 %v1334, %v1333
      %v1496 = vpack.c.b16 %v1336, %v1335
      %v1497 = vpack.c.b16 %v1338, %v1337
      %v1498 = vpack.c.b16 %v1340, %v1339
      %v1499 = vpack.c.b16 %v1342, %v1341
      %v1500 = vpack.c.b16 %v1344, %v1343
      %v1501 = vpack.c.b16 %v1346, %v1345
      %v1502 = vpack.c.b16 %v1348, %v1347
      %v1503 = vpack.c.b16 %v1350, %v1349
      %v1504 = vpack.c.b16 %v1352, %v1351
      %v1505 = vpack.c.b16 %v1354, %v1353
      %v1506 = vpack.c.b16 %v1356, %v1355
      %v1507 = vpack.c.b16 %v1358, %v1357
      %v1508 = vpack.c.b16 %v1360, %v1359
      %v1509 = vpack.c.b16 %v1362, %v1361
      %v1510 = vpack.c.b16 %v1364, %v1363
      %v1511 = vpack.c.b16 %v1366, %v1365
      %v1512 = vpack.c.b16 %v1368, %v1367
      %v1513 = vpack.c.b16 %v1370, %v1369
      %v1514 = vpack.c.b16 %v1372, %v1371
      %v1515 = vpack.c.b16 %v1374, %v1373
      %v1516 = vpack.c.b16 %v1376, %v1375
      %v1517 = vpack.c.b16 %v1378, %v1377
      %v1518 = vpack.c.b16 %v1380, %v1379
      %v1519 = vpack.c.b16 %v1382, %v1381
      %v1520 = vpack.c.b16 %v1384, %v1383
      %v1521 = vpack.c.b16 %v1386, %v1385
      %v1522 = vpack.c.b16 %v1388, %v1387
      %v1523 = vpack.c.b16 %v1390, %v1389
      %v1524 = vpack.c.b16 %v1392, %v1391
      %v1525 = vpack.c.b16 %v1394, %v1393
      %v1526 = vpack.c.b16 %v1396, %v1395
      %v1527 = vpack.c.b16 %v1398, %v1397
      %v1528 = vpack.c.b16 %v1400, %v1399
      %v1529 = vpack.c.b16 %v1402, %v1401
      %v1530 = vpack.c.b16 %v1404, %v1403
      %v1531 = vpack.c.b16 %v1406, %v1405
      %v1532 = vpack.c.b16 %v1408, %v1407
      %v1533 = vpack.c.b16 %v1410, %v1409
      %v1534 = vpack.c.b16 %v1412, %v1411
      %v1535 = vpack.c.b16 %v1414, %v1413
      %v1536 = vpack.c.b16 %v1416, %v1415
      %v1537 = vpack.c.b16 %v1418, %v1417
      %v1538 = vpack.c.b16 %v1420, %v1419
      %v1539 = vpack.c.b16 %v1422, %v1421
      %v1540 = vpack.c.b16 %v1424, %v1423
      %v1541 = vpack.c.b16 %v1426, %v1425
      %v1542 = vpack.c.b16 %v1428, %v1427
      %v1543 = vpack.c.b16 %v1430, %v1429
      %v1544 = vpack.c.b16 %v1432, %v1431
      %v1545 = vpack.c.b16 %v1434, %v1433
      %v1546 = vpack.c.b16 %v1436, %v1435
      %v1547 = vpack.c.b16 %v1438, %v1437
      %v1548 = vpack.c.b16 %v1440, %v1439
      %v1549 = vpack.c.b16 %v1442, %v1441
      %v1550 = vpack.c.b16 %v1444, %v1443
      %v1551 = vpack.c.b16 %v1446, %v1445
      %v1552 = vpack.c.b16 %v1448, %v1447
      %v1553 = vpack.c.b16 %v1450, %v1449
      %v1554 = vpack.c.b16 %v1452, %v1451
      %v1555 = vpack.c.b16 %v1454, %v1453
      %v1556 = vpack.c.b16 %v1456, %v1455
      %v1557 = vpack.c.b16 %v1458, %v1457
      %v1558 = vpack.c.b16 %v1460, %v1459
      %vm1657 = vcmask 261120
      %v1659 = vsel %vm1657, %v881, 0
      %v1662 = vsel %vm1657, %v894, 0
      %v1665 = vsel %vm1657, %v907, 0
      %v1668 = vsel %vm1657, %v920, 0
      %v1671 = vsel %vm1657, %v933, 0
      %v1674 = vsel %vm1657, %v946, 0
      %v1677 = vsel %vm1657, %v959, 0
      %v1680 = vsel %vm1657, %v972, 0
      %1682 = vmatprep.subr.bf16.mxu0 0
      %1683 = vmatpush1.bf16.msra.mxu0 %v1461
      %1684 = vmatprep.subr.bf16.mxu0 0
      %1685 = vmatpush1.bf16.msra.mxu0 %v1462
      %1686 = vmatprep.subr.bf16.mxu0 0
      %1687 = vmatpush1.bf16.msra.mxu0 %v1463
      %1688 = vmatprep.subr.bf16.mxu0 0
      %1689 = vmatpush1.bf16.msra.mxu0 %v1464
      %1690 = vmatprep.subr.bf16.mxu0 0
      %1691 = vmatpush1.bf16.msra.mxu0 %v1465
      %1692 = vmatprep.subr.bf16.mxu0 0
      %1693 = vmatpush1.bf16.msra.mxu0 %v1466
      %1694 = vmatprep.subr.bf16.mxu0 0
      %1695 = vmatpush1.bf16.msra.mxu0 %v1467
      %1696 = vmatprep.subr.bf16.mxu0 0
      %1697 = vmatpush1.bf16.msra.mxu0 %v1468
      %1698 = vmatprep.subr.bf16.mxu0 0
      %1699 = vmatpush1.bf16.msra.mxu0 %v1469
      %1700 = vmatprep.subr.bf16.mxu0 0
      %1701 = vmatpush1.bf16.msra.mxu0 %v1470
      %1702 = vmatprep.subr.bf16.mxu0 0
      %1703 = vmatpush1.bf16.msra.mxu0 %v1471
      %1704 = vmatprep.subr.bf16.mxu0 0
      %1705 = vmatpush1.bf16.msra.mxu0 %v1472
      %1706 = vmatprep.subr.bf16.mxu0 0
      %1707 = vmatpush1.bf16.msra.mxu0 %v1473
      %1708 = vmatprep.subr.bf16.mxu0 0
      %1709 = vmatpush1.bf16.msra.mxu0 %v1474
      %1710 = vmatprep.subr.bf16.mxu0 0
      %1711 = vmatpush1.bf16.msra.mxu0 %v1475
      %1712 = vmatprep.subr.bf16.mxu0 0
      %1713 = vmatpush1.bf16.msra.mxu0 %v1476
      %1714 = vmatprep.mubr.bf16.mxu0 %v870
      %1715 = vmatmul.mubr.bf16.gmra.mrb[0].mxu0 %v869
      %v1716 = vpop.f32.mrb[0].mxu0
      %v1717 = vadd.f32 0.0, %v1716
      %v1718 = vpop.f32.mrb[0].mxu0
      %v1719 = vpop.f32.mrb[0].mxu0
      %v1720 = vadd.f32 0.0, %v1719
      %v1721 = vpop.f32.mrb[0].mxu0
      %1722 = vmatprep.mubr.bf16.mxu0 %v883
      %1723 = vmatmul.mubr.bf16.gmra.mrb[0].mxu0 %v882
      %v1724 = vpop.f32.mrb[0].mxu0
      %v1725 = vadd.f32 0.0, %v1724
      %v1726 = vpop.f32.mrb[0].mxu0
      %v1727 = vpop.f32.mrb[0].mxu0
      %v1728 = vadd.f32 0.0, %v1727
      %v1729 = vpop.f32.mrb[0].mxu0
      %1730 = vmatprep.mubr.bf16.mxu0 %v896
      %1731 = vmatmul.mubr.bf16.gmra.mrb[0].mxu0 %v895
      %v1732 = vpop.f32.mrb[0].mxu0
      %v1733 = vadd.f32 0.0, %v1732
      %v1734 = vpop.f32.mrb[0].mxu0
      %v1735 = vpop.f32.mrb[0].mxu0
      %v1736 = vadd.f32 0.0, %v1735
      %v1737 = vpop.f32.mrb[0].mxu0
      %1738 = vmatprep.mubr.bf16.mxu0 %v909
      %1739 = vmatmul.mubr.bf16.gmra.mrb[0].mxu0 %v908
      %v1740 = vpop.f32.mrb[0].mxu0
      %v1741 = vadd.f32 0.0, %v1740
      %v1742 = vpop.f32.mrb[0].mxu0
      %v1743 = vpop.f32.mrb[0].mxu0
      %v1744 = vadd.f32 0.0, %v1743
      %v1745 = vpop.f32.mrb[0].mxu0
      %1746 = vmatprep.mubr.bf16.mxu0 %v922
      %1747 = vmatmul.mubr.bf16.gmra.mrb[0].mxu0 %v921
      %v1748 = vpop.f32.mrb[0].mxu0
      %v1749 = vadd.f32 0.0, %v1748
      %v1750 = vpop.f32.mrb[0].mxu0
      %v1751 = vpop.f32.mrb[0].mxu0
      %v1752 = vadd.f32 0.0, %v1751
      %v1753 = vpop.f32.mrb[0].mxu0
      %1754 = vmatprep.mubr.bf16.mxu0 %v935
      %1755 = vmatmul.mubr.bf16.gmra.mrb[0].mxu0 %v934
      %v1756 = vpop.f32.mrb[0].mxu0
      %v1757 = vadd.f32 0.0, %v1756
      %v1758 = vpop.f32.mrb[0].mxu0
      %v1759 = vpop.f32.mrb[0].mxu0
      %v1760 = vadd.f32 0.0, %v1759
      %v1761 = vpop.f32.mrb[0].mxu0
      %1762 = vmatprep.mubr.bf16.mxu0 %v948
      %1763 = vmatmul.mubr.bf16.gmra.mrb[0].mxu0 %v947
      %v1764 = vpop.f32.mrb[0].mxu0
      %v1765 = vadd.f32 0.0, %v1764
      %v1766 = vpop.f32.mrb[0].mxu0
      %v1767 = vpop.f32.mrb[0].mxu0
      %v1768 = vadd.f32 0.0, %v1767
      %v1769 = vpop.f32.mrb[0].mxu0
      %1770 = vmatprep.mubr.bf16.mxu0 %v961
      %1771 = vmatmul.mubr.bf16.gmra.mrb[0].mxu0 %v960
      %v1772 = vpop.f32.mrb[0].mxu0
      %v1773 = vadd.f32 0.0, %v1772
      %v1774 = vpop.f32.mrb[0].mxu0
      %v1775 = vpop.f32.mrb[0].mxu0
      %v1776 = vadd.f32 0.0, %v1775
      %v1777 = vpop.f32.mrb[0].mxu0
      %1778 = vdwg.mxu0
      %1779 = vmatprep.subr.bf16.mxu0 0
      %1780 = vmatpush1.bf16.msra.mxu0 %v1477
      %1781 = vmatprep.subr.bf16.mxu0 0
      %1782 = vmatpush1.bf16.msra.mxu0 %v1478
      %1783 = vmatprep.subr.bf16.mxu0 0
      %1784 = vmatpush1.bf16.msra.mxu0 %v1479
      %1785 = vmatprep.subr.bf16.mxu0 0
      %1786 = vmatpush1.bf16.msra.mxu0 %v1480
      %1787 = vmatprep.subr.bf16.mxu0 0
      %1788 = vmatpush1.bf16.msra.mxu0 %v1481
      %1789 = vmatprep.subr.bf16.mxu0 0
      %1790 = vmatpush1.bf16.msra.mxu0 %v1482
      %1791 = vmatprep.subr.bf16.mxu0 0
      %1792 = vmatpush1.bf16.msra.mxu0 %v1483
      %1793 = vmatprep.subr.bf16.mxu0 0
      %1794 = vmatpush1.bf16.msra.mxu0 %v1484
      %1795 = vmatprep.subr.bf16.mxu0 0
      %1796 = vmatpush1.bf16.msra.mxu0 %v1485
      %1797 = vmatprep.subr.bf16.mxu0 0
      %1798 = vmatpush1.bf16.msra.mxu0 %v1486
      %1799 = vmatprep.subr.bf16.mxu0 0
      %1800 = vmatpush1.bf16.msra.mxu0 %v1487
      %1801 = vmatprep.subr.bf16.mxu0 0
      %1802 = vmatpush1.bf16.msra.mxu0 %v1488
      %1803 = vmatprep.subr.bf16.mxu0 0
      %1804 = vmatpush1.bf16.msra.mxu0 %v1489
      %1805 = vmatprep.subr.bf16.mxu0 0
      %1806 = vmatpush1.bf16.msra.mxu0 %v1490
      %1807 = vmatprep.subr.bf16.mxu0 0
      %1808 = vmatpush1.bf16.msra.mxu0 %v1491
      %1809 = vmatprep.subr.bf16.mxu0 0
      %1810 = vmatpush1.bf16.msra.mxu0 %v1492
      %1811 = vmatprep.mubr.bf16.mxu0 %v872
      %1812 = vmatmul.mubr.bf16.gmra.mrb[0].mxu0 %v871
      %v1813 = vpop.f32.mrb[0].mxu0
      %v1814 = vadd.f32 %v1717, %v1813
      %v1815 = vpop.f32.mrb[0].mxu0
      %v1816 = vpop.f32.mrb[0].mxu0
      %v1817 = vadd.f32 %v1720, %v1816
      %v1818 = vpop.f32.mrb[0].mxu0
      %1819 = vmatprep.mubr.bf16.mxu0 %v885
      %1820 = vmatmul.mubr.bf16.gmra.mrb[0].mxu0 %v884
      %v1821 = vpop.f32.mrb[0].mxu0
      %v1822 = vadd.f32 %v1725, %v1821
      %v1823 = vpop.f32.mrb[0].mxu0
      %v1824 = vpop.f32.mrb[0].mxu0
      %v1825 = vadd.f32 %v1728, %v1824
      %v1826 = vpop.f32.mrb[0].mxu0
      %1827 = vmatprep.mubr.bf16.mxu0 %v898
      %1828 = vmatmul.mubr.bf16.gmra.mrb[0].mxu0 %v897
      %v1829 = vpop.f32.mrb[0].mxu0
      %v1830 = vadd.f32 %v1733, %v1829
      %v1831 = vpop.f32.mrb[0].mxu0
      %v1832 = vpop.f32.mrb[0].mxu0
      %v1833 = vadd.f32 %v1736, %v1832
      %v1834 = vpop.f32.mrb[0].mxu0
      %1835 = vmatprep.mubr.bf16.mxu0 %v911
      %1836 = vmatmul.mubr.bf16.gmra.mrb[0].mxu0 %v910
      %v1837 = vpop.f32.mrb[0].mxu0
      %v1838 = vadd.f32 %v1741, %v1837
      %v1839 = vpop.f32.mrb[0].mxu0
      %v1840 = vpop.f32.mrb[0].mxu0
      %v1841 = vadd.f32 %v1744, %v1840
      %v1842 = vpop.f32.mrb[0].mxu0
      %1843 = vmatprep.mubr.bf16.mxu0 %v924
      %1844 = vmatmul.mubr.bf16.gmra.mrb[0].mxu0 %v923
      %v1845 = vpop.f32.mrb[0].mxu0
      %v1846 = vadd.f32 %v1749, %v1845
      %v1847 = vpop.f32.mrb[0].mxu0
      %v1848 = vpop.f32.mrb[0].mxu0
      %v1849 = vadd.f32 %v1752, %v1848
      %v1850 = vpop.f32.mrb[0].mxu0
      %1851 = vmatprep.mubr.bf16.mxu0 %v937
      %1852 = vmatmul.mubr.bf16.gmra.mrb[0].mxu0 %v936
      %v1853 = vpop.f32.mrb[0].mxu0
      %v1854 = vadd.f32 %v1757, %v1853
      %v1855 = vpop.f32.mrb[0].mxu0
      %v1856 = vpop.f32.mrb[0].mxu0
      %v1857 = vadd.f32 %v1760, %v1856
      %v1858 = vpop.f32.mrb[0].mxu0
      %1859 = vmatprep.mubr.bf16.mxu0 %v950
      %1860 = vmatmul.mubr.bf16.gmra.mrb[0].mxu0 %v949
      %v1861 = vpop.f32.mrb[0].mxu0
      %v1862 = vadd.f32 %v1765, %v1861
      %v1863 = vpop.f32.mrb[0].mxu0
      %v1864 = vpop.f32.mrb[0].mxu0
      %v1865 = vadd.f32 %v1768, %v1864
      %v1866 = vpop.f32.mrb[0].mxu0
      %1867 = vmatprep.mubr.bf16.mxu0 %v963
      %1868 = vmatmul.mubr.bf16.gmra.mrb[0].mxu0 %v962
      %v1869 = vpop.f32.mrb[0].mxu0
      %v1870 = vadd.f32 %v1773, %v1869
      %v1871 = vpop.f32.mrb[0].mxu0
      %v1872 = vpop.f32.mrb[0].mxu0
      %v1873 = vadd.f32 %v1776, %v1872
      %v1874 = vpop.f32.mrb[0].mxu0
      %1875 = vdwg.mxu0
      %1876 = vmatprep.subr.bf16.mxu0 0
      %1877 = vmatpush1.bf16.msra.mxu0 %v1493
      %1878 = vmatprep.subr.bf16.mxu0 0
      %1879 = vmatpush1.bf16.msra.mxu0 %v1494
      %1880 = vmatprep.subr.bf16.mxu0 0
      %1881 = vmatpush1.bf16.msra.mxu0 %v1495
      %1882 = vmatprep.subr.bf16.mxu0 0
      %1883 = vmatpush1.bf16.msra.mxu0 %v1496
      %1884 = vmatprep.subr.bf16.mxu0 0
      %1885 = vmatpush1.bf16.msra.mxu0 %v1497
      %1886 = vmatprep.subr.bf16.mxu0 0
      %1887 = vmatpush1.bf16.msra.mxu0 %v1498
      %1888 = vmatprep.subr.bf16.mxu0 0
      %1889 = vmatpush1.bf16.msra.mxu0 %v1499
      %1890 = vmatprep.subr.bf16.mxu0 0
      %1891 = vmatpush1.bf16.msra.mxu0 %v1500
      %1892 = vmatprep.subr.bf16.mxu0 0
      %1893 = vmatpush1.bf16.msra.mxu0 %v1501
      %1894 = vmatprep.subr.bf16.mxu0 0
      %1895 = vmatpush1.bf16.msra.mxu0 %v1502
      %1896 = vmatprep.subr.bf16.mxu0 0
      %1897 = vmatpush1.bf16.msra.mxu0 %v1503
      %1898 = vmatprep.subr.bf16.mxu0 0
      %1899 = vmatpush1.bf16.msra.mxu0 %v1504
      %1900 = vmatprep.subr.bf16.mxu0 0
      %1901 = vmatpush1.bf16.msra.mxu0 %v1505
      %1902 = vmatprep.subr.bf16.mxu0 0
      %1903 = vmatpush1.bf16.msra.mxu0 %v1506
      %1904 = vmatprep.subr.bf16.mxu0 0
      %1905 = vmatpush1.bf16.msra.mxu0 %v1507
      %1906 = vmatprep.subr.bf16.mxu0 0
      %1907 = vmatpush1.bf16.msra.mxu0 %v1508
      %1908 = vmatprep.mubr.bf16.mxu0 %v874
      %1909 = vmatmul.mubr.bf16.gmra.mrb[0].mxu0 %v873
      %v1910 = vpop.f32.mrb[0].mxu0
      %v1911 = vadd.f32 %v1814, %v1910
      %v1912 = vpop.f32.mrb[0].mxu0
      %v1913 = vpop.f32.mrb[0].mxu0
      %v1914 = vadd.f32 %v1817, %v1913
      %v1915 = vpop.f32.mrb[0].mxu0
      %1916 = vmatprep.mubr.bf16.mxu0 %v887
      %1917 = vmatmul.mubr.bf16.gmra.mrb[0].mxu0 %v886
      %v1918 = vpop.f32.mrb[0].mxu0
      %v1919 = vadd.f32 %v1822, %v1918
      %v1920 = vpop.f32.mrb[0].mxu0
      %v1921 = vpop.f32.mrb[0].mxu0
      %v1922 = vadd.f32 %v1825, %v1921
      %v1923 = vpop.f32.mrb[0].mxu0
      %1924 = vmatprep.mubr.bf16.mxu0 %v900
      %1925 = vmatmul.mubr.bf16.gmra.mrb[0].mxu0 %v899
      %v1926 = vpop.f32.mrb[0].mxu0
      %v1927 = vadd.f32 %v1830, %v1926
      %v1928 = vpop.f32.mrb[0].mxu0
      %v1929 = vpop.f32.mrb[0].mxu0
      %v1930 = vadd.f32 %v1833, %v1929
      %v1931 = vpop.f32.mrb[0].mxu0
      %1932 = vmatprep.mubr.bf16.mxu0 %v913
      %1933 = vmatmul.mubr.bf16.gmra.mrb[0].mxu0 %v912
      %v1934 = vpop.f32.mrb[0].mxu0
      %v1935 = vadd.f32 %v1838, %v1934
      %v1936 = vpop.f32.mrb[0].mxu0
      %v1937 = vpop.f32.mrb[0].mxu0
      %v1938 = vadd.f32 %v1841, %v1937
      %v1939 = vpop.f32.mrb[0].mxu0
      %1940 = vmatprep.mubr.bf16.mxu0 %v926
      %1941 = vmatmul.mubr.bf16.gmra.mrb[0].mxu0 %v925
      %v1942 = vpop.f32.mrb[0].mxu0
      %v1943 = vadd.f32 %v1846, %v1942
      %v1944 = vpop.f32.mrb[0].mxu0
      %v1945 = vpop.f32.mrb[0].mxu0
      %v1946 = vadd.f32 %v1849, %v1945
      %v1947 = vpop.f32.mrb[0].mxu0
      %1948 = vmatprep.mubr.bf16.mxu0 %v939
      %1949 = vmatmul.mubr.bf16.gmra.mrb[0].mxu0 %v938
      %v1950 = vpop.f32.mrb[0].mxu0
      %v1951 = vadd.f32 %v1854, %v1950
      %v1952 = vpop.f32.mrb[0].mxu0
      %v1953 = vpop.f32.mrb[0].mxu0
      %v1954 = vadd.f32 %v1857, %v1953
      %v1955 = vpop.f32.mrb[0].mxu0
      %1956 = vmatprep.mubr.bf16.mxu0 %v952
      %1957 = vmatmul.mubr.bf16.gmra.mrb[0].mxu0 %v951
      %v1958 = vpop.f32.mrb[0].mxu0
      %v1959 = vadd.f32 %v1862, %v1958
      %v1960 = vpop.f32.mrb[0].mxu0
      %v1961 = vpop.f32.mrb[0].mxu0
      %v1962 = vadd.f32 %v1865, %v1961
      %v1963 = vpop.f32.mrb[0].mxu0
      %1964 = vmatprep.mubr.bf16.mxu0 %v965
      %1965 = vmatmul.mubr.bf16.gmra.mrb[0].mxu0 %v964
      %v1966 = vpop.f32.mrb[0].mxu0
      %v1967 = vadd.f32 %v1870, %v1966
      %v1968 = vpop.f32.mrb[0].mxu0
      %v1969 = vpop.f32.mrb[0].mxu0
      %v1970 = vadd.f32 %v1873, %v1969
      %v1971 = vpop.f32.mrb[0].mxu0
      %1972 = vdwg.mxu0
      %1973 = vmatprep.subr.bf16.mxu0 0
      %1974 = vmatpush1.bf16.msra.mxu0 %v1509
      %1975 = vmatprep.subr.bf16.mxu0 0
      %1976 = vmatpush1.bf16.msra.mxu0 %v1510
      %1977 = vmatprep.subr.bf16.mxu0 0
      %1978 = vmatpush1.bf16.msra.mxu0 %v1511
      %1979 = vmatprep.subr.bf16.mxu0 0
      %1980 = vmatpush1.bf16.msra.mxu0 %v1512
      %1981 = vmatprep.subr.bf16.mxu0 0
      %1982 = vmatpush1.bf16.msra.mxu0 %v1513
      %1983 = vmatprep.subr.bf16.mxu0 0
      %1984 = vmatpush1.bf16.msra.mxu0 %v1514
      %1985 = vmatprep.subr.bf16.mxu0 0
      %1986 = vmatpush1.bf16.msra.mxu0 %v1515
      %1987 = vmatprep.subr.bf16.mxu0 0
      %1988 = vmatpush1.bf16.msra.mxu0 %v1516
      %1989 = vmatprep.subr.bf16.mxu0 0
      %1990 = vmatpush1.bf16.msra.mxu0 %v1517
      %1991 = vmatprep.subr.bf16.mxu0 0
      %1992 = vmatpush1.bf16.msra.mxu0 %v1518
      %1993 = vmatprep.subr.bf16.mxu0 0
      %1994 = vmatpush1.bf16.msra.mxu0 %v1519
      %1995 = vmatprep.subr.bf16.mxu0 0
      %1996 = vmatpush1.bf16.msra.mxu0 %v1520
      %1997 = vmatprep.subr.bf16.mxu0 0
      %1998 = vmatpush1.bf16.msra.mxu0 %v1521
      %1999 = vmatprep.subr.bf16.mxu0 0
      %2000 = vmatpush1.bf16.msra.mxu0 %v1522
      %2001 = vmatprep.subr.bf16.mxu0 0
      %2002 = vmatpush1.bf16.msra.mxu0 %v1523
      %2003 = vmatprep.subr.bf16.mxu0 0
      %2004 = vmatpush1.bf16.msra.mxu0 %v1524
      %2005 = vmatprep.mubr.bf16.mxu0 %v876
      %2006 = vmatmul.mubr.bf16.gmra.mrb[0].mxu0 %v875
      %v2007 = vpop.f32.mrb[0].mxu0
      %v2008 = vadd.f32 %v1911, %v2007
      %v2009 = vpop.f32.mrb[0].mxu0
      %v2010 = vpop.f32.mrb[0].mxu0
      %v2011 = vadd.f32 %v1914, %v2010
      %v2012 = vpop.f32.mrb[0].mxu0
      %2013 = vmatprep.mubr.bf16.mxu0 %v889
      %2014 = vmatmul.mubr.bf16.gmra.mrb[0].mxu0 %v888
      %v2015 = vpop.f32.mrb[0].mxu0
      %v2016 = vadd.f32 %v1919, %v2015
      %v2017 = vpop.f32.mrb[0].mxu0
      %v2018 = vpop.f32.mrb[0].mxu0
      %v2019 = vadd.f32 %v1922, %v2018
      %v2020 = vpop.f32.mrb[0].mxu0
      %2021 = vmatprep.mubr.bf16.mxu0 %v902
      %2022 = vmatmul.mubr.bf16.gmra.mrb[0].mxu0 %v901
      %v2023 = vpop.f32.mrb[0].mxu0
      %v2024 = vadd.f32 %v1927, %v2023
      %v2025 = vpop.f32.mrb[0].mxu0
      %v2026 = vpop.f32.mrb[0].mxu0
      %v2027 = vadd.f32 %v1930, %v2026
      %v2028 = vpop.f32.mrb[0].mxu0
      %2029 = vmatprep.mubr.bf16.mxu0 %v915
      %2030 = vmatmul.mubr.bf16.gmra.mrb[0].mxu0 %v914
      %v2031 = vpop.f32.mrb[0].mxu0
      %v2032 = vadd.f32 %v1935, %v2031
      %v2033 = vpop.f32.mrb[0].mxu0
      %v2034 = vpop.f32.mrb[0].mxu0
      %v2035 = vadd.f32 %v1938, %v2034
      %v2036 = vpop.f32.mrb[0].mxu0
      %2037 = vmatprep.mubr.bf16.mxu0 %v928
      %2038 = vmatmul.mubr.bf16.gmra.mrb[0].mxu0 %v927
      %v2039 = vpop.f32.mrb[0].mxu0
      %v2040 = vadd.f32 %v1943, %v2039
      %v2041 = vpop.f32.mrb[0].mxu0
      %v2042 = vpop.f32.mrb[0].mxu0
      %v2043 = vadd.f32 %v1946, %v2042
      %v2044 = vpop.f32.mrb[0].mxu0
      %2045 = vmatprep.mubr.bf16.mxu0 %v941
      %2046 = vmatmul.mubr.bf16.gmra.mrb[0].mxu0 %v940
      %v2047 = vpop.f32.mrb[0].mxu0
      %v2048 = vadd.f32 %v1951, %v2047
      %v2049 = vpop.f32.mrb[0].mxu0
      %v2050 = vpop.f32.mrb[0].mxu0
      %v2051 = vadd.f32 %v1954, %v2050
      %v2052 = vpop.f32.mrb[0].mxu0
      %2053 = vmatprep.mubr.bf16.mxu0 %v954
      %2054 = vmatmul.mubr.bf16.gmra.mrb[0].mxu0 %v953
      %v2055 = vpop.f32.mrb[0].mxu0
      %v2056 = vadd.f32 %v1959, %v2055
      %v2057 = vpop.f32.mrb[0].mxu0
      %v2058 = vpop.f32.mrb[0].mxu0
      %v2059 = vadd.f32 %v1962, %v2058
      %v2060 = vpop.f32.mrb[0].mxu0
      %2061 = vmatprep.mubr.bf16.mxu0 %v967
      %2062 = vmatmul.mubr.bf16.gmra.mrb[0].mxu0 %v966
      %v2063 = vpop.f32.mrb[0].mxu0
      %v2064 = vadd.f32 %v1967, %v2063
      %v2065 = vpop.f32.mrb[0].mxu0
      %v2066 = vpop.f32.mrb[0].mxu0
      %v2067 = vadd.f32 %v1970, %v2066
      %v2068 = vpop.f32.mrb[0].mxu0
      %2069 = vdwg.mxu0
      %2070 = vmatprep.subr.bf16.mxu0 0
      %2071 = vmatpush1.bf16.msra.mxu0 %v1525
      %2072 = vmatprep.subr.bf16.mxu0 0
      %2073 = vmatpush1.bf16.msra.mxu0 %v1526
      %2074 = vmatprep.subr.bf16.mxu0 0
      %2075 = vmatpush1.bf16.msra.mxu0 %v1527
      %2076 = vmatprep.subr.bf16.mxu0 0
      %2077 = vmatpush1.bf16.msra.mxu0 %v1528
      %2078 = vmatprep.subr.bf16.mxu0 0
      %2079 = vmatpush1.bf16.msra.mxu0 %v1529
      %2080 = vmatprep.subr.bf16.mxu0 0
      %2081 = vmatpush1.bf16.msra.mxu0 %v1530
      %2082 = vmatprep.subr.bf16.mxu0 0
      %2083 = vmatpush1.bf16.msra.mxu0 %v1531
      %2084 = vmatprep.subr.bf16.mxu0 0
      %2085 = vmatpush1.bf16.msra.mxu0 %v1532
      %2086 = vmatprep.subr.bf16.mxu0 0
      %2087 = vmatpush1.bf16.msra.mxu0 %v1533
      %2088 = vmatprep.subr.bf16.mxu0 0
      %2089 = vmatpush1.bf16.msra.mxu0 %v1534
      %2090 = vmatprep.subr.bf16.mxu0 0
      %2091 = vmatpush1.bf16.msra.mxu0 %v1535
      %2092 = vmatprep.subr.bf16.mxu0 0
      %2093 = vmatpush1.bf16.msra.mxu0 %v1536
      %2094 = vmatprep.subr.bf16.mxu0 0
      %2095 = vmatpush1.bf16.msra.mxu0 %v1537
      %2096 = vmatprep.subr.bf16.mxu0 0
      %2097 = vmatpush1.bf16.msra.mxu0 %v1538
      %2098 = vmatprep.subr.bf16.mxu0 0
      %2099 = vmatpush1.bf16.msra.mxu0 %v1539
      %2100 = vmatprep.subr.bf16.mxu0 0
      %2101 = vmatpush1.bf16.msra.mxu0 %v1540
      %2102 = vmatprep.mubr.bf16.mxu0 %v878
      %2103 = vmatmul.mubr.bf16.gmra.mrb[0].mxu0 %v877
      %v2104 = vpop.f32.mrb[0].mxu0
      %v2105 = vadd.f32 %v2008, %v2104
      %v2106 = vpop.f32.mrb[0].mxu0
      %v2107 = vpop.f32.mrb[0].mxu0
      %v2108 = vadd.f32 %v2011, %v2107
      %v2109 = vpop.f32.mrb[0].mxu0
      %2110 = vmatprep.mubr.bf16.mxu0 %v891
      %2111 = vmatmul.mubr.bf16.gmra.mrb[0].mxu0 %v890
      %v2112 = vpop.f32.mrb[0].mxu0
      %v2113 = vadd.f32 %v2016, %v2112
      %v2114 = vpop.f32.mrb[0].mxu0
      %v2115 = vpop.f32.mrb[0].mxu0
      %v2116 = vadd.f32 %v2019, %v2115
      %v2117 = vpop.f32.mrb[0].mxu0
      %2118 = vmatprep.mubr.bf16.mxu0 %v904
      %2119 = vmatmul.mubr.bf16.gmra.mrb[0].mxu0 %v903
      %v2120 = vpop.f32.mrb[0].mxu0
      %v2121 = vadd.f32 %v2024, %v2120
      %v2122 = vpop.f32.mrb[0].mxu0
      %v2123 = vpop.f32.mrb[0].mxu0
      %v2124 = vadd.f32 %v2027, %v2123
      %v2125 = vpop.f32.mrb[0].mxu0
      %2126 = vmatprep.mubr.bf16.mxu0 %v917
      %2127 = vmatmul.mubr.bf16.gmra.mrb[0].mxu0 %v916
      %v2128 = vpop.f32.mrb[0].mxu0
      %v2129 = vadd.f32 %v2032, %v2128
      %v2130 = vpop.f32.mrb[0].mxu0
      %v2131 = vpop.f32.mrb[0].mxu0
      %v2132 = vadd.f32 %v2035, %v2131
      %v2133 = vpop.f32.mrb[0].mxu0
      %2134 = vmatprep.mubr.bf16.mxu0 %v930
      %2135 = vmatmul.mubr.bf16.gmra.mrb[0].mxu0 %v929
      %v2136 = vpop.f32.mrb[0].mxu0
      %v2137 = vadd.f32 %v2040, %v2136
      %v2138 = vpop.f32.mrb[0].mxu0
      %v2139 = vpop.f32.mrb[0].mxu0
      %v2140 = vadd.f32 %v2043, %v2139
      %v2141 = vpop.f32.mrb[0].mxu0
      %2142 = vmatprep.mubr.bf16.mxu0 %v943
      %2143 = vmatmul.mubr.bf16.gmra.mrb[0].mxu0 %v942
      %v2144 = vpop.f32.mrb[0].mxu0
      %v2145 = vadd.f32 %v2048, %v2144
      %v2146 = vpop.f32.mrb[0].mxu0
      %v2147 = vpop.f32.mrb[0].mxu0
      %v2148 = vadd.f32 %v2051, %v2147
      %v2149 = vpop.f32.mrb[0].mxu0
      %2150 = vmatprep.mubr.bf16.mxu0 %v956
      %2151 = vmatmul.mubr.bf16.gmra.mrb[0].mxu0 %v955
      %v2152 = vpop.f32.mrb[0].mxu0
      %v2153 = vadd.f32 %v2056, %v2152
      %v2154 = vpop.f32.mrb[0].mxu0
      %v2155 = vpop.f32.mrb[0].mxu0
      %v2156 = vadd.f32 %v2059, %v2155
      %v2157 = vpop.f32.mrb[0].mxu0
      %2158 = vmatprep.mubr.bf16.mxu0 %v969
      %2159 = vmatmul.mubr.bf16.gmra.mrb[0].mxu0 %v968
      %v2160 = vpop.f32.mrb[0].mxu0
      %v2161 = vadd.f32 %v2064, %v2160
      %v2162 = vpop.f32.mrb[0].mxu0
      %v2163 = vpop.f32.mrb[0].mxu0
      %v2164 = vadd.f32 %v2067, %v2163
      %v2165 = vpop.f32.mrb[0].mxu0
      %2166 = vdwg.mxu0
      %2167 = vmatprep.subr.bf16.mxu0 0
      %2168 = vmatpush1.bf16.msra.mxu0 %v1541
      %2169 = vmatprep.subr.bf16.mxu0 0
      %2170 = vmatpush1.bf16.msra.mxu0 %v1542
      %2171 = vmatprep.subr.bf16.mxu0 0
      %2172 = vmatpush1.bf16.msra.mxu0 %v1543
      %2173 = vmatprep.subr.bf16.mxu0 0
      %2174 = vmatpush1.bf16.msra.mxu0 %v1544
      %2175 = vmatprep.subr.bf16.mxu0 0
      %2176 = vmatpush1.bf16.msra.mxu0 %v1545
      %2177 = vmatprep.subr.bf16.mxu0 0
      %2178 = vmatpush1.bf16.msra.mxu0 %v1546
      %2179 = vmatprep.subr.bf16.mxu0 0
      %2180 = vmatpush1.bf16.msra.mxu0 %v1547
      %2181 = vmatprep.subr.bf16.mxu0 0
      %2182 = vmatpush1.bf16.msra.mxu0 %v1548
      %2183 = vmatprep.subr.bf16.mxu0 0
      %2184 = vmatpush1.bf16.msra.mxu0 %v1549
      %2185 = vmatprep.subr.bf16.mxu0 0
      %2186 = vmatpush1.bf16.msra.mxu0 %v1550
      %2187 = vmatprep.subr.bf16.mxu0 0
      %2188 = vmatpush1.bf16.msra.mxu0 %v1551
      %2189 = vmatprep.subr.bf16.mxu0 0
      %2190 = vmatpush1.bf16.msra.mxu0 %v1552
      %2191 = vmatprep.subr.bf16.mxu0 0
      %2192 = vmatpush1.bf16.msra.mxu0 %v1553
      %2193 = vmatprep.subr.bf16.mxu0 0
      %2194 = vmatpush1.bf16.msra.mxu0 %v1554
      %2195 = vmatprep.subr.bf16.mxu0 0
      %2196 = vmatpush1.bf16.msra.mxu0 %v1555
      %2197 = vmatprep.subr.bf16.mxu0 0
      %2198 = vmatpush1.bf16.msra.mxu0 %v1556
      %2199 = vmatprep.mubr.bf16.mxu0 %v880
      %2200 = vmatmul.mubr.bf16.gmra.mrb[0].mxu0 %v879
      %v2201 = vpop.f32.mrb[0].mxu0
      %v2202 = vadd.f32 %v2105, %v2201
      %v2203 = vpop.f32.mrb[0].mxu0
      %v2204 = vpop.f32.mrb[0].mxu0
      %v2205 = vadd.f32 %v2108, %v2204
      %v2206 = vpop.f32.mrb[0].mxu0
      %2207 = vmatprep.mubr.bf16.mxu0 %v893
      %2208 = vmatmul.mubr.bf16.gmra.mrb[0].mxu0 %v892
      %v2209 = vpop.f32.mrb[0].mxu0
      %v2210 = vadd.f32 %v2113, %v2209
      %v2211 = vpop.f32.mrb[0].mxu0
      %v2212 = vpop.f32.mrb[0].mxu0
      %v2213 = vadd.f32 %v2116, %v2212
      %v2214 = vpop.f32.mrb[0].mxu0
      %2215 = vmatprep.mubr.bf16.mxu0 %v906
      %2216 = vmatmul.mubr.bf16.gmra.mrb[0].mxu0 %v905
      %v2217 = vpop.f32.mrb[0].mxu0
      %v2218 = vadd.f32 %v2121, %v2217
      %v2219 = vpop.f32.mrb[0].mxu0
      %v2220 = vpop.f32.mrb[0].mxu0
      %v2221 = vadd.f32 %v2124, %v2220
      %v2222 = vpop.f32.mrb[0].mxu0
      %2223 = vmatprep.mubr.bf16.mxu0 %v919
      %2224 = vmatmul.mubr.bf16.gmra.mrb[0].mxu0 %v918
      %v2225 = vpop.f32.mrb[0].mxu0
      %v2226 = vadd.f32 %v2129, %v2225
      %v2227 = vpop.f32.mrb[0].mxu0
      %v2228 = vpop.f32.mrb[0].mxu0
      %v2229 = vadd.f32 %v2132, %v2228
      %v2230 = vpop.f32.mrb[0].mxu0
      %2231 = vmatprep.mubr.bf16.mxu0 %v932
      %2232 = vmatmul.mubr.bf16.gmra.mrb[0].mxu0 %v931
      %v2233 = vpop.f32.mrb[0].mxu0
      %v2234 = vadd.f32 %v2137, %v2233
      %v2235 = vpop.f32.mrb[0].mxu0
      %v2236 = vpop.f32.mrb[0].mxu0
      %v2237 = vadd.f32 %v2140, %v2236
      %v2238 = vpop.f32.mrb[0].mxu0
      %2239 = vmatprep.mubr.bf16.mxu0 %v945
      %2240 = vmatmul.mubr.bf16.gmra.mrb[0].mxu0 %v944
      %v2241 = vpop.f32.mrb[0].mxu0
      %v2242 = vadd.f32 %v2145, %v2241
      %v2243 = vpop.f32.mrb[0].mxu0
      %v2244 = vpop.f32.mrb[0].mxu0
      %v2245 = vadd.f32 %v2148, %v2244
      %v2246 = vpop.f32.mrb[0].mxu0
      %2247 = vmatprep.mubr.bf16.mxu0 %v958
      %2248 = vmatmul.mubr.bf16.gmra.mrb[0].mxu0 %v957
      %v2249 = vpop.f32.mrb[0].mxu0
      %v2250 = vadd.f32 %v2153, %v2249
      %v2251 = vpop.f32.mrb[0].mxu0
      %v2252 = vpop.f32.mrb[0].mxu0
      %v2253 = vadd.f32 %v2156, %v2252
      %v2254 = vpop.f32.mrb[0].mxu0
      %2255 = vmatprep.mubr.bf16.mxu0 %v971
      %2256 = vmatmul.mubr.bf16.gmra.mrb[0].mxu0 %v970
      %v2257 = vpop.f32.mrb[0].mxu0
      %v2258 = vadd.f32 %v2161, %v2257
      %v2259 = vpop.f32.mrb[0].mxu0
      %v2260 = vpop.f32.mrb[0].mxu0
      %v2261 = vadd.f32 %v2164, %v2260
      %v2262 = vpop.f32.mrb[0].mxu0
      %2263 = vdwg.mxu0
      %2264 = vmatprep.subr.bf16.mxu0 0
      %2265 = vmatpush1.bf16.msra.mxu0 %v1557
      %2266 = vmatprep.subr.bf16.mxu0 0
      %2267 = vmatpush1.bf16.msra.mxu0 %v1558
      %2268 = vmatprep.subr.bf16.mxu0 0
      %2269 = vmatpush1.bf16.msra.mxu0 0
      %2270 = vmatprep.subr.bf16.mxu0 0
      %2271 = vmatpush1.bf16.msra.mxu0 0
      %2272 = vmatprep.subr.bf16.mxu0 0
      %2273 = vmatpush1.bf16.msra.mxu0 0
      %2274 = vmatprep.subr.bf16.mxu0 0
      %2275 = vmatpush1.bf16.msra.mxu0 0
      %2276 = vmatprep.subr.bf16.mxu0 0
      %2277 = vmatpush1.bf16.msra.mxu0 0
      %2278 = vmatprep.subr.bf16.mxu0 0
      %2279 = vmatpush1.bf16.msra.mxu0 0
      %2280 = vmatprep.subr.bf16.mxu0 0
      %2281 = vmatpush1.bf16.msra.mxu0 0
      %2282 = vmatprep.subr.bf16.mxu0 0
      %2283 = vmatpush1.bf16.msra.mxu0 0
      %2284 = vmatprep.subr.bf16.mxu0 0
      %2285 = vmatpush1.bf16.msra.mxu0 0
      %2286 = vmatprep.subr.bf16.mxu0 0
      %2287 = vmatpush1.bf16.msra.mxu0 0
      %2288 = vmatprep.subr.bf16.mxu0 0
      %2289 = vmatpush1.bf16.msra.mxu0 0
      %2290 = vmatprep.subr.bf16.mxu0 0
      %2291 = vmatpush1.bf16.msra.mxu0 0
      %2292 = vmatprep.subr.bf16.mxu0 0
      %2293 = vmatpush1.bf16.msra.mxu0 0
      %2294 = vmatprep.subr.bf16.mxu0 0
      %2295 = vmatpush1.bf16.msra.mxu0 0
      %2296 = vmatprep.mubr.bf16.mxu0 0
      %2297 = vmatmul.mubr.bf16.gmra.mrb[0].mxu0 %v1659
      %v2298 = vpop.f32.mrb[0].mxu0
      %v2299 = vadd.f32 %v2202, %v2298
      %v2300 = vpop.f32.mrb[0].mxu0
      %v2301 = vpop.f32.mrb[0].mxu0
      %v2302 = vadd.f32 %v2205, %v2301
      %v2303 = vpop.f32.mrb[0].mxu0
      %2304 = vmatprep.mubr.bf16.mxu0 0
      %2305 = vmatmul.mubr.bf16.gmra.mrb[0].mxu0 %v1662
      %v2306 = vpop.f32.mrb[0].mxu0
      %v2307 = vadd.f32 %v2210, %v2306
      %v2308 = vpop.f32.mrb[0].mxu0
      %v2309 = vpop.f32.mrb[0].mxu0
      %v2310 = vadd.f32 %v2213, %v2309
      %v2311 = vpop.f32.mrb[0].mxu0
      %2312 = vmatprep.mubr.bf16.mxu0 0
      %2313 = vmatmul.mubr.bf16.gmra.mrb[0].mxu0 %v1665
      %v2314 = vpop.f32.mrb[0].mxu0
      %v2315 = vadd.f32 %v2218, %v2314
      %v2316 = vpop.f32.mrb[0].mxu0
      %v2317 = vpop.f32.mrb[0].mxu0
      %v2318 = vadd.f32 %v2221, %v2317
      %v2319 = vpop.f32.mrb[0].mxu0
      %2320 = vmatprep.mubr.bf16.mxu0 0
      %2321 = vmatmul.mubr.bf16.gmra.mrb[0].mxu0 %v1668
      %v2322 = vpop.f32.mrb[0].mxu0
      %v2323 = vadd.f32 %v2226, %v2322
      %v2324 = vpop.f32.mrb[0].mxu0
      %v2325 = vpop.f32.mrb[0].mxu0
      %v2326 = vadd.f32 %v2229, %v2325
      %v2327 = vpop.f32.mrb[0].mxu0
      %2328 = vmatprep.mubr.bf16.mxu0 0
      %2329 = vmatmul.mubr.bf16.gmra.mrb[0].mxu0 %v1671
      %v2330 = vpop.f32.mrb[0].mxu0
      %v2331 = vadd.f32 %v2234, %v2330
      %v2332 = vpop.f32.mrb[0].mxu0
      %v2333 = vpop.f32.mrb[0].mxu0
      %v2334 = vadd.f32 %v2237, %v2333
      %v2335 = vpop.f32.mrb[0].mxu0
      %2336 = vmatprep.mubr.bf16.mxu0 0
      %2337 = vmatmul.mubr.bf16.gmra.mrb[0].mxu0 %v1674
      %v2338 = vpop.f32.mrb[0].mxu0
      %v2339 = vadd.f32 %v2242, %v2338
      %v2340 = vpop.f32.mrb[0].mxu0
      %v2341 = vpop.f32.mrb[0].mxu0
      %v2342 = vadd.f32 %v2245, %v2341
      %v2343 = vpop.f32.mrb[0].mxu0
      %2344 = vmatprep.mubr.bf16.mxu0 0
      %2345 = vmatmul.mubr.bf16.gmra.mrb[0].mxu0 %v1677
      %v2346 = vpop.f32.mrb[0].mxu0
      %v2347 = vadd.f32 %v2250, %v2346
      %v2348 = vpop.f32.mrb[0].mxu0
      %v2349 = vpop.f32.mrb[0].mxu0
      %v2350 = vadd.f32 %v2253, %v2349
      %v2351 = vpop.f32.mrb[0].mxu0
      %2352 = vmatprep.mubr.bf16.mxu0 0
      %2353 = vmatmul.mubr.bf16.gmra.mrb[0].mxu0 %v1680
      %v2354 = vpop.f32.mrb[0].mxu0
      %v2355 = vadd.f32 %v2258, %v2354
      %v2356 = vpop.f32.mrb[0].mxu0
      %v2357 = vpop.f32.mrb[0].mxu0
      %v2358 = vadd.f32 %v2261, %v2357
      %v2359 = vpop.f32.mrb[0].mxu0
      %2360 = vdwg.mxu0
      %v2361 = vld [vmem:[%s2] sm:$0x1]
      %v2363 = vlaneseq
      %v2364 = vshrl.u32 %v2363, 7
      %v2365 = vsub.s32 0, %v2364
      %v2366 = vrot.slane %v2361, %v2365
      %v2368 = vmul.f32 %v2299, %v2366
      %v2369 = vmul.f32 %v2302, %v2366
      %v2370 = vmul.f32 %v2307, %v2366
      %v2371 = vmul.f32 %v2310, %v2366
      %v2372 = vmul.f32 %v2315, %v2366
      %v2373 = vmul.f32 %v2318, %v2366
      %v2374 = vmul.f32 %v2323, %v2366
      %v2375 = vmul.f32 %v2326, %v2366
      %v2376 = vmul.f32 %v2331, %v2366
      %v2377 = vmul.f32 %v2334, %v2366
      %v2378 = vmul.f32 %v2339, %v2366
      %v2379 = vmul.f32 %v2342, %v2366
      %v2380 = vmul.f32 %v2347, %v2366
      %v2381 = vmul.f32 %v2350, %v2366
      %v2382 = vmul.f32 %v2355, %v2366
      %v2383 = vmul.f32 %v2358, %v2366
      %v2384 = vld [vmem:[%s3] sm:$0x1]
      %v2386 = vlaneseq
      %v2387 = vshrl.u32 %v2386, 7
      %v2388 = vsub.s32 0, %v2387
      %v2389 = vrot.slane %v2384, %v2388
      %v2391 = vadd.f32 %v2368, %v2389
      %v2392 = vadd.f32 %v2369, %v2389
      %v2393 = vadd.f32 %v2370, %v2389
      %v2394 = vadd.f32 %v2371, %v2389
      %v2395 = vadd.f32 %v2372, %v2389
      %v2396 = vadd.f32 %v2373, %v2389
      %v2397 = vadd.f32 %v2374, %v2389
      %v2398 = vadd.f32 %v2375, %v2389
      %v2399 = vadd.f32 %v2376, %v2389
      %v2400 = vadd.f32 %v2377, %v2389
      %v2401 = vadd.f32 %v2378, %v2389
      %v2402 = vadd.f32 %v2379, %v2389
      %v2403 = vadd.f32 %v2380, %v2389
      %v2404 = vadd.f32 %v2381, %v2389
      %v2405 = vadd.f32 %v2382, %v2389
      %v2406 = vadd.f32 %v2383, %v2389
      %2407 = vst [vmem:[%s238] sm:$0xff] %v2391
      %2408 = vst [vmem:[%s238 + $0x8] sm:$0xff] %v2392
      %2409 = vst [vmem:[%s238 + $0x10] sm:$0xff] %v2393
      %2410 = vst [vmem:[%s238 + $0x18] sm:$0xff] %v2394
      %2411 = vst [vmem:[%s238 + $0x20] sm:$0xff] %v2395
      %2412 = vst [vmem:[%s238 + $0x28] sm:$0xff] %v2396
      %2413 = vst [vmem:[%s238 + $0x30] sm:$0xff] %v2397
      %2414 = vst [vmem:[%s238 + $0x38] sm:$0xff] %v2398
      %2415 = vst [vmem:[%s238 + $0x40] sm:$0xff] %v2399
      %2416 = vst [vmem:[%s238 + $0x48] sm:$0xff] %v2400
      %2417 = vst [vmem:[%s238 + $0x50] sm:$0xff] %v2401
      %2418 = vst [vmem:[%s238 + $0x58] sm:$0xff] %v2402
      %2419 = vst [vmem:[%s238 + $0x60] sm:$0xff] %v2403
      %2420 = vst [vmem:[%s238 + $0x68] sm:$0xff] %v2404
      %2421 = vst [vmem:[%s238 + $0x70] sm:$0xff] %v2405
      %2422 = vst [vmem:[%s238 + $0x78] sm:$0xff] %v2406
      %s2423 = smul.u32 16, %s20
      %p2424 = scmp.lt.s32.totalorder %s19, 1
      %s2425 = scalar_select %p2424, %s19, 1
      %p2426 = scmp.lt.s32.totalorder %s2423, 31
      %s2427 = scalar_select %p2426, %s2423, 31
      %s2428 = smul.addr %s2425, 32
      %s2429 = sadd.s32 %s2427, %s2428
      %s2430 = smul.addr %s2429, 8
      %s2431 = scalar_lea.vmem %s4, %s2430
      // Predicated region
      $region37: #{fgc_forward.13} parent=35 // pred_check
        %p2432 = pneg %p138
      $region38: #{fgc_forward.13} parent=35 // pred_check_branch
        %2434 = sbr.rel (%p2432) target = $region40
      $region39: #{fgc_forward.13} parent=35 // pred_region
        %s2435 = smul.u32 16, %s20
      $region40: #{fgc_forward.13} parent=35 // pred_fallthru
        _
    $region36: #{fgc_forward.13} parent=5 // pred_fallthru
      _
    %p2436 = scmp.le.s32.totalorder 2, %s10
    // Predicated region
    $region41: #{fgc_forward.13} parent=5 // pred_check
      %p2437 = pneg %p2436
    $region42: #{fgc_forward.13} parent=5 // pred_check_branch
      %2439 = sbr.rel (%p2437) target = $region44
    $region43: #{fgc_forward.13} parent=5 // pred_region
      %s2440 = ssub.s32 %s10, 2
      // Predicated region
      $region45: #{fgc_forward.13} parent=43 // pred_check
        %p2441 = pneg %p144
      $region46: #{fgc_forward.13} parent=43 // pred_check_branch
        %2443 = sbr.rel (%p2441) target = $region48
      $region47: #{fgc_forward.13} parent=43 // pred_region
        %s2444 = smul.u32 16, %s22
        %p2445 = scmp.lt.s32.totalorder %s21, 1
        %s2446 = scalar_select %p2445, %s21, 1
        %p2447 = scmp.lt.s32.totalorder %s2444, 31
        %s2448 = scalar_select %p2447, %s2444, 31
        %s2449 = smul.addr %s2446, 32
        %s2450 = sadd.s32 %s2448, %s2449
        %s2451 = smul.addr %s2450, 8
        %s2452 = scalar_lea.vmem %s4, %s2451
      $region48: #{fgc_forward.13} parent=43 // pred_fallthru
        _
    $region44: #{fgc_forward.13} parent=5 // pred_fallthru
      _
  $region6: #{fgc_forward.13} parent=0 // loop_footer
    %s14 = sadd.s32 1, %s10
  $region7: #{fgc_forward.13} parent=0 // loop_footer_branch
    %9 = sbr.rel target = $region3
  $region8: #{fgc_forward.13} parent=0 // loop_exit
    _

</llo_original>
